<compile_context>
chip_gen: v6e
topology: v6e:2x2x1
jax: 0.10.0
libtpu: 0.0.40
codegen_flags: <defaults>
</compile_context>

<pallas_src>
import numpy as np
import jax
import jax.numpy as jnp
from jax.experimental import pallas as pl
from jax.experimental.pallas import tpu as pltpu


_KW = 11                      # effective Inception kernel width (sizes 1..11 embedded)
_PAD = (_KW - 1) // 2         # 5
_OFF = 8                      # sublane-aligned interior offset inside padded scratches
_EPS = 1e-5


# -----------------------------------------------------------------------------
# In-kernel math helpers
# -----------------------------------------------------------------------------
def _erf(x):
    # Abramowitz & Stegun 7.1.26 (max abs err ~1.5e-7). Uses only exp/abs/where/div,
    # all of which lower cleanly in Mosaic.
    a1, a2, a3, a4, a5 = 0.254829592, -0.284496736, 1.421413741, -1.453152027, 1.061405429
    p = 0.3275911
    ax = jnp.abs(x)
    t = 1.0 / (1.0 + p * ax)
    poly = ((((a5 * t + a4) * t + a3) * t + a2) * t + a1) * t
    y = 1.0 - poly * jnp.exp(-ax * ax)
    return jnp.where(x >= 0, y, -y)


def _gelu(x):
    # PyTorch nn.GELU() default = exact erf form.
    return 0.5 * x * (1.0 + _erf(x * 0.7071067811865476))


def _layernorm(y, gamma, beta):
    mu = jnp.mean(y, axis=-1, keepdims=True)
    var = jnp.mean((y - mu) * (y - mu), axis=-1, keepdims=True)
    return (y - mu) * jax.lax.rsqrt(var + _EPS) * gamma + beta


# -----------------------------------------------------------------------------
# The single fused kernel (whole forward pass, all batches, all layers)
# -----------------------------------------------------------------------------
def _timesnet_kernel(x_ref, wtok_ref, pe_ref, wp_ref, bp_ref, sel_ref,
                     k1_ref, b1_ref, k2_ref, b2_ref, gamma_ref, beta_ref,
                     wprojT_ref, bproj_ref, wp2_ref, bp2_ref,
                     o_ref, xpad_ref, gpad_ref, hpad_ref):
    B, S, _C = x_ref.shape
    T, D = wp_ref.shape[0], wtok_ref.shape[1]
    W = T // 2
    NL = k1_ref.shape[0]

    # Hoisted weight loads (shared by every batch / layer).
    wtok = wtok_ref[...]
    pe = pe_ref[...]
    wp = wp_ref[...]
    bp = bp_ref[...]
    sel = sel_ref[...]                     # [T, T] bf16 permutation: [even times | odd]
    gamma = gamma_ref[...]
    beta = beta_ref[...]
    wprojT = wprojT_ref[...]
    bproj = bproj_ref[...]
    wp2 = wp2_ref[...]
    bp2 = bp2_ref[...]

    # Zero the conv pad scratches ONCE.  Only rows [_OFF:_OFF+W] are ever overwritten,
    # so the pad bands stay zero for every (batch, layer) iteration.
    gpad_ref[...] = jnp.zeros_like(gpad_ref)
    hpad_ref[...] = jnp.zeros_like(hpad_ref)

    for b in range(B):                                     # static unroll (tiny B)
        # ---- instance normalization over time, per channel (unbiased=False) ----
        xb = x_ref[b]                                      # [S, C] f32
        mu = jnp.mean(xb, axis=0, keepdims=True)
        var = jnp.mean((xb - mu) * (xb - mu), axis=0, keepdims=True)
        xn = (xb - mu) * jax.lax.rsqrt(var + _EPS)         # [S, C]

        # ---- TokenEmbedding: circular k=3 conv over time as one [S,3C]@[3C,D] ----
        # Three aligned copies of xn make the circular +/-1 windows plain windows.
        xpad_ref[0:S, :] = xn
        xpad_ref[S:2 * S, :] = xn
        xpad_ref[2 * S:3 * S, :] = xn
        x3 = jnp.concatenate(
            [xpad_ref[S - 1:2 * S - 1, :],                 # x[(t-1) mod S]
             xpad_ref[S:2 * S, :],                         # x[t]
             xpad_ref[S + 1:2 * S + 1, :]],                # x[(t+1) mod S]
            axis=-1)                                       # [S, 3C] f32
        emb = jnp.dot(x3.astype(jnp.bfloat16), wtok,
                      preferred_element_type=jnp.float32) + pe            # [S, D]

        # ---- predict_linear over the time axis: [T,S] @ [S,D] ----
        enc = jnp.dot(wp, emb.astype(jnp.bfloat16),
                      preferred_element_type=jnp.float32) + bp            # [T, D]

        # ---- e_layers x (TimesBlock, period hard-coded to 2) + shared LayerNorm ----
        for l in range(NL):                                # static unroll (tiny NL)
            # De-interleave time onto the period-2 grid via a permutation matmul
            # (bulletproof MXU op; conv input is bf16 anyway so no extra precision loss).
            p2 = jnp.dot(sel, enc.astype(jnp.bfloat16),
                         preferred_element_type=jnp.float32)              # [T, D]
            g = jnp.concatenate([p2[0:W, :], p2[W:T, :]], axis=-1)        # [W, 2D]
            gpad_ref[_OFF:_OFF + W, :] = g                 # aligned interior store

            # Inception #1 (D -> 4D): single im2col matmul over the 11 W-taps.
            win1 = jnp.concatenate(
                [gpad_ref[_OFF - _PAD + j:_OFF - _PAD + j + W, :] for j in range(_KW)],
                axis=-1)                                                   # [W, 11*2D]
            h = jnp.dot(win1.astype(jnp.bfloat16), k1_ref[l],
                        preferred_element_type=jnp.float32) + b1_ref[l]    # [W, 2*4D]
            h = _gelu(h)
            hpad_ref[_OFF:_OFF + W, :] = h                 # aligned interior store

            # Inception #2 (4D -> D): single im2col matmul.
            win2 = jnp.concatenate(
                [hpad_ref[_OFF - _PAD + j:_OFF - _PAD + j + W, :] for j in range(_KW)],
                axis=-1)                                                   # [W, 11*2*4D]
            r = jnp.dot(win2.astype(jnp.bfloat16), k2_ref[l],
                        preferred_element_type=jnp.float32) + b2_ref[l]    # [W, 2D]

            # Identical k=2 branches -> softmax combine == identity.  The spec's
            # reshape-back ordering is t' = h*W + w, so output half 0 = conv row h=0,
            # half 1 = row h=1, residual-added with x at the same natural t'.
            y = jnp.concatenate([r[:, 0:D] + enc[0:W, :],
                                 r[:, D:2 * D] + enc[W:T, :]], axis=0)     # [T, D]
            enc = _layernorm(y, gamma, beta)

        # ---- projection (D -> c_out), then projection2 (T -> pred_len) ----
        d1 = jnp.dot(enc.astype(jnp.bfloat16), wprojT,
                     preferred_element_type=jnp.float32) + bproj           # [T, CO]
        o_ref[b, :, :] = jnp.dot(wp2, d1.astype(jnp.bfloat16),
                                 preferred_element_type=jnp.float32) + bp2  # [PL, CO]


# -----------------------------------------------------------------------------
# pallas_call wrapper: the whole forward is ONE kernel invocation.
# -----------------------------------------------------------------------------
def timesnet_forward(x_enc, ops):
    B, S, C = x_enc.shape
    T, D = ops["wp"].shape[0], ops["wtok"].shape[1]
    PL_, CO = ops["wp2"].shape[0], ops["wprojT"].shape[1]
    W = T // 2
    C1 = 4 * D

    def full(a):
        return pl.BlockSpec(a.shape, lambda i, _nd=a.ndim: (0,) * _nd)

    args = (x_enc, ops["wtok"], ops["pe"], ops["wp"], ops["bp"], ops["sel"],
            ops["k1"], ops["b1"], ops["k2"], ops["b2"], ops["gamma"], ops["beta"],
            ops["wprojT"], ops["bproj"], ops["wp2"], ops["bp2"])

    return pl.pallas_call(
        _timesnet_kernel,
        out_shape=jax.ShapeDtypeStruct((B, PL_, CO), jnp.float32),
        grid=(1,),
        in_specs=[full(a) for a in args],
        out_specs=pl.BlockSpec((B, PL_, CO), lambda i: (0, 0, 0)),
        scratch_shapes=[
            pltpu.VMEM((3 * S, C), jnp.float32),           # circular pad for token conv
            pltpu.VMEM((W + 16, 2 * D), jnp.float32),      # W-padded period-2 grid
            pltpu.VMEM((W + 16, 2 * C1), jnp.float32),     # W-padded GELU intermediate
        ],
        # TODO(synk): at production sizes, add a "parallel" grid axis over batch/W so
        # v7x's two TensorCores split the work (not worth it at this toy problem size).
        compiler_params=pltpu.CompilerParams(dimension_semantics=("arbitrary",)),
    )(*args)


# -----------------------------------------------------------------------------
# Parameter construction (deterministic numpy init; weights packed for the kernel)
# -----------------------------------------------------------------------------
def build_timesnet_params(p, rng):
    S, PL_, D = p["seq_len"], p["pred_len"], p["d_model"]
    C, CO, NL = p["enc_in"], p["c_out"], p["e_layers"]
    T = S + PL_
    C1 = 4 * D
    K, pad = _KW, _PAD
    W = T // 2
    assert T % 2 == 0, "period is hard-coded to [2, 2] in the reference module"

    def init(fan_in, shape):
        return (rng.standard_normal(shape) / np.sqrt(fan_in)).astype(np.float32)

    # DataEmbedding: TokenEmbedding (circular Conv1d k=3, no bias) + sinusoidal PE.
    Wt = init(C * 3, (D, C, 3))                                   # [out, in, k]
    wtok = np.transpose(Wt, (2, 1, 0)).reshape(3 * C, D)          # rows = (tap j, chan c)
    pos = np.arange(S, dtype=np.float32)[:, None]
    div = np.exp(np.arange(0, D, 2, dtype=np.float32) * -(np.log(10000.0) / D))
    pe = np.zeros((S, D), np.float32)
    pe[:, 0::2] = np.sin(pos * div)
    pe[:, 1::2] = np.cos(pos * div)

    # predict_linear: Linear(S -> T) applied over the time axis.
    Wp = init(S, (T, S))
    bp = init(S, (T,))[:, None]

    # Period-2 de-interleave permutation: rows [even times | odd times].
    sel = np.zeros((T, T), np.float32)
    for w in range(W):
        sel[w, 2 * w] = 1.0
        sel[W + w, 2 * w + 1] = 1.0

    # Per-layer TimesBlock: Inception(D,4D) -> GELU -> Inception(4D,D), 6 kernels avg.
    k1s, b1s, k2s, b2s = [], [], [], []
    for _ in range(NL):
        W1 = np.zeros((C1, D, K, K), np.float32)
        W2 = np.zeros((D, C1, K, K), np.float32)
        b1 = np.zeros((C1,), np.float32)
        b2 = np.zeros((D,), np.float32)
        for i in range(6):                                 # kernel sizes 1,3,...,11
            k = 2 * i + 1
            off = pad - i
            W1[:, :, off:off + k, off:off + k] += init(D * k * k, (C1, D, k, k))
            W2[:, :, off:off + k, off:off + k] += init(C1 * k * k, (D, C1, k, k))
            b1 += init(D * k * k, (C1,))
            b2 += init(C1 * k * k, (D,))
        W1 /= 6.0; W2 /= 6.0; b1 /= 6.0; b2 /= 6.0

        # im2col-packed tap matrices on the period-2 grid.  Input channels per tap are
        # [row h_in=0 | row h_in=1]; output channels [out h=0 | out h=1]; the H-offset
        # of the 2-row image selects kh = h_in - h_out + pad.
        K1 = np.zeros((K, 2 * D, 2 * C1), np.float32)
        K2 = np.zeros((K, 2 * C1, 2 * D), np.float32)
        for j in range(K):
            K1[j, 0:D, 0:C1] = W1[:, :, pad, j].T          # out h=0 <- in h=0
            K1[j, D:, 0:C1] = W1[:, :, pad + 1, j].T       # out h=0 <- in h=1
            K1[j, 0:D, C1:] = W1[:, :, pad - 1, j].T       # out h=1 <- in h=0
            K1[j, D:, C1:] = W1[:, :, pad, j].T            # out h=1 <- in h=1
            K2[j, 0:C1, 0:D] = W2[:, :, pad, j].T
            K2[j, C1:, 0:D] = W2[:, :, pad + 1, j].T
            K2[j, 0:C1, D:] = W2[:, :, pad - 1, j].T
            K2[j, C1:, D:] = W2[:, :, pad, j].T
        k1s.append(K1.reshape(K * 2 * D, 2 * C1))          # [11*2D, 2*4D]
        k2s.append(K2.reshape(K * 2 * C1, 2 * D))          # [11*2*4D, 2D]
        b1s.append(np.tile(b1, 2)[None, :])
        b2s.append(np.tile(b2, 2)[None, :])

    # Shared LayerNorm (PyTorch default init), projection, projection2.
    gamma = np.ones((1, D), np.float32)
    beta = np.zeros((1, D), np.float32)
    Wproj = init(D, (CO, D)); bproj = init(D, (CO,))[None, :]
    Wp2 = init(T, (PL_, T)); bp2 = init(T, (PL_,))[:, None]

    bf = lambda a: jnp.asarray(a, jnp.bfloat16)
    f32 = lambda a: jnp.asarray(a, jnp.float32)
    return dict(
        wtok=bf(wtok), pe=f32(pe), wp=bf(Wp), bp=f32(bp), sel=bf(sel),
        k1=bf(np.stack(k1s)), b1=f32(np.stack(b1s)),
        k2=bf(np.stack(k2s)), b2=f32(np.stack(b2s)),
        gamma=f32(gamma), beta=f32(beta),
        wprojT=bf(Wproj.T), bproj=f32(bproj), wp2=bf(Wp2), bp2=f32(bp2),
    )


# -----------------------------------------------------------------------------
if __name__ == "__main__":
    parameter = dict(seq_len=8, label_len=4, pred_len=8, d_model=16,
                     e_layers=2, enc_in=4, c_out=4)
    ops = build_timesnet_params(parameter, np.random.default_rng(0))

    key = jax.random.PRNGKey(0)
    x_enc = jax.random.normal(
        key, (2, parameter["seq_len"], parameter["enc_in"]), dtype=jnp.float32)

    fwd = jax.jit(lambda x: timesnet_forward(x, ops))
    out = jax.block_until_ready(fwd(x_enc))

    assert out.shape == (2, parameter["pred_len"], parameter["c_out"]), out.shape
    assert bool(jnp.all(jnp.isfinite(out)))
    print("KERNEL_OK")
</pallas_src>

<mosaic_0001>
module attributes {stable_mosaic.version = 11 : i64} {
  func.func @_timesnet_kernel(%arg0: i32, %arg1: memref<2x8x4xf32, #tpu.memory_space<vmem>>, %arg2: memref<12x16xbf16, #tpu.memory_space<vmem>>, %arg3: memref<8x16xf32, #tpu.memory_space<vmem>>, %arg4: memref<16x8xbf16, #tpu.memory_space<vmem>>, %arg5: memref<16x1xf32, #tpu.memory_space<vmem>>, %arg6: memref<16x16xbf16, #tpu.memory_space<vmem>>, %arg7: memref<2x352x128xbf16, #tpu.memory_space<vmem>>, %arg8: memref<2x1x128xf32, #tpu.memory_space<vmem>>, %arg9: memref<2x1408x32xbf16, #tpu.memory_space<vmem>>, %arg10: memref<2x1x32xf32, #tpu.memory_space<vmem>>, %arg11: memref<1x16xf32, #tpu.memory_space<vmem>>, %arg12: memref<1x16xf32, #tpu.memory_space<vmem>>, %arg13: memref<16x4xbf16, #tpu.memory_space<vmem>>, %arg14: memref<1x4xf32, #tpu.memory_space<vmem>>, %arg15: memref<8x16xbf16, #tpu.memory_space<vmem>>, %arg16: memref<8x1xf32, #tpu.memory_space<vmem>>, %arg17: memref<2x8x4xf32, #tpu.memory_space<vmem>>, %arg18: memref<24x4xf32, #tpu.memory_space<vmem>>, %arg19: memref<24x32xf32, #tpu.memory_space<vmem>>, %arg20: memref<24x128xf32, #tpu.memory_space<vmem>>) attributes {dimension_semantics = [#tpu.dimension_semantics<arbitrary>], iteration_bounds = array<i64: 1>, scalar_prefetch = 0 : i64, scratch_operands = 3 : i64, tpu.core_type = #tpu.core_type<tc>, window_params = [{pipeline_mode = #tpu.pipeline_mode<synchronous>, transform_indices = @transform_0, window_bounds = array<i64: 2, 8, 4>}, {pipeline_mode = #tpu.pipeline_mode<synchronous>, transform_indices = @transform_1, window_bounds = array<i64: 12, 16>}, {pipeline_mode = #tpu.pipeline_mode<synchronous>, transform_indices = @transform_2, window_bounds = array<i64: 8, 16>}, {pipeline_mode = #tpu.pipeline_mode<synchronous>, transform_indices = @transform_3, window_bounds = array<i64: 16, 8>}, {pipeline_mode = #tpu.pipeline_mode<synchronous>, transform_indices = @transform_4, window_bounds = array<i64: 16, 1>}, {pipeline_mode = #tpu.pipeline_mode<synchronous>, transform_indices = @transform_5, window_bounds = array<i64: 16, 16>}, {pipeline_mode = #tpu.pipeline_mode<synchronous>, transform_indices = @transform_6, window_bounds = array<i64: 2, 352, 128>}, {pipeline_mode = #tpu.pipeline_mode<synchronous>, transform_indices = @transform_7, window_bounds = array<i64: 2, 1, 128>}, {pipeline_mode = #tpu.pipeline_mode<synchronous>, transform_indices = @transform_8, window_bounds = array<i64: 2, 1408, 32>}, {pipeline_mode = #tpu.pipeline_mode<synchronous>, transform_indices = @transform_9, window_bounds = array<i64: 2, 1, 32>}, {pipeline_mode = #tpu.pipeline_mode<synchronous>, transform_indices = @transform_10, window_bounds = array<i64: 1, 16>}, {pipeline_mode = #tpu.pipeline_mode<synchronous>, transform_indices = @transform_11, window_bounds = array<i64: 1, 16>}, {pipeline_mode = #tpu.pipeline_mode<synchronous>, transform_indices = @transform_12, window_bounds = array<i64: 16, 4>}, {pipeline_mode = #tpu.pipeline_mode<synchronous>, transform_indices = @transform_13, window_bounds = array<i64: 1, 4>}, {pipeline_mode = #tpu.pipeline_mode<synchronous>, transform_indices = @transform_14, window_bounds = array<i64: 8, 16>}, {pipeline_mode = #tpu.pipeline_mode<synchronous>, transform_indices = @transform_15, window_bounds = array<i64: 8, 1>}, {pipeline_mode = #tpu.pipeline_mode<synchronous>, transform_indices = @transform_16, window_bounds = array<i64: 2, 8, 4>}]} {
    %c0 = arith.constant 0 : index
    %c0_0 = arith.constant 0 : index
    %0 = vector.load %arg2[%c0, %c0_0] : memref<12x16xbf16, #tpu.memory_space<vmem>>, vector<12x16xbf16>
    %c0_1 = arith.constant 0 : index
    %c0_2 = arith.constant 0 : index
    %1 = vector.load %arg3[%c0_1, %c0_2] : memref<8x16xf32, #tpu.memory_space<vmem>>, vector<8x16xf32>
    %c0_3 = arith.constant 0 : index
    %c0_4 = arith.constant 0 : index
    %2 = vector.load %arg4[%c0_3, %c0_4] : memref<16x8xbf16, #tpu.memory_space<vmem>>, vector<16x8xbf16>
    %c0_5 = arith.constant 0 : index
    %c0_6 = arith.constant 0 : index
    %3 = vector.load %arg5[%c0_5, %c0_6] : memref<16x1xf32, #tpu.memory_space<vmem>>, vector<16x1xf32>
    %c0_7 = arith.constant 0 : index
    %c0_8 = arith.constant 0 : index
    %4 = vector.load %arg6[%c0_7, %c0_8] : memref<16x16xbf16, #tpu.memory_space<vmem>>, vector<16x16xbf16>
    %c0_9 = arith.constant 0 : index
    %c0_10 = arith.constant 0 : index
    %5 = vector.load %arg11[%c0_9, %c0_10] : memref<1x16xf32, #tpu.memory_space<vmem>>, vector<1x16xf32>
    %c0_11 = arith.constant 0 : index
    %c0_12 = arith.constant 0 : index
    %6 = vector.load %arg12[%c0_11, %c0_12] : memref<1x16xf32, #tpu.memory_space<vmem>>, vector<1x16xf32>
    %c0_13 = arith.constant 0 : index
    %c0_14 = arith.constant 0 : index
    %7 = vector.load %arg13[%c0_13, %c0_14] : memref<16x4xbf16, #tpu.memory_space<vmem>>, vector<16x4xbf16>
    %c0_15 = arith.constant 0 : index
    %c0_16 = arith.constant 0 : index
    %8 = vector.load %arg14[%c0_15, %c0_16] : memref<1x4xf32, #tpu.memory_space<vmem>>, vector<1x4xf32>
    %c0_17 = arith.constant 0 : index
    %c0_18 = arith.constant 0 : index
    %9 = vector.load %arg15[%c0_17, %c0_18] : memref<8x16xbf16, #tpu.memory_space<vmem>>, vector<8x16xbf16>
    %c0_19 = arith.constant 0 : index
    %c0_20 = arith.constant 0 : index
    %10 = vector.load %arg16[%c0_19, %c0_20] : memref<8x1xf32, #tpu.memory_space<vmem>>, vector<8x1xf32>
    %cst = arith.constant 0.000000e+00 : f32
    %11 = vector.broadcast %cst : f32 to vector<24x32xf32>
    %c0_21 = arith.constant 0 : index
    %c0_22 = arith.constant 0 : index
    %12 = vector.load %arg19[%c0_21, %c0_22] : memref<24x32xf32, #tpu.memory_space<vmem>>, vector<24x32xf32>
    tpu.vector_store %arg19[%c0_21, %c0_22], %11 {strides = array<i32>} : memref<24x32xf32, #tpu.memory_space<vmem>>, vector<24x32xf32>,
    %cst_23 = arith.constant 0.000000e+00 : f32
    %13 = vector.broadcast %cst_23 : f32 to vector<24x128xf32>
    %c0_24 = arith.constant 0 : index
    %c0_25 = arith.constant 0 : index
    %14 = vector.load %arg20[%c0_24, %c0_25] : memref<24x128xf32, #tpu.memory_space<vmem>>, vector<24x128xf32>
    tpu.vector_store %arg20[%c0_24, %c0_25], %13 {strides = array<i32>} : memref<24x128xf32, #tpu.memory_space<vmem>>, vector<24x128xf32>,
    %c0_26 = arith.constant 0 : index
    %c0_27 = arith.constant 0 : index
    %c0_28 = arith.constant 0 : index
    %15 = vector.load %arg1[%c0_26, %c0_27, %c0_28] : memref<2x8x4xf32, #tpu.memory_space<vmem>>, vector<1x8x4xf32>
    %16 = vector.shape_cast %15 : vector<1x8x4xf32> to vector<8x4xf32>
    %cst_29 = arith.constant dense<0.000000e+00> : vector<4xf32>
    %17 = vector.multi_reduction <add>, %16, %cst_29 [0] : vector<8x4xf32> to vector<4xf32>
    %18 = vector.shape_cast %17 : vector<4xf32> to vector<1x4xf32>
    %cst_30 = arith.constant 8.000000e+00 : f32
    %19 = vector.broadcast %cst_30 : f32 to vector<1x4xf32>
    %20 = arith.divf %18, %19 : vector<1x4xf32>
    %21 = vector.broadcast %20 : vector<1x4xf32> to vector<8x4xf32>
    %22 = arith.subf %16, %21 : vector<8x4xf32>
    %23 = vector.broadcast %20 : vector<1x4xf32> to vector<8x4xf32>
    %24 = arith.subf %16, %23 : vector<8x4xf32>
    %25 = arith.mulf %22, %24 : vector<8x4xf32>
    %cst_31 = arith.constant dense<0.000000e+00> : vector<4xf32>
    %26 = vector.multi_reduction <add>, %25, %cst_31 [0] : vector<8x4xf32> to vector<4xf32>
    %27 = vector.shape_cast %26 : vector<4xf32> to vector<1x4xf32>
    %cst_32 = arith.constant 8.000000e+00 : f32
    %28 = vector.broadcast %cst_32 : f32 to vector<1x4xf32>
    %29 = arith.divf %27, %28 : vector<1x4xf32>
    %30 = vector.broadcast %20 : vector<1x4xf32> to vector<8x4xf32>
    %31 = arith.subf %16, %30 : vector<8x4xf32>
    %cst_33 = arith.constant 9.99999974E-6 : f32
    %32 = vector.broadcast %cst_33 : f32 to vector<1x4xf32>
    %33 = arith.addf %29, %32 : vector<1x4xf32>
    %34 = math.rsqrt %33 : vector<1x4xf32>
    %35 = vector.broadcast %34 : vector<1x4xf32> to vector<8x4xf32>
    %36 = arith.mulf %31, %35 : vector<8x4xf32>
    %c0_34 = arith.constant 0 : index
    %c0_35 = arith.constant 0 : index
    %37 = vector.load %arg18[%c0_34, %c0_35] : memref<24x4xf32, #tpu.memory_space<vmem>>, vector<8x4xf32>
    tpu.vector_store %arg18[%c0_34, %c0_35], %36 {strides = array<i32>} : memref<24x4xf32, #tpu.memory_space<vmem>>, vector<8x4xf32>,
    %c8 = arith.constant 8 : index
    %c0_36 = arith.constant 0 : index
    %38 = vector.load %arg18[%c8, %c0_36] : memref<24x4xf32, #tpu.memory_space<vmem>>, vector<8x4xf32>
    tpu.vector_store %arg18[%c8, %c0_36], %36 {strides = array<i32>} : memref<24x4xf32, #tpu.memory_space<vmem>>, vector<8x4xf32>,
    %c16 = arith.constant 16 : index
    %c0_37 = arith.constant 0 : index
    %39 = vector.load %arg18[%c16, %c0_37] : memref<24x4xf32, #tpu.memory_space<vmem>>, vector<8x4xf32>
    tpu.vector_store %arg18[%c16, %c0_37], %36 {strides = array<i32>} : memref<24x4xf32, #tpu.memory_space<vmem>>, vector<8x4xf32>,
    %c7 = arith.constant 7 : index
    %c0_38 = arith.constant 0 : index
    %40 = vector.load %arg18[%c7, %c0_38] : memref<24x4xf32, #tpu.memory_space<vmem>>, vector<8x4xf32>
    %c8_39 = arith.constant 8 : index
    %c0_40 = arith.constant 0 : index
    %41 = vector.load %arg18[%c8_39, %c0_40] : memref<24x4xf32, #tpu.memory_space<vmem>>, vector<8x4xf32>
    %c9 = arith.constant 9 : index
    %c0_41 = arith.constant 0 : index
    %42 = vector.load %arg18[%c9, %c0_41] : memref<24x4xf32, #tpu.memory_space<vmem>>, vector<8x4xf32>
    %43 = tpu.concatenate %40, %41, %42 in 1 : vector<8x4xf32>, vector<8x4xf32>, vector<8x4xf32> -> vector<8x12xf32>
    %44 = arith.truncf %43 : vector<8x12xf32> to vector<8x12xbf16>
    %cst_42 = arith.constant dense<0.000000e+00> : vector<8x16xf32>
    %45 = tpu.matmul %44, %0, %cst_42 {dimension_numbers = #tpu.dot_dimension_numbers<[1], [0], [0], [1], [0, 0, 1, 1], [], []>} : vector<8x12xbf16>, vector<12x16xbf16>, vector<8x16xf32> -> vector<8x16xf32>
    %46 = arith.addf %45, %1 : vector<8x16xf32>
    %47 = arith.truncf %46 : vector<8x16xf32> to vector<8x16xbf16>
    %cst_43 = arith.constant dense<0.000000e+00> : vector<16x16xf32>
    %48 = tpu.matmul %2, %47, %cst_43 {dimension_numbers = #tpu.dot_dimension_numbers<[1], [0], [0], [1], [0, 0, 1, 1], [], []>} : vector<16x8xbf16>, vector<8x16xbf16>, vector<16x16xf32> -> vector<16x16xf32>
    %49 = vector.broadcast %3 : vector<16x1xf32> to vector<16x16xf32>
    %50 = arith.addf %48, %49 : vector<16x16xf32>
    %51 = arith.truncf %50 : vector<16x16xf32> to vector<16x16xbf16>
    %cst_44 = arith.constant dense<0.000000e+00> : vector<16x16xf32>
    %52 = tpu.matmul %4, %51, %cst_44 {dimension_numbers = #tpu.dot_dimension_numbers<[1], [0], [0], [1], [0, 0, 1, 1], [], []>} : vector<16x16xbf16>, vector<16x16xbf16>, vector<16x16xf32> -> vector<16x16xf32>
    %53 = vector.extract_strided_slice %52 {offsets = [0, 0], sizes = [8, 16], strides = [1, 1]} : vector<16x16xf32> to vector<8x16xf32>
    %54 = vector.extract_strided_slice %52 {offsets = [8, 0], sizes = [8, 16], strides = [1, 1]} : vector<16x16xf32> to vector<8x16xf32>
    %55 = tpu.concatenate %53, %54 in 1 : vector<8x16xf32>, vector<8x16xf32> -> vector<8x32xf32>
    %c8_45 = arith.constant 8 : index
    %c0_46 = arith.constant 0 : index
    %56 = vector.load %arg19[%c8_45, %c0_46] : memref<24x32xf32, #tpu.memory_space<vmem>>, vector<8x32xf32>
    tpu.vector_store %arg19[%c8_45, %c0_46], %55 {strides = array<i32>} : memref<24x32xf32, #tpu.memory_space<vmem>>, vector<8x32xf32>,
    %c3 = arith.constant 3 : index
    %c0_47 = arith.constant 0 : index
    %57 = vector.load %arg19[%c3, %c0_47] : memref<24x32xf32, #tpu.memory_space<vmem>>, vector<8x32xf32>
    %c4 = arith.constant 4 : index
    %c0_48 = arith.constant 0 : index
    %58 = vector.load %arg19[%c4, %c0_48] : memref<24x32xf32, #tpu.memory_space<vmem>>, vector<8x32xf32>
    %c5 = arith.constant 5 : index
    %c0_49 = arith.constant 0 : index
    %59 = vector.load %arg19[%c5, %c0_49] : memref<24x32xf32, #tpu.memory_space<vmem>>, vector<8x32xf32>
    %c6 = arith.constant 6 : index
    %c0_50 = arith.constant 0 : index
    %60 = vector.load %arg19[%c6, %c0_50] : memref<24x32xf32, #tpu.memory_space<vmem>>, vector<8x32xf32>
    %c7_51 = arith.constant 7 : index
    %c0_52 = arith.constant 0 : index
    %61 = vector.load %arg19[%c7_51, %c0_52] : memref<24x32xf32, #tpu.memory_space<vmem>>, vector<8x32xf32>
    %c8_53 = arith.constant 8 : index
    %c0_54 = arith.constant 0 : index
    %62 = vector.load %arg19[%c8_53, %c0_54] : memref<24x32xf32, #tpu.memory_space<vmem>>, vector<8x32xf32>
    %c9_55 = arith.constant 9 : index
    %c0_56 = arith.constant 0 : index
    %63 = vector.load %arg19[%c9_55, %c0_56] : memref<24x32xf32, #tpu.memory_space<vmem>>, vector<8x32xf32>
    %c10 = arith.constant 10 : index
    %c0_57 = arith.constant 0 : index
    %64 = vector.load %arg19[%c10, %c0_57] : memref<24x32xf32, #tpu.memory_space<vmem>>, vector<8x32xf32>
    %c11 = arith.constant 11 : index
    %c0_58 = arith.constant 0 : index
    %65 = vector.load %arg19[%c11, %c0_58] : memref<24x32xf32, #tpu.memory_space<vmem>>, vector<8x32xf32>
    %c12 = arith.constant 12 : index
    %c0_59 = arith.constant 0 : index
    %66 = vector.load %arg19[%c12, %c0_59] : memref<24x32xf32, #tpu.memory_space<vmem>>, vector<8x32xf32>
    %c13 = arith.constant 13 : index
    %c0_60 = arith.constant 0 : index
    %67 = vector.load %arg19[%c13, %c0_60] : memref<24x32xf32, #tpu.memory_space<vmem>>, vector<8x32xf32>
    %68 = tpu.concatenate %57, %58, %59, %60, %61, %62, %63, %64, %65, %66, %67 in 1 : vector<8x32xf32>, vector<8x32xf32>, vector<8x32xf32>, vector<8x32xf32>, vector<8x32xf32>, vector<8x32xf32>, vector<8x32xf32>, vector<8x32xf32>, vector<8x32xf32>, vector<8x32xf32>, vector<8x32xf32> -> vector<8x352xf32>
    %69 = arith.truncf %68 : vector<8x352xf32> to vector<8x352xbf16>
    %c0_61 = arith.constant 0 : index
    %c0_62 = arith.constant 0 : index
    %c0_63 = arith.constant 0 : index
    %70 = vector.load %arg7[%c0_61, %c0_62, %c0_63] : memref<2x352x128xbf16, #tpu.memory_space<vmem>>, vector<1x352x128xbf16>
    %71 = vector.shape_cast %70 : vector<1x352x128xbf16> to vector<352x128xbf16>
    %cst_64 = arith.constant dense<0.000000e+00> : vector<8x128xf32>
    %72 = tpu.matmul %69, %71, %cst_64 {dimension_numbers = #tpu.dot_dimension_numbers<[1], [0], [0], [1], [0, 0, 1, 1], [], []>} : vector<8x352xbf16>, vector<352x128xbf16>, vector<8x128xf32> -> vector<8x128xf32>
    %c0_65 = arith.constant 0 : index
    %c0_66 = arith.constant 0 : index
    %c0_67 = arith.constant 0 : index
    %73 = vector.load %arg8[%c0_65, %c0_66, %c0_67] : memref<2x1x128xf32, #tpu.memory_space<vmem>>, vector<1x1x128xf32>
    %74 = vector.shape_cast %73 : vector<1x1x128xf32> to vector<1x128xf32>
    %75 = vector.broadcast %74 : vector<1x128xf32> to vector<8x128xf32>
    %76 = arith.addf %72, %75 : vector<8x128xf32>
    %cst_68 = arith.constant 5.000000e-01 : f32
    %77 = vector.broadcast %cst_68 : f32 to vector<8x128xf32>
    %78 = arith.mulf %77, %76 : vector<8x128xf32>
    %cst_69 = arith.constant 0.707106769 : f32
    %79 = vector.broadcast %cst_69 : f32 to vector<8x128xf32>
    %80 = arith.mulf %76, %79 : vector<8x128xf32>
    %81 = math.absf %80 : vector<8x128xf32>
    %cst_70 = arith.constant 0.327591091 : f32
    %82 = vector.broadcast %cst_70 : f32 to vector<8x128xf32>
    %83 = arith.mulf %82, %81 : vector<8x128xf32>
    %cst_71 = arith.constant 1.000000e+00 : f32
    %84 = vector.broadcast %cst_71 : f32 to vector<8x128xf32>
    %85 = arith.addf %84, %83 : vector<8x128xf32>
    %cst_72 = arith.constant 1.000000e+00 : f32
    %86 = vector.broadcast %cst_72 : f32 to vector<8x128xf32>
    %87 = arith.divf %86, %85 : vector<8x128xf32>
    %cst_73 = arith.constant 1.06140542 : f32
    %88 = vector.broadcast %cst_73 : f32 to vector<8x128xf32>
    %89 = arith.mulf %88, %87 : vector<8x128xf32>
    %cst_74 = arith.constant -1.45315206 : f32
    %90 = vector.broadcast %cst_74 : f32 to vector<8x128xf32>
    %91 = arith.addf %89, %90 : vector<8x128xf32>
    %92 = arith.mulf %91, %87 : vector<8x128xf32>
    %cst_75 = arith.constant 1.42141378 : f32
    %93 = vector.broadcast %cst_75 : f32 to vector<8x128xf32>
    %94 = arith.addf %92, %93 : vector<8x128xf32>
    %95 = arith.mulf %94, %87 : vector<8x128xf32>
    %cst_76 = arith.constant -0.284496725 : f32
    %96 = vector.broadcast %cst_76 : f32 to vector<8x128xf32>
    %97 = arith.addf %95, %96 : vector<8x128xf32>
    %98 = arith.mulf %97, %87 : vector<8x128xf32>
    %cst_77 = arith.constant 0.254829586 : f32
    %99 = vector.broadcast %cst_77 : f32 to vector<8x128xf32>
    %100 = arith.addf %98, %99 : vector<8x128xf32>
    %101 = arith.mulf %100, %87 : vector<8x128xf32>
    %cst_78 = arith.constant 0.000000e+00 : f32
    %102 = vector.broadcast %cst_78 : f32 to vector<8x128xf32>
    %103 = arith.subf %102, %81 : vector<8x128xf32>
    %104 = arith.mulf %103, %81 : vector<8x128xf32>
    %105 = math.exp %104 : vector<8x128xf32>
    %106 = arith.mulf %101, %105 : vector<8x128xf32>
    %cst_79 = arith.constant 1.000000e+00 : f32
    %107 = vector.broadcast %cst_79 : f32 to vector<8x128xf32>
    %108 = arith.subf %107, %106 : vector<8x128xf32>
    %cst_80 = arith.constant 0.000000e+00 : f32
    %109 = vector.broadcast %cst_80 : f32 to vector<8x128xf32>
    %110 = arith.cmpf oge, %80, %109 : vector<8x128xf32>
    %cst_81 = arith.constant 0.000000e+00 : f32
    %111 = vector.broadcast %cst_81 : f32 to vector<8x128xf32>
    %112 = arith.subf %111, %108 : vector<8x128xf32>
    %113 = arith.select %110, %108, %112 : vector<8x128xi1>, vector<8x128xf32>
    %cst_82 = arith.constant 1.000000e+00 : f32
    %114 = vector.broadcast %cst_82 : f32 to vector<8x128xf32>
    %115 = arith.addf %114, %113 : vector<8x128xf32>
    %116 = arith.mulf %78, %115 : vector<8x128xf32>
    %c8_83 = arith.constant 8 : index
    %c0_84 = arith.constant 0 : index
    %117 = vector.load %arg20[%c8_83, %c0_84] : memref<24x128xf32, #tpu.memory_space<vmem>>, vector<8x128xf32>
    tpu.vector_store %arg20[%c8_83, %c0_84], %116 {strides = array<i32>} : memref<24x128xf32, #tpu.memory_space<vmem>>, vector<8x128xf32>,
    %c3_85 = arith.constant 3 : index
    %c0_86 = arith.constant 0 : index
    %118 = vector.load %arg20[%c3_85, %c0_86] : memref<24x128xf32, #tpu.memory_space<vmem>>, vector<8x128xf32>
    %c4_87 = arith.constant 4 : index
    %c0_88 = arith.constant 0 : index
    %119 = vector.load %arg20[%c4_87, %c0_88] : memref<24x128xf32, #tpu.memory_space<vmem>>, vector<8x128xf32>
    %c5_89 = arith.constant 5 : index
    %c0_90 = arith.constant 0 : index
    %120 = vector.load %arg20[%c5_89, %c0_90] : memref<24x128xf32, #tpu.memory_space<vmem>>, vector<8x128xf32>
    %c6_91 = arith.constant 6 : index
    %c0_92 = arith.constant 0 : index
    %121 = vector.load %arg20[%c6_91, %c0_92] : memref<24x128xf32, #tpu.memory_space<vmem>>, vector<8x128xf32>
    %c7_93 = arith.constant 7 : index
    %c0_94 = arith.constant 0 : index
    %122 = vector.load %arg20[%c7_93, %c0_94] : memref<24x128xf32, #tpu.memory_space<vmem>>, vector<8x128xf32>
    %c8_95 = arith.constant 8 : index
    %c0_96 = arith.constant 0 : index
    %123 = vector.load %arg20[%c8_95, %c0_96] : memref<24x128xf32, #tpu.memory_space<vmem>>, vector<8x128xf32>
    %c9_97 = arith.constant 9 : index
    %c0_98 = arith.constant 0 : index
    %124 = vector.load %arg20[%c9_97, %c0_98] : memref<24x128xf32, #tpu.memory_space<vmem>>, vector<8x128xf32>
    %c10_99 = arith.constant 10 : index
    %c0_100 = arith.constant 0 : index
    %125 = vector.load %arg20[%c10_99, %c0_100] : memref<24x128xf32, #tpu.memory_space<vmem>>, vector<8x128xf32>
    %c11_101 = arith.constant 11 : index
    %c0_102 = arith.constant 0 : index
    %126 = vector.load %arg20[%c11_101, %c0_102] : memref<24x128xf32, #tpu.memory_space<vmem>>, vector<8x128xf32>
    %c12_103 = arith.constant 12 : index
    %c0_104 = arith.constant 0 : index
    %127 = vector.load %arg20[%c12_103, %c0_104] : memref<24x128xf32, #tpu.memory_space<vmem>>, vector<8x128xf32>
    %c13_105 = arith.constant 13 : index
    %c0_106 = arith.constant 0 : index
    %128 = vector.load %arg20[%c13_105, %c0_106] : memref<24x128xf32, #tpu.memory_space<vmem>>, vector<8x128xf32>
    %129 = tpu.concatenate %118, %119, %120, %121, %122, %123, %124, %125, %126, %127, %128 in 1 : vector<8x128xf32>, vector<8x128xf32>, vector<8x128xf32>, vector<8x128xf32>, vector<8x128xf32>, vector<8x128xf32>, vector<8x128xf32>, vector<8x128xf32>, vector<8x128xf32>, vector<8x128xf32>, vector<8x128xf32> -> vector<8x1408xf32>
    %130 = arith.truncf %129 : vector<8x1408xf32> to vector<8x1408xbf16>
    %c0_107 = arith.constant 0 : index
    %c0_108 = arith.constant 0 : index
    %c0_109 = arith.constant 0 : index
    %131 = vector.load %arg9[%c0_107, %c0_108, %c0_109] : memref<2x1408x32xbf16, #tpu.memory_space<vmem>>, vector<1x1408x32xbf16>
    %132 = vector.shape_cast %131 : vector<1x1408x32xbf16> to vector<1408x32xbf16>
    %cst_110 = arith.constant dense<0.000000e+00> : vector<8x32xf32>
    %133 = tpu.matmul %130, %132, %cst_110 {dimension_numbers = #tpu.dot_dimension_numbers<[1], [0], [0], [1], [0, 0, 1, 1], [], []>} : vector<8x1408xbf16>, vector<1408x32xbf16>, vector<8x32xf32> -> vector<8x32xf32>
    %c0_111 = arith.constant 0 : index
    %c0_112 = arith.constant 0 : index
    %c0_113 = arith.constant 0 : index
    %134 = vector.load %arg10[%c0_111, %c0_112, %c0_113] : memref<2x1x32xf32, #tpu.memory_space<vmem>>, vector<1x1x32xf32>
    %135 = vector.shape_cast %134 : vector<1x1x32xf32> to vector<1x32xf32>
    %136 = vector.broadcast %135 : vector<1x32xf32> to vector<8x32xf32>
    %137 = arith.addf %133, %136 : vector<8x32xf32>
    %138 = vector.extract_strided_slice %137 {offsets = [0, 0], sizes = [8, 16], strides = [1, 1]} : vector<8x32xf32> to vector<8x16xf32>
    %139 = vector.extract_strided_slice %50 {offsets = [0, 0], sizes = [8, 16], strides = [1, 1]} : vector<16x16xf32> to vector<8x16xf32>
    %140 = arith.addf %138, %139 : vector<8x16xf32>
    %141 = vector.extract_strided_slice %137 {offsets = [0, 16], sizes = [8, 16], strides = [1, 1]} : vector<8x32xf32> to vector<8x16xf32>
    %142 = vector.extract_strided_slice %50 {offsets = [8, 0], sizes = [8, 16], strides = [1, 1]} : vector<16x16xf32> to vector<8x16xf32>
    %143 = arith.addf %141, %142 : vector<8x16xf32>
    %144 = tpu.concatenate %140, %143 in 0 : vector<8x16xf32>, vector<8x16xf32> -> vector<16x16xf32>
    %cst_114 = arith.constant dense<0.000000e+00> : vector<16xf32>
    %145 = vector.multi_reduction <add>, %144, %cst_114 [1] : vector<16x16xf32> to vector<16xf32>
    %146 = vector.shape_cast %145 : vector<16xf32> to vector<16x1xf32>
    %cst_115 = arith.constant 1.600000e+01 : f32
    %147 = vector.broadcast %cst_115 : f32 to vector<16x1xf32>
    %148 = arith.divf %146, %147 : vector<16x1xf32>
    %149 = vector.broadcast %148 : vector<16x1xf32> to vector<16x16xf32>
    %150 = arith.subf %144, %149 : vector<16x16xf32>
    %151 = vector.broadcast %148 : vector<16x1xf32> to vector<16x16xf32>
    %152 = arith.subf %144, %151 : vector<16x16xf32>
    %153 = arith.mulf %150, %152 : vector<16x16xf32>
    %cst_116 = arith.constant dense<0.000000e+00> : vector<16xf32>
    %154 = vector.multi_reduction <add>, %153, %cst_116 [1] : vector<16x16xf32> to vector<16xf32>
    %155 = vector.shape_cast %154 : vector<16xf32> to vector<16x1xf32>
    %cst_117 = arith.constant 1.600000e+01 : f32
    %156 = vector.broadcast %cst_117 : f32 to vector<16x1xf32>
    %157 = arith.divf %155, %156 : vector<16x1xf32>
    %158 = vector.broadcast %148 : vector<16x1xf32> to vector<16x16xf32>
    %159 = arith.subf %144, %158 : vector<16x16xf32>
    %cst_118 = arith.constant 9.99999974E-6 : f32
    %160 = vector.broadcast %cst_118 : f32 to vector<16x1xf32>
    %161 = arith.addf %157, %160 : vector<16x1xf32>
    %162 = math.rsqrt %161 : vector<16x1xf32>
    %163 = vector.broadcast %162 : vector<16x1xf32> to vector<16x16xf32>
    %164 = arith.mulf %159, %163 : vector<16x16xf32>
    %165 = vector.broadcast %5 : vector<1x16xf32> to vector<16x16xf32>
    %166 = arith.mulf %164, %165 : vector<16x16xf32>
    %167 = vector.broadcast %6 : vector<1x16xf32> to vector<16x16xf32>
    %168 = arith.addf %166, %167 : vector<16x16xf32>
    %169 = arith.truncf %168 : vector<16x16xf32> to vector<16x16xbf16>
    %cst_119 = arith.constant dense<0.000000e+00> : vector<16x16xf32>
    %170 = tpu.matmul %4, %169, %cst_119 {dimension_numbers = #tpu.dot_dimension_numbers<[1], [0], [0], [1], [0, 0, 1, 1], [], []>} : vector<16x16xbf16>, vector<16x16xbf16>, vector<16x16xf32> -> vector<16x16xf32>
    %171 = vector.extract_strided_slice %170 {offsets = [0, 0], sizes = [8, 16], strides = [1, 1]} : vector<16x16xf32> to vector<8x16xf32>
    %172 = vector.extract_strided_slice %170 {offsets = [8, 0], sizes = [8, 16], strides = [1, 1]} : vector<16x16xf32> to vector<8x16xf32>
    %173 = tpu.concatenate %171, %172 in 1 : vector<8x16xf32>, vector<8x16xf32> -> vector<8x32xf32>
    %c8_120 = arith.constant 8 : index
    %c0_121 = arith.constant 0 : index
    %174 = vector.load %arg19[%c8_120, %c0_121] : memref<24x32xf32, #tpu.memory_space<vmem>>, vector<8x32xf32>
    tpu.vector_store %arg19[%c8_120, %c0_121], %173 {strides = array<i32>} : memref<24x32xf32, #tpu.memory_space<vmem>>, vector<8x32xf32>,
    %c3_122 = arith.constant 3 : index
    %c0_123 = arith.constant 0 : index
    %175 = vector.load %arg19[%c3_122, %c0_123] : memref<24x32xf32, #tpu.memory_space<vmem>>, vector<8x32xf32>
    %c4_124 = arith.constant 4 : index
    %c0_125 = arith.constant 0 : index
    %176 = vector.load %arg19[%c4_124, %c0_125] : memref<24x32xf32, #tpu.memory_space<vmem>>, vector<8x32xf32>
    %c5_126 = arith.constant 5 : index
    %c0_127 = arith.constant 0 : index
    %177 = vector.load %arg19[%c5_126, %c0_127] : memref<24x32xf32, #tpu.memory_space<vmem>>, vector<8x32xf32>
    %c6_128 = arith.constant 6 : index
    %c0_129 = arith.constant 0 : index
    %178 = vector.load %arg19[%c6_128, %c0_129] : memref<24x32xf32, #tpu.memory_space<vmem>>, vector<8x32xf32>
    %c7_130 = arith.constant 7 : index
    %c0_131 = arith.constant 0 : index
    %179 = vector.load %arg19[%c7_130, %c0_131] : memref<24x32xf32, #tpu.memory_space<vmem>>, vector<8x32xf32>
    %c8_132 = arith.constant 8 : index
    %c0_133 = arith.constant 0 : index
    %180 = vector.load %arg19[%c8_132, %c0_133] : memref<24x32xf32, #tpu.memory_space<vmem>>, vector<8x32xf32>
    %c9_134 = arith.constant 9 : index
    %c0_135 = arith.constant 0 : index
    %181 = vector.load %arg19[%c9_134, %c0_135] : memref<24x32xf32, #tpu.memory_space<vmem>>, vector<8x32xf32>
    %c10_136 = arith.constant 10 : index
    %c0_137 = arith.constant 0 : index
    %182 = vector.load %arg19[%c10_136, %c0_137] : memref<24x32xf32, #tpu.memory_space<vmem>>, vector<8x32xf32>
    %c11_138 = arith.constant 11 : index
    %c0_139 = arith.constant 0 : index
    %183 = vector.load %arg19[%c11_138, %c0_139] : memref<24x32xf32, #tpu.memory_space<vmem>>, vector<8x32xf32>
    %c12_140 = arith.constant 12 : index
    %c0_141 = arith.constant 0 : index
    %184 = vector.load %arg19[%c12_140, %c0_141] : memref<24x32xf32, #tpu.memory_space<vmem>>, vector<8x32xf32>
    %c13_142 = arith.constant 13 : index
    %c0_143 = arith.constant 0 : index
    %185 = vector.load %arg19[%c13_142, %c0_143] : memref<24x32xf32, #tpu.memory_space<vmem>>, vector<8x32xf32>
    %186 = tpu.concatenate %175, %176, %177, %178, %179, %180, %181, %182, %183, %184, %185 in 1 : vector<8x32xf32>, vector<8x32xf32>, vector<8x32xf32>, vector<8x32xf32>, vector<8x32xf32>, vector<8x32xf32>, vector<8x32xf32>, vector<8x32xf32>, vector<8x32xf32>, vector<8x32xf32>, vector<8x32xf32> -> vector<8x352xf32>
    %187 = arith.truncf %186 : vector<8x352xf32> to vector<8x352xbf16>
    %c1 = arith.constant 1 : index
    %c0_144 = arith.constant 0 : index
    %c0_145 = arith.constant 0 : index
    %188 = vector.load %arg7[%c1, %c0_144, %c0_145] : memref<2x352x128xbf16, #tpu.memory_space<vmem>>, vector<1x352x128xbf16>
    %189 = vector.shape_cast %188 : vector<1x352x128xbf16> to vector<352x128xbf16>
    %cst_146 = arith.constant dense<0.000000e+00> : vector<8x128xf32>
    %190 = tpu.matmul %187, %189, %cst_146 {dimension_numbers = #tpu.dot_dimension_numbers<[1], [0], [0], [1], [0, 0, 1, 1], [], []>} : vector<8x352xbf16>, vector<352x128xbf16>, vector<8x128xf32> -> vector<8x128xf32>
    %c1_147 = arith.constant 1 : index
    %c0_148 = arith.constant 0 : index
    %c0_149 = arith.constant 0 : index
    %191 = vector.load %arg8[%c1_147, %c0_148, %c0_149] : memref<2x1x128xf32, #tpu.memory_space<vmem>>, vector<1x1x128xf32>
    %192 = vector.shape_cast %191 : vector<1x1x128xf32> to vector<1x128xf32>
    %193 = vector.broadcast %192 : vector<1x128xf32> to vector<8x128xf32>
    %194 = arith.addf %190, %193 : vector<8x128xf32>
    %cst_150 = arith.constant 5.000000e-01 : f32
    %195 = vector.broadcast %cst_150 : f32 to vector<8x128xf32>
    %196 = arith.mulf %195, %194 : vector<8x128xf32>
    %cst_151 = arith.constant 0.707106769 : f32
    %197 = vector.broadcast %cst_151 : f32 to vector<8x128xf32>
    %198 = arith.mulf %194, %197 : vector<8x128xf32>
    %199 = math.absf %198 : vector<8x128xf32>
    %cst_152 = arith.constant 0.327591091 : f32
    %200 = vector.broadcast %cst_152 : f32 to vector<8x128xf32>
    %201 = arith.mulf %200, %199 : vector<8x128xf32>
    %cst_153 = arith.constant 1.000000e+00 : f32
    %202 = vector.broadcast %cst_153 : f32 to vector<8x128xf32>
    %203 = arith.addf %202, %201 : vector<8x128xf32>
    %cst_154 = arith.constant 1.000000e+00 : f32
    %204 = vector.broadcast %cst_154 : f32 to vector<8x128xf32>
    %205 = arith.divf %204, %203 : vector<8x128xf32>
    %cst_155 = arith.constant 1.06140542 : f32
    %206 = vector.broadcast %cst_155 : f32 to vector<8x128xf32>
    %207 = arith.mulf %206, %205 : vector<8x128xf32>
    %cst_156 = arith.constant -1.45315206 : f32
    %208 = vector.broadcast %cst_156 : f32 to vector<8x128xf32>
    %209 = arith.addf %207, %208 : vector<8x128xf32>
    %210 = arith.mulf %209, %205 : vector<8x128xf32>
    %cst_157 = arith.constant 1.42141378 : f32
    %211 = vector.broadcast %cst_157 : f32 to vector<8x128xf32>
    %212 = arith.addf %210, %211 : vector<8x128xf32>
    %213 = arith.mulf %212, %205 : vector<8x128xf32>
    %cst_158 = arith.constant -0.284496725 : f32
    %214 = vector.broadcast %cst_158 : f32 to vector<8x128xf32>
    %215 = arith.addf %213, %214 : vector<8x128xf32>
    %216 = arith.mulf %215, %205 : vector<8x128xf32>
    %cst_159 = arith.constant 0.254829586 : f32
    %217 = vector.broadcast %cst_159 : f32 to vector<8x128xf32>
    %218 = arith.addf %216, %217 : vector<8x128xf32>
    %219 = arith.mulf %218, %205 : vector<8x128xf32>
    %cst_160 = arith.constant 0.000000e+00 : f32
    %220 = vector.broadcast %cst_160 : f32 to vector<8x128xf32>
    %221 = arith.subf %220, %199 : vector<8x128xf32>
    %222 = arith.mulf %221, %199 : vector<8x128xf32>
    %223 = math.exp %222 : vector<8x128xf32>
    %224 = arith.mulf %219, %223 : vector<8x128xf32>
    %cst_161 = arith.constant 1.000000e+00 : f32
    %225 = vector.broadcast %cst_161 : f32 to vector<8x128xf32>
    %226 = arith.subf %225, %224 : vector<8x128xf32>
    %cst_162 = arith.constant 0.000000e+00 : f32
    %227 = vector.broadcast %cst_162 : f32 to vector<8x128xf32>
    %228 = arith.cmpf oge, %198, %227 : vector<8x128xf32>
    %cst_163 = arith.constant 0.000000e+00 : f32
    %229 = vector.broadcast %cst_163 : f32 to vector<8x128xf32>
    %230 = arith.subf %229, %226 : vector<8x128xf32>
    %231 = arith.select %228, %226, %230 : vector<8x128xi1>, vector<8x128xf32>
    %cst_164 = arith.constant 1.000000e+00 : f32
    %232 = vector.broadcast %cst_164 : f32 to vector<8x128xf32>
    %233 = arith.addf %232, %231 : vector<8x128xf32>
    %234 = arith.mulf %196, %233 : vector<8x128xf32>
    %c8_165 = arith.constant 8 : index
    %c0_166 = arith.constant 0 : index
    %235 = vector.load %arg20[%c8_165, %c0_166] : memref<24x128xf32, #tpu.memory_space<vmem>>, vector<8x128xf32>
    tpu.vector_store %arg20[%c8_165, %c0_166], %234 {strides = array<i32>} : memref<24x128xf32, #tpu.memory_space<vmem>>, vector<8x128xf32>,
    %c3_167 = arith.constant 3 : index
    %c0_168 = arith.constant 0 : index
    %236 = vector.load %arg20[%c3_167, %c0_168] : memref<24x128xf32, #tpu.memory_space<vmem>>, vector<8x128xf32>
    %c4_169 = arith.constant 4 : index
    %c0_170 = arith.constant 0 : index
    %237 = vector.load %arg20[%c4_169, %c0_170] : memref<24x128xf32, #tpu.memory_space<vmem>>, vector<8x128xf32>
    %c5_171 = arith.constant 5 : index
    %c0_172 = arith.constant 0 : index
    %238 = vector.load %arg20[%c5_171, %c0_172] : memref<24x128xf32, #tpu.memory_space<vmem>>, vector<8x128xf32>
    %c6_173 = arith.constant 6 : index
    %c0_174 = arith.constant 0 : index
    %239 = vector.load %arg20[%c6_173, %c0_174] : memref<24x128xf32, #tpu.memory_space<vmem>>, vector<8x128xf32>
    %c7_175 = arith.constant 7 : index
    %c0_176 = arith.constant 0 : index
    %240 = vector.load %arg20[%c7_175, %c0_176] : memref<24x128xf32, #tpu.memory_space<vmem>>, vector<8x128xf32>
    %c8_177 = arith.constant 8 : index
    %c0_178 = arith.constant 0 : index
    %241 = vector.load %arg20[%c8_177, %c0_178] : memref<24x128xf32, #tpu.memory_space<vmem>>, vector<8x128xf32>
    %c9_179 = arith.constant 9 : index
    %c0_180 = arith.constant 0 : index
    %242 = vector.load %arg20[%c9_179, %c0_180] : memref<24x128xf32, #tpu.memory_space<vmem>>, vector<8x128xf32>
    %c10_181 = arith.constant 10 : index
    %c0_182 = arith.constant 0 : index
    %243 = vector.load %arg20[%c10_181, %c0_182] : memref<24x128xf32, #tpu.memory_space<vmem>>, vector<8x128xf32>
    %c11_183 = arith.constant 11 : index
    %c0_184 = arith.constant 0 : index
    %244 = vector.load %arg20[%c11_183, %c0_184] : memref<24x128xf32, #tpu.memory_space<vmem>>, vector<8x128xf32>
    %c12_185 = arith.constant 12 : index
    %c0_186 = arith.constant 0 : index
    %245 = vector.load %arg20[%c12_185, %c0_186] : memref<24x128xf32, #tpu.memory_space<vmem>>, vector<8x128xf32>
    %c13_187 = arith.constant 13 : index
    %c0_188 = arith.constant 0 : index
    %246 = vector.load %arg20[%c13_187, %c0_188] : memref<24x128xf32, #tpu.memory_space<vmem>>, vector<8x128xf32>
    %247 = tpu.concatenate %236, %237, %238, %239, %240, %241, %242, %243, %244, %245, %246 in 1 : vector<8x128xf32>, vector<8x128xf32>, vector<8x128xf32>, vector<8x128xf32>, vector<8x128xf32>, vector<8x128xf32>, vector<8x128xf32>, vector<8x128xf32>, vector<8x128xf32>, vector<8x128xf32>, vector<8x128xf32> -> vector<8x1408xf32>
    %248 = arith.truncf %247 : vector<8x1408xf32> to vector<8x1408xbf16>
    %c1_189 = arith.constant 1 : index
    %c0_190 = arith.constant 0 : index
    %c0_191 = arith.constant 0 : index
    %249 = vector.load %arg9[%c1_189, %c0_190, %c0_191] : memref<2x1408x32xbf16, #tpu.memory_space<vmem>>, vector<1x1408x32xbf16>
    %250 = vector.shape_cast %249 : vector<1x1408x32xbf16> to vector<1408x32xbf16>
    %cst_192 = arith.constant dense<0.000000e+00> : vector<8x32xf32>
    %251 = tpu.matmul %248, %250, %cst_192 {dimension_numbers = #tpu.dot_dimension_numbers<[1], [0], [0], [1], [0, 0, 1, 1], [], []>} : vector<8x1408xbf16>, vector<1408x32xbf16>, vector<8x32xf32> -> vector<8x32xf32>
    %c1_193 = arith.constant 1 : index
    %c0_194 = arith.constant 0 : index
    %c0_195 = arith.constant 0 : index
    %252 = vector.load %arg10[%c1_193, %c0_194, %c0_195] : memref<2x1x32xf32, #tpu.memory_space<vmem>>, vector<1x1x32xf32>
    %253 = vector.shape_cast %252 : vector<1x1x32xf32> to vector<1x32xf32>
    %254 = vector.broadcast %253 : vector<1x32xf32> to vector<8x32xf32>
    %255 = arith.addf %251, %254 : vector<8x32xf32>
    %256 = vector.extract_strided_slice %255 {offsets = [0, 0], sizes = [8, 16], strides = [1, 1]} : vector<8x32xf32> to vector<8x16xf32>
    %257 = vector.extract_strided_slice %168 {offsets = [0, 0], sizes = [8, 16], strides = [1, 1]} : vector<16x16xf32> to vector<8x16xf32>
    %258 = arith.addf %256, %257 : vector<8x16xf32>
    %259 = vector.extract_strided_slice %255 {offsets = [0, 16], sizes = [8, 16], strides = [1, 1]} : vector<8x32xf32> to vector<8x16xf32>
    %260 = vector.extract_strided_slice %168 {offsets = [8, 0], sizes = [8, 16], strides = [1, 1]} : vector<16x16xf32> to vector<8x16xf32>
    %261 = arith.addf %259, %260 : vector<8x16xf32>
    %262 = tpu.concatenate %258, %261 in 0 : vector<8x16xf32>, vector<8x16xf32> -> vector<16x16xf32>
    %cst_196 = arith.constant dense<0.000000e+00> : vector<16xf32>
    %263 = vector.multi_reduction <add>, %262, %cst_196 [1] : vector<16x16xf32> to vector<16xf32>
    %264 = vector.shape_cast %263 : vector<16xf32> to vector<16x1xf32>
    %cst_197 = arith.constant 1.600000e+01 : f32
    %265 = vector.broadcast %cst_197 : f32 to vector<16x1xf32>
    %266 = arith.divf %264, %265 : vector<16x1xf32>
    %267 = vector.broadcast %266 : vector<16x1xf32> to vector<16x16xf32>
    %268 = arith.subf %262, %267 : vector<16x16xf32>
    %269 = vector.broadcast %266 : vector<16x1xf32> to vector<16x16xf32>
    %270 = arith.subf %262, %269 : vector<16x16xf32>
    %271 = arith.mulf %268, %270 : vector<16x16xf32>
    %cst_198 = arith.constant dense<0.000000e+00> : vector<16xf32>
    %272 = vector.multi_reduction <add>, %271, %cst_198 [1] : vector<16x16xf32> to vector<16xf32>
    %273 = vector.shape_cast %272 : vector<16xf32> to vector<16x1xf32>
    %cst_199 = arith.constant 1.600000e+01 : f32
    %274 = vector.broadcast %cst_199 : f32 to vector<16x1xf32>
    %275 = arith.divf %273, %274 : vector<16x1xf32>
    %276 = vector.broadcast %266 : vector<16x1xf32> to vector<16x16xf32>
    %277 = arith.subf %262, %276 : vector<16x16xf32>
    %cst_200 = arith.constant 9.99999974E-6 : f32
    %278 = vector.broadcast %cst_200 : f32 to vector<16x1xf32>
    %279 = arith.addf %275, %278 : vector<16x1xf32>
    %280 = math.rsqrt %279 : vector<16x1xf32>
    %281 = vector.broadcast %280 : vector<16x1xf32> to vector<16x16xf32>
    %282 = arith.mulf %277, %281 : vector<16x16xf32>
    %283 = vector.broadcast %5 : vector<1x16xf32> to vector<16x16xf32>
    %284 = arith.mulf %282, %283 : vector<16x16xf32>
    %285 = vector.broadcast %6 : vector<1x16xf32> to vector<16x16xf32>
    %286 = arith.addf %284, %285 : vector<16x16xf32>
    %287 = arith.truncf %286 : vector<16x16xf32> to vector<16x16xbf16>
    %cst_201 = arith.constant dense<0.000000e+00> : vector<16x4xf32>
    %288 = tpu.matmul %287, %7, %cst_201 {dimension_numbers = #tpu.dot_dimension_numbers<[1], [0], [0], [1], [0, 0, 1, 1], [], []>} : vector<16x16xbf16>, vector<16x4xbf16>, vector<16x4xf32> -> vector<16x4xf32>
    %289 = vector.broadcast %8 : vector<1x4xf32> to vector<16x4xf32>
    %290 = arith.addf %288, %289 : vector<16x4xf32>
    %291 = arith.truncf %290 : vector<16x4xf32> to vector<16x4xbf16>
    %cst_202 = arith.constant dense<0.000000e+00> : vector<8x4xf32>
    %292 = tpu.matmul %9, %291, %cst_202 {dimension_numbers = #tpu.dot_dimension_numbers<[1], [0], [0], [1], [0, 0, 1, 1], [], []>} : vector<8x16xbf16>, vector<16x4xbf16>, vector<8x4xf32> -> vector<8x4xf32>
    %293 = vector.broadcast %10 : vector<8x1xf32> to vector<8x4xf32>
    %294 = arith.addf %292, %293 : vector<8x4xf32>
    %c0_203 = arith.constant 0 : index
    %c0_204 = arith.constant 0 : index
    %c0_205 = arith.constant 0 : index
    %295 = vector.load %arg17[%c0_203, %c0_204, %c0_205] : memref<2x8x4xf32, #tpu.memory_space<vmem>>, vector<1x8x4xf32>
    %296 = vector.shape_cast %295 : vector<1x8x4xf32> to vector<8x4xf32>
    %297 = vector.shape_cast %294 : vector<8x4xf32> to vector<1x8x4xf32>
    tpu.vector_store %arg17[%c0_203, %c0_204, %c0_205], %297 {strides = array<i32>} : memref<2x8x4xf32, #tpu.memory_space<vmem>>, vector<1x8x4xf32>,
    %c1_206 = arith.constant 1 : index
    %c0_207 = arith.constant 0 : index
    %c0_208 = arith.constant 0 : index
    %298 = vector.load %arg1[%c1_206, %c0_207, %c0_208] : memref<2x8x4xf32, #tpu.memory_space<vmem>>, vector<1x8x4xf32>
    %299 = vector.shape_cast %298 : vector<1x8x4xf32> to vector<8x4xf32>
    %cst_209 = arith.constant dense<0.000000e+00> : vector<4xf32>
    %300 = vector.multi_reduction <add>, %299, %cst_209 [0] : vector<8x4xf32> to vector<4xf32>
    %301 = vector.shape_cast %300 : vector<4xf32> to vector<1x4xf32>
    %cst_210 = arith.constant 8.000000e+00 : f32
    %302 = vector.broadcast %cst_210 : f32 to vector<1x4xf32>
    %303 = arith.divf %301, %302 : vector<1x4xf32>
    %304 = vector.broadcast %303 : vector<1x4xf32> to vector<8x4xf32>
    %305 = arith.subf %299, %304 : vector<8x4xf32>
    %306 = vector.broadcast %303 : vector<1x4xf32> to vector<8x4xf32>
    %307 = arith.subf %299, %306 : vector<8x4xf32>
    %308 = arith.mulf %305, %307 : vector<8x4xf32>
    %cst_211 = arith.constant dense<0.000000e+00> : vector<4xf32>
    %309 = vector.multi_reduction <add>, %308, %cst_211 [0] : vector<8x4xf32> to vector<4xf32>
    %310 = vector.shape_cast %309 : vector<4xf32> to vector<1x4xf32>
    %cst_212 = arith.constant 8.000000e+00 : f32
    %311 = vector.broadcast %cst_212 : f32 to vector<1x4xf32>
    %312 = arith.divf %310, %311 : vector<1x4xf32>
    %313 = vector.broadcast %303 : vector<1x4xf32> to vector<8x4xf32>
    %314 = arith.subf %299, %313 : vector<8x4xf32>
    %cst_213 = arith.constant 9.99999974E-6 : f32
    %315 = vector.broadcast %cst_213 : f32 to vector<1x4xf32>
    %316 = arith.addf %312, %315 : vector<1x4xf32>
    %317 = math.rsqrt %316 : vector<1x4xf32>
    %318 = vector.broadcast %317 : vector<1x4xf32> to vector<8x4xf32>
    %319 = arith.mulf %314, %318 : vector<8x4xf32>
    %c0_214 = arith.constant 0 : index
    %c0_215 = arith.constant 0 : index
    %320 = vector.load %arg18[%c0_214, %c0_215] : memref<24x4xf32, #tpu.memory_space<vmem>>, vector<8x4xf32>
    tpu.vector_store %arg18[%c0_214, %c0_215], %319 {strides = array<i32>} : memref<24x4xf32, #tpu.memory_space<vmem>>, vector<8x4xf32>,
    %c8_216 = arith.constant 8 : index
    %c0_217 = arith.constant 0 : index
    %321 = vector.load %arg18[%c8_216, %c0_217] : memref<24x4xf32, #tpu.memory_space<vmem>>, vector<8x4xf32>
    tpu.vector_store %arg18[%c8_216, %c0_217], %319 {strides = array<i32>} : memref<24x4xf32, #tpu.memory_space<vmem>>, vector<8x4xf32>,
    %c16_218 = arith.constant 16 : index
    %c0_219 = arith.constant 0 : index
    %322 = vector.load %arg18[%c16_218, %c0_219] : memref<24x4xf32, #tpu.memory_space<vmem>>, vector<8x4xf32>
    tpu.vector_store %arg18[%c16_218, %c0_219], %319 {strides = array<i32>} : memref<24x4xf32, #tpu.memory_space<vmem>>, vector<8x4xf32>,
    %c7_220 = arith.constant 7 : index
    %c0_221 = arith.constant 0 : index
    %323 = vector.load %arg18[%c7_220, %c0_221] : memref<24x4xf32, #tpu.memory_space<vmem>>, vector<8x4xf32>
    %c8_222 = arith.constant 8 : index
    %c0_223 = arith.constant 0 : index
    %324 = vector.load %arg18[%c8_222, %c0_223] : memref<24x4xf32, #tpu.memory_space<vmem>>, vector<8x4xf32>
    %c9_224 = arith.constant 9 : index
    %c0_225 = arith.constant 0 : index
    %325 = vector.load %arg18[%c9_224, %c0_225] : memref<24x4xf32, #tpu.memory_space<vmem>>, vector<8x4xf32>
    %326 = tpu.concatenate %323, %324, %325 in 1 : vector<8x4xf32>, vector<8x4xf32>, vector<8x4xf32> -> vector<8x12xf32>
    %327 = arith.truncf %326 : vector<8x12xf32> to vector<8x12xbf16>
    %cst_226 = arith.constant dense<0.000000e+00> : vector<8x16xf32>
    %328 = tpu.matmul %327, %0, %cst_226 {dimension_numbers = #tpu.dot_dimension_numbers<[1], [0], [0], [1], [0, 0, 1, 1], [], []>} : vector<8x12xbf16>, vector<12x16xbf16>, vector<8x16xf32> -> vector<8x16xf32>
    %329 = arith.addf %328, %1 : vector<8x16xf32>
    %330 = arith.truncf %329 : vector<8x16xf32> to vector<8x16xbf16>
    %cst_227 = arith.constant dense<0.000000e+00> : vector<16x16xf32>
    %331 = tpu.matmul %2, %330, %cst_227 {dimension_numbers = #tpu.dot_dimension_numbers<[1], [0], [0], [1], [0, 0, 1, 1], [], []>} : vector<16x8xbf16>, vector<8x16xbf16>, vector<16x16xf32> -> vector<16x16xf32>
    %332 = vector.broadcast %3 : vector<16x1xf32> to vector<16x16xf32>
    %333 = arith.addf %331, %332 : vector<16x16xf32>
    %334 = arith.truncf %333 : vector<16x16xf32> to vector<16x16xbf16>
    %cst_228 = arith.constant dense<0.000000e+00> : vector<16x16xf32>
    %335 = tpu.matmul %4, %334, %cst_228 {dimension_numbers = #tpu.dot_dimension_numbers<[1], [0], [0], [1], [0, 0, 1, 1], [], []>} : vector<16x16xbf16>, vector<16x16xbf16>, vector<16x16xf32> -> vector<16x16xf32>
    %336 = vector.extract_strided_slice %335 {offsets = [0, 0], sizes = [8, 16], strides = [1, 1]} : vector<16x16xf32> to vector<8x16xf32>
    %337 = vector.extract_strided_slice %335 {offsets = [8, 0], sizes = [8, 16], strides = [1, 1]} : vector<16x16xf32> to vector<8x16xf32>
    %338 = tpu.concatenate %336, %337 in 1 : vector<8x16xf32>, vector<8x16xf32> -> vector<8x32xf32>
    %c8_229 = arith.constant 8 : index
    %c0_230 = arith.constant 0 : index
    %339 = vector.load %arg19[%c8_229, %c0_230] : memref<24x32xf32, #tpu.memory_space<vmem>>, vector<8x32xf32>
    tpu.vector_store %arg19[%c8_229, %c0_230], %338 {strides = array<i32>} : memref<24x32xf32, #tpu.memory_space<vmem>>, vector<8x32xf32>,
    %c3_231 = arith.constant 3 : index
    %c0_232 = arith.constant 0 : index
    %340 = vector.load %arg19[%c3_231, %c0_232] : memref<24x32xf32, #tpu.memory_space<vmem>>, vector<8x32xf32>
    %c4_233 = arith.constant 4 : index
    %c0_234 = arith.constant 0 : index
    %341 = vector.load %arg19[%c4_233, %c0_234] : memref<24x32xf32, #tpu.memory_space<vmem>>, vector<8x32xf32>
    %c5_235 = arith.constant 5 : index
    %c0_236 = arith.constant 0 : index
    %342 = vector.load %arg19[%c5_235, %c0_236] : memref<24x32xf32, #tpu.memory_space<vmem>>, vector<8x32xf32>
    %c6_237 = arith.constant 6 : index
    %c0_238 = arith.constant 0 : index
    %343 = vector.load %arg19[%c6_237, %c0_238] : memref<24x32xf32, #tpu.memory_space<vmem>>, vector<8x32xf32>
    %c7_239 = arith.constant 7 : index
    %c0_240 = arith.constant 0 : index
    %344 = vector.load %arg19[%c7_239, %c0_240] : memref<24x32xf32, #tpu.memory_space<vmem>>, vector<8x32xf32>
    %c8_241 = arith.constant 8 : index
    %c0_242 = arith.constant 0 : index
    %345 = vector.load %arg19[%c8_241, %c0_242] : memref<24x32xf32, #tpu.memory_space<vmem>>, vector<8x32xf32>
    %c9_243 = arith.constant 9 : index
    %c0_244 = arith.constant 0 : index
    %346 = vector.load %arg19[%c9_243, %c0_244] : memref<24x32xf32, #tpu.memory_space<vmem>>, vector<8x32xf32>
    %c10_245 = arith.constant 10 : index
    %c0_246 = arith.constant 0 : index
    %347 = vector.load %arg19[%c10_245, %c0_246] : memref<24x32xf32, #tpu.memory_space<vmem>>, vector<8x32xf32>
    %c11_247 = arith.constant 11 : index
    %c0_248 = arith.constant 0 : index
    %348 = vector.load %arg19[%c11_247, %c0_248] : memref<24x32xf32, #tpu.memory_space<vmem>>, vector<8x32xf32>
    %c12_249 = arith.constant 12 : index
    %c0_250 = arith.constant 0 : index
    %349 = vector.load %arg19[%c12_249, %c0_250] : memref<24x32xf32, #tpu.memory_space<vmem>>, vector<8x32xf32>
    %c13_251 = arith.constant 13 : index
    %c0_252 = arith.constant 0 : index
    %350 = vector.load %arg19[%c13_251, %c0_252] : memref<24x32xf32, #tpu.memory_space<vmem>>, vector<8x32xf32>
    %351 = tpu.concatenate %340, %341, %342, %343, %344, %345, %346, %347, %348, %349, %350 in 1 : vector<8x32xf32>, vector<8x32xf32>, vector<8x32xf32>, vector<8x32xf32>, vector<8x32xf32>, vector<8x32xf32>, vector<8x32xf32>, vector<8x32xf32>, vector<8x32xf32>, vector<8x32xf32>, vector<8x32xf32> -> vector<8x352xf32>
    %352 = arith.truncf %351 : vector<8x352xf32> to vector<8x352xbf16>
    %c0_253 = arith.constant 0 : index
    %c0_254 = arith.constant 0 : index
    %c0_255 = arith.constant 0 : index
    %353 = vector.load %arg7[%c0_253, %c0_254, %c0_255] : memref<2x352x128xbf16, #tpu.memory_space<vmem>>, vector<1x352x128xbf16>
    %354 = vector.shape_cast %353 : vector<1x352x128xbf16> to vector<352x128xbf16>
    %cst_256 = arith.constant dense<0.000000e+00> : vector<8x128xf32>
    %355 = tpu.matmul %352, %354, %cst_256 {dimension_numbers = #tpu.dot_dimension_numbers<[1], [0], [0], [1], [0, 0, 1, 1], [], []>} : vector<8x352xbf16>, vector<352x128xbf16>, vector<8x128xf32> -> vector<8x128xf32>
    %c0_257 = arith.constant 0 : index
    %c0_258 = arith.constant 0 : index
    %c0_259 = arith.constant 0 : index
    %356 = vector.load %arg8[%c0_257, %c0_258, %c0_259] : memref<2x1x128xf32, #tpu.memory_space<vmem>>, vector<1x1x128xf32>
    %357 = vector.shape_cast %356 : vector<1x1x128xf32> to vector<1x128xf32>
    %358 = vector.broadcast %357 : vector<1x128xf32> to vector<8x128xf32>
    %359 = arith.addf %355, %358 : vector<8x128xf32>
    %cst_260 = arith.constant 5.000000e-01 : f32
    %360 = vector.broadcast %cst_260 : f32 to vector<8x128xf32>
    %361 = arith.mulf %360, %359 : vector<8x128xf32>
    %cst_261 = arith.constant 0.707106769 : f32
    %362 = vector.broadcast %cst_261 : f32 to vector<8x128xf32>
    %363 = arith.mulf %359, %362 : vector<8x128xf32>
    %364 = math.absf %363 : vector<8x128xf32>
    %cst_262 = arith.constant 0.327591091 : f32
    %365 = vector.broadcast %cst_262 : f32 to vector<8x128xf32>
    %366 = arith.mulf %365, %364 : vector<8x128xf32>
    %cst_263 = arith.constant 1.000000e+00 : f32
    %367 = vector.broadcast %cst_263 : f32 to vector<8x128xf32>
    %368 = arith.addf %367, %366 : vector<8x128xf32>
    %cst_264 = arith.constant 1.000000e+00 : f32
    %369 = vector.broadcast %cst_264 : f32 to vector<8x128xf32>
    %370 = arith.divf %369, %368 : vector<8x128xf32>
    %cst_265 = arith.constant 1.06140542 : f32
    %371 = vector.broadcast %cst_265 : f32 to vector<8x128xf32>
    %372 = arith.mulf %371, %370 : vector<8x128xf32>
    %cst_266 = arith.constant -1.45315206 : f32
    %373 = vector.broadcast %cst_266 : f32 to vector<8x128xf32>
    %374 = arith.addf %372, %373 : vector<8x128xf32>
    %375 = arith.mulf %374, %370 : vector<8x128xf32>
    %cst_267 = arith.constant 1.42141378 : f32
    %376 = vector.broadcast %cst_267 : f32 to vector<8x128xf32>
    %377 = arith.addf %375, %376 : vector<8x128xf32>
    %378 = arith.mulf %377, %370 : vector<8x128xf32>
    %cst_268 = arith.constant -0.284496725 : f32
    %379 = vector.broadcast %cst_268 : f32 to vector<8x128xf32>
    %380 = arith.addf %378, %379 : vector<8x128xf32>
    %381 = arith.mulf %380, %370 : vector<8x128xf32>
    %cst_269 = arith.constant 0.254829586 : f32
    %382 = vector.broadcast %cst_269 : f32 to vector<8x128xf32>
    %383 = arith.addf %381, %382 : vector<8x128xf32>
    %384 = arith.mulf %383, %370 : vector<8x128xf32>
    %cst_270 = arith.constant 0.000000e+00 : f32
    %385 = vector.broadcast %cst_270 : f32 to vector<8x128xf32>
    %386 = arith.subf %385, %364 : vector<8x128xf32>
    %387 = arith.mulf %386, %364 : vector<8x128xf32>
    %388 = math.exp %387 : vector<8x128xf32>
    %389 = arith.mulf %384, %388 : vector<8x128xf32>
    %cst_271 = arith.constant 1.000000e+00 : f32
    %390 = vector.broadcast %cst_271 : f32 to vector<8x128xf32>
    %391 = arith.subf %390, %389 : vector<8x128xf32>
    %cst_272 = arith.constant 0.000000e+00 : f32
    %392 = vector.broadcast %cst_272 : f32 to vector<8x128xf32>
    %393 = arith.cmpf oge, %363, %392 : vector<8x128xf32>
    %cst_273 = arith.constant 0.000000e+00 : f32
    %394 = vector.broadcast %cst_273 : f32 to vector<8x128xf32>
    %395 = arith.subf %394, %391 : vector<8x128xf32>
    %396 = arith.select %393, %391, %395 : vector<8x128xi1>, vector<8x128xf32>
    %cst_274 = arith.constant 1.000000e+00 : f32
    %397 = vector.broadcast %cst_274 : f32 to vector<8x128xf32>
    %398 = arith.addf %397, %396 : vector<8x128xf32>
    %399 = arith.mulf %361, %398 : vector<8x128xf32>
    %c8_275 = arith.constant 8 : index
    %c0_276 = arith.constant 0 : index
    %400 = vector.load %arg20[%c8_275, %c0_276] : memref<24x128xf32, #tpu.memory_space<vmem>>, vector<8x128xf32>
    tpu.vector_store %arg20[%c8_275, %c0_276], %399 {strides = array<i32>} : memref<24x128xf32, #tpu.memory_space<vmem>>, vector<8x128xf32>,
    %c3_277 = arith.constant 3 : index
    %c0_278 = arith.constant 0 : index
    %401 = vector.load %arg20[%c3_277, %c0_278] : memref<24x128xf32, #tpu.memory_space<vmem>>, vector<8x128xf32>
    %c4_279 = arith.constant 4 : index
    %c0_280 = arith.constant 0 : index
    %402 = vector.load %arg20[%c4_279, %c0_280] : memref<24x128xf32, #tpu.memory_space<vmem>>, vector<8x128xf32>
    %c5_281 = arith.constant 5 : index
    %c0_282 = arith.constant 0 : index
    %403 = vector.load %arg20[%c5_281, %c0_282] : memref<24x128xf32, #tpu.memory_space<vmem>>, vector<8x128xf32>
    %c6_283 = arith.constant 6 : index
    %c0_284 = arith.constant 0 : index
    %404 = vector.load %arg20[%c6_283, %c0_284] : memref<24x128xf32, #tpu.memory_space<vmem>>, vector<8x128xf32>
    %c7_285 = arith.constant 7 : index
    %c0_286 = arith.constant 0 : index
    %405 = vector.load %arg20[%c7_285, %c0_286] : memref<24x128xf32, #tpu.memory_space<vmem>>, vector<8x128xf32>
    %c8_287 = arith.constant 8 : index
    %c0_288 = arith.constant 0 : index
    %406 = vector.load %arg20[%c8_287, %c0_288] : memref<24x128xf32, #tpu.memory_space<vmem>>, vector<8x128xf32>
    %c9_289 = arith.constant 9 : index
    %c0_290 = arith.constant 0 : index
    %407 = vector.load %arg20[%c9_289, %c0_290] : memref<24x128xf32, #tpu.memory_space<vmem>>, vector<8x128xf32>
    %c10_291 = arith.constant 10 : index
    %c0_292 = arith.constant 0 : index
    %408 = vector.load %arg20[%c10_291, %c0_292] : memref<24x128xf32, #tpu.memory_space<vmem>>, vector<8x128xf32>
    %c11_293 = arith.constant 11 : index
    %c0_294 = arith.constant 0 : index
    %409 = vector.load %arg20[%c11_293, %c0_294] : memref<24x128xf32, #tpu.memory_space<vmem>>, vector<8x128xf32>
    %c12_295 = arith.constant 12 : index
    %c0_296 = arith.constant 0 : index
    %410 = vector.load %arg20[%c12_295, %c0_296] : memref<24x128xf32, #tpu.memory_space<vmem>>, vector<8x128xf32>
    %c13_297 = arith.constant 13 : index
    %c0_298 = arith.constant 0 : index
    %411 = vector.load %arg20[%c13_297, %c0_298] : memref<24x128xf32, #tpu.memory_space<vmem>>, vector<8x128xf32>
    %412 = tpu.concatenate %401, %402, %403, %404, %405, %406, %407, %408, %409, %410, %411 in 1 : vector<8x128xf32>, vector<8x128xf32>, vector<8x128xf32>, vector<8x128xf32>, vector<8x128xf32>, vector<8x128xf32>, vector<8x128xf32>, vector<8x128xf32>, vector<8x128xf32>, vector<8x128xf32>, vector<8x128xf32> -> vector<8x1408xf32>
    %413 = arith.truncf %412 : vector<8x1408xf32> to vector<8x1408xbf16>
    %c0_299 = arith.constant 0 : index
    %c0_300 = arith.constant 0 : index
    %c0_301 = arith.constant 0 : index
    %414 = vector.load %arg9[%c0_299, %c0_300, %c0_301] : memref<2x1408x32xbf16, #tpu.memory_space<vmem>>, vector<1x1408x32xbf16>
    %415 = vector.shape_cast %414 : vector<1x1408x32xbf16> to vector<1408x32xbf16>
    %cst_302 = arith.constant dense<0.000000e+00> : vector<8x32xf32>
    %416 = tpu.matmul %413, %415, %cst_302 {dimension_numbers = #tpu.dot_dimension_numbers<[1], [0], [0], [1], [0, 0, 1, 1], [], []>} : vector<8x1408xbf16>, vector<1408x32xbf16>, vector<8x32xf32> -> vector<8x32xf32>
    %c0_303 = arith.constant 0 : index
    %c0_304 = arith.constant 0 : index
    %c0_305 = arith.constant 0 : index
    %417 = vector.load %arg10[%c0_303, %c0_304, %c0_305] : memref<2x1x32xf32, #tpu.memory_space<vmem>>, vector<1x1x32xf32>
    %418 = vector.shape_cast %417 : vector<1x1x32xf32> to vector<1x32xf32>
    %419 = vector.broadcast %418 : vector<1x32xf32> to vector<8x32xf32>
    %420 = arith.addf %416, %419 : vector<8x32xf32>
    %421 = vector.extract_strided_slice %420 {offsets = [0, 0], sizes = [8, 16], strides = [1, 1]} : vector<8x32xf32> to vector<8x16xf32>
    %422 = vector.extract_strided_slice %333 {offsets = [0, 0], sizes = [8, 16], strides = [1, 1]} : vector<16x16xf32> to vector<8x16xf32>
    %423 = arith.addf %421, %422 : vector<8x16xf32>
    %424 = vector.extract_strided_slice %420 {offsets = [0, 16], sizes = [8, 16], strides = [1, 1]} : vector<8x32xf32> to vector<8x16xf32>
    %425 = vector.extract_strided_slice %333 {offsets = [8, 0], sizes = [8, 16], strides = [1, 1]} : vector<16x16xf32> to vector<8x16xf32>
    %426 = arith.addf %424, %425 : vector<8x16xf32>
    %427 = tpu.concatenate %423, %426 in 0 : vector<8x16xf32>, vector<8x16xf32> -> vector<16x16xf32>
    %cst_306 = arith.constant dense<0.000000e+00> : vector<16xf32>
    %428 = vector.multi_reduction <add>, %427, %cst_306 [1] : vector<16x16xf32> to vector<16xf32>
    %429 = vector.shape_cast %428 : vector<16xf32> to vector<16x1xf32>
    %cst_307 = arith.constant 1.600000e+01 : f32
    %430 = vector.broadcast %cst_307 : f32 to vector<16x1xf32>
    %431 = arith.divf %429, %430 : vector<16x1xf32>
    %432 = vector.broadcast %431 : vector<16x1xf32> to vector<16x16xf32>
    %433 = arith.subf %427, %432 : vector<16x16xf32>
    %434 = vector.broadcast %431 : vector<16x1xf32> to vector<16x16xf32>
    %435 = arith.subf %427, %434 : vector<16x16xf32>
    %436 = arith.mulf %433, %435 : vector<16x16xf32>
    %cst_308 = arith.constant dense<0.000000e+00> : vector<16xf32>
    %437 = vector.multi_reduction <add>, %436, %cst_308 [1] : vector<16x16xf32> to vector<16xf32>
    %438 = vector.shape_cast %437 : vector<16xf32> to vector<16x1xf32>
    %cst_309 = arith.constant 1.600000e+01 : f32
    %439 = vector.broadcast %cst_309 : f32 to vector<16x1xf32>
    %440 = arith.divf %438, %439 : vector<16x1xf32>
    %441 = vector.broadcast %431 : vector<16x1xf32> to vector<16x16xf32>
    %442 = arith.subf %427, %441 : vector<16x16xf32>
    %cst_310 = arith.constant 9.99999974E-6 : f32
    %443 = vector.broadcast %cst_310 : f32 to vector<16x1xf32>
    %444 = arith.addf %440, %443 : vector<16x1xf32>
    %445 = math.rsqrt %444 : vector<16x1xf32>
    %446 = vector.broadcast %445 : vector<16x1xf32> to vector<16x16xf32>
    %447 = arith.mulf %442, %446 : vector<16x16xf32>
    %448 = vector.broadcast %5 : vector<1x16xf32> to vector<16x16xf32>
    %449 = arith.mulf %447, %448 : vector<16x16xf32>
    %450 = vector.broadcast %6 : vector<1x16xf32> to vector<16x16xf32>
    %451 = arith.addf %449, %450 : vector<16x16xf32>
    %452 = arith.truncf %451 : vector<16x16xf32> to vector<16x16xbf16>
    %cst_311 = arith.constant dense<0.000000e+00> : vector<16x16xf32>
    %453 = tpu.matmul %4, %452, %cst_311 {dimension_numbers = #tpu.dot_dimension_numbers<[1], [0], [0], [1], [0, 0, 1, 1], [], []>} : vector<16x16xbf16>, vector<16x16xbf16>, vector<16x16xf32> -> vector<16x16xf32>
    %454 = vector.extract_strided_slice %453 {offsets = [0, 0], sizes = [8, 16], strides = [1, 1]} : vector<16x16xf32> to vector<8x16xf32>
    %455 = vector.extract_strided_slice %453 {offsets = [8, 0], sizes = [8, 16], strides = [1, 1]} : vector<16x16xf32> to vector<8x16xf32>
    %456 = tpu.concatenate %454, %455 in 1 : vector<8x16xf32>, vector<8x16xf32> -> vector<8x32xf32>
    %c8_312 = arith.constant 8 : index
    %c0_313 = arith.constant 0 : index
    %457 = vector.load %arg19[%c8_312, %c0_313] : memref<24x32xf32, #tpu.memory_space<vmem>>, vector<8x32xf32>
    tpu.vector_store %arg19[%c8_312, %c0_313], %456 {strides = array<i32>} : memref<24x32xf32, #tpu.memory_space<vmem>>, vector<8x32xf32>,
    %c3_314 = arith.constant 3 : index
    %c0_315 = arith.constant 0 : index
    %458 = vector.load %arg19[%c3_314, %c0_315] : memref<24x32xf32, #tpu.memory_space<vmem>>, vector<8x32xf32>
    %c4_316 = arith.constant 4 : index
    %c0_317 = arith.constant 0 : index
    %459 = vector.load %arg19[%c4_316, %c0_317] : memref<24x32xf32, #tpu.memory_space<vmem>>, vector<8x32xf32>
    %c5_318 = arith.constant 5 : index
    %c0_319 = arith.constant 0 : index
    %460 = vector.load %arg19[%c5_318, %c0_319] : memref<24x32xf32, #tpu.memory_space<vmem>>, vector<8x32xf32>
    %c6_320 = arith.constant 6 : index
    %c0_321 = arith.constant 0 : index
    %461 = vector.load %arg19[%c6_320, %c0_321] : memref<24x32xf32, #tpu.memory_space<vmem>>, vector<8x32xf32>
    %c7_322 = arith.constant 7 : index
    %c0_323 = arith.constant 0 : index
    %462 = vector.load %arg19[%c7_322, %c0_323] : memref<24x32xf32, #tpu.memory_space<vmem>>, vector<8x32xf32>
    %c8_324 = arith.constant 8 : index
    %c0_325 = arith.constant 0 : index
    %463 = vector.load %arg19[%c8_324, %c0_325] : memref<24x32xf32, #tpu.memory_space<vmem>>, vector<8x32xf32>
    %c9_326 = arith.constant 9 : index
    %c0_327 = arith.constant 0 : index
    %464 = vector.load %arg19[%c9_326, %c0_327] : memref<24x32xf32, #tpu.memory_space<vmem>>, vector<8x32xf32>
    %c10_328 = arith.constant 10 : index
    %c0_329 = arith.constant 0 : index
    %465 = vector.load %arg19[%c10_328, %c0_329] : memref<24x32xf32, #tpu.memory_space<vmem>>, vector<8x32xf32>
    %c11_330 = arith.constant 11 : index
    %c0_331 = arith.constant 0 : index
    %466 = vector.load %arg19[%c11_330, %c0_331] : memref<24x32xf32, #tpu.memory_space<vmem>>, vector<8x32xf32>
    %c12_332 = arith.constant 12 : index
    %c0_333 = arith.constant 0 : index
    %467 = vector.load %arg19[%c12_332, %c0_333] : memref<24x32xf32, #tpu.memory_space<vmem>>, vector<8x32xf32>
    %c13_334 = arith.constant 13 : index
    %c0_335 = arith.constant 0 : index
    %468 = vector.load %arg19[%c13_334, %c0_335] : memref<24x32xf32, #tpu.memory_space<vmem>>, vector<8x32xf32>
    %469 = tpu.concatenate %458, %459, %460, %461, %462, %463, %464, %465, %466, %467, %468 in 1 : vector<8x32xf32>, vector<8x32xf32>, vector<8x32xf32>, vector<8x32xf32>, vector<8x32xf32>, vector<8x32xf32>, vector<8x32xf32>, vector<8x32xf32>, vector<8x32xf32>, vector<8x32xf32>, vector<8x32xf32> -> vector<8x352xf32>
    %470 = arith.truncf %469 : vector<8x352xf32> to vector<8x352xbf16>
    %c1_336 = arith.constant 1 : index
    %c0_337 = arith.constant 0 : index
    %c0_338 = arith.constant 0 : index
    %471 = vector.load %arg7[%c1_336, %c0_337, %c0_338] : memref<2x352x128xbf16, #tpu.memory_space<vmem>>, vector<1x352x128xbf16>
    %472 = vector.shape_cast %471 : vector<1x352x128xbf16> to vector<352x128xbf16>
    %cst_339 = arith.constant dense<0.000000e+00> : vector<8x128xf32>
    %473 = tpu.matmul %470, %472, %cst_339 {dimension_numbers = #tpu.dot_dimension_numbers<[1], [0], [0], [1], [0, 0, 1, 1], [], []>} : vector<8x352xbf16>, vector<352x128xbf16>, vector<8x128xf32> -> vector<8x128xf32>
    %c1_340 = arith.constant 1 : index
    %c0_341 = arith.constant 0 : index
    %c0_342 = arith.constant 0 : index
    %474 = vector.load %arg8[%c1_340, %c0_341, %c0_342] : memref<2x1x128xf32, #tpu.memory_space<vmem>>, vector<1x1x128xf32>
    %475 = vector.shape_cast %474 : vector<1x1x128xf32> to vector<1x128xf32>
    %476 = vector.broadcast %475 : vector<1x128xf32> to vector<8x128xf32>
    %477 = arith.addf %473, %476 : vector<8x128xf32>
    %cst_343 = arith.constant 5.000000e-01 : f32
    %478 = vector.broadcast %cst_343 : f32 to vector<8x128xf32>
    %479 = arith.mulf %478, %477 : vector<8x128xf32>
    %cst_344 = arith.constant 0.707106769 : f32
    %480 = vector.broadcast %cst_344 : f32 to vector<8x128xf32>
    %481 = arith.mulf %477, %480 : vector<8x128xf32>
    %482 = math.absf %481 : vector<8x128xf32>
    %cst_345 = arith.constant 0.327591091 : f32
    %483 = vector.broadcast %cst_345 : f32 to vector<8x128xf32>
    %484 = arith.mulf %483, %482 : vector<8x128xf32>
    %cst_346 = arith.constant 1.000000e+00 : f32
    %485 = vector.broadcast %cst_346 : f32 to vector<8x128xf32>
    %486 = arith.addf %485, %484 : vector<8x128xf32>
    %cst_347 = arith.constant 1.000000e+00 : f32
    %487 = vector.broadcast %cst_347 : f32 to vector<8x128xf32>
    %488 = arith.divf %487, %486 : vector<8x128xf32>
    %cst_348 = arith.constant 1.06140542 : f32
    %489 = vector.broadcast %cst_348 : f32 to vector<8x128xf32>
    %490 = arith.mulf %489, %488 : vector<8x128xf32>
    %cst_349 = arith.constant -1.45315206 : f32
    %491 = vector.broadcast %cst_349 : f32 to vector<8x128xf32>
    %492 = arith.addf %490, %491 : vector<8x128xf32>
    %493 = arith.mulf %492, %488 : vector<8x128xf32>
    %cst_350 = arith.constant 1.42141378 : f32
    %494 = vector.broadcast %cst_350 : f32 to vector<8x128xf32>
    %495 = arith.addf %493, %494 : vector<8x128xf32>
    %496 = arith.mulf %495, %488 : vector<8x128xf32>
    %cst_351 = arith.constant -0.284496725 : f32
    %497 = vector.broadcast %cst_351 : f32 to vector<8x128xf32>
    %498 = arith.addf %496, %497 : vector<8x128xf32>
    %499 = arith.mulf %498, %488 : vector<8x128xf32>
    %cst_352 = arith.constant 0.254829586 : f32
    %500 = vector.broadcast %cst_352 : f32 to vector<8x128xf32>
    %501 = arith.addf %499, %500 : vector<8x128xf32>
    %502 = arith.mulf %501, %488 : vector<8x128xf32>
    %cst_353 = arith.constant 0.000000e+00 : f32
    %503 = vector.broadcast %cst_353 : f32 to vector<8x128xf32>
    %504 = arith.subf %503, %482 : vector<8x128xf32>
    %505 = arith.mulf %504, %482 : vector<8x128xf32>
    %506 = math.exp %505 : vector<8x128xf32>
    %507 = arith.mulf %502, %506 : vector<8x128xf32>
    %cst_354 = arith.constant 1.000000e+00 : f32
    %508 = vector.broadcast %cst_354 : f32 to vector<8x128xf32>
    %509 = arith.subf %508, %507 : vector<8x128xf32>
    %cst_355 = arith.constant 0.000000e+00 : f32
    %510 = vector.broadcast %cst_355 : f32 to vector<8x128xf32>
    %511 = arith.cmpf oge, %481, %510 : vector<8x128xf32>
    %cst_356 = arith.constant 0.000000e+00 : f32
    %512 = vector.broadcast %cst_356 : f32 to vector<8x128xf32>
    %513 = arith.subf %512, %509 : vector<8x128xf32>
    %514 = arith.select %511, %509, %513 : vector<8x128xi1>, vector<8x128xf32>
    %cst_357 = arith.constant 1.000000e+00 : f32
    %515 = vector.broadcast %cst_357 : f32 to vector<8x128xf32>
    %516 = arith.addf %515, %514 : vector<8x128xf32>
    %517 = arith.mulf %479, %516 : vector<8x128xf32>
    %c8_358 = arith.constant 8 : index
    %c0_359 = arith.constant 0 : index
    %518 = vector.load %arg20[%c8_358, %c0_359] : memref<24x128xf32, #tpu.memory_space<vmem>>, vector<8x128xf32>
    tpu.vector_store %arg20[%c8_358, %c0_359], %517 {strides = array<i32>} : memref<24x128xf32, #tpu.memory_space<vmem>>, vector<8x128xf32>,
    %c3_360 = arith.constant 3 : index
    %c0_361 = arith.constant 0 : index
    %519 = vector.load %arg20[%c3_360, %c0_361] : memref<24x128xf32, #tpu.memory_space<vmem>>, vector<8x128xf32>
    %c4_362 = arith.constant 4 : index
    %c0_363 = arith.constant 0 : index
    %520 = vector.load %arg20[%c4_362, %c0_363] : memref<24x128xf32, #tpu.memory_space<vmem>>, vector<8x128xf32>
    %c5_364 = arith.constant 5 : index
    %c0_365 = arith.constant 0 : index
    %521 = vector.load %arg20[%c5_364, %c0_365] : memref<24x128xf32, #tpu.memory_space<vmem>>, vector<8x128xf32>
    %c6_366 = arith.constant 6 : index
    %c0_367 = arith.constant 0 : index
    %522 = vector.load %arg20[%c6_366, %c0_367] : memref<24x128xf32, #tpu.memory_space<vmem>>, vector<8x128xf32>
    %c7_368 = arith.constant 7 : index
    %c0_369 = arith.constant 0 : index
    %523 = vector.load %arg20[%c7_368, %c0_369] : memref<24x128xf32, #tpu.memory_space<vmem>>, vector<8x128xf32>
    %c8_370 = arith.constant 8 : index
    %c0_371 = arith.constant 0 : index
    %524 = vector.load %arg20[%c8_370, %c0_371] : memref<24x128xf32, #tpu.memory_space<vmem>>, vector<8x128xf32>
    %c9_372 = arith.constant 9 : index
    %c0_373 = arith.constant 0 : index
    %525 = vector.load %arg20[%c9_372, %c0_373] : memref<24x128xf32, #tpu.memory_space<vmem>>, vector<8x128xf32>
    %c10_374 = arith.constant 10 : index
    %c0_375 = arith.constant 0 : index
    %526 = vector.load %arg20[%c10_374, %c0_375] : memref<24x128xf32, #tpu.memory_space<vmem>>, vector<8x128xf32>
    %c11_376 = arith.constant 11 : index
    %c0_377 = arith.constant 0 : index
    %527 = vector.load %arg20[%c11_376, %c0_377] : memref<24x128xf32, #tpu.memory_space<vmem>>, vector<8x128xf32>
    %c12_378 = arith.constant 12 : index
    %c0_379 = arith.constant 0 : index
    %528 = vector.load %arg20[%c12_378, %c0_379] : memref<24x128xf32, #tpu.memory_space<vmem>>, vector<8x128xf32>
    %c13_380 = arith.constant 13 : index
    %c0_381 = arith.constant 0 : index
    %529 = vector.load %arg20[%c13_380, %c0_381] : memref<24x128xf32, #tpu.memory_space<vmem>>, vector<8x128xf32>
    %530 = tpu.concatenate %519, %520, %521, %522, %523, %524, %525, %526, %527, %528, %529 in 1 : vector<8x128xf32>, vector<8x128xf32>, vector<8x128xf32>, vector<8x128xf32>, vector<8x128xf32>, vector<8x128xf32>, vector<8x128xf32>, vector<8x128xf32>, vector<8x128xf32>, vector<8x128xf32>, vector<8x128xf32> -> vector<8x1408xf32>
    %531 = arith.truncf %530 : vector<8x1408xf32> to vector<8x1408xbf16>
    %c1_382 = arith.constant 1 : index
    %c0_383 = arith.constant 0 : index
    %c0_384 = arith.constant 0 : index
    %532 = vector.load %arg9[%c1_382, %c0_383, %c0_384] : memref<2x1408x32xbf16, #tpu.memory_space<vmem>>, vector<1x1408x32xbf16>
    %533 = vector.shape_cast %532 : vector<1x1408x32xbf16> to vector<1408x32xbf16>
    %cst_385 = arith.constant dense<0.000000e+00> : vector<8x32xf32>
    %534 = tpu.matmul %531, %533, %cst_385 {dimension_numbers = #tpu.dot_dimension_numbers<[1], [0], [0], [1], [0, 0, 1, 1], [], []>} : vector<8x1408xbf16>, vector<1408x32xbf16>, vector<8x32xf32> -> vector<8x32xf32>
    %c1_386 = arith.constant 1 : index
    %c0_387 = arith.constant 0 : index
    %c0_388 = arith.constant 0 : index
    %535 = vector.load %arg10[%c1_386, %c0_387, %c0_388] : memref<2x1x32xf32, #tpu.memory_space<vmem>>, vector<1x1x32xf32>
    %536 = vector.shape_cast %535 : vector<1x1x32xf32> to vector<1x32xf32>
    %537 = vector.broadcast %536 : vector<1x32xf32> to vector<8x32xf32>
    %538 = arith.addf %534, %537 : vector<8x32xf32>
    %539 = vector.extract_strided_slice %538 {offsets = [0, 0], sizes = [8, 16], strides = [1, 1]} : vector<8x32xf32> to vector<8x16xf32>
    %540 = vector.extract_strided_slice %451 {offsets = [0, 0], sizes = [8, 16], strides = [1, 1]} : vector<16x16xf32> to vector<8x16xf32>
    %541 = arith.addf %539, %540 : vector<8x16xf32>
    %542 = vector.extract_strided_slice %538 {offsets = [0, 16], sizes = [8, 16], strides = [1, 1]} : vector<8x32xf32> to vector<8x16xf32>
    %543 = vector.extract_strided_slice %451 {offsets = [8, 0], sizes = [8, 16], strides = [1, 1]} : vector<16x16xf32> to vector<8x16xf32>
    %544 = arith.addf %542, %543 : vector<8x16xf32>
    %545 = tpu.concatenate %541, %544 in 0 : vector<8x16xf32>, vector<8x16xf32> -> vector<16x16xf32>
    %cst_389 = arith.constant dense<0.000000e+00> : vector<16xf32>
    %546 = vector.multi_reduction <add>, %545, %cst_389 [1] : vector<16x16xf32> to vector<16xf32>
    %547 = vector.shape_cast %546 : vector<16xf32> to vector<16x1xf32>
    %cst_390 = arith.constant 1.600000e+01 : f32
    %548 = vector.broadcast %cst_390 : f32 to vector<16x1xf32>
    %549 = arith.divf %547, %548 : vector<16x1xf32>
    %550 = vector.broadcast %549 : vector<16x1xf32> to vector<16x16xf32>
    %551 = arith.subf %545, %550 : vector<16x16xf32>
    %552 = vector.broadcast %549 : vector<16x1xf32> to vector<16x16xf32>
    %553 = arith.subf %545, %552 : vector<16x16xf32>
    %554 = arith.mulf %551, %553 : vector<16x16xf32>
    %cst_391 = arith.constant dense<0.000000e+00> : vector<16xf32>
    %555 = vector.multi_reduction <add>, %554, %cst_391 [1] : vector<16x16xf32> to vector<16xf32>
    %556 = vector.shape_cast %555 : vector<16xf32> to vector<16x1xf32>
    %cst_392 = arith.constant 1.600000e+01 : f32
    %557 = vector.broadcast %cst_392 : f32 to vector<16x1xf32>
    %558 = arith.divf %556, %557 : vector<16x1xf32>
    %559 = vector.broadcast %549 : vector<16x1xf32> to vector<16x16xf32>
    %560 = arith.subf %545, %559 : vector<16x16xf32>
    %cst_393 = arith.constant 9.99999974E-6 : f32
    %561 = vector.broadcast %cst_393 : f32 to vector<16x1xf32>
    %562 = arith.addf %558, %561 : vector<16x1xf32>
    %563 = math.rsqrt %562 : vector<16x1xf32>
    %564 = vector.broadcast %563 : vector<16x1xf32> to vector<16x16xf32>
    %565 = arith.mulf %560, %564 : vector<16x16xf32>
    %566 = vector.broadcast %5 : vector<1x16xf32> to vector<16x16xf32>
    %567 = arith.mulf %565, %566 : vector<16x16xf32>
    %568 = vector.broadcast %6 : vector<1x16xf32> to vector<16x16xf32>
    %569 = arith.addf %567, %568 : vector<16x16xf32>
    %570 = arith.truncf %569 : vector<16x16xf32> to vector<16x16xbf16>
    %cst_394 = arith.constant dense<0.000000e+00> : vector<16x4xf32>
    %571 = tpu.matmul %570, %7, %cst_394 {dimension_numbers = #tpu.dot_dimension_numbers<[1], [0], [0], [1], [0, 0, 1, 1], [], []>} : vector<16x16xbf16>, vector<16x4xbf16>, vector<16x4xf32> -> vector<16x4xf32>
    %572 = vector.broadcast %8 : vector<1x4xf32> to vector<16x4xf32>
    %573 = arith.addf %571, %572 : vector<16x4xf32>
    %574 = arith.truncf %573 : vector<16x4xf32> to vector<16x4xbf16>
    %cst_395 = arith.constant dense<0.000000e+00> : vector<8x4xf32>
    %575 = tpu.matmul %9, %574, %cst_395 {dimension_numbers = #tpu.dot_dimension_numbers<[1], [0], [0], [1], [0, 0, 1, 1], [], []>} : vector<8x16xbf16>, vector<16x4xbf16>, vector<8x4xf32> -> vector<8x4xf32>
    %576 = vector.broadcast %10 : vector<8x1xf32> to vector<8x4xf32>
    %577 = arith.addf %575, %576 : vector<8x4xf32>
    %c1_396 = arith.constant 1 : index
    %c0_397 = arith.constant 0 : index
    %c0_398 = arith.constant 0 : index
    %578 = vector.load %arg17[%c1_396, %c0_397, %c0_398] : memref<2x8x4xf32, #tpu.memory_space<vmem>>, vector<1x8x4xf32>
    %579 = vector.shape_cast %578 : vector<1x8x4xf32> to vector<8x4xf32>
    %580 = vector.shape_cast %577 : vector<8x4xf32> to vector<1x8x4xf32>
    tpu.vector_store %arg17[%c1_396, %c0_397, %c0_398], %580 {strides = array<i32>} : memref<2x8x4xf32, #tpu.memory_space<vmem>>, vector<1x8x4xf32>,
    return
  }
  func.func @transform_0(%arg0: i32) -> (i32, i32, i32) {
    %c0_i32 = arith.constant 0 : i32
    %c0_i32_0 = arith.constant 0 : i32
    %c0_i32_1 = arith.constant 0 : i32
    %c0_i32_2 = arith.constant 0 : i32
    return %c0_i32, %c0_i32_0, %c0_i32_1 : i32, i32, i32
  }
  func.func @transform_1(%arg0: i32) -> (i32, i32) {
    %c0_i32 = arith.constant 0 : i32
    %c0_i32_0 = arith.constant 0 : i32
    %c0_i32_1 = arith.constant 0 : i32
    return %c0_i32, %c0_i32_0 : i32, i32
  }
  func.func @transform_2(%arg0: i32) -> (i32, i32) {
    %c0_i32 = arith.constant 0 : i32
    %c0_i32_0 = arith.constant 0 : i32
    %c0_i32_1 = arith.constant 0 : i32
    return %c0_i32, %c0_i32_0 : i32, i32
  }
  func.func @transform_3(%arg0: i32) -> (i32, i32) {
    %c0_i32 = arith.constant 0 : i32
    %c0_i32_0 = arith.constant 0 : i32
    %c0_i32_1 = arith.constant 0 : i32
    return %c0_i32, %c0_i32_0 : i32, i32
  }
  func.func @transform_4(%arg0: i32) -> (i32, i32) {
    %c0_i32 = arith.constant 0 : i32
    %c0_i32_0 = arith.constant 0 : i32
    %c0_i32_1 = arith.constant 0 : i32
    return %c0_i32, %c0_i32_0 : i32, i32
  }
  func.func @transform_5(%arg0: i32) -> (i32, i32) {
    %c0_i32 = arith.constant 0 : i32
    %c0_i32_0 = arith.constant 0 : i32
    %c0_i32_1 = arith.constant 0 : i32
    return %c0_i32, %c0_i32_0 : i32, i32
  }
  func.func @transform_6(%arg0: i32) -> (i32, i32, i32) {
    %c0_i32 = arith.constant 0 : i32
    %c0_i32_0 = arith.constant 0 : i32
    %c0_i32_1 = arith.constant 0 : i32
    %c0_i32_2 = arith.constant 0 : i32
    return %c0_i32, %c0_i32_0, %c0_i32_1 : i32, i32, i32
  }
  func.func @transform_7(%arg0: i32) -> (i32, i32, i32) {
    %c0_i32 = arith.constant 0 : i32
    %c0_i32_0 = arith.constant 0 : i32
    %c0_i32_1 = arith.constant 0 : i32
    %c0_i32_2 = arith.constant 0 : i32
    return %c0_i32, %c0_i32_0, %c0_i32_1 : i32, i32, i32
  }
  func.func @transform_8(%arg0: i32) -> (i32, i32, i32) {
    %c0_i32 = arith.constant 0 : i32
    %c0_i32_0 = arith.constant 0 : i32
    %c0_i32_1 = arith.constant 0 : i32
    %c0_i32_2 = arith.constant 0 : i32
    return %c0_i32, %c0_i32_0, %c0_i32_1 : i32, i32, i32
  }
  func.func @transform_9(%arg0: i32) -> (i32, i32, i32) {
    %c0_i32 = arith.constant 0 : i32
    %c0_i32_0 = arith.constant 0 : i32
    %c0_i32_1 = arith.constant 0 : i32
    %c0_i32_2 = arith.constant 0 : i32
    return %c0_i32, %c0_i32_0, %c0_i32_1 : i32, i32, i32
  }
  func.func @transform_10(%arg0: i32) -> (i32, i32) {
    %c0_i32 = arith.constant 0 : i32
    %c0_i32_0 = arith.constant 0 : i32
    %c0_i32_1 = arith.constant 0 : i32
    return %c0_i32, %c0_i32_0 : i32, i32
  }
  func.func @transform_11(%arg0: i32) -> (i32, i32) {
    %c0_i32 = arith.constant 0 : i32
    %c0_i32_0 = arith.constant 0 : i32
    %c0_i32_1 = arith.constant 0 : i32
    return %c0_i32, %c0_i32_0 : i32, i32
  }
  func.func @transform_12(%arg0: i32) -> (i32, i32) {
    %c0_i32 = arith.constant 0 : i32
    %c0_i32_0 = arith.constant 0 : i32
    %c0_i32_1 = arith.constant 0 : i32
    return %c0_i32, %c0_i32_0 : i32, i32
  }
  func.func @transform_13(%arg0: i32) -> (i32, i32) {
    %c0_i32 = arith.constant 0 : i32
    %c0_i32_0 = arith.constant 0 : i32
    %c0_i32_1 = arith.constant 0 : i32
    return %c0_i32, %c0_i32_0 : i32, i32
  }
  func.func @transform_14(%arg0: i32) -> (i32, i32) {
    %c0_i32 = arith.constant 0 : i32
    %c0_i32_0 = arith.constant 0 : i32
    %c0_i32_1 = arith.constant 0 : i32
    return %c0_i32, %c0_i32_0 : i32, i32
  }
  func.func @transform_15(%arg0: i32) -> (i32, i32) {
    %c0_i32 = arith.constant 0 : i32
    %c0_i32_0 = arith.constant 0 : i32
    %c0_i32_1 = arith.constant 0 : i32
    return %c0_i32, %c0_i32_0 : i32, i32
  }
  func.func @transform_16(%arg0: i32) -> (i32, i32, i32) {
    %c0_i32 = arith.constant 0 : i32
    %c0_i32_0 = arith.constant 0 : i32
    %c0_i32_1 = arith.constant 0 : i32
    %c0_i32_2 = arith.constant 0 : i32
    return %c0_i32, %c0_i32_0, %c0_i32_1 : i32, i32, i32
  }
}

</mosaic_0001>

<llo_original>
// kernel: _lambda_.1
$region0: #{_lambda_.1}
  #allocation0 [shape = 'u32[]', space=smem, size = 0x4, offset = 0x4, fixed_abs, tag = 'smem constant byte address 0x4 - core index']
  #allocation1 [shape = 'u32[144,128]{1,0:T(1,128)}', space=vmem, size = 0x12000, scoped, tag = 'internal scratch']
  #allocation2 [shape = 'f32[24,4]{1,0:T(8,128)}', space=vmem, size = 0x3000, scoped, tag = 'scratch operand']
  #allocation3 [shape = 'f32[24,32]{1,0:T(8,128)}', space=vmem, size = 0x3000, scoped, tag = 'scratch operand']
  #allocation4 [shape = 'f32[24,128]{1,0:T(8,128)}', space=vmem, size = 0x3000, scoped, tag = 'scratch operand']
  %s0 = inlined_call_operand.vmem [shape: f32[2,8,4], index: 0, kind: input, shape index: {}]
  %s1 = inlined_call_operand.hbm [shape: bf16[12,16], index: 1, kind: input, shape index: {}]
  %s2 = inlined_call_operand.hbm [shape: f32[8,16], index: 2, kind: input, shape index: {}]
  %s3 = inlined_call_operand.hbm [shape: bf16[16,8], index: 3, kind: input, shape index: {}]
  %s4 = inlined_call_operand.vmem [shape: f32[16,1], index: 4, kind: input, shape index: {}]
  %s5 = inlined_call_operand.vmem [shape: bf16[16,16], index: 5, kind: input, shape index: {}]
  %s6 = inlined_call_operand.hbm [shape: bf16[2,352,128], index: 6, kind: input, shape index: {}]
  %s7 = inlined_call_operand.hbm [shape: f32[2,1,128], index: 7, kind: input, shape index: {}]
  %s8 = inlined_call_operand.hbm [shape: bf16[2,1408,32], index: 8, kind: input, shape index: {}]
  %s9 = inlined_call_operand.vmem [shape: f32[2,1,32], index: 9, kind: input, shape index: {}]
  %s10 = inlined_call_operand.vmem [shape: f32[1,16], index: 10, kind: input, shape index: {}]
  %s11 = inlined_call_operand.vmem [shape: f32[1,16], index: 11, kind: input, shape index: {}]
  %s12 = inlined_call_operand.vmem [shape: bf16[16,4], index: 12, kind: input, shape index: {}]
  %s13 = inlined_call_operand.vmem [shape: f32[1,4], index: 13, kind: input, shape index: {}]
  %s14 = inlined_call_operand.vmem [shape: bf16[8,16], index: 14, kind: input, shape index: {}]
  %s15 = inlined_call_operand.vmem [shape: f32[8,1], index: 15, kind: input, shape index: {}]
  %s16 = inlined_call_operand.vmem [shape: f32[2,8,4], index: 16, kind: output, shape index: {}]
  %s17 = sld [smem:[#allocation0]]
  $region98: #{_lambda_.1} parent=0
    _
  %s19 = ssub.s32 1, %s17
  %s20 = scalar_select 0, %s19, %s17
  $region1: #{_lambda_.1} parent=0
    #allocation5 [shape = 'u8[4096]{0}', space=vmem, size = 0x1000, scoped, tag = 'input window, operand 1, single buffered']
    #allocation6 [shape = 's32[1]{0}', space=sflag, size = 0x4, scoped, tag = 'scoped memory for _lambda_.1']
    #allocation7 [shape = 'u8[4096]{0}', space=vmem, size = 0x1000, scoped, tag = 'input window, operand 2, single buffered']
    #allocation8 [shape = 's32[1]{0}', space=sflag, size = 0x4, scoped, tag = 'scoped memory for _lambda_.1']
    #allocation9 [shape = 'u8[4096]{0}', space=vmem, size = 0x1000, scoped, tag = 'input window, operand 3, single buffered']
    #allocation10 [shape = 'u8[180224]{0}', space=vmem, size = 0x2c000, scoped, tag = 'input window, operand 6, single buffered']
    #allocation11 [shape = 's32[1]{0}', space=sflag, size = 0x4, scoped, tag = 'scoped memory for _lambda_.1']
    #allocation12 [shape = 'u8[1024]{0}', space=vmem, size = 0x400, scoped, tag = 'input window, operand 7, single buffered']
    #allocation13 [shape = 'u8[720896]{0}', space=vmem, size = 0xb0000, scoped, tag = 'input window, operand 8, single buffered']
    #allocation14 [shape = 's32[1]{0}', space=sflag, size = 0x4, scoped, tag = 'scoped memory for _lambda_.1']
    %21 = vsyncpa [#allocation6], 0
    %22 = vsyncpa [#allocation8], 0
    %23 = vsyncpa [#allocation11], 0
    %24 = vsyncpa [#allocation14], 0
    // Predicated region
    $region2: #{_lambda_.1} parent=1 // pred_check
      _
    $region3: #{_lambda_.1} parent=1 // pred_check_branch
      %26 = sbr.rel (0) target = $region5
    $region4: #{_lambda_.1} parent=1 // pred_region
      _
    $region5: #{_lambda_.1} parent=1 // pred_fallthru
      _
    // Predicated region
    $region6: #{_lambda_.1} parent=1 // pred_check
      _
    $region7: #{_lambda_.1} parent=1 // pred_check_branch
      %28 = sbr.rel (0) target = $region9
    $region8: #{_lambda_.1} parent=1 // pred_region
      %s30 = ssub.s32 128, 128
      %31 = vsyncadd [#allocation6], %s30
      %s32 = sshll.u32 [#allocation5], 4
      %s33 = int_to_ptr.vmem [resolvable:$true] %s32
      %38 = dma.hbm_to_vmem [thread:$0]  %s1, 128, %s33, [#allocation6], 64, 64, 4
    $region9: #{_lambda_.1} parent=1 // pred_fallthru
      _
    // Predicated region
    $region10: #{_lambda_.1} parent=1 // pred_check
      _
    $region11: #{_lambda_.1} parent=1 // pred_check_branch
      %40 = sbr.rel (0) target = $region13
    $region12: #{_lambda_.1} parent=1 // pred_region
      %s42 = ssub.s32 128, 128
      %43 = vsyncadd [#allocation8], %s42
      %s45 = sshll.u32 [#allocation7], 4
      %s46 = int_to_ptr.vmem [resolvable:$true] %s45
      %48 = dma.hbm_to_vmem [thread:$0]  %s2, 128, %s46, [#allocation8]
    $region13: #{_lambda_.1} parent=1 // pred_fallthru
      _
    // Predicated region
    $region14: #{_lambda_.1} parent=1 // pred_check
      _
    $region15: #{_lambda_.1} parent=1 // pred_check_branch
      %50 = sbr.rel (0) target = $region17
    $region16: #{_lambda_.1} parent=1 // pred_region
      %s52 = ssub.s32 128, 128
      %53 = vsyncadd [#allocation8], %s52
      %s54 = sshll.u32 [#allocation9], 4
      %s55 = int_to_ptr.vmem [resolvable:$true] %s54
      %60 = dma.hbm_to_vmem [thread:$0]  %s3, 128, %s55, [#allocation8], 64, 64, 4
    $region17: #{_lambda_.1} parent=1 // pred_fallthru
      _
    // Predicated region
    $region18: #{_lambda_.1} parent=1 // pred_check
      _
    $region19: #{_lambda_.1} parent=1 // pred_check_branch
      %62 = sbr.rel (0) target = $region21
    $region20: #{_lambda_.1} parent=1 // pred_region
      _
    $region21: #{_lambda_.1} parent=1 // pred_fallthru
      _
    // Predicated region
    $region22: #{_lambda_.1} parent=1 // pred_check
      _
    $region23: #{_lambda_.1} parent=1 // pred_check_branch
      %64 = sbr.rel (0) target = $region25
    $region24: #{_lambda_.1} parent=1 // pred_region
      _
    $region25: #{_lambda_.1} parent=1 // pred_fallthru
      _
    // Predicated region
    $region26: #{_lambda_.1} parent=1 // pred_check
      _
    $region27: #{_lambda_.1} parent=1 // pred_check_branch
      %66 = sbr.rel (0) target = $region29
    $region28: #{_lambda_.1} parent=1 // pred_region
      %s68 = ssub.s32 5632, 5632
      %69 = vsyncadd [#allocation11], %s68
      %s70 = sshll.u32 [#allocation10], 4
      %s71 = int_to_ptr.vmem [resolvable:$true] %s70
      %76 = dma.hbm_to_vmem [thread:$0]  %s6, 5632, %s71, [#allocation11], 64, 64, 4
    $region29: #{_lambda_.1} parent=1 // pred_fallthru
      _
    // Predicated region
    $region30: #{_lambda_.1} parent=1 // pred_check
      _
    $region31: #{_lambda_.1} parent=1 // pred_check_branch
      %78 = sbr.rel (0) target = $region33
    $region32: #{_lambda_.1} parent=1 // pred_region
      %s80 = ssub.s32 32, 32
      %81 = vsyncadd [#allocation11], %s80
      %s82 = sshll.u32 [#allocation12], 4
      %s83 = int_to_ptr.vmem [resolvable:$true] %s82
      %88 = dma.hbm_to_vmem [thread:$0]  %s7, 32, %s83, [#allocation11], 16, 16, 1
    $region33: #{_lambda_.1} parent=1 // pred_fallthru
      _
    // Predicated region
    $region34: #{_lambda_.1} parent=1 // pred_check
      _
    $region35: #{_lambda_.1} parent=1 // pred_check_branch
      %90 = sbr.rel (0) target = $region37
    $region36: #{_lambda_.1} parent=1 // pred_region
      %s92 = ssub.s32 22528, 22528
      %93 = vsyncadd [#allocation14], %s92
      %s94 = sshll.u32 [#allocation13], 4
      %s95 = int_to_ptr.vmem [resolvable:$true] %s94
      %100 = dma.hbm_to_vmem [thread:$0]  %s8, 22528, %s95, [#allocation14], 64, 64, 4
    $region37: #{_lambda_.1} parent=1 // pred_fallthru
      _
    // Predicated region
    $region38: #{_lambda_.1} parent=1 // pred_check
      _
    $region39: #{_lambda_.1} parent=1 // pred_check_branch
      %102 = sbr.rel (0) target = $region41
    $region40: #{_lambda_.1} parent=1 // pred_region
      _
    $region41: #{_lambda_.1} parent=1 // pred_fallthru
      _
    // Predicated region
    $region42: #{_lambda_.1} parent=1 // pred_check
      _
    $region43: #{_lambda_.1} parent=1 // pred_check_branch
      %104 = sbr.rel (0) target = $region45
    $region44: #{_lambda_.1} parent=1 // pred_region
      _
    $region45: #{_lambda_.1} parent=1 // pred_fallthru
      _
    // Predicated region
    $region46: #{_lambda_.1} parent=1 // pred_check
      _
    $region47: #{_lambda_.1} parent=1 // pred_check_branch
      %106 = sbr.rel (0) target = $region49
    $region48: #{_lambda_.1} parent=1 // pred_region
      _
    $region49: #{_lambda_.1} parent=1 // pred_fallthru
      _
    // Predicated region
    $region50: #{_lambda_.1} parent=1 // pred_check
      _
    $region51: #{_lambda_.1} parent=1 // pred_check_branch
      %108 = sbr.rel (0) target = $region53
    $region52: #{_lambda_.1} parent=1 // pred_region
      _
    $region53: #{_lambda_.1} parent=1 // pred_fallthru
      _
    // Predicated region
    $region54: #{_lambda_.1} parent=1 // pred_check
      _
    $region55: #{_lambda_.1} parent=1 // pred_check_branch
      %110 = sbr.rel (0) target = $region57
    $region56: #{_lambda_.1} parent=1 // pred_region
      _
    $region57: #{_lambda_.1} parent=1 // pred_fallthru
      _
    // Predicated region
    $region58: #{_lambda_.1} parent=1 // pred_check
      _
    $region59: #{_lambda_.1} parent=1 // pred_check_branch
      %112 = sbr.rel (0) target = $region61
    $region60: #{_lambda_.1} parent=1 // pred_region
      _
    $region61: #{_lambda_.1} parent=1 // pred_fallthru
      _
    // Predicated region
    $region62: #{_lambda_.1} parent=1 // pred_check
      _
    $region63: #{_lambda_.1} parent=1 // pred_check_branch
      %114 = sbr.rel (0) target = $region65
    $region64: #{_lambda_.1} parent=1 // pred_region
      _
    $region65: #{_lambda_.1} parent=1 // pred_fallthru
      _
    // Predicated region
    $region66: #{_lambda_.1} parent=1 // pred_check
      _
    $region67: #{_lambda_.1} parent=1 // pred_check_branch
      %116 = sbr.rel (0) target = $region69
    $region68: #{_lambda_.1} parent=1 // pred_region
      %117 = dma.done [#allocation6], 128
    $region69: #{_lambda_.1} parent=1 // pred_fallthru
      _
    // Predicated region
    $region70: #{_lambda_.1} parent=1 // pred_check
      _
    $region71: #{_lambda_.1} parent=1 // pred_check_branch
      %119 = sbr.rel (0) target = $region73
    $region72: #{_lambda_.1} parent=1 // pred_region
      %120 = dma.done [#allocation8], 128
    $region73: #{_lambda_.1} parent=1 // pred_fallthru
      _
    // Predicated region
    $region74: #{_lambda_.1} parent=1 // pred_check
      _
    $region75: #{_lambda_.1} parent=1 // pred_check_branch
      %122 = sbr.rel (0) target = $region77
    $region76: #{_lambda_.1} parent=1 // pred_region
      %123 = dma.done [#allocation8], 128
    $region77: #{_lambda_.1} parent=1 // pred_fallthru
      _
    // Predicated region
    $region78: #{_lambda_.1} parent=1 // pred_check
      _
    $region79: #{_lambda_.1} parent=1 // pred_check_branch
      %125 = sbr.rel (0) target = $region81
    $region80: #{_lambda_.1} parent=1 // pred_region
      %126 = dma.done [#allocation11], 5632
    $region81: #{_lambda_.1} parent=1 // pred_fallthru
      _
    // Predicated region
    $region82: #{_lambda_.1} parent=1 // pred_check
      _
    $region83: #{_lambda_.1} parent=1 // pred_check_branch
      %128 = sbr.rel (0) target = $region85
    $region84: #{_lambda_.1} parent=1 // pred_region
      %129 = dma.done [#allocation11], 32
    $region85: #{_lambda_.1} parent=1 // pred_fallthru
      _
    // Predicated region
    $region86: #{_lambda_.1} parent=1 // pred_check
      _
    $region87: #{_lambda_.1} parent=1 // pred_check_branch
      %131 = sbr.rel (0) target = $region89
    $region88: #{_lambda_.1} parent=1 // pred_region
      %132 = dma.done [#allocation14], 22528
    $region89: #{_lambda_.1} parent=1 // pred_fallthru
      _
    %v134 = vld [vmem:[#allocation5] sm:$0xf]
    %v135 = vld [vmem:[#allocation5 + $0x4] sm:$0x3]
    %v136 = vld [vmem:[#allocation7] sm:$0xff]
    %v137 = vld [vmem:[#allocation9] sm:$0xf]
    %v138 = vld [vmem:[#allocation9 + $0x4] sm:$0xf]
    %v139 = vld [vmem:[%s4] sm:$0xff]
    %v140 = vld [vmem:[%s4 + $0x8] sm:$0xff]
    %v141 = vld [vmem:[%s5] sm:$0xf]
    %v142 = vld [vmem:[%s5 + $0x4] sm:$0xf]
    %v143 = vld [vmem:[%s10] sm:$0x1]
    %v144 = vld [vmem:[%s11] sm:$0x1]
    %v145 = vld [vmem:[%s12] sm:$0xf]
    %v146 = vld [vmem:[%s12 + $0x4] sm:$0xf]
    %v147 = vld [vmem:[%s13] sm:$0x1]
    %v148 = vld [vmem:[%s14] sm:$0xf]
    %v149 = vld [vmem:[%s15] sm:$0xff]
    %vm150 = vcmask 261120
    %151 = vst.msk [vmem:[#allocation3] sm:$0xff] %vm150, 0.0
    %152 = vst.msk [vmem:[#allocation3 + $0x8] sm:$0xff] %vm150, 0.0
    %153 = vst.msk [vmem:[#allocation3 + $0x10] sm:$0xff] %vm150, 0.0
    %154 = vst [vmem:[#allocation4] sm:$0xff] 0.0
    %155 = vst [vmem:[#allocation4 + $0x8] sm:$0xff] 0.0
    %156 = vst [vmem:[#allocation4 + $0x10] sm:$0xff] 0.0
    %v157 = vld [vmem:[%s0] sm:$0xff]
    %vm158 = vcmask 31744
    %v159 = vsel %vm158, %v157, 0.0
    %v160 = vrot.slane %v159, 4
    %v161 = vadd.f32 %v159, %v160
    %v162 = vrot.slane %v161, 2
    %v163 = vadd.f32 %v161, %v162
    %v164 = vrot.slane %v163, 1
    %v165 = vadd.f32 %v163, %v164
    %v166 = vrcp.pop 8.0
    %v167 = vmul.f32 %v165, %v166
    %v168 = vsub.f32 %v157, %v167
    %v169 = vmul.f32 %v168, %v168
    %v170 = vsel %vm158, %v169, 0.0
    %v171 = vrot.slane %v170, 4
    %v172 = vadd.f32 %v170, %v171
    %v173 = vrot.slane %v172, 2
    %v174 = vadd.f32 %v172, %v173
    %v175 = vrot.slane %v174, 1
    %v176 = vadd.f32 %v174, %v175
    %v177 = vmul.f32 %v176, %v166
    %v178 = vadd.f32 %v177, 1e-05
    %v179 = vrsqrt.pop %v178
    %v180 = vmul.f32 %v168, %v179
    %181 = vst.msk [vmem:[#allocation2] sm:$0xff] %vm158, %v180
    %182 = vst.msk [vmem:[#allocation2 + $0x8] sm:$0xff] %vm158, %v180
    %183 = vst.msk [vmem:[#allocation2 + $0x10] sm:$0xff] %vm158, %v180
    %v184 = vld [vmem:[#allocation2 + $0x7] sm:$0xff]
    %v185 = vld [vmem:[#allocation2 + $0x8] sm:$0xff]
    %v186 = vld [vmem:[#allocation2 + $0x9] sm:$0xff]
    %188 = vrot.lane.b32.xlu0 %v185, 4
    %v189 = vpop.permute.xlu0 %188
    %192 = vrot.lane.b32.xlu0 %v186, 8
    %v193 = vpop.permute.xlu0 %192
    %v195 = vsel %vm158, %v184, %v189
    %vm196 = vcmask 64512
    %v197 = vsel %vm196, %v195, %v193
    %v198 = vpack.c.bf16 %v197, %v197
    %v201 = vunpack.c.l.b16 %v134
    %v202 = vunpack.c.l.b16 %v135
    %v203 = vpack.c.b16 %v202, %v201
    %vm204 = vcmask 97280
    %v206 = vsel %vm204, %v198, 0
    %vm208 = vcmask 1045504
    %v210 = vsel %vm208, %v203, 0
    %212 = vmatprep.subr.bf16.mxu0 0
    %213 = vmatpush1.bf16.msra.mxu0 0
    %214 = vmatprep.subr.bf16.mxu0 0
    %215 = vmatpush1.bf16.msra.mxu0 0
    %216 = vmatprep.subr.bf16.mxu0 0
    %217 = vmatpush1.bf16.msra.mxu0 0
    %218 = vmatprep.subr.bf16.mxu0 0
    %219 = vmatpush1.bf16.msra.mxu0 0
    %220 = vmatprep.subr.bf16.mxu0 0
    %221 = vmatpush1.bf16.msra.mxu0 0
    %222 = vmatprep.subr.bf16.mxu0 0
    %223 = vmatpush1.bf16.msra.mxu0 0
    %224 = vmatprep.subr.bf16.mxu0 0
    %225 = vmatpush1.bf16.msra.mxu0 0
    %226 = vmatprep.subr.bf16.mxu0 0
    %227 = vmatpush1.bf16.msra.mxu0 %v210
    %228 = vmatprep.subr.bf16.mxu0 0
    %229 = vmatpush2.bf16.msra.mxu0 0
    %230 = vmatprep.subr.bf16.mxu0 0
    %231 = vmatpush2.bf16.msra.mxu0 0
    %232 = vmatprep.subr.bf16.mxu0 0
    %233 = vmatpush2.bf16.msra.mxu0 0
    %234 = vmatprep.subr.bf16.mxu0 0
    %235 = vmatpush2.bf16.msra.mxu0 0
    %236 = vmatprep.subr.bf16.mxu0 0
    %237 = vmatpush2.bf16.msra.mxu0 0
    %238 = vmatprep.subr.bf16.mxu0 0
    %239 = vmatpush2.bf16.msra.mxu0 0
    %240 = vmatprep.subr.bf16.mxu0 0
    %241 = vmatpush2.bf16.msra.mxu0 0
    %242 = vmatprep.subr.bf16.mxu0 0
    %243 = vmatpush2.bf16.msra.mxu0 0
    %244 = vmatprep.mubr.bf16.mxu0 0
    %245 = vmatmul.mubr.bf16.gmra.mxu0 %v206
    %v246 = vpop.f32.mrf.mxu0
    %v247 = vadd.f32 %v136, %v246
    %v248 = vpop.f32.mrf.mxu0
    %v249 = vpop.f32.mrf.mxu0
    %v250 = vpop.f32.mrf.mxu0
    %251 = vdwg.mxu0
    %v252 = vpack.c.bf16 %v247, %v247
    %254 = vset.pattern.permute.xlu0 0
    %255 = vperm.xlu0 %254, %v139
    %v256 = vpop.permute.xlu0 %255
    %259 = vset.pattern.permute.xlu0 0
    %260 = vperm.xlu0 %259, %v140
    %v261 = vpop.permute.xlu0 %260
    %v265 = vunpack.c.l.b16 %v137
    %v266 = vunpack.c.l.b16 %v138
    %v267 = vpack.c.b16 %v266, %v265
    %v269 = vsel %vm196, %v267, 0
    %vm271 = vcmask 1043456
    %v273 = vsel %vm271, %v252, 0
    %275 = vmatprep.subr.bf16.mxu0 0
    %276 = vmatpush1.bf16.msra.mxu0 0
    %277 = vmatprep.subr.bf16.mxu0 0
    %278 = vmatpush1.bf16.msra.mxu0 0
    %279 = vmatprep.subr.bf16.mxu0 0
    %280 = vmatpush1.bf16.msra.mxu0 0
    %281 = vmatprep.subr.bf16.mxu0 0
    %282 = vmatpush1.bf16.msra.mxu0 0
    %283 = vmatprep.subr.bf16.mxu0 0
    %284 = vmatpush1.bf16.msra.mxu0 0
    %285 = vmatprep.subr.bf16.mxu0 0
    %286 = vmatpush1.bf16.msra.mxu0 0
    %287 = vmatprep.subr.bf16.mxu0 0
    %288 = vmatpush1.bf16.msra.mxu0 0
    %289 = vmatprep.subr.bf16.mxu0 0
    %290 = vmatpush1.bf16.msra.mxu0 %v273
    %291 = vmatprep.subr.bf16.mxu0 0
    %292 = vmatpush2.bf16.msra.mxu0 0
    %293 = vmatprep.subr.bf16.mxu0 0
    %294 = vmatpush2.bf16.msra.mxu0 0
    %295 = vmatprep.subr.bf16.mxu0 0
    %296 = vmatpush2.bf16.msra.mxu0 0
    %297 = vmatprep.subr.bf16.mxu0 0
    %298 = vmatpush2.bf16.msra.mxu0 0
    %299 = vmatprep.subr.bf16.mxu0 0
    %300 = vmatpush2.bf16.msra.mxu0 0
    %301 = vmatprep.subr.bf16.mxu0 0
    %302 = vmatpush2.bf16.msra.mxu0 0
    %303 = vmatprep.subr.bf16.mxu0 0
    %304 = vmatpush2.bf16.msra.mxu0 0
    %305 = vmatprep.subr.bf16.mxu0 0
    %306 = vmatpush2.bf16.msra.mxu0 0
    %307 = vmatprep.mubr.bf16.mxu0 0
    %308 = vmatmul.mubr.bf16.gmra.mxu0 %v269
    %v309 = vpop.f32.mrf.mxu0
    %v310 = vadd.f32 %v256, %v309
    %v311 = vpop.f32.mrf.mxu0
    %v312 = vpop.f32.mrf.mxu0
    %v313 = vadd.f32 %v261, %v312
    %v314 = vpop.f32.mrf.mxu0
    %315 = vdwg.mxu0
    %v316 = vpack.c.bf16 %v313, %v310
    %v319 = vunpack.c.l.b16 %v141
    %v320 = vunpack.c.l.b16 %v142
    %v321 = vpack.c.b16 %v320, %v319
    %vm322 = vcmask 130048
    %v324 = vsel %vm322, %v321, 0
    %326 = vmatprep.subr.bf16.mxu0 0
    %327 = vmatpush1.bf16.msra.mxu0 0
    %328 = vmatprep.subr.bf16.mxu0 0
    %329 = vmatpush1.bf16.msra.mxu0 0
    %330 = vmatprep.subr.bf16.mxu0 0
    %331 = vmatpush1.bf16.msra.mxu0 0
    %332 = vmatprep.subr.bf16.mxu0 0
    %333 = vmatpush1.bf16.msra.mxu0 0
    %334 = vmatprep.subr.bf16.mxu0 0
    %335 = vmatpush1.bf16.msra.mxu0 0
    %336 = vmatprep.subr.bf16.mxu0 0
    %337 = vmatpush1.bf16.msra.mxu0 0
    %338 = vmatprep.subr.bf16.mxu0 0
    %339 = vmatpush1.bf16.msra.mxu0 0
    %340 = vmatprep.subr.bf16.mxu0 0
    %341 = vmatpush1.bf16.msra.mxu0 %v316
    %342 = vmatprep.subr.bf16.mxu0 0
    %343 = vmatpush2.bf16.msra.mxu0 0
    %344 = vmatprep.subr.bf16.mxu0 0
    %345 = vmatpush2.bf16.msra.mxu0 0
    %346 = vmatprep.subr.bf16.mxu0 0
    %347 = vmatpush2.bf16.msra.mxu0 0
    %348 = vmatprep.subr.bf16.mxu0 0
    %349 = vmatpush2.bf16.msra.mxu0 0
    %350 = vmatprep.subr.bf16.mxu0 0
    %351 = vmatpush2.bf16.msra.mxu0 0
    %352 = vmatprep.subr.bf16.mxu0 0
    %353 = vmatpush2.bf16.msra.mxu0 0
    %354 = vmatprep.subr.bf16.mxu0 0
    %355 = vmatpush2.bf16.msra.mxu0 0
    %356 = vmatprep.subr.bf16.mxu0 0
    %357 = vmatpush2.bf16.msra.mxu0 0
    %358 = vmatprep.mubr.bf16.mxu0 0
    %359 = vmatmul.mubr.bf16.gmra.mxu0 %v324
    %v360 = vpop.f32.mrf.mxu0
    %v361 = vadd.f32 0.0, %v360
    %v362 = vpop.f32.mrf.mxu0
    %v363 = vpop.f32.mrf.mxu0
    %v364 = vadd.f32 0.0, %v363
    %v365 = vpop.f32.mrf.mxu0
    %366 = vdwg.mxu0
    %368 = vrot.lane.b32.xlu0 %v364, 16
    %v369 = vpop.permute.xlu0 %368
    %v371 = vsel %vm322, %v361, %v369
    %372 = vst.msk [vmem:[#allocation3 + $0x8] sm:$0xff] %vm150, %v371
    %v373 = vld [vmem:[#allocation3 + $0x3] sm:$0xff]
    %v374 = vld [vmem:[#allocation3 + $0x4] sm:$0xff]
    %v375 = vld [vmem:[#allocation3 + $0x5] sm:$0xff]
    %v376 = vld [vmem:[#allocation3 + $0x6] sm:$0xff]
    %v377 = vld [vmem:[#allocation3 + $0x7] sm:$0xff]
    %v378 = vld [vmem:[#allocation3 + $0x8] sm:$0xff]
    %v379 = vld [vmem:[#allocation3 + $0x9] sm:$0xff]
    %v380 = vld [vmem:[#allocation3 + $0xa] sm:$0xff]
    %v381 = vld [vmem:[#allocation3 + $0xb] sm:$0xff]
    %v382 = vld [vmem:[#allocation3 + $0xc] sm:$0xff]
    %v383 = vld [vmem:[#allocation3 + $0xd] sm:$0xff]
    %385 = vrot.lane.b32.xlu0 %v374, 32
    %v386 = vpop.permute.xlu0 %385
    %389 = vrot.lane.b32.xlu0 %v375, 64
    %v390 = vpop.permute.xlu0 %389
    %393 = vrot.lane.b32.xlu0 %v376, 96
    %v394 = vpop.permute.xlu0 %393
    %397 = vrot.lane.b32.xlu0 %v378, 32
    %v398 = vpop.permute.xlu0 %397
    %401 = vrot.lane.b32.xlu0 %v379, 64
    %v402 = vpop.permute.xlu0 %401
    %405 = vrot.lane.b32.xlu0 %v380, 96
    %v406 = vpop.permute.xlu0 %405
    %409 = vrot.lane.b32.xlu0 %v382, 32
    %v410 = vpop.permute.xlu0 %409
    %413 = vrot.lane.b32.xlu0 %v383, 64
    %v414 = vpop.permute.xlu0 %413
    %v416 = vsel %vm150, %v373, %v386
    %vm417 = vcmask 523264
    %v418 = vsel %vm417, %v416, %v390
    %vm419 = vcmask 785408
    %v420 = vsel %vm419, %v418, %v394
    %v421 = vsel %vm150, %v377, %v398
    %v422 = vsel %vm417, %v421, %v402
    %v423 = vsel %vm419, %v422, %v406
    %v424 = vsel %vm150, %v381, %v410
    %v425 = vsel %vm417, %v424, %v414
    %v426 = vpack.c.bf16 %v420, %v420
    %v427 = vpack.c.bf16 %v423, %v423
    %v428 = vpack.c.bf16 %v425, %v425
    %v429 = vld [vmem:[#allocation10] sm:$0xf]
    %v430 = vld [vmem:[#allocation10 + $0x4] sm:$0xf]
    %v431 = vld [vmem:[#allocation10 + $0x8] sm:$0xf]
    %v432 = vld [vmem:[#allocation10 + $0xc] sm:$0xf]
    %v433 = vld [vmem:[#allocation10 + $0x10] sm:$0xf]
    %v434 = vld [vmem:[#allocation10 + $0x14] sm:$0xf]
    %v435 = vld [vmem:[#allocation10 + $0x18] sm:$0xf]
    %v436 = vld [vmem:[#allocation10 + $0x1c] sm:$0xf]
    %v437 = vld [vmem:[#allocation10 + $0x20] sm:$0xf]
    %v438 = vld [vmem:[#allocation10 + $0x24] sm:$0xf]
    %v439 = vld [vmem:[#allocation10 + $0x28] sm:$0xf]
    %v440 = vld [vmem:[#allocation10 + $0x2c] sm:$0xf]
    %v441 = vld [vmem:[#allocation10 + $0x30] sm:$0xf]
    %v442 = vld [vmem:[#allocation10 + $0x34] sm:$0xf]
    %v443 = vld [vmem:[#allocation10 + $0x38] sm:$0xf]
    %v444 = vld [vmem:[#allocation10 + $0x3c] sm:$0xf]
    %v445 = vld [vmem:[#allocation10 + $0x40] sm:$0xf]
    %v446 = vld [vmem:[#allocation10 + $0x44] sm:$0xf]
    %v447 = vld [vmem:[#allocation10 + $0x48] sm:$0xf]
    %v448 = vld [vmem:[#allocation10 + $0x4c] sm:$0xf]
    %v449 = vld [vmem:[#allocation10 + $0x50] sm:$0xf]
    %v450 = vld [vmem:[#allocation10 + $0x54] sm:$0xf]
    %v451 = vld [vmem:[#allocation10 + $0x58] sm:$0xf]
    %v452 = vld [vmem:[#allocation10 + $0x5c] sm:$0xf]
    %v453 = vld [vmem:[#allocation10 + $0x60] sm:$0xf]
    %v454 = vld [vmem:[#allocation10 + $0x64] sm:$0xf]
    %v455 = vld [vmem:[#allocation10 + $0x68] sm:$0xf]
    %v456 = vld [vmem:[#allocation10 + $0x6c] sm:$0xf]
    %v457 = vld [vmem:[#allocation10 + $0x70] sm:$0xf]
    %v458 = vld [vmem:[#allocation10 + $0x74] sm:$0xf]
    %v459 = vld [vmem:[#allocation10 + $0x78] sm:$0xf]
    %v460 = vld [vmem:[#allocation10 + $0x7c] sm:$0xf]
    %v461 = vld [vmem:[#allocation10 + $0x80] sm:$0xf]
    %v462 = vld [vmem:[#allocation10 + $0x84] sm:$0xf]
    %v463 = vld [vmem:[#allocation10 + $0x88] sm:$0xf]
    %v464 = vld [vmem:[#allocation10 + $0x8c] sm:$0xf]
    %v465 = vld [vmem:[#allocation10 + $0x90] sm:$0xf]
    %v466 = vld [vmem:[#allocation10 + $0x94] sm:$0xf]
    %v467 = vld [vmem:[#allocation10 + $0x98] sm:$0xf]
    %v468 = vld [vmem:[#allocation10 + $0x9c] sm:$0xf]
    %v469 = vld [vmem:[#allocation10 + $0xa0] sm:$0xf]
    %v470 = vld [vmem:[#allocation10 + $0xa4] sm:$0xf]
    %v471 = vld [vmem:[#allocation10 + $0xa8] sm:$0xf]
    %v472 = vld [vmem:[#allocation10 + $0xac] sm:$0xf]
    %v473 = vld [vmem:[#allocation12] sm:$0x1]
    %v475 = vlaneseq
    %v476 = vshrl.u32 %v475, 7
    %v477 = vsub.s32 0, %v476
    %v478 = vrot.slane %v473, %v477
    %v524 = vunpack.c.l.b16 %v429
    %v525 = vunpack.c.l.b16 %v430
    %v526 = vunpack.c.l.b16 %v431
    %v527 = vunpack.c.l.b16 %v432
    %v528 = vunpack.c.l.b16 %v433
    %v529 = vunpack.c.l.b16 %v434
    %v530 = vunpack.c.l.b16 %v435
    %v531 = vunpack.c.l.b16 %v436
    %v532 = vunpack.c.l.b16 %v437
    %v533 = vunpack.c.l.b16 %v438
    %v534 = vunpack.c.l.b16 %v439
    %v535 = vunpack.c.l.b16 %v440
    %v536 = vunpack.c.l.b16 %v441
    %v537 = vunpack.c.l.b16 %v442
    %v538 = vunpack.c.l.b16 %v443
    %v539 = vunpack.c.l.b16 %v444
    %v540 = vunpack.c.l.b16 %v445
    %v541 = vunpack.c.l.b16 %v446
    %v542 = vunpack.c.l.b16 %v447
    %v543 = vunpack.c.l.b16 %v448
    %v544 = vunpack.c.l.b16 %v449
    %v545 = vunpack.c.l.b16 %v450
    %v546 = vunpack.c.l.b16 %v451
    %v547 = vunpack.c.l.b16 %v452
    %v548 = vunpack.c.l.b16 %v453
    %v549 = vunpack.c.l.b16 %v454
    %v550 = vunpack.c.l.b16 %v455
    %v551 = vunpack.c.l.b16 %v456
    %v552 = vunpack.c.l.b16 %v457
    %v553 = vunpack.c.l.b16 %v458
    %v554 = vunpack.c.l.b16 %v459
    %v555 = vunpack.c.l.b16 %v460
    %v556 = vunpack.c.l.b16 %v461
    %v557 = vunpack.c.l.b16 %v462
    %v558 = vunpack.c.l.b16 %v463
    %v559 = vunpack.c.l.b16 %v464
    %v560 = vunpack.c.l.b16 %v465
    %v561 = vunpack.c.l.b16 %v466
    %v562 = vunpack.c.l.b16 %v467
    %v563 = vunpack.c.l.b16 %v468
    %v564 = vunpack.c.l.b16 %v469
    %v565 = vunpack.c.l.b16 %v470
    %v566 = vunpack.c.l.b16 %v471
    %v567 = vunpack.c.l.b16 %v472
    %v568 = vpack.c.b16 %v525, %v524
    %v569 = vpack.c.b16 %v527, %v526
    %v570 = vpack.c.b16 %v529, %v528
    %v571 = vpack.c.b16 %v531, %v530
    %v572 = vpack.c.b16 %v533, %v532
    %v573 = vpack.c.b16 %v535, %v534
    %v574 = vpack.c.b16 %v537, %v536
    %v575 = vpack.c.b16 %v539, %v538
    %v576 = vpack.c.b16 %v541, %v540
    %v577 = vpack.c.b16 %v543, %v542
    %v578 = vpack.c.b16 %v545, %v544
    %v579 = vpack.c.b16 %v547, %v546
    %v580 = vpack.c.b16 %v549, %v548
    %v581 = vpack.c.b16 %v551, %v550
    %v582 = vpack.c.b16 %v553, %v552
    %v583 = vpack.c.b16 %v555, %v554
    %v584 = vpack.c.b16 %v557, %v556
    %v585 = vpack.c.b16 %v559, %v558
    %v586 = vpack.c.b16 %v561, %v560
    %v587 = vpack.c.b16 %v563, %v562
    %v588 = vpack.c.b16 %v565, %v564
    %v589 = vpack.c.b16 %v567, %v566
    %v613 = vsel %vm419, %v428, 0
    %615 = vmatprep.subr.bf16.mxu0 0
    %616 = vmatpush1.bf16.msra.mxu0 %v575
    %617 = vmatprep.subr.bf16.mxu0 0
    %618 = vmatpush1.bf16.msra.mxu0 %v574
    %619 = vmatprep.subr.bf16.mxu0 0
    %620 = vmatpush1.bf16.msra.mxu0 %v573
    %621 = vmatprep.subr.bf16.mxu0 0
    %622 = vmatpush1.bf16.msra.mxu0 %v572
    %623 = vmatprep.subr.bf16.mxu0 0
    %624 = vmatpush1.bf16.msra.mxu0 %v571
    %625 = vmatprep.subr.bf16.mxu0 0
    %626 = vmatpush1.bf16.msra.mxu0 %v570
    %627 = vmatprep.subr.bf16.mxu0 0
    %628 = vmatpush1.bf16.msra.mxu0 %v569
    %629 = vmatprep.subr.bf16.mxu0 0
    %630 = vmatpush1.bf16.msra.mxu0 %v568
    %631 = vmatprep.subr.bf16.mxu0 0
    %632 = vmatpush2.bf16.msra.mxu0 %v583
    %633 = vmatprep.subr.bf16.mxu0 0
    %634 = vmatpush2.bf16.msra.mxu0 %v582
    %635 = vmatprep.subr.bf16.mxu0 0
    %636 = vmatpush2.bf16.msra.mxu0 %v581
    %637 = vmatprep.subr.bf16.mxu0 0
    %638 = vmatpush2.bf16.msra.mxu0 %v580
    %639 = vmatprep.subr.bf16.mxu0 0
    %640 = vmatpush2.bf16.msra.mxu0 %v579
    %641 = vmatprep.subr.bf16.mxu0 0
    %642 = vmatpush2.bf16.msra.mxu0 %v578
    %643 = vmatprep.subr.bf16.mxu0 0
    %644 = vmatpush2.bf16.msra.mxu0 %v577
    %645 = vmatprep.subr.bf16.mxu0 0
    %646 = vmatpush2.bf16.msra.mxu0 %v576
    %647 = vmatprep.mubr.bf16.mxu0 %v427
    %648 = vmatmul.mubr.bf16.gmra.mxu0 %v426
    %v649 = vpop.f32.mrf.mxu0
    %v650 = vadd.f32 %v478, %v649
    %v651 = vpop.f32.mrf.mxu0
    %v652 = vpop.f32.mrf.mxu0
    %v653 = vpop.f32.mrf.mxu0
    %654 = vdwg.mxu0
    %655 = vmatprep.subr.bf16.mxu0 0
    %656 = vmatpush1.bf16.msra.mxu0 0
    %657 = vmatprep.subr.bf16.mxu0 0
    %658 = vmatpush1.bf16.msra.mxu0 0
    %659 = vmatprep.subr.bf16.mxu0 0
    %660 = vmatpush1.bf16.msra.mxu0 %v589
    %661 = vmatprep.subr.bf16.mxu0 0
    %662 = vmatpush1.bf16.msra.mxu0 %v588
    %663 = vmatprep.subr.bf16.mxu0 0
    %664 = vmatpush1.bf16.msra.mxu0 %v587
    %665 = vmatprep.subr.bf16.mxu0 0
    %666 = vmatpush1.bf16.msra.mxu0 %v586
    %667 = vmatprep.subr.bf16.mxu0 0
    %668 = vmatpush1.bf16.msra.mxu0 %v585
    %669 = vmatprep.subr.bf16.mxu0 0
    %670 = vmatpush1.bf16.msra.mxu0 %v584
    %671 = vmatprep.subr.bf16.mxu0 0
    %672 = vmatpush2.bf16.msra.mxu0 0
    %673 = vmatprep.subr.bf16.mxu0 0
    %674 = vmatpush2.bf16.msra.mxu0 0
    %675 = vmatprep.subr.bf16.mxu0 0
    %676 = vmatpush2.bf16.msra.mxu0 0
    %677 = vmatprep.subr.bf16.mxu0 0
    %678 = vmatpush2.bf16.msra.mxu0 0
    %679 = vmatprep.subr.bf16.mxu0 0
    %680 = vmatpush2.bf16.msra.mxu0 0
    %681 = vmatprep.subr.bf16.mxu0 0
    %682 = vmatpush2.bf16.msra.mxu0 0
    %683 = vmatprep.subr.bf16.mxu0 0
    %684 = vmatpush2.bf16.msra.mxu0 0
    %685 = vmatprep.subr.bf16.mxu0 0
    %686 = vmatpush2.bf16.msra.mxu0 0
    %687 = vmatprep.mubr.bf16.mxu0 0
    %688 = vmatmul.mubr.bf16.gmra.mxu0 %v613
    %v689 = vpop.f32.mrf.mxu0
    %v690 = vadd.f32 %v650, %v689
    %v691 = vpop.f32.mrf.mxu0
    %v692 = vpop.f32.mrf.mxu0
    %v693 = vpop.f32.mrf.mxu0
    %694 = vdwg.mxu0
    %v695 = vmul.f32 %v690, 0.5
    %v696 = vmul.f32 %v690, 0.70710677
    %v697 = vand.u32 2147483647, %v696
    %v698 = vmul.f32 %v697, 0.3275911
    %v699 = vadd.f32 %v698, 1.0
    %v700 = vrcp.pop %v699
    %v701 = vmul.f32 1.0, %v700
    %v702 = vmul.f32 %v701, 1.0614054
    %v703 = vadd.f32 %v702, -1.4531521
    %v704 = vmul.f32 %v703, %v701
    %v705 = vadd.f32 %v704, 1.4214138
    %v706 = vmul.f32 %v705, %v701
    %v707 = vadd.f32 %v706, -0.28449672
    %v708 = vmul.f32 %v707, %v701
    %v709 = vadd.f32 %v708, 0.2548296
    %v710 = vmul.f32 %v709, %v701
    %v711 = vsub.f32 0.0, %v697
    %v712 = vmul.f32 %v711, %v697
    %v713 = vmul.f32 %v712, 1.442695
    %v714 = vpow.pop %v713
    %v715 = vmul.f32 %v710, %v714
    %v716 = vsub.f32 1.0, %v715
    %vm717 = vcmp.ge.f32.partialorder %v696, 0.0
    %v718 = vsub.f32 0.0, %v716
    %v719 = vsel %vm717, %v716, %v718
    %v720 = vadd.f32 %v719, 1.0
    %v721 = vmul.f32 %v695, %v720
    %722 = vst [vmem:[#allocation4 + $0x8] sm:$0xff] %v721
    %v723 = vld [vmem:[#allocation4 + $0x3] sm:$0xff]
    %v724 = vld [vmem:[#allocation4 + $0x4] sm:$0xff]
    %v725 = vld [vmem:[#allocation4 + $0x5] sm:$0xff]
    %v726 = vld [vmem:[#allocation4 + $0x6] sm:$0xff]
    %v727 = vld [vmem:[#allocation4 + $0x7] sm:$0xff]
    %v728 = vld [vmem:[#allocation4 + $0x8] sm:$0xff]
    %v729 = vld [vmem:[#allocation4 + $0x9] sm:$0xff]
    %v730 = vld [vmem:[#allocation4 + $0xa] sm:$0xff]
    %v731 = vld [vmem:[#allocation4 + $0xb] sm:$0xff]
    %v732 = vld [vmem:[#allocation4 + $0xc] sm:$0xff]
    %v733 = vld [vmem:[#allocation4 + $0xd] sm:$0xff]
    %v734 = vpack.c.bf16 %v723, %v723
    %v735 = vpack.c.bf16 %v724, %v724
    %v736 = vpack.c.bf16 %v725, %v725
    %v737 = vpack.c.bf16 %v726, %v726
    %v738 = vpack.c.bf16 %v727, %v727
    %v739 = vpack.c.bf16 %v728, %v728
    %v740 = vpack.c.bf16 %v729, %v729
    %v741 = vpack.c.bf16 %v730, %v730
    %v742 = vpack.c.bf16 %v731, %v731
    %v743 = vpack.c.bf16 %v732, %v732
    %v744 = vpack.c.bf16 %v733, %v733
    %v745 = vld [vmem:[#allocation13] sm:$0xf]
    %v746 = vld [vmem:[#allocation13 + $0x4] sm:$0xf]
    %v747 = vld [vmem:[#allocation13 + $0x8] sm:$0xf]
    %v748 = vld [vmem:[#allocation13 + $0xc] sm:$0xf]
    %v749 = vld [vmem:[#allocation13 + $0x10] sm:$0xf]
    %v750 = vld [vmem:[#allocation13 + $0x14] sm:$0xf]
    %v751 = vld [vmem:[#allocation13 + $0x18] sm:$0xf]
    %v752 = vld [vmem:[#allocation13 + $0x1c] sm:$0xf]
    %v753 = vld [vmem:[#allocation13 + $0x20] sm:$0xf]
    %v754 = vld [vmem:[#allocation13 + $0x24] sm:$0xf]
    %v755 = vld [vmem:[#allocation13 + $0x28] sm:$0xf]
    %v756 = vld [vmem:[#allocation13 + $0x2c] sm:$0xf]
    %v757 = vld [vmem:[#allocation13 + $0x30] sm:$0xf]
    %v758 = vld [vmem:[#allocation13 + $0x34] sm:$0xf]
    %v759 = vld [vmem:[#allocation13 + $0x38] sm:$0xf]
    %v760 = vld [vmem:[#allocation13 + $0x3c] sm:$0xf]
    %v761 = vld [vmem:[#allocation13 + $0x40] sm:$0xf]
    %v762 = vld [vmem:[#allocation13 + $0x44] sm:$0xf]
    %v763 = vld [vmem:[#allocation13 + $0x48] sm:$0xf]
    %v764 = vld [vmem:[#allocation13 + $0x4c] sm:$0xf]
    %v765 = vld [vmem:[#allocation13 + $0x50] sm:$0xf]
    %v766 = vld [vmem:[#allocation13 + $0x54] sm:$0xf]
    %v767 = vld [vmem:[#allocation13 + $0x58] sm:$0xf]
    %v768 = vld [vmem:[#allocation13 + $0x5c] sm:$0xf]
    %v769 = vld [vmem:[#allocation13 + $0x60] sm:$0xf]
    %v770 = vld [vmem:[#allocation13 + $0x64] sm:$0xf]
    %v771 = vld [vmem:[#allocation13 + $0x68] sm:$0xf]
    %v772 = vld [vmem:[#allocation13 + $0x6c] sm:$0xf]
    %v773 = vld [vmem:[#allocation13 + $0x70] sm:$0xf]
    %v774 = vld [vmem:[#allocation13 + $0x74] sm:$0xf]
    %v775 = vld [vmem:[#allocation13 + $0x78] sm:$0xf]
    %v776 = vld [vmem:[#allocation13 + $0x7c] sm:$0xf]
    %v777 = vld [vmem:[#allocation13 + $0x80] sm:$0xf]
    %v778 = vld [vmem:[#allocation13 + $0x84] sm:$0xf]
    %v779 = vld [vmem:[#allocation13 + $0x88] sm:$0xf]
    %v780 = vld [vmem:[#allocation13 + $0x8c] sm:$0xf]
    %v781 = vld [vmem:[#allocation13 + $0x90] sm:$0xf]
    %v782 = vld [vmem:[#allocation13 + $0x94] sm:$0xf]
    %v783 = vld [vmem:[#allocation13 + $0x98] sm:$0xf]
    %v784 = vld [vmem:[#allocation13 + $0x9c] sm:$0xf]
    %v785 = vld [vmem:[#allocation13 + $0xa0] sm:$0xf]
    %v786 = vld [vmem:[#allocation13 + $0xa4] sm:$0xf]
    %v787 = vld [vmem:[#allocation13 + $0xa8] sm:$0xf]
    %v788 = vld [vmem:[#allocation13 + $0xac] sm:$0xf]
    %v789 = vld [vmem:[#allocation13 + $0xb0] sm:$0xf]
    %v790 = vld [vmem:[#allocation13 + $0xb4] sm:$0xf]
    %v791 = vld [vmem:[#allocation13 + $0xb8] sm:$0xf]
    %v792 = vld [vmem:[#allocation13 + $0xbc] sm:$0xf]
    %v793 = vld [vmem:[#allocation13 + $0xc0] sm:$0xf]
    %v794 = vld [vmem:[#allocation13 + $0xc4] sm:$0xf]
    %v795 = vld [vmem:[#allocation13 + $0xc8] sm:$0xf]
    %v796 = vld [vmem:[#allocation13 + $0xcc] sm:$0xf]
    %v797 = vld [vmem:[#allocation13 + $0xd0] sm:$0xf]
    %v798 = vld [vmem:[#allocation13 + $0xd4] sm:$0xf]
    %v799 = vld [vmem:[#allocation13 + $0xd8] sm:$0xf]
    %v800 = vld [vmem:[#allocation13 + $0xdc] sm:$0xf]
    %v801 = vld [vmem:[#allocation13 + $0xe0] sm:$0xf]
    %v802 = vld [vmem:[#allocation13 + $0xe4] sm:$0xf]
    %v803 = vld [vmem:[#allocation13 + $0xe8] sm:$0xf]
    %v804 = vld [vmem:[#allocation13 + $0xec] sm:$0xf]
    %v805 = vld [vmem:[#allocation13 + $0xf0] sm:$0xf]
    %v806 = vld [vmem:[#allocation13 + $0xf4] sm:$0xf]
    %v807 = vld [vmem:[#allocation13 + $0xf8] sm:$0xf]
    %v808 = vld [vmem:[#allocation13 + $0xfc] sm:$0xf]
    %v809 = vld [vmem:[#allocation13 + $0x100] sm:$0xf]
    %v810 = vld [vmem:[#allocation13 + $0x104] sm:$0xf]
    %v811 = vld [vmem:[#allocation13 + $0x108] sm:$0xf]
    %v812 = vld [vmem:[#allocation13 + $0x10c] sm:$0xf]
    %v813 = vld [vmem:[#allocation13 + $0x110] sm:$0xf]
    %v814 = vld [vmem:[#allocation13 + $0x114] sm:$0xf]
    %v815 = vld [vmem:[#allocation13 + $0x118] sm:$0xf]
    %v816 = vld [vmem:[#allocation13 + $0x11c] sm:$0xf]
    %v817 = vld [vmem:[#allocation13 + $0x120] sm:$0xf]
    %v818 = vld [vmem:[#allocation13 + $0x124] sm:$0xf]
    %v819 = vld [vmem:[#allocation13 + $0x128] sm:$0xf]
    %v820 = vld [vmem:[#allocation13 + $0x12c] sm:$0xf]
    %v821 = vld [vmem:[#allocation13 + $0x130] sm:$0xf]
    %v822 = vld [vmem:[#allocation13 + $0x134] sm:$0xf]
    %v823 = vld [vmem:[#allocation13 + $0x138] sm:$0xf]
    %v824 = vld [vmem:[#allocation13 + $0x13c] sm:$0xf]
    %v825 = vld [vmem:[#allocation13 + $0x140] sm:$0xf]
    %v826 = vld [vmem:[#allocation13 + $0x144] sm:$0xf]
    %v827 = vld [vmem:[#allocation13 + $0x148] sm:$0xf]
    %v828 = vld [vmem:[#allocation13 + $0x14c] sm:$0xf]
    %v829 = vld [vmem:[#allocation13 + $0x150] sm:$0xf]
    %v830 = vld [vmem:[#allocation13 + $0x154] sm:$0xf]
    %v831 = vld [vmem:[#allocation13 + $0x158] sm:$0xf]
    %v832 = vld [vmem:[#allocation13 + $0x15c] sm:$0xf]
    %v833 = vld [vmem:[#allocation13 + $0x160] sm:$0xf]
    %v834 = vld [vmem:[#allocation13 + $0x164] sm:$0xf]
    %v835 = vld [vmem:[#allocation13 + $0x168] sm:$0xf]
    %v836 = vld [vmem:[#allocation13 + $0x16c] sm:$0xf]
    %v837 = vld [vmem:[#allocation13 + $0x170] sm:$0xf]
    %v838 = vld [vmem:[#allocation13 + $0x174] sm:$0xf]
    %v839 = vld [vmem:[#allocation13 + $0x178] sm:$0xf]
    %v840 = vld [vmem:[#allocation13 + $0x17c] sm:$0xf]
    %v841 = vld [vmem:[#allocation13 + $0x180] sm:$0xf]
    %v842 = vld [vmem:[#allocation13 + $0x184] sm:$0xf]
    %v843 = vld [vmem:[#allocation13 + $0x188] sm:$0xf]
    %v844 = vld [vmem:[#allocation13 + $0x18c] sm:$0xf]
    %v845 = vld [vmem:[#allocation13 + $0x190] sm:$0xf]
    %v846 = vld [vmem:[#allocation13 + $0x194] sm:$0xf]
    %v847 = vld [vmem:[#allocation13 + $0x198] sm:$0xf]
    %v848 = vld [vmem:[#allocation13 + $0x19c] sm:$0xf]
    %v849 = vld [vmem:[#allocation13 + $0x1a0] sm:$0xf]
    %v850 = vld [vmem:[#allocation13 + $0x1a4] sm:$0xf]
    %v851 = vld [vmem:[#allocation13 + $0x1a8] sm:$0xf]
    %v852 = vld [vmem:[#allocation13 + $0x1ac] sm:$0xf]
    %v853 = vld [vmem:[#allocation13 + $0x1b0] sm:$0xf]
    %v854 = vld [vmem:[#allocation13 + $0x1b4] sm:$0xf]
    %v855 = vld [vmem:[#allocation13 + $0x1b8] sm:$0xf]
    %v856 = vld [vmem:[#allocation13 + $0x1bc] sm:$0xf]
    %v857 = vld [vmem:[#allocation13 + $0x1c0] sm:$0xf]
    %v858 = vld [vmem:[#allocation13 + $0x1c4] sm:$0xf]
    %v859 = vld [vmem:[#allocation13 + $0x1c8] sm:$0xf]
    %v860 = vld [vmem:[#allocation13 + $0x1cc] sm:$0xf]
    %v861 = vld [vmem:[#allocation13 + $0x1d0] sm:$0xf]
    %v862 = vld [vmem:[#allocation13 + $0x1d4] sm:$0xf]
    %v863 = vld [vmem:[#allocation13 + $0x1d8] sm:$0xf]
    %v864 = vld [vmem:[#allocation13 + $0x1dc] sm:$0xf]
    %v865 = vld [vmem:[#allocation13 + $0x1e0] sm:$0xf]
    %v866 = vld [vmem:[#allocation13 + $0x1e4] sm:$0xf]
    %v867 = vld [vmem:[#allocation13 + $0x1e8] sm:$0xf]
    %v868 = vld [vmem:[#allocation13 + $0x1ec] sm:$0xf]
    %v869 = vld [vmem:[#allocation13 + $0x1f0] sm:$0xf]
    %v870 = vld [vmem:[#allocation13 + $0x1f4] sm:$0xf]
    %v871 = vld [vmem:[#allocation13 + $0x1f8] sm:$0xf]
    %v872 = vld [vmem:[#allocation13 + $0x1fc] sm:$0xf]
    %v873 = vld [vmem:[#allocation13 + $0x200] sm:$0xf]
    %v874 = vld [vmem:[#allocation13 + $0x204] sm:$0xf]
    %v875 = vld [vmem:[#allocation13 + $0x208] sm:$0xf]
    %v876 = vld [vmem:[#allocation13 + $0x20c] sm:$0xf]
    %v877 = vld [vmem:[#allocation13 + $0x210] sm:$0xf]
    %v878 = vld [vmem:[#allocation13 + $0x214] sm:$0xf]
    %v879 = vld [vmem:[#allocation13 + $0x218] sm:$0xf]
    %v880 = vld [vmem:[#allocation13 + $0x21c] sm:$0xf]
    %v881 = vld [vmem:[#allocation13 + $0x220] sm:$0xf]
    %v882 = vld [vmem:[#allocation13 + $0x224] sm:$0xf]
    %v883 = vld [vmem:[#allocation13 + $0x228] sm:$0xf]
    %v884 = vld [vmem:[#allocation13 + $0x22c] sm:$0xf]
    %v885 = vld [vmem:[#allocation13 + $0x230] sm:$0xf]
    %v886 = vld [vmem:[#allocation13 + $0x234] sm:$0xf]
    %v887 = vld [vmem:[#allocation13 + $0x238] sm:$0xf]
    %v888 = vld [vmem:[#allocation13 + $0x23c] sm:$0xf]
    %v889 = vld [vmem:[#allocation13 + $0x240] sm:$0xf]
    %v890 = vld [vmem:[#allocation13 + $0x244] sm:$0xf]
    %v891 = vld [vmem:[#allocation13 + $0x248] sm:$0xf]
    %v892 = vld [vmem:[#allocation13 + $0x24c] sm:$0xf]
    %v893 = vld [vmem:[#allocation13 + $0x250] sm:$0xf]
    %v894 = vld [vmem:[#allocation13 + $0x254] sm:$0xf]
    %v895 = vld [vmem:[#allocation13 + $0x258] sm:$0xf]
    %v896 = vld [vmem:[#allocation13 + $0x25c] sm:$0xf]
    %v897 = vld [vmem:[#allocation13 + $0x260] sm:$0xf]
    %v898 = vld [vmem:[#allocation13 + $0x264] sm:$0xf]
    %v899 = vld [vmem:[#allocation13 + $0x268] sm:$0xf]
    %v900 = vld [vmem:[#allocation13 + $0x26c] sm:$0xf]
    %v901 = vld [vmem:[#allocation13 + $0x270] sm:$0xf]
    %v902 = vld [vmem:[#allocation13 + $0x274] sm:$0xf]
    %v903 = vld [vmem:[#allocation13 + $0x278] sm:$0xf]
    %v904 = vld [vmem:[#allocation13 + $0x27c] sm:$0xf]
    %v905 = vld [vmem:[#allocation13 + $0x280] sm:$0xf]
    %v906 = vld [vmem:[#allocation13 + $0x284] sm:$0xf]
    %v907 = vld [vmem:[#allocation13 + $0x288] sm:$0xf]
    %v908 = vld [vmem:[#allocation13 + $0x28c] sm:$0xf]
    %v909 = vld [vmem:[#allocation13 + $0x290] sm:$0xf]
    %v910 = vld [vmem:[#allocation13 + $0x294] sm:$0xf]
    %v911 = vld [vmem:[#allocation13 + $0x298] sm:$0xf]
    %v912 = vld [vmem:[#allocation13 + $0x29c] sm:$0xf]
    %v913 = vld [vmem:[#allocation13 + $0x2a0] sm:$0xf]
    %v914 = vld [vmem:[#allocation13 + $0x2a4] sm:$0xf]
    %v915 = vld [vmem:[#allocation13 + $0x2a8] sm:$0xf]
    %v916 = vld [vmem:[#allocation13 + $0x2ac] sm:$0xf]
    %v917 = vld [vmem:[#allocation13 + $0x2b0] sm:$0xf]
    %v918 = vld [vmem:[#allocation13 + $0x2b4] sm:$0xf]
    %v919 = vld [vmem:[#allocation13 + $0x2b8] sm:$0xf]
    %v920 = vld [vmem:[#allocation13 + $0x2bc] sm:$0xf]
    %v921 = vld [vmem:[%s9] sm:$0x1]
    %v923 = vlaneseq
    %v924 = vshrl.u32 %v923, 7
    %v925 = vsub.s32 0, %v924
    %v926 = vrot.slane %v921, %v925
    %v1104 = vunpack.c.l.b16 %v745
    %v1105 = vunpack.c.l.b16 %v746
    %v1106 = vunpack.c.l.b16 %v747
    %v1107 = vunpack.c.l.b16 %v748
    %v1108 = vunpack.c.l.b16 %v749
    %v1109 = vunpack.c.l.b16 %v750
    %v1110 = vunpack.c.l.b16 %v751
    %v1111 = vunpack.c.l.b16 %v752
    %v1112 = vunpack.c.l.b16 %v753
    %v1113 = vunpack.c.l.b16 %v754
    %v1114 = vunpack.c.l.b16 %v755
    %v1115 = vunpack.c.l.b16 %v756
    %v1116 = vunpack.c.l.b16 %v757
    %v1117 = vunpack.c.l.b16 %v758
    %v1118 = vunpack.c.l.b16 %v759
    %v1119 = vunpack.c.l.b16 %v760
    %v1120 = vunpack.c.l.b16 %v761
    %v1121 = vunpack.c.l.b16 %v762
    %v1122 = vunpack.c.l.b16 %v763
    %v1123 = vunpack.c.l.b16 %v764
    %v1124 = vunpack.c.l.b16 %v765
    %v1125 = vunpack.c.l.b16 %v766
    %v1126 = vunpack.c.l.b16 %v767
    %v1127 = vunpack.c.l.b16 %v768
    %v1128 = vunpack.c.l.b16 %v769
    %v1129 = vunpack.c.l.b16 %v770
    %v1130 = vunpack.c.l.b16 %v771
    %v1131 = vunpack.c.l.b16 %v772
    %v1132 = vunpack.c.l.b16 %v773
    %v1133 = vunpack.c.l.b16 %v774
    %v1134 = vunpack.c.l.b16 %v775
    %v1135 = vunpack.c.l.b16 %v776
    %v1136 = vunpack.c.l.b16 %v777
    %v1137 = vunpack.c.l.b16 %v778
    %v1138 = vunpack.c.l.b16 %v779
    %v1139 = vunpack.c.l.b16 %v780
    %v1140 = vunpack.c.l.b16 %v781
    %v1141 = vunpack.c.l.b16 %v782
    %v1142 = vunpack.c.l.b16 %v783
    %v1143 = vunpack.c.l.b16 %v784
    %v1144 = vunpack.c.l.b16 %v785
    %v1145 = vunpack.c.l.b16 %v786
    %v1146 = vunpack.c.l.b16 %v787
    %v1147 = vunpack.c.l.b16 %v788
    %v1148 = vunpack.c.l.b16 %v789
    %v1149 = vunpack.c.l.b16 %v790
    %v1150 = vunpack.c.l.b16 %v791
    %v1151 = vunpack.c.l.b16 %v792
    %v1152 = vunpack.c.l.b16 %v793
    %v1153 = vunpack.c.l.b16 %v794
    %v1154 = vunpack.c.l.b16 %v795
    %v1155 = vunpack.c.l.b16 %v796
    %v1156 = vunpack.c.l.b16 %v797
    %v1157 = vunpack.c.l.b16 %v798
    %v1158 = vunpack.c.l.b16 %v799
    %v1159 = vunpack.c.l.b16 %v800
    %v1160 = vunpack.c.l.b16 %v801
    %v1161 = vunpack.c.l.b16 %v802
    %v1162 = vunpack.c.l.b16 %v803
    %v1163 = vunpack.c.l.b16 %v804
    %v1164 = vunpack.c.l.b16 %v805
    %v1165 = vunpack.c.l.b16 %v806
    %v1166 = vunpack.c.l.b16 %v807
    %v1167 = vunpack.c.l.b16 %v808
    %v1168 = vunpack.c.l.b16 %v809
    %v1169 = vunpack.c.l.b16 %v810
    %v1170 = vunpack.c.l.b16 %v811
    %v1171 = vunpack.c.l.b16 %v812
    %v1172 = vunpack.c.l.b16 %v813
    %v1173 = vunpack.c.l.b16 %v814
    %v1174 = vunpack.c.l.b16 %v815
    %v1175 = vunpack.c.l.b16 %v816
    %v1176 = vunpack.c.l.b16 %v817
    %v1177 = vunpack.c.l.b16 %v818
    %v1178 = vunpack.c.l.b16 %v819
    %v1179 = vunpack.c.l.b16 %v820
    %v1180 = vunpack.c.l.b16 %v821
    %v1181 = vunpack.c.l.b16 %v822
    %v1182 = vunpack.c.l.b16 %v823
    %v1183 = vunpack.c.l.b16 %v824
    %v1184 = vunpack.c.l.b16 %v825
    %v1185 = vunpack.c.l.b16 %v826
    %v1186 = vunpack.c.l.b16 %v827
    %v1187 = vunpack.c.l.b16 %v828
    %v1188 = vunpack.c.l.b16 %v829
    %v1189 = vunpack.c.l.b16 %v830
    %v1190 = vunpack.c.l.b16 %v831
    %v1191 = vunpack.c.l.b16 %v832
    %v1192 = vunpack.c.l.b16 %v833
    %v1193 = vunpack.c.l.b16 %v834
    %v1194 = vunpack.c.l.b16 %v835
    %v1195 = vunpack.c.l.b16 %v836
    %v1196 = vunpack.c.l.b16 %v837
    %v1197 = vunpack.c.l.b16 %v838
    %v1198 = vunpack.c.l.b16 %v839
    %v1199 = vunpack.c.l.b16 %v840
    %v1200 = vunpack.c.l.b16 %v841
    %v1201 = vunpack.c.l.b16 %v842
    %v1202 = vunpack.c.l.b16 %v843
    %v1203 = vunpack.c.l.b16 %v844
    %v1204 = vunpack.c.l.b16 %v845
    %v1205 = vunpack.c.l.b16 %v846
    %v1206 = vunpack.c.l.b16 %v847
    %v1207 = vunpack.c.l.b16 %v848
    %v1208 = vunpack.c.l.b16 %v849
    %v1209 = vunpack.c.l.b16 %v850
    %v1210 = vunpack.c.l.b16 %v851
    %v1211 = vunpack.c.l.b16 %v852
    %v1212 = vunpack.c.l.b16 %v853
    %v1213 = vunpack.c.l.b16 %v854
    %v1214 = vunpack.c.l.b16 %v855
    %v1215 = vunpack.c.l.b16 %v856
    %v1216 = vunpack.c.l.b16 %v857
    %v1217 = vunpack.c.l.b16 %v858
    %v1218 = vunpack.c.l.b16 %v859
    %v1219 = vunpack.c.l.b16 %v860
    %v1220 = vunpack.c.l.b16 %v861
    %v1221 = vunpack.c.l.b16 %v862
    %v1222 = vunpack.c.l.b16 %v863
    %v1223 = vunpack.c.l.b16 %v864
    %v1224 = vunpack.c.l.b16 %v865
    %v1225 = vunpack.c.l.b16 %v866
    %v1226 = vunpack.c.l.b16 %v867
    %v1227 = vunpack.c.l.b16 %v868
    %v1228 = vunpack.c.l.b16 %v869
    %v1229 = vunpack.c.l.b16 %v870
    %v1230 = vunpack.c.l.b16 %v871
    %v1231 = vunpack.c.l.b16 %v872
    %v1232 = vunpack.c.l.b16 %v873
    %v1233 = vunpack.c.l.b16 %v874
    %v1234 = vunpack.c.l.b16 %v875
    %v1235 = vunpack.c.l.b16 %v876
    %v1236 = vunpack.c.l.b16 %v877
    %v1237 = vunpack.c.l.b16 %v878
    %v1238 = vunpack.c.l.b16 %v879
    %v1239 = vunpack.c.l.b16 %v880
    %v1240 = vunpack.c.l.b16 %v881
    %v1241 = vunpack.c.l.b16 %v882
    %v1242 = vunpack.c.l.b16 %v883
    %v1243 = vunpack.c.l.b16 %v884
    %v1244 = vunpack.c.l.b16 %v885
    %v1245 = vunpack.c.l.b16 %v886
    %v1246 = vunpack.c.l.b16 %v887
    %v1247 = vunpack.c.l.b16 %v888
    %v1248 = vunpack.c.l.b16 %v889
    %v1249 = vunpack.c.l.b16 %v890
    %v1250 = vunpack.c.l.b16 %v891
    %v1251 = vunpack.c.l.b16 %v892
    %v1252 = vunpack.c.l.b16 %v893
    %v1253 = vunpack.c.l.b16 %v894
    %v1254 = vunpack.c.l.b16 %v895
    %v1255 = vunpack.c.l.b16 %v896
    %v1256 = vunpack.c.l.b16 %v897
    %v1257 = vunpack.c.l.b16 %v898
    %v1258 = vunpack.c.l.b16 %v899
    %v1259 = vunpack.c.l.b16 %v900
    %v1260 = vunpack.c.l.b16 %v901
    %v1261 = vunpack.c.l.b16 %v902
    %v1262 = vunpack.c.l.b16 %v903
    %v1263 = vunpack.c.l.b16 %v904
    %v1264 = vunpack.c.l.b16 %v905
    %v1265 = vunpack.c.l.b16 %v906
    %v1266 = vunpack.c.l.b16 %v907
    %v1267 = vunpack.c.l.b16 %v908
    %v1268 = vunpack.c.l.b16 %v909
    %v1269 = vunpack.c.l.b16 %v910
    %v1270 = vunpack.c.l.b16 %v911
    %v1271 = vunpack.c.l.b16 %v912
    %v1272 = vunpack.c.l.b16 %v913
    %v1273 = vunpack.c.l.b16 %v914
    %v1274 = vunpack.c.l.b16 %v915
    %v1275 = vunpack.c.l.b16 %v916
    %v1276 = vunpack.c.l.b16 %v917
    %v1277 = vunpack.c.l.b16 %v918
    %v1278 = vunpack.c.l.b16 %v919
    %v1279 = vunpack.c.l.b16 %v920
    %v1280 = vpack.c.b16 %v1105, %v1104
    %v1281 = vpack.c.b16 %v1107, %v1106
    %v1282 = vpack.c.b16 %v1109, %v1108
    %v1283 = vpack.c.b16 %v1111, %v1110
    %v1284 = vpack.c.b16 %v1113, %v1112
    %v1285 = vpack.c.b16 %v1115, %v1114
    %v1286 = vpack.c.b16 %v1117, %v1116
    %v1287 = vpack.c.b16 %v1119, %v1118
    %v1288 = vpack.c.b16 %v1121, %v1120
    %v1289 = vpack.c.b16 %v1123, %v1122
    %v1290 = vpack.c.b16 %v1125, %v1124
    %v1291 = vpack.c.b16 %v1127, %v1126
    %v1292 = vpack.c.b16 %v1129, %v1128
    %v1293 = vpack.c.b16 %v1131, %v1130
    %v1294 = vpack.c.b16 %v1133, %v1132
    %v1295 = vpack.c.b16 %v1135, %v1134
    %v1296 = vpack.c.b16 %v1137, %v1136
    %v1297 = vpack.c.b16 %v1139, %v1138
    %v1298 = vpack.c.b16 %v1141, %v1140
    %v1299 = vpack.c.b16 %v1143, %v1142
    %v1300 = vpack.c.b16 %v1145, %v1144
    %v1301 = vpack.c.b16 %v1147, %v1146
    %v1302 = vpack.c.b16 %v1149, %v1148
    %v1303 = vpack.c.b16 %v1151, %v1150
    %v1304 = vpack.c.b16 %v1153, %v1152
    %v1305 = vpack.c.b16 %v1155, %v1154
    %v1306 = vpack.c.b16 %v1157, %v1156
    %v1307 = vpack.c.b16 %v1159, %v1158
    %v1308 = vpack.c.b16 %v1161, %v1160
    %v1309 = vpack.c.b16 %v1163, %v1162
    %v1310 = vpack.c.b16 %v1165, %v1164
    %v1311 = vpack.c.b16 %v1167, %v1166
    %v1312 = vpack.c.b16 %v1169, %v1168
    %v1313 = vpack.c.b16 %v1171, %v1170
    %v1314 = vpack.c.b16 %v1173, %v1172
    %v1315 = vpack.c.b16 %v1175, %v1174
    %v1316 = vpack.c.b16 %v1177, %v1176
    %v1317 = vpack.c.b16 %v1179, %v1178
    %v1318 = vpack.c.b16 %v1181, %v1180
    %v1319 = vpack.c.b16 %v1183, %v1182
    %v1320 = vpack.c.b16 %v1185, %v1184
    %v1321 = vpack.c.b16 %v1187, %v1186
    %v1322 = vpack.c.b16 %v1189, %v1188
    %v1323 = vpack.c.b16 %v1191, %v1190
    %v1324 = vpack.c.b16 %v1193, %v1192
    %v1325 = vpack.c.b16 %v1195, %v1194
    %v1326 = vpack.c.b16 %v1197, %v1196
    %v1327 = vpack.c.b16 %v1199, %v1198
    %v1328 = vpack.c.b16 %v1201, %v1200
    %v1329 = vpack.c.b16 %v1203, %v1202
    %v1330 = vpack.c.b16 %v1205, %v1204
    %v1331 = vpack.c.b16 %v1207, %v1206
    %v1332 = vpack.c.b16 %v1209, %v1208
    %v1333 = vpack.c.b16 %v1211, %v1210
    %v1334 = vpack.c.b16 %v1213, %v1212
    %v1335 = vpack.c.b16 %v1215, %v1214
    %v1336 = vpack.c.b16 %v1217, %v1216
    %v1337 = vpack.c.b16 %v1219, %v1218
    %v1338 = vpack.c.b16 %v1221, %v1220
    %v1339 = vpack.c.b16 %v1223, %v1222
    %v1340 = vpack.c.b16 %v1225, %v1224
    %v1341 = vpack.c.b16 %v1227, %v1226
    %v1342 = vpack.c.b16 %v1229, %v1228
    %v1343 = vpack.c.b16 %v1231, %v1230
    %v1344 = vpack.c.b16 %v1233, %v1232
    %v1345 = vpack.c.b16 %v1235, %v1234
    %v1346 = vpack.c.b16 %v1237, %v1236
    %v1347 = vpack.c.b16 %v1239, %v1238
    %v1348 = vpack.c.b16 %v1241, %v1240
    %v1349 = vpack.c.b16 %v1243, %v1242
    %v1350 = vpack.c.b16 %v1245, %v1244
    %v1351 = vpack.c.b16 %v1247, %v1246
    %v1352 = vpack.c.b16 %v1249, %v1248
    %v1353 = vpack.c.b16 %v1251, %v1250
    %v1354 = vpack.c.b16 %v1253, %v1252
    %v1355 = vpack.c.b16 %v1255, %v1254
    %v1356 = vpack.c.b16 %v1257, %v1256
    %v1357 = vpack.c.b16 %v1259, %v1258
    %v1358 = vpack.c.b16 %v1261, %v1260
    %v1359 = vpack.c.b16 %v1263, %v1262
    %v1360 = vpack.c.b16 %v1265, %v1264
    %v1361 = vpack.c.b16 %v1267, %v1266
    %v1362 = vpack.c.b16 %v1269, %v1268
    %v1363 = vpack.c.b16 %v1271, %v1270
    %v1364 = vpack.c.b16 %v1273, %v1272
    %v1365 = vpack.c.b16 %v1275, %v1274
    %v1366 = vpack.c.b16 %v1277, %v1276
    %v1367 = vpack.c.b16 %v1279, %v1278
    %1456 = vmatprep.subr.bf16.mxu0 0
    %1457 = vmatpush1.bf16.msra.mxu0 %v1287
    %1458 = vmatprep.subr.bf16.mxu0 0
    %1459 = vmatpush1.bf16.msra.mxu0 %v1286
    %1460 = vmatprep.subr.bf16.mxu0 0
    %1461 = vmatpush1.bf16.msra.mxu0 %v1285
    %1462 = vmatprep.subr.bf16.mxu0 0
    %1463 = vmatpush1.bf16.msra.mxu0 %v1284
    %1464 = vmatprep.subr.bf16.mxu0 0
    %1465 = vmatpush1.bf16.msra.mxu0 %v1283
    %1466 = vmatprep.subr.bf16.mxu0 0
    %1467 = vmatpush1.bf16.msra.mxu0 %v1282
    %1468 = vmatprep.subr.bf16.mxu0 0
    %1469 = vmatpush1.bf16.msra.mxu0 %v1281
    %1470 = vmatprep.subr.bf16.mxu0 0
    %1471 = vmatpush1.bf16.msra.mxu0 %v1280
    %1472 = vmatprep.subr.bf16.mxu0 0
    %1473 = vmatpush2.bf16.msra.mxu0 %v1295
    %1474 = vmatprep.subr.bf16.mxu0 0
    %1475 = vmatpush2.bf16.msra.mxu0 %v1294
    %1476 = vmatprep.subr.bf16.mxu0 0
    %1477 = vmatpush2.bf16.msra.mxu0 %v1293
    %1478 = vmatprep.subr.bf16.mxu0 0
    %1479 = vmatpush2.bf16.msra.mxu0 %v1292
    %1480 = vmatprep.subr.bf16.mxu0 0
    %1481 = vmatpush2.bf16.msra.mxu0 %v1291
    %1482 = vmatprep.subr.bf16.mxu0 0
    %1483 = vmatpush2.bf16.msra.mxu0 %v1290
    %1484 = vmatprep.subr.bf16.mxu0 0
    %1485 = vmatpush2.bf16.msra.mxu0 %v1289
    %1486 = vmatprep.subr.bf16.mxu0 0
    %1487 = vmatpush2.bf16.msra.mxu0 %v1288
    %1488 = vmatprep.mubr.bf16.mxu0 %v735
    %1489 = vmatmul.mubr.bf16.gmra.mxu0 %v734
    %v1490 = vpop.f32.mrf.mxu0
    %v1491 = vadd.f32 %v926, %v1490
    %v1492 = vpop.f32.mrf.mxu0
    %v1493 = vpop.f32.mrf.mxu0
    %v1494 = vpop.f32.mrf.mxu0
    %1495 = vdwg.mxu0
    %1496 = vmatprep.subr.bf16.mxu0 0
    %1497 = vmatpush1.bf16.msra.mxu0 %v1303
    %1498 = vmatprep.subr.bf16.mxu0 0
    %1499 = vmatpush1.bf16.msra.mxu0 %v1302
    %1500 = vmatprep.subr.bf16.mxu0 0
    %1501 = vmatpush1.bf16.msra.mxu0 %v1301
    %1502 = vmatprep.subr.bf16.mxu0 0
    %1503 = vmatpush1.bf16.msra.mxu0 %v1300
    %1504 = vmatprep.subr.bf16.mxu0 0
    %1505 = vmatpush1.bf16.msra.mxu0 %v1299
    %1506 = vmatprep.subr.bf16.mxu0 0
    %1507 = vmatpush1.bf16.msra.mxu0 %v1298
    %1508 = vmatprep.subr.bf16.mxu0 0
    %1509 = vmatpush1.bf16.msra.mxu0 %v1297
    %1510 = vmatprep.subr.bf16.mxu0 0
    %1511 = vmatpush1.bf16.msra.mxu0 %v1296
    %1512 = vmatprep.subr.bf16.mxu0 0
    %1513 = vmatpush2.bf16.msra.mxu0 %v1311
    %1514 = vmatprep.subr.bf16.mxu0 0
    %1515 = vmatpush2.bf16.msra.mxu0 %v1310
    %1516 = vmatprep.subr.bf16.mxu0 0
    %1517 = vmatpush2.bf16.msra.mxu0 %v1309
    %1518 = vmatprep.subr.bf16.mxu0 0
    %1519 = vmatpush2.bf16.msra.mxu0 %v1308
    %1520 = vmatprep.subr.bf16.mxu0 0
    %1521 = vmatpush2.bf16.msra.mxu0 %v1307
    %1522 = vmatprep.subr.bf16.mxu0 0
    %1523 = vmatpush2.bf16.msra.mxu0 %v1306
    %1524 = vmatprep.subr.bf16.mxu0 0
    %1525 = vmatpush2.bf16.msra.mxu0 %v1305
    %1526 = vmatprep.subr.bf16.mxu0 0
    %1527 = vmatpush2.bf16.msra.mxu0 %v1304
    %1528 = vmatprep.mubr.bf16.mxu0 %v737
    %1529 = vmatmul.mubr.bf16.gmra.mxu0 %v736
    %v1530 = vpop.f32.mrf.mxu0
    %v1531 = vadd.f32 %v1491, %v1530
    %v1532 = vpop.f32.mrf.mxu0
    %v1533 = vpop.f32.mrf.mxu0
    %v1534 = vpop.f32.mrf.mxu0
    %1535 = vdwg.mxu0
    %1536 = vmatprep.subr.bf16.mxu0 0
    %1537 = vmatpush1.bf16.msra.mxu0 %v1319
    %1538 = vmatprep.subr.bf16.mxu0 0
    %1539 = vmatpush1.bf16.msra.mxu0 %v1318
    %1540 = vmatprep.subr.bf16.mxu0 0
    %1541 = vmatpush1.bf16.msra.mxu0 %v1317
    %1542 = vmatprep.subr.bf16.mxu0 0
    %1543 = vmatpush1.bf16.msra.mxu0 %v1316
    %1544 = vmatprep.subr.bf16.mxu0 0
    %1545 = vmatpush1.bf16.msra.mxu0 %v1315
    %1546 = vmatprep.subr.bf16.mxu0 0
    %1547 = vmatpush1.bf16.msra.mxu0 %v1314
    %1548 = vmatprep.subr.bf16.mxu0 0
    %1549 = vmatpush1.bf16.msra.mxu0 %v1313
    %1550 = vmatprep.subr.bf16.mxu0 0
    %1551 = vmatpush1.bf16.msra.mxu0 %v1312
    %1552 = vmatprep.subr.bf16.mxu0 0
    %1553 = vmatpush2.bf16.msra.mxu0 %v1327
    %1554 = vmatprep.subr.bf16.mxu0 0
    %1555 = vmatpush2.bf16.msra.mxu0 %v1326
    %1556 = vmatprep.subr.bf16.mxu0 0
    %1557 = vmatpush2.bf16.msra.mxu0 %v1325
    %1558 = vmatprep.subr.bf16.mxu0 0
    %1559 = vmatpush2.bf16.msra.mxu0 %v1324
    %1560 = vmatprep.subr.bf16.mxu0 0
    %1561 = vmatpush2.bf16.msra.mxu0 %v1323
    %1562 = vmatprep.subr.bf16.mxu0 0
    %1563 = vmatpush2.bf16.msra.mxu0 %v1322
    %1564 = vmatprep.subr.bf16.mxu0 0
    %1565 = vmatpush2.bf16.msra.mxu0 %v1321
    %1566 = vmatprep.subr.bf16.mxu0 0
    %1567 = vmatpush2.bf16.msra.mxu0 %v1320
    %1568 = vmatprep.mubr.bf16.mxu0 %v739
    %1569 = vmatmul.mubr.bf16.gmra.mxu0 %v738
    %v1570 = vpop.f32.mrf.mxu0
    %v1571 = vadd.f32 %v1531, %v1570
    %v1572 = vpop.f32.mrf.mxu0
    %v1573 = vpop.f32.mrf.mxu0
    %v1574 = vpop.f32.mrf.mxu0
    %1575 = vdwg.mxu0
    %1576 = vmatprep.subr.bf16.mxu0 0
    %1577 = vmatpush1.bf16.msra.mxu0 %v1335
    %1578 = vmatprep.subr.bf16.mxu0 0
    %1579 = vmatpush1.bf16.msra.mxu0 %v1334
    %1580 = vmatprep.subr.bf16.mxu0 0
    %1581 = vmatpush1.bf16.msra.mxu0 %v1333
    %1582 = vmatprep.subr.bf16.mxu0 0
    %1583 = vmatpush1.bf16.msra.mxu0 %v1332
    %1584 = vmatprep.subr.bf16.mxu0 0
    %1585 = vmatpush1.bf16.msra.mxu0 %v1331
    %1586 = vmatprep.subr.bf16.mxu0 0
    %1587 = vmatpush1.bf16.msra.mxu0 %v1330
    %1588 = vmatprep.subr.bf16.mxu0 0
    %1589 = vmatpush1.bf16.msra.mxu0 %v1329
    %1590 = vmatprep.subr.bf16.mxu0 0
    %1591 = vmatpush1.bf16.msra.mxu0 %v1328
    %1592 = vmatprep.subr.bf16.mxu0 0
    %1593 = vmatpush2.bf16.msra.mxu0 %v1343
    %1594 = vmatprep.subr.bf16.mxu0 0
    %1595 = vmatpush2.bf16.msra.mxu0 %v1342
    %1596 = vmatprep.subr.bf16.mxu0 0
    %1597 = vmatpush2.bf16.msra.mxu0 %v1341
    %1598 = vmatprep.subr.bf16.mxu0 0
    %1599 = vmatpush2.bf16.msra.mxu0 %v1340
    %1600 = vmatprep.subr.bf16.mxu0 0
    %1601 = vmatpush2.bf16.msra.mxu0 %v1339
    %1602 = vmatprep.subr.bf16.mxu0 0
    %1603 = vmatpush2.bf16.msra.mxu0 %v1338
    %1604 = vmatprep.subr.bf16.mxu0 0
    %1605 = vmatpush2.bf16.msra.mxu0 %v1337
    %1606 = vmatprep.subr.bf16.mxu0 0
    %1607 = vmatpush2.bf16.msra.mxu0 %v1336
    %1608 = vmatprep.mubr.bf16.mxu0 %v741
    %1609 = vmatmul.mubr.bf16.gmra.mxu0 %v740
    %v1610 = vpop.f32.mrf.mxu0
    %v1611 = vadd.f32 %v1571, %v1610
    %v1612 = vpop.f32.mrf.mxu0
    %v1613 = vpop.f32.mrf.mxu0
    %v1614 = vpop.f32.mrf.mxu0
    %1615 = vdwg.mxu0
    %1616 = vmatprep.subr.bf16.mxu0 0
    %1617 = vmatpush1.bf16.msra.mxu0 %v1351
    %1618 = vmatprep.subr.bf16.mxu0 0
    %1619 = vmatpush1.bf16.msra.mxu0 %v1350
    %1620 = vmatprep.subr.bf16.mxu0 0
    %1621 = vmatpush1.bf16.msra.mxu0 %v1349
    %1622 = vmatprep.subr.bf16.mxu0 0
    %1623 = vmatpush1.bf16.msra.mxu0 %v1348
    %1624 = vmatprep.subr.bf16.mxu0 0
    %1625 = vmatpush1.bf16.msra.mxu0 %v1347
    %1626 = vmatprep.subr.bf16.mxu0 0
    %1627 = vmatpush1.bf16.msra.mxu0 %v1346
    %1628 = vmatprep.subr.bf16.mxu0 0
    %1629 = vmatpush1.bf16.msra.mxu0 %v1345
    %1630 = vmatprep.subr.bf16.mxu0 0
    %1631 = vmatpush1.bf16.msra.mxu0 %v1344
    %1632 = vmatprep.subr.bf16.mxu0 0
    %1633 = vmatpush2.bf16.msra.mxu0 %v1359
    %1634 = vmatprep.subr.bf16.mxu0 0
    %1635 = vmatpush2.bf16.msra.mxu0 %v1358
    %1636 = vmatprep.subr.bf16.mxu0 0
    %1637 = vmatpush2.bf16.msra.mxu0 %v1357
    %1638 = vmatprep.subr.bf16.mxu0 0
    %1639 = vmatpush2.bf16.msra.mxu0 %v1356
    %1640 = vmatprep.subr.bf16.mxu0 0
    %1641 = vmatpush2.bf16.msra.mxu0 %v1355
    %1642 = vmatprep.subr.bf16.mxu0 0
    %1643 = vmatpush2.bf16.msra.mxu0 %v1354
    %1644 = vmatprep.subr.bf16.mxu0 0
    %1645 = vmatpush2.bf16.msra.mxu0 %v1353
    %1646 = vmatprep.subr.bf16.mxu0 0
    %1647 = vmatpush2.bf16.msra.mxu0 %v1352
    %1648 = vmatprep.mubr.bf16.mxu0 %v743
    %1649 = vmatmul.mubr.bf16.gmra.mxu0 %v742
    %v1650 = vpop.f32.mrf.mxu0
    %v1651 = vadd.f32 %v1611, %v1650
    %v1652 = vpop.f32.mrf.mxu0
    %v1653 = vpop.f32.mrf.mxu0
    %v1654 = vpop.f32.mrf.mxu0
    %1655 = vdwg.mxu0
    %1656 = vmatprep.subr.bf16.mxu0 0
    %1657 = vmatpush1.bf16.msra.mxu0 %v1367
    %1658 = vmatprep.subr.bf16.mxu0 0
    %1659 = vmatpush1.bf16.msra.mxu0 %v1366
    %1660 = vmatprep.subr.bf16.mxu0 0
    %1661 = vmatpush1.bf16.msra.mxu0 %v1365
    %1662 = vmatprep.subr.bf16.mxu0 0
    %1663 = vmatpush1.bf16.msra.mxu0 %v1364
    %1664 = vmatprep.subr.bf16.mxu0 0
    %1665 = vmatpush1.bf16.msra.mxu0 %v1363
    %1666 = vmatprep.subr.bf16.mxu0 0
    %1667 = vmatpush1.bf16.msra.mxu0 %v1362
    %1668 = vmatprep.subr.bf16.mxu0 0
    %1669 = vmatpush1.bf16.msra.mxu0 %v1361
    %1670 = vmatprep.subr.bf16.mxu0 0
    %1671 = vmatpush1.bf16.msra.mxu0 %v1360
    %1672 = vmatprep.subr.bf16.mxu0 0
    %1673 = vmatpush2.bf16.msra.mxu0 0
    %1674 = vmatprep.subr.bf16.mxu0 0
    %1675 = vmatpush2.bf16.msra.mxu0 0
    %1676 = vmatprep.subr.bf16.mxu0 0
    %1677 = vmatpush2.bf16.msra.mxu0 0
    %1678 = vmatprep.subr.bf16.mxu0 0
    %1679 = vmatpush2.bf16.msra.mxu0 0
    %1680 = vmatprep.subr.bf16.mxu0 0
    %1681 = vmatpush2.bf16.msra.mxu0 0
    %1682 = vmatprep.subr.bf16.mxu0 0
    %1683 = vmatpush2.bf16.msra.mxu0 0
    %1684 = vmatprep.subr.bf16.mxu0 0
    %1685 = vmatpush2.bf16.msra.mxu0 0
    %1686 = vmatprep.subr.bf16.mxu0 0
    %1687 = vmatpush2.bf16.msra.mxu0 0
    %1688 = vmatprep.mubr.bf16.mxu0 0
    %1689 = vmatmul.mubr.bf16.gmra.mxu0 %v744
    %v1690 = vpop.f32.mrf.mxu0
    %v1691 = vadd.f32 %v1651, %v1690
    %v1692 = vpop.f32.mrf.mxu0
    %v1693 = vpop.f32.mrf.mxu0
    %v1694 = vpop.f32.mrf.mxu0
    %1695 = vdwg.mxu0
    %v1696 = vadd.f32 %v1691, %v310
    %1698 = vrot.lane.b32.xlu0 %v313, 16
    %v1699 = vpop.permute.xlu0 %1698
    %v1701 = vadd.f32 %v1691, %v1699
    %1703 = vrot.lane.b32.xlu0 %v1701, 112
    %v1704 = vpop.permute.xlu0 %1703
    %v1706 = vsel %vm322, %v1696, 0.0
    %1707 = vadd.xlane.f32.xlu0 %v1706
    %v1708 = vpop.xlane.xlu0 %1707
    %v1709 = vsel %vm322, %v1704, 0.0
    %1710 = vadd.xlane.f32.xlu0 %v1709
    %v1711 = vpop.xlane.xlu0 %1710
    %v1712 = vrcp.pop 16.0
    %v1713 = vmul.f32 %v1708, %v1712
    %v1714 = vmul.f32 %v1711, %v1712
    %v1715 = vsub.f32 %v1696, %v1713
    %v1716 = vsub.f32 %v1704, %v1714
    %v1717 = vmul.f32 %v1715, %v1715
    %v1718 = vmul.f32 %v1716, %v1716
    %v1719 = vsel %vm322, %v1717, 0.0
    %1720 = vadd.xlane.f32.xlu0 %v1719
    %v1721 = vpop.xlane.xlu0 %1720
    %v1722 = vsel %vm322, %v1718, 0.0
    %1723 = vadd.xlane.f32.xlu0 %v1722
    %v1724 = vpop.xlane.xlu0 %1723
    %v1725 = vmul.f32 %v1721, %v1712
    %v1726 = vmul.f32 %v1724, %v1712
    %v1727 = vadd.f32 %v1725, 1e-05
    %v1728 = vadd.f32 %v1726, 1e-05
    %v1729 = vrsqrt.pop %v1727
    %v1730 = vrsqrt.pop %v1728
    %v1731 = vmul.f32 %v1715, %v1729
    %v1732 = vmul.f32 %v1716, %v1730
    %v1734 = vlaneseq
    %v1735 = vshrl.u32 %v1734, 7
    %v1736 = vsub.s32 0, %v1735
    %v1737 = vrot.slane %v143, %v1736
    %v1739 = vmul.f32 %v1731, %v1737
    %v1740 = vmul.f32 %v1732, %v1737
    %v1742 = vlaneseq
    %v1743 = vshrl.u32 %v1742, 7
    %v1744 = vsub.s32 0, %v1743
    %v1745 = vrot.slane %v144, %v1744
    %v1747 = vadd.f32 %v1739, %v1745
    %v1748 = vadd.f32 %v1740, %v1745
    %v1749 = vpack.c.bf16 %v1748, %v1747
    %1750 = vmatprep.subr.bf16.mxu0 0
    %1751 = vmatpush1.bf16.msra.mxu0 0
    %1752 = vmatprep.subr.bf16.mxu0 0
    %1753 = vmatpush1.bf16.msra.mxu0 0
    %1754 = vmatprep.subr.bf16.mxu0 0
    %1755 = vmatpush1.bf16.msra.mxu0 0
    %1756 = vmatprep.subr.bf16.mxu0 0
    %1757 = vmatpush1.bf16.msra.mxu0 0
    %1758 = vmatprep.subr.bf16.mxu0 0
    %1759 = vmatpush1.bf16.msra.mxu0 0
    %1760 = vmatprep.subr.bf16.mxu0 0
    %1761 = vmatpush1.bf16.msra.mxu0 0
    %1762 = vmatprep.subr.bf16.mxu0 0
    %1763 = vmatpush1.bf16.msra.mxu0 0
    %1764 = vmatprep.subr.bf16.mxu0 0
    %1765 = vmatpush1.bf16.msra.mxu0 %v1749
    %1766 = vmatprep.subr.bf16.mxu0 0
    %1767 = vmatpush2.bf16.msra.mxu0 0
    %1768 = vmatprep.subr.bf16.mxu0 0
    %1769 = vmatpush2.bf16.msra.mxu0 0
    %1770 = vmatprep.subr.bf16.mxu0 0
    %1771 = vmatpush2.bf16.msra.mxu0 0
    %1772 = vmatprep.subr.bf16.mxu0 0
    %1773 = vmatpush2.bf16.msra.mxu0 0
    %1774 = vmatprep.subr.bf16.mxu0 0
    %1775 = vmatpush2.bf16.msra.mxu0 0
    %1776 = vmatprep.subr.bf16.mxu0 0
    %1777 = vmatpush2.bf16.msra.mxu0 0
    %1778 = vmatprep.subr.bf16.mxu0 0
    %1779 = vmatpush2.bf16.msra.mxu0 0
    %1780 = vmatprep.subr.bf16.mxu0 0
    %1781 = vmatpush2.bf16.msra.mxu0 0
    %1782 = vmatprep.mubr.bf16.mxu0 0
    %1783 = vmatmul.mubr.bf16.gmra.mxu0 %v324
    %v1784 = vpop.f32.mrf.mxu0
    %v1785 = vadd.f32 0.0, %v1784
    %v1786 = vpop.f32.mrf.mxu0
    %v1787 = vpop.f32.mrf.mxu0
    %v1788 = vadd.f32 0.0, %v1787
    %v1789 = vpop.f32.mrf.mxu0
    %1790 = vdwg.mxu0
    %1792 = vrot.lane.b32.xlu0 %v1788, 16
    %v1793 = vpop.permute.xlu0 %1792
    %v1795 = vsel %vm322, %v1785, %v1793
    %1796 = vst.msk [vmem:[#allocation3 + $0x8] sm:$0xff] %vm150, %v1795
    %v1797 = vld [vmem:[#allocation3 + $0x3] sm:$0xff]
    %v1798 = vld [vmem:[#allocation3 + $0x4] sm:$0xff]
    %v1799 = vld [vmem:[#allocation3 + $0x5] sm:$0xff]
    %v1800 = vld [vmem:[#allocation3 + $0x6] sm:$0xff]
    %v1801 = vld [vmem:[#allocation3 + $0x7] sm:$0xff]
    %v1802 = vld [vmem:[#allocation3 + $0x8] sm:$0xff]
    %v1803 = vld [vmem:[#allocation3 + $0x9] sm:$0xff]
    %v1804 = vld [vmem:[#allocation3 + $0xa] sm:$0xff]
    %v1805 = vld [vmem:[#allocation3 + $0xb] sm:$0xff]
    %v1806 = vld [vmem:[#allocation3 + $0xc] sm:$0xff]
    %v1807 = vld [vmem:[#allocation3 + $0xd] sm:$0xff]
    %1809 = vrot.lane.b32.xlu0 %v1798, 32
    %v1810 = vpop.permute.xlu0 %1809
    %1813 = vrot.lane.b32.xlu0 %v1799, 64
    %v1814 = vpop.permute.xlu0 %1813
    %1817 = vrot.lane.b32.xlu0 %v1800, 96
    %v1818 = vpop.permute.xlu0 %1817
    %1821 = vrot.lane.b32.xlu0 %v1802, 32
    %v1822 = vpop.permute.xlu0 %1821
    %1825 = vrot.lane.b32.xlu0 %v1803, 64
    %v1826 = vpop.permute.xlu0 %1825
    %1829 = vrot.lane.b32.xlu0 %v1804, 96
    %v1830 = vpop.permute.xlu0 %1829
    %1833 = vrot.lane.b32.xlu0 %v1806, 32
    %v1834 = vpop.permute.xlu0 %1833
    %1837 = vrot.lane.b32.xlu0 %v1807, 64
    %v1838 = vpop.permute.xlu0 %1837
    %v1840 = vsel %vm150, %v1797, %v1810
    %v1841 = vsel %vm417, %v1840, %v1814
    %v1842 = vsel %vm419, %v1841, %v1818
    %v1843 = vsel %vm150, %v1801, %v1822
    %v1844 = vsel %vm417, %v1843, %v1826
    %v1845 = vsel %vm419, %v1844, %v1830
    %v1846 = vsel %vm150, %v1805, %v1834
    %v1847 = vsel %vm417, %v1846, %v1838
    %v1848 = vpack.c.bf16 %v1842, %v1842
    %v1849 = vpack.c.bf16 %v1845, %v1845
    %v1850 = vpack.c.bf16 %v1847, %v1847
    %s1851 = scalar_lea.vmem [#allocation10], 176
    %v1852 = vld [vmem:[%s1851] sm:$0xf]
    %v1853 = vld [vmem:[%s1851 + $0x4] sm:$0xf]
    %v1854 = vld [vmem:[%s1851 + $0x8] sm:$0xf]
    %v1855 = vld [vmem:[%s1851 + $0xc] sm:$0xf]
    %v1856 = vld [vmem:[%s1851 + $0x10] sm:$0xf]
    %v1857 = vld [vmem:[%s1851 + $0x14] sm:$0xf]
    %v1858 = vld [vmem:[%s1851 + $0x18] sm:$0xf]
    %v1859 = vld [vmem:[%s1851 + $0x1c] sm:$0xf]
    %v1860 = vld [vmem:[%s1851 + $0x20] sm:$0xf]
    %v1861 = vld [vmem:[%s1851 + $0x24] sm:$0xf]
    %v1862 = vld [vmem:[%s1851 + $0x28] sm:$0xf]
    %v1863 = vld [vmem:[%s1851 + $0x2c] sm:$0xf]
    %v1864 = vld [vmem:[%s1851 + $0x30] sm:$0xf]
    %v1865 = vld [vmem:[%s1851 + $0x34] sm:$0xf]
    %v1866 = vld [vmem:[%s1851 + $0x38] sm:$0xf]
    %v1867 = vld [vmem:[%s1851 + $0x3c] sm:$0xf]
    %v1868 = vld [vmem:[%s1851 + $0x40] sm:$0xf]
    %v1869 = vld [vmem:[%s1851 + $0x44] sm:$0xf]
    %v1870 = vld [vmem:[%s1851 + $0x48] sm:$0xf]
    %v1871 = vld [vmem:[%s1851 + $0x4c] sm:$0xf]
    %v1872 = vld [vmem:[%s1851 + $0x50] sm:$0xf]
    %v1873 = vld [vmem:[%s1851 + $0x54] sm:$0xf]
    %v1874 = vld [vmem:[%s1851 + $0x58] sm:$0xf]
    %v1875 = vld [vmem:[%s1851 + $0x5c] sm:$0xf]
    %v1876 = vld [vmem:[%s1851 + $0x60] sm:$0xf]
    %v1877 = vld [vmem:[%s1851 + $0x64] sm:$0xf]
    %v1878 = vld [vmem:[%s1851 + $0x68] sm:$0xf]
    %v1879 = vld [vmem:[%s1851 + $0x6c] sm:$0xf]
    %v1880 = vld [vmem:[%s1851 + $0x70] sm:$0xf]
    %v1881 = vld [vmem:[%s1851 + $0x74] sm:$0xf]
    %v1882 = vld [vmem:[%s1851 + $0x78] sm:$0xf]
    %v1883 = vld [vmem:[%s1851 + $0x7c] sm:$0xf]
    %v1884 = vld [vmem:[%s1851 + $0x80] sm:$0xf]
    %v1885 = vld [vmem:[%s1851 + $0x84] sm:$0xf]
    %v1886 = vld [vmem:[%s1851 + $0x88] sm:$0xf]
    %v1887 = vld [vmem:[%s1851 + $0x8c] sm:$0xf]
    %v1888 = vld [vmem:[%s1851 + $0x90] sm:$0xf]
    %v1889 = vld [vmem:[%s1851 + $0x94] sm:$0xf]
    %v1890 = vld [vmem:[%s1851 + $0x98] sm:$0xf]
    %v1891 = vld [vmem:[%s1851 + $0x9c] sm:$0xf]
    %v1892 = vld [vmem:[%s1851 + $0xa0] sm:$0xf]
    %v1893 = vld [vmem:[%s1851 + $0xa4] sm:$0xf]
    %v1894 = vld [vmem:[%s1851 + $0xa8] sm:$0xf]
    %v1895 = vld [vmem:[%s1851 + $0xac] sm:$0xf]
    %s1896 = scalar_lea.vmem [#allocation12], 1
    %v1897 = vld [vmem:[%s1896] sm:$0x1]
    %v1899 = vlaneseq
    %v1900 = vshrl.u32 %v1899, 7
    %v1901 = vsub.s32 0, %v1900
    %v1902 = vrot.slane %v1897, %v1901
    %v1948 = vunpack.c.l.b16 %v1852
    %v1949 = vunpack.c.l.b16 %v1853
    %v1950 = vunpack.c.l.b16 %v1854
    %v1951 = vunpack.c.l.b16 %v1855
    %v1952 = vunpack.c.l.b16 %v1856
    %v1953 = vunpack.c.l.b16 %v1857
    %v1954 = vunpack.c.l.b16 %v1858
    %v1955 = vunpack.c.l.b16 %v1859
    %v1956 = vunpack.c.l.b16 %v1860
    %v1957 = vunpack.c.l.b16 %v1861
    %v1958 = vunpack.c.l.b16 %v1862
    %v1959 = vunpack.c.l.b16 %v1863
    %v1960 = vunpack.c.l.b16 %v1864
    %v1961 = vunpack.c.l.b16 %v1865
    %v1962 = vunpack.c.l.b16 %v1866
    %v1963 = vunpack.c.l.b16 %v1867
    %v1964 = vunpack.c.l.b16 %v1868
    %v1965 = vunpack.c.l.b16 %v1869
    %v1966 = vunpack.c.l.b16 %v1870
    %v1967 = vunpack.c.l.b16 %v1871
    %v1968 = vunpack.c.l.b16 %v1872
    %v1969 = vunpack.c.l.b16 %v1873
    %v1970 = vunpack.c.l.b16 %v1874
    %v1971 = vunpack.c.l.b16 %v1875
    %v1972 = vunpack.c.l.b16 %v1876
    %v1973 = vunpack.c.l.b16 %v1877
    %v1974 = vunpack.c.l.b16 %v1878
    %v1975 = vunpack.c.l.b16 %v1879
    %v1976 = vunpack.c.l.b16 %v1880
    %v1977 = vunpack.c.l.b16 %v1881
    %v1978 = vunpack.c.l.b16 %v1882
    %v1979 = vunpack.c.l.b16 %v1883
    %v1980 = vunpack.c.l.b16 %v1884
    %v1981 = vunpack.c.l.b16 %v1885
    %v1982 = vunpack.c.l.b16 %v1886
    %v1983 = vunpack.c.l.b16 %v1887
    %v1984 = vunpack.c.l.b16 %v1888
    %v1985 = vunpack.c.l.b16 %v1889
    %v1986 = vunpack.c.l.b16 %v1890
    %v1987 = vunpack.c.l.b16 %v1891
    %v1988 = vunpack.c.l.b16 %v1892
    %v1989 = vunpack.c.l.b16 %v1893
    %v1990 = vunpack.c.l.b16 %v1894
    %v1991 = vunpack.c.l.b16 %v1895
    %v1992 = vpack.c.b16 %v1949, %v1948
    %v1993 = vpack.c.b16 %v1951, %v1950
    %v1994 = vpack.c.b16 %v1953, %v1952
    %v1995 = vpack.c.b16 %v1955, %v1954
    %v1996 = vpack.c.b16 %v1957, %v1956
    %v1997 = vpack.c.b16 %v1959, %v1958
    %v1998 = vpack.c.b16 %v1961, %v1960
    %v1999 = vpack.c.b16 %v1963, %v1962
    %v2000 = vpack.c.b16 %v1965, %v1964
    %v2001 = vpack.c.b16 %v1967, %v1966
    %v2002 = vpack.c.b16 %v1969, %v1968
    %v2003 = vpack.c.b16 %v1971, %v1970
    %v2004 = vpack.c.b16 %v1973, %v1972
    %v2005 = vpack.c.b16 %v1975, %v1974
    %v2006 = vpack.c.b16 %v1977, %v1976
    %v2007 = vpack.c.b16 %v1979, %v1978
    %v2008 = vpack.c.b16 %v1981, %v1980
    %v2009 = vpack.c.b16 %v1983, %v1982
    %v2010 = vpack.c.b16 %v1985, %v1984
    %v2011 = vpack.c.b16 %v1987, %v1986
    %v2012 = vpack.c.b16 %v1989, %v1988
    %v2013 = vpack.c.b16 %v1991, %v1990
    %v2037 = vsel %vm419, %v1850, 0
    %2039 = vmatprep.subr.bf16.mxu0 0
    %2040 = vmatpush1.bf16.msra.mxu0 %v1999
    %2041 = vmatprep.subr.bf16.mxu0 0
    %2042 = vmatpush1.bf16.msra.mxu0 %v1998
    %2043 = vmatprep.subr.bf16.mxu0 0
    %2044 = vmatpush1.bf16.msra.mxu0 %v1997
    %2045 = vmatprep.subr.bf16.mxu0 0
    %2046 = vmatpush1.bf16.msra.mxu0 %v1996
    %2047 = vmatprep.subr.bf16.mxu0 0
    %2048 = vmatpush1.bf16.msra.mxu0 %v1995
    %2049 = vmatprep.subr.bf16.mxu0 0
    %2050 = vmatpush1.bf16.msra.mxu0 %v1994
    %2051 = vmatprep.subr.bf16.mxu0 0
    %2052 = vmatpush1.bf16.msra.mxu0 %v1993
    %2053 = vmatprep.subr.bf16.mxu0 0
    %2054 = vmatpush1.bf16.msra.mxu0 %v1992
    %2055 = vmatprep.subr.bf16.mxu0 0
    %2056 = vmatpush2.bf16.msra.mxu0 %v2007
    %2057 = vmatprep.subr.bf16.mxu0 0
    %2058 = vmatpush2.bf16.msra.mxu0 %v2006
    %2059 = vmatprep.subr.bf16.mxu0 0
    %2060 = vmatpush2.bf16.msra.mxu0 %v2005
    %2061 = vmatprep.subr.bf16.mxu0 0
    %2062 = vmatpush2.bf16.msra.mxu0 %v2004
    %2063 = vmatprep.subr.bf16.mxu0 0
    %2064 = vmatpush2.bf16.msra.mxu0 %v2003
    %2065 = vmatprep.subr.bf16.mxu0 0
    %2066 = vmatpush2.bf16.msra.mxu0 %v2002
    %2067 = vmatprep.subr.bf16.mxu0 0
    %2068 = vmatpush2.bf16.msra.mxu0 %v2001
    %2069 = vmatprep.subr.bf16.mxu0 0
    %2070 = vmatpush2.bf16.msra.mxu0 %v2000
    %2071 = vmatprep.mubr.bf16.mxu0 %v1849
    %2072 = vmatmul.mubr.bf16.gmra.mxu0 %v1848
    %v2073 = vpop.f32.mrf.mxu0
    %v2074 = vadd.f32 %v1902, %v2073
    %v2075 = vpop.f32.mrf.mxu0
    %v2076 = vpop.f32.mrf.mxu0
    %v2077 = vpop.f32.mrf.mxu0
    %2078 = vdwg.mxu0
    %2079 = vmatprep.subr.bf16.mxu0 0
    %2080 = vmatpush1.bf16.msra.mxu0 0
    %2081 = vmatprep.subr.bf16.mxu0 0
    %2082 = vmatpush1.bf16.msra.mxu0 0
    %2083 = vmatprep.subr.bf16.mxu0 0
    %2084 = vmatpush1.bf16.msra.mxu0 %v2013
    %2085 = vmatprep.subr.bf16.mxu0 0
    %2086 = vmatpush1.bf16.msra.mxu0 %v2012
    %2087 = vmatprep.subr.bf16.mxu0 0
    %2088 = vmatpush1.bf16.msra.mxu0 %v2011
    %2089 = vmatprep.subr.bf16.mxu0 0
    %2090 = vmatpush1.bf16.msra.mxu0 %v2010
    %2091 = vmatprep.subr.bf16.mxu0 0
    %2092 = vmatpush1.bf16.msra.mxu0 %v2009
    %2093 = vmatprep.subr.bf16.mxu0 0
    %2094 = vmatpush1.bf16.msra.mxu0 %v2008
    %2095 = vmatprep.subr.bf16.mxu0 0
    %2096 = vmatpush2.bf16.msra.mxu0 0
    %2097 = vmatprep.subr.bf16.mxu0 0
    %2098 = vmatpush2.bf16.msra.mxu0 0
    %2099 = vmatprep.subr.bf16.mxu0 0
    %2100 = vmatpush2.bf16.msra.mxu0 0
    %2101 = vmatprep.subr.bf16.mxu0 0
    %2102 = vmatpush2.bf16.msra.mxu0 0
    %2103 = vmatprep.subr.bf16.mxu0 0
    %2104 = vmatpush2.bf16.msra.mxu0 0
    %2105 = vmatprep.subr.bf16.mxu0 0
    %2106 = vmatpush2.bf16.msra.mxu0 0
    %2107 = vmatprep.subr.bf16.mxu0 0
    %2108 = vmatpush2.bf16.msra.mxu0 0
    %2109 = vmatprep.subr.bf16.mxu0 0
    %2110 = vmatpush2.bf16.msra.mxu0 0
    %2111 = vmatprep.mubr.bf16.mxu0 0
    %2112 = vmatmul.mubr.bf16.gmra.mxu0 %v2037
    %v2113 = vpop.f32.mrf.mxu0
    %v2114 = vadd.f32 %v2074, %v2113
    %v2115 = vpop.f32.mrf.mxu0
    %v2116 = vpop.f32.mrf.mxu0
    %v2117 = vpop.f32.mrf.mxu0
    %2118 = vdwg.mxu0
    %v2119 = vmul.f32 %v2114, 0.5
    %v2120 = vmul.f32 %v2114, 0.70710677
    %v2121 = vand.u32 2147483647, %v2120
    %v2122 = vmul.f32 %v2121, 0.3275911
    %v2123 = vadd.f32 %v2122, 1.0
    %v2124 = vrcp.pop %v2123
    %v2125 = vmul.f32 1.0, %v2124
    %v2126 = vmul.f32 %v2125, 1.0614054
    %v2127 = vadd.f32 %v2126, -1.4531521
    %v2128 = vmul.f32 %v2127, %v2125
    %v2129 = vadd.f32 %v2128, 1.4214138
    %v2130 = vmul.f32 %v2129, %v2125
    %v2131 = vadd.f32 %v2130, -0.28449672
    %v2132 = vmul.f32 %v2131, %v2125
    %v2133 = vadd.f32 %v2132, 0.2548296
    %v2134 = vmul.f32 %v2133, %v2125
    %v2135 = vsub.f32 0.0, %v2121
    %v2136 = vmul.f32 %v2135, %v2121
    %v2137 = vmul.f32 %v2136, 1.442695
    %v2138 = vpow.pop %v2137
    %v2139 = vmul.f32 %v2134, %v2138
    %v2140 = vsub.f32 1.0, %v2139
    %vm2141 = vcmp.ge.f32.partialorder %v2120, 0.0
    %v2142 = vsub.f32 0.0, %v2140
    %v2143 = vsel %vm2141, %v2140, %v2142
    %v2144 = vadd.f32 %v2143, 1.0
    %v2145 = vmul.f32 %v2119, %v2144
    %2146 = vst [vmem:[#allocation4 + $0x8] sm:$0xff] %v2145
    %v2147 = vld [vmem:[#allocation4 + $0x3] sm:$0xff]
    %v2148 = vld [vmem:[#allocation4 + $0x4] sm:$0xff]
    %v2149 = vld [vmem:[#allocation4 + $0x5] sm:$0xff]
    %v2150 = vld [vmem:[#allocation4 + $0x6] sm:$0xff]
    %v2151 = vld [vmem:[#allocation4 + $0x7] sm:$0xff]
    %v2152 = vld [vmem:[#allocation4 + $0x8] sm:$0xff]
    %v2153 = vld [vmem:[#allocation4 + $0x9] sm:$0xff]
    %v2154 = vld [vmem:[#allocation4 + $0xa] sm:$0xff]
    %v2155 = vld [vmem:[#allocation4 + $0xb] sm:$0xff]
    %v2156 = vld [vmem:[#allocation4 + $0xc] sm:$0xff]
    %v2157 = vld [vmem:[#allocation4 + $0xd] sm:$0xff]
    %v2158 = vpack.c.bf16 %v2147, %v2147
    %v2159 = vpack.c.bf16 %v2148, %v2148
    %v2160 = vpack.c.bf16 %v2149, %v2149
    %v2161 = vpack.c.bf16 %v2150, %v2150
    %v2162 = vpack.c.bf16 %v2151, %v2151
    %v2163 = vpack.c.bf16 %v2152, %v2152
    %v2164 = vpack.c.bf16 %v2153, %v2153
    %v2165 = vpack.c.bf16 %v2154, %v2154
    %v2166 = vpack.c.bf16 %v2155, %v2155
    %v2167 = vpack.c.bf16 %v2156, %v2156
    %v2168 = vpack.c.bf16 %v2157, %v2157
    %s2169 = scalar_lea.vmem [#allocation13], 704
    %v2170 = vld [vmem:[%s2169] sm:$0xf]
    %v2171 = vld [vmem:[%s2169 + $0x4] sm:$0xf]
    %v2172 = vld [vmem:[%s2169 + $0x8] sm:$0xf]
    %v2173 = vld [vmem:[%s2169 + $0xc] sm:$0xf]
    %v2174 = vld [vmem:[%s2169 + $0x10] sm:$0xf]
    %v2175 = vld [vmem:[%s2169 + $0x14] sm:$0xf]
    %v2176 = vld [vmem:[%s2169 + $0x18] sm:$0xf]
    %v2177 = vld [vmem:[%s2169 + $0x1c] sm:$0xf]
    %v2178 = vld [vmem:[%s2169 + $0x20] sm:$0xf]
    %v2179 = vld [vmem:[%s2169 + $0x24] sm:$0xf]
    %v2180 = vld [vmem:[%s2169 + $0x28] sm:$0xf]
    %v2181 = vld [vmem:[%s2169 + $0x2c] sm:$0xf]
    %v2182 = vld [vmem:[%s2169 + $0x30] sm:$0xf]
    %v2183 = vld [vmem:[%s2169 + $0x34] sm:$0xf]
    %v2184 = vld [vmem:[%s2169 + $0x38] sm:$0xf]
    %v2185 = vld [vmem:[%s2169 + $0x3c] sm:$0xf]
    %v2186 = vld [vmem:[%s2169 + $0x40] sm:$0xf]
    %v2187 = vld [vmem:[%s2169 + $0x44] sm:$0xf]
    %v2188 = vld [vmem:[%s2169 + $0x48] sm:$0xf]
    %v2189 = vld [vmem:[%s2169 + $0x4c] sm:$0xf]
    %v2190 = vld [vmem:[%s2169 + $0x50] sm:$0xf]
    %v2191 = vld [vmem:[%s2169 + $0x54] sm:$0xf]
    %v2192 = vld [vmem:[%s2169 + $0x58] sm:$0xf]
    %v2193 = vld [vmem:[%s2169 + $0x5c] sm:$0xf]
    %v2194 = vld [vmem:[%s2169 + $0x60] sm:$0xf]
    %v2195 = vld [vmem:[%s2169 + $0x64] sm:$0xf]
    %v2196 = vld [vmem:[%s2169 + $0x68] sm:$0xf]
    %v2197 = vld [vmem:[%s2169 + $0x6c] sm:$0xf]
    %v2198 = vld [vmem:[%s2169 + $0x70] sm:$0xf]
    %v2199 = vld [vmem:[%s2169 + $0x74] sm:$0xf]
    %v2200 = vld [vmem:[%s2169 + $0x78] sm:$0xf]
    %v2201 = vld [vmem:[%s2169 + $0x7c] sm:$0xf]
    %v2202 = vld [vmem:[%s2169 + $0x80] sm:$0xf]
    %v2203 = vld [vmem:[%s2169 + $0x84] sm:$0xf]
    %v2204 = vld [vmem:[%s2169 + $0x88] sm:$0xf]
    %v2205 = vld [vmem:[%s2169 + $0x8c] sm:$0xf]
    %v2206 = vld [vmem:[%s2169 + $0x90] sm:$0xf]
    %v2207 = vld [vmem:[%s2169 + $0x94] sm:$0xf]
    %v2208 = vld [vmem:[%s2169 + $0x98] sm:$0xf]
    %v2209 = vld [vmem:[%s2169 + $0x9c] sm:$0xf]
    %v2210 = vld [vmem:[%s2169 + $0xa0] sm:$0xf]
    %v2211 = vld [vmem:[%s2169 + $0xa4] sm:$0xf]
    %v2212 = vld [vmem:[%s2169 + $0xa8] sm:$0xf]
    %v2213 = vld [vmem:[%s2169 + $0xac] sm:$0xf]
    %v2214 = vld [vmem:[%s2169 + $0xb0] sm:$0xf]
    %v2215 = vld [vmem:[%s2169 + $0xb4] sm:$0xf]
    %v2216 = vld [vmem:[%s2169 + $0xb8] sm:$0xf]
    %v2217 = vld [vmem:[%s2169 + $0xbc] sm:$0xf]
    %v2218 = vld [vmem:[%s2169 + $0xc0] sm:$0xf]
    %v2219 = vld [vmem:[%s2169 + $0xc4] sm:$0xf]
    %v2220 = vld [vmem:[%s2169 + $0xc8] sm:$0xf]
    %v2221 = vld [vmem:[%s2169 + $0xcc] sm:$0xf]
    %v2222 = vld [vmem:[%s2169 + $0xd0] sm:$0xf]
    %v2223 = vld [vmem:[%s2169 + $0xd4] sm:$0xf]
    %v2224 = vld [vmem:[%s2169 + $0xd8] sm:$0xf]
    %v2225 = vld [vmem:[%s2169 + $0xdc] sm:$0xf]
    %v2226 = vld [vmem:[%s2169 + $0xe0] sm:$0xf]
    %v2227 = vld [vmem:[%s2169 + $0xe4] sm:$0xf]
    %v2228 = vld [vmem:[%s2169 + $0xe8] sm:$0xf]
    %v2229 = vld [vmem:[%s2169 + $0xec] sm:$0xf]
    %v2230 = vld [vmem:[%s2169 + $0xf0] sm:$0xf]
    %v2231 = vld [vmem:[%s2169 + $0xf4] sm:$0xf]
    %v2232 = vld [vmem:[%s2169 + $0xf8] sm:$0xf]
    %v2233 = vld [vmem:[%s2169 + $0xfc] sm:$0xf]
    %v2234 = vld [vmem:[%s2169 + $0x100] sm:$0xf]
    %v2235 = vld [vmem:[%s2169 + $0x104] sm:$0xf]
    %v2236 = vld [vmem:[%s2169 + $0x108] sm:$0xf]
    %v2237 = vld [vmem:[%s2169 + $0x10c] sm:$0xf]
    %v2238 = vld [vmem:[%s2169 + $0x110] sm:$0xf]
    %v2239 = vld [vmem:[%s2169 + $0x114] sm:$0xf]
    %v2240 = vld [vmem:[%s2169 + $0x118] sm:$0xf]
    %v2241 = vld [vmem:[%s2169 + $0x11c] sm:$0xf]
    %v2242 = vld [vmem:[%s2169 + $0x120] sm:$0xf]
    %v2243 = vld [vmem:[%s2169 + $0x124] sm:$0xf]
    %v2244 = vld [vmem:[%s2169 + $0x128] sm:$0xf]
    %v2245 = vld [vmem:[%s2169 + $0x12c] sm:$0xf]
    %v2246 = vld [vmem:[%s2169 + $0x130] sm:$0xf]
    %v2247 = vld [vmem:[%s2169 + $0x134] sm:$0xf]
    %v2248 = vld [vmem:[%s2169 + $0x138] sm:$0xf]
    %v2249 = vld [vmem:[%s2169 + $0x13c] sm:$0xf]
    %v2250 = vld [vmem:[%s2169 + $0x140] sm:$0xf]
    %v2251 = vld [vmem:[%s2169 + $0x144] sm:$0xf]
    %v2252 = vld [vmem:[%s2169 + $0x148] sm:$0xf]
    %v2253 = vld [vmem:[%s2169 + $0x14c] sm:$0xf]
    %v2254 = vld [vmem:[%s2169 + $0x150] sm:$0xf]
    %v2255 = vld [vmem:[%s2169 + $0x154] sm:$0xf]
    %v2256 = vld [vmem:[%s2169 + $0x158] sm:$0xf]
    %v2257 = vld [vmem:[%s2169 + $0x15c] sm:$0xf]
    %v2258 = vld [vmem:[%s2169 + $0x160] sm:$0xf]
    %v2259 = vld [vmem:[%s2169 + $0x164] sm:$0xf]
    %v2260 = vld [vmem:[%s2169 + $0x168] sm:$0xf]
    %v2261 = vld [vmem:[%s2169 + $0x16c] sm:$0xf]
    %v2262 = vld [vmem:[%s2169 + $0x170] sm:$0xf]
    %v2263 = vld [vmem:[%s2169 + $0x174] sm:$0xf]
    %v2264 = vld [vmem:[%s2169 + $0x178] sm:$0xf]
    %v2265 = vld [vmem:[%s2169 + $0x17c] sm:$0xf]
    %v2266 = vld [vmem:[%s2169 + $0x180] sm:$0xf]
    %v2267 = vld [vmem:[%s2169 + $0x184] sm:$0xf]
    %v2268 = vld [vmem:[%s2169 + $0x188] sm:$0xf]
    %v2269 = vld [vmem:[%s2169 + $0x18c] sm:$0xf]
    %v2270 = vld [vmem:[%s2169 + $0x190] sm:$0xf]
    %v2271 = vld [vmem:[%s2169 + $0x194] sm:$0xf]
    %v2272 = vld [vmem:[%s2169 + $0x198] sm:$0xf]
    %v2273 = vld [vmem:[%s2169 + $0x19c] sm:$0xf]
    %v2274 = vld [vmem:[%s2169 + $0x1a0] sm:$0xf]
    %v2275 = vld [vmem:[%s2169 + $0x1a4] sm:$0xf]
    %v2276 = vld [vmem:[%s2169 + $0x1a8] sm:$0xf]
    %v2277 = vld [vmem:[%s2169 + $0x1ac] sm:$0xf]
    %v2278 = vld [vmem:[%s2169 + $0x1b0] sm:$0xf]
    %v2279 = vld [vmem:[%s2169 + $0x1b4] sm:$0xf]
    %v2280 = vld [vmem:[%s2169 + $0x1b8] sm:$0xf]
    %v2281 = vld [vmem:[%s2169 + $0x1bc] sm:$0xf]
    %v2282 = vld [vmem:[%s2169 + $0x1c0] sm:$0xf]
    %v2283 = vld [vmem:[%s2169 + $0x1c4] sm:$0xf]
    %v2284 = vld [vmem:[%s2169 + $0x1c8] sm:$0xf]
    %v2285 = vld [vmem:[%s2169 + $0x1cc] sm:$0xf]
    %v2286 = vld [vmem:[%s2169 + $0x1d0] sm:$0xf]
    %v2287 = vld [vmem:[%s2169 + $0x1d4] sm:$0xf]
    %v2288 = vld [vmem:[%s2169 + $0x1d8] sm:$0xf]
    %v2289 = vld [vmem:[%s2169 + $0x1dc] sm:$0xf]
    %v2290 = vld [vmem:[%s2169 + $0x1e0] sm:$0xf]
    %v2291 = vld [vmem:[%s2169 + $0x1e4] sm:$0xf]
    %v2292 = vld [vmem:[%s2169 + $0x1e8] sm:$0xf]
    %v2293 = vld [vmem:[%s2169 + $0x1ec] sm:$0xf]
    %v2294 = vld [vmem:[%s2169 + $0x1f0] sm:$0xf]
    %v2295 = vld [vmem:[%s2169 + $0x1f4] sm:$0xf]
    %v2296 = vld [vmem:[%s2169 + $0x1f8] sm:$0xf]
    %v2297 = vld [vmem:[%s2169 + $0x1fc] sm:$0xf]
    %v2298 = vld [vmem:[%s2169 + $0x200] sm:$0xf]
    %v2299 = vld [vmem:[%s2169 + $0x204] sm:$0xf]
    %v2300 = vld [vmem:[%s2169 + $0x208] sm:$0xf]
    %v2301 = vld [vmem:[%s2169 + $0x20c] sm:$0xf]
    %v2302 = vld [vmem:[%s2169 + $0x210] sm:$0xf]
    %v2303 = vld [vmem:[%s2169 + $0x214] sm:$0xf]
    %v2304 = vld [vmem:[%s2169 + $0x218] sm:$0xf]
    %v2305 = vld [vmem:[%s2169 + $0x21c] sm:$0xf]
    %v2306 = vld [vmem:[%s2169 + $0x220] sm:$0xf]
    %v2307 = vld [vmem:[%s2169 + $0x224] sm:$0xf]
    %v2308 = vld [vmem:[%s2169 + $0x228] sm:$0xf]
    %v2309 = vld [vmem:[%s2169 + $0x22c] sm:$0xf]
    %v2310 = vld [vmem:[%s2169 + $0x230] sm:$0xf]
    %v2311 = vld [vmem:[%s2169 + $0x234] sm:$0xf]
    %v2312 = vld [vmem:[%s2169 + $0x238] sm:$0xf]
    %v2313 = vld [vmem:[%s2169 + $0x23c] sm:$0xf]
    %v2314 = vld [vmem:[%s2169 + $0x240] sm:$0xf]
    %v2315 = vld [vmem:[%s2169 + $0x244] sm:$0xf]
    %v2316 = vld [vmem:[%s2169 + $0x248] sm:$0xf]
    %v2317 = vld [vmem:[%s2169 + $0x24c] sm:$0xf]
    %v2318 = vld [vmem:[%s2169 + $0x250] sm:$0xf]
    %v2319 = vld [vmem:[%s2169 + $0x254] sm:$0xf]
    %v2320 = vld [vmem:[%s2169 + $0x258] sm:$0xf]
    %v2321 = vld [vmem:[%s2169 + $0x25c] sm:$0xf]
    %v2322 = vld [vmem:[%s2169 + $0x260] sm:$0xf]
    %v2323 = vld [vmem:[%s2169 + $0x264] sm:$0xf]
    %v2324 = vld [vmem:[%s2169 + $0x268] sm:$0xf]
    %v2325 = vld [vmem:[%s2169 + $0x26c] sm:$0xf]
    %v2326 = vld [vmem:[%s2169 + $0x270] sm:$0xf]
    %v2327 = vld [vmem:[%s2169 + $0x274] sm:$0xf]
    %v2328 = vld [vmem:[%s2169 + $0x278] sm:$0xf]
    %v2329 = vld [vmem:[%s2169 + $0x27c] sm:$0xf]
    %v2330 = vld [vmem:[%s2169 + $0x280] sm:$0xf]
    %v2331 = vld [vmem:[%s2169 + $0x284] sm:$0xf]
    %v2332 = vld [vmem:[%s2169 + $0x288] sm:$0xf]
    %v2333 = vld [vmem:[%s2169 + $0x28c] sm:$0xf]
    %v2334 = vld [vmem:[%s2169 + $0x290] sm:$0xf]
    %v2335 = vld [vmem:[%s2169 + $0x294] sm:$0xf]
    %v2336 = vld [vmem:[%s2169 + $0x298] sm:$0xf]
    %v2337 = vld [vmem:[%s2169 + $0x29c] sm:$0xf]
    %v2338 = vld [vmem:[%s2169 + $0x2a0] sm:$0xf]
    %v2339 = vld [vmem:[%s2169 + $0x2a4] sm:$0xf]
    %v2340 = vld [vmem:[%s2169 + $0x2a8] sm:$0xf]
    %v2341 = vld [vmem:[%s2169 + $0x2ac] sm:$0xf]
    %v2342 = vld [vmem:[%s2169 + $0x2b0] sm:$0xf]
    %v2343 = vld [vmem:[%s2169 + $0x2b4] sm:$0xf]
    %v2344 = vld [vmem:[%s2169 + $0x2b8] sm:$0xf]
    %v2345 = vld [vmem:[%s2169 + $0x2bc] sm:$0xf]
    %s2346 = scalar_lea.vmem %s9, 1
    %v2347 = vld [vmem:[%s2346] sm:$0x1]
    %v2349 = vlaneseq
    %v2350 = vshrl.u32 %v2349, 7
    %v2351 = vsub.s32 0, %v2350
    %v2352 = vrot.slane %v2347, %v2351
    %v2530 = vunpack.c.l.b16 %v2170
    %v2531 = vunpack.c.l.b16 %v2171
    %v2532 = vunpack.c.l.b16 %v2172
    %v2533 = vunpack.c.l.b16 %v2173
    %v2534 = vunpack.c.l.b16 %v2174
    %v2535 = vunpack.c.l.b16 %v2175
    %v2536 = vunpack.c.l.b16 %v2176
    %v2537 = vunpack.c.l.b16 %v2177
    %v2538 = vunpack.c.l.b16 %v2178
    %v2539 = vunpack.c.l.b16 %v2179
    %v2540 = vunpack.c.l.b16 %v2180
    %v2541 = vunpack.c.l.b16 %v2181
    %v2542 = vunpack.c.l.b16 %v2182
    %v2543 = vunpack.c.l.b16 %v2183
    %v2544 = vunpack.c.l.b16 %v2184
    %v2545 = vunpack.c.l.b16 %v2185
    %v2546 = vunpack.c.l.b16 %v2186
    %v2547 = vunpack.c.l.b16 %v2187
    %v2548 = vunpack.c.l.b16 %v2188
    %v2549 = vunpack.c.l.b16 %v2189
    %v2550 = vunpack.c.l.b16 %v2190
    %v2551 = vunpack.c.l.b16 %v2191
    %v2552 = vunpack.c.l.b16 %v2192
    %v2553 = vunpack.c.l.b16 %v2193
    %v2554 = vunpack.c.l.b16 %v2194
    %v2555 = vunpack.c.l.b16 %v2195
    %v2556 = vunpack.c.l.b16 %v2196
    %v2557 = vunpack.c.l.b16 %v2197
    %v2558 = vunpack.c.l.b16 %v2198
    %v2559 = vunpack.c.l.b16 %v2199
    %v2560 = vunpack.c.l.b16 %v2200
    %v2561 = vunpack.c.l.b16 %v2201
    %v2562 = vunpack.c.l.b16 %v2202
    %v2563 = vunpack.c.l.b16 %v2203
    %v2564 = vunpack.c.l.b16 %v2204
    %v2565 = vunpack.c.l.b16 %v2205
    %v2566 = vunpack.c.l.b16 %v2206
    %v2567 = vunpack.c.l.b16 %v2207
    %v2568 = vunpack.c.l.b16 %v2208
    %v2569 = vunpack.c.l.b16 %v2209
    %v2570 = vunpack.c.l.b16 %v2210
    %v2571 = vunpack.c.l.b16 %v2211
    %v2572 = vunpack.c.l.b16 %v2212
    %v2573 = vunpack.c.l.b16 %v2213
    %v2574 = vunpack.c.l.b16 %v2214
    %v2575 = vunpack.c.l.b16 %v2215
    %v2576 = vunpack.c.l.b16 %v2216
    %v2577 = vunpack.c.l.b16 %v2217
    %v2578 = vunpack.c.l.b16 %v2218
    %v2579 = vunpack.c.l.b16 %v2219
    %v2580 = vunpack.c.l.b16 %v2220
    %v2581 = vunpack.c.l.b16 %v2221
    %v2582 = vunpack.c.l.b16 %v2222
    %v2583 = vunpack.c.l.b16 %v2223
    %v2584 = vunpack.c.l.b16 %v2224
    %v2585 = vunpack.c.l.b16 %v2225
    %v2586 = vunpack.c.l.b16 %v2226
    %v2587 = vunpack.c.l.b16 %v2227
    %v2588 = vunpack.c.l.b16 %v2228
    %v2589 = vunpack.c.l.b16 %v2229
    %v2590 = vunpack.c.l.b16 %v2230
    %v2591 = vunpack.c.l.b16 %v2231
    %v2592 = vunpack.c.l.b16 %v2232
    %v2593 = vunpack.c.l.b16 %v2233
    %v2594 = vunpack.c.l.b16 %v2234
    %v2595 = vunpack.c.l.b16 %v2235
    %v2596 = vunpack.c.l.b16 %v2236
    %v2597 = vunpack.c.l.b16 %v2237
    %v2598 = vunpack.c.l.b16 %v2238
    %v2599 = vunpack.c.l.b16 %v2239
    %v2600 = vunpack.c.l.b16 %v2240
    %v2601 = vunpack.c.l.b16 %v2241
    %v2602 = vunpack.c.l.b16 %v2242
    %v2603 = vunpack.c.l.b16 %v2243
    %v2604 = vunpack.c.l.b16 %v2244
    %v2605 = vunpack.c.l.b16 %v2245
    %v2606 = vunpack.c.l.b16 %v2246
    %v2607 = vunpack.c.l.b16 %v2247
    %v2608 = vunpack.c.l.b16 %v2248
    %v2609 = vunpack.c.l.b16 %v2249
    %v2610 = vunpack.c.l.b16 %v2250
    %v2611 = vunpack.c.l.b16 %v2251
    %v2612 = vunpack.c.l.b16 %v2252
    %v2613 = vunpack.c.l.b16 %v2253
    %v2614 = vunpack.c.l.b16 %v2254
    %v2615 = vunpack.c.l.b16 %v2255
    %v2616 = vunpack.c.l.b16 %v2256
    %v2617 = vunpack.c.l.b16 %v2257
    %v2618 = vunpack.c.l.b16 %v2258
    %v2619 = vunpack.c.l.b16 %v2259
    %v2620 = vunpack.c.l.b16 %v2260
    %v2621 = vunpack.c.l.b16 %v2261
    %v2622 = vunpack.c.l.b16 %v2262
    %v2623 = vunpack.c.l.b16 %v2263
    %v2624 = vunpack.c.l.b16 %v2264
    %v2625 = vunpack.c.l.b16 %v2265
    %v2626 = vunpack.c.l.b16 %v2266
    %v2627 = vunpack.c.l.b16 %v2267
    %v2628 = vunpack.c.l.b16 %v2268
    %v2629 = vunpack.c.l.b16 %v2269
    %v2630 = vunpack.c.l.b16 %v2270
    %v2631 = vunpack.c.l.b16 %v2271
    %v2632 = vunpack.c.l.b16 %v2272
    %v2633 = vunpack.c.l.b16 %v2273
    %v2634 = vunpack.c.l.b16 %v2274
    %v2635 = vunpack.c.l.b16 %v2275
    %v2636 = vunpack.c.l.b16 %v2276
    %v2637 = vunpack.c.l.b16 %v2277
    %v2638 = vunpack.c.l.b16 %v2278
    %v2639 = vunpack.c.l.b16 %v2279
    %v2640 = vunpack.c.l.b16 %v2280
    %v2641 = vunpack.c.l.b16 %v2281
    %v2642 = vunpack.c.l.b16 %v2282
    %v2643 = vunpack.c.l.b16 %v2283
    %v2644 = vunpack.c.l.b16 %v2284
    %v2645 = vunpack.c.l.b16 %v2285
    %v2646 = vunpack.c.l.b16 %v2286
    %v2647 = vunpack.c.l.b16 %v2287
    %v2648 = vunpack.c.l.b16 %v2288
    %v2649 = vunpack.c.l.b16 %v2289
    %v2650 = vunpack.c.l.b16 %v2290
    %v2651 = vunpack.c.l.b16 %v2291
    %v2652 = vunpack.c.l.b16 %v2292
    %v2653 = vunpack.c.l.b16 %v2293
    %v2654 = vunpack.c.l.b16 %v2294
    %v2655 = vunpack.c.l.b16 %v2295
    %v2656 = vunpack.c.l.b16 %v2296
    %v2657 = vunpack.c.l.b16 %v2297
    %v2658 = vunpack.c.l.b16 %v2298
    %v2659 = vunpack.c.l.b16 %v2299
    %v2660 = vunpack.c.l.b16 %v2300
    %v2661 = vunpack.c.l.b16 %v2301
    %v2662 = vunpack.c.l.b16 %v2302
    %v2663 = vunpack.c.l.b16 %v2303
    %v2664 = vunpack.c.l.b16 %v2304
    %v2665 = vunpack.c.l.b16 %v2305
    %v2666 = vunpack.c.l.b16 %v2306
    %v2667 = vunpack.c.l.b16 %v2307
    %v2668 = vunpack.c.l.b16 %v2308
    %v2669 = vunpack.c.l.b16 %v2309
    %v2670 = vunpack.c.l.b16 %v2310
    %v2671 = vunpack.c.l.b16 %v2311
    %v2672 = vunpack.c.l.b16 %v2312
    %v2673 = vunpack.c.l.b16 %v2313
    %v2674 = vunpack.c.l.b16 %v2314
    %v2675 = vunpack.c.l.b16 %v2315
    %v2676 = vunpack.c.l.b16 %v2316
    %v2677 = vunpack.c.l.b16 %v2317
    %v2678 = vunpack.c.l.b16 %v2318
    %v2679 = vunpack.c.l.b16 %v2319
    %v2680 = vunpack.c.l.b16 %v2320
    %v2681 = vunpack.c.l.b16 %v2321
    %v2682 = vunpack.c.l.b16 %v2322
    %v2683 = vunpack.c.l.b16 %v2323
    %v2684 = vunpack.c.l.b16 %v2324
    %v2685 = vunpack.c.l.b16 %v2325
    %v2686 = vunpack.c.l.b16 %v2326
    %v2687 = vunpack.c.l.b16 %v2327
    %v2688 = vunpack.c.l.b16 %v2328
    %v2689 = vunpack.c.l.b16 %v2329
    %v2690 = vunpack.c.l.b16 %v2330
    %v2691 = vunpack.c.l.b16 %v2331
    %v2692 = vunpack.c.l.b16 %v2332
    %v2693 = vunpack.c.l.b16 %v2333
    %v2694 = vunpack.c.l.b16 %v2334
    %v2695 = vunpack.c.l.b16 %v2335
    %v2696 = vunpack.c.l.b16 %v2336
    %v2697 = vunpack.c.l.b16 %v2337
    %v2698 = vunpack.c.l.b16 %v2338
    %v2699 = vunpack.c.l.b16 %v2339
    %v2700 = vunpack.c.l.b16 %v2340
    %v2701 = vunpack.c.l.b16 %v2341
    %v2702 = vunpack.c.l.b16 %v2342
    %v2703 = vunpack.c.l.b16 %v2343
    %v2704 = vunpack.c.l.b16 %v2344
    %v2705 = vunpack.c.l.b16 %v2345
    %v2706 = vpack.c.b16 %v2531, %v2530
    %v2707 = vpack.c.b16 %v2533, %v2532
    %v2708 = vpack.c.b16 %v2535, %v2534
    %v2709 = vpack.c.b16 %v2537, %v2536
    %v2710 = vpack.c.b16 %v2539, %v2538
    %v2711 = vpack.c.b16 %v2541, %v2540
    %v2712 = vpack.c.b16 %v2543, %v2542
    %v2713 = vpack.c.b16 %v2545, %v2544
    %v2714 = vpack.c.b16 %v2547, %v2546
    %v2715 = vpack.c.b16 %v2549, %v2548
    %v2716 = vpack.c.b16 %v2551, %v2550
    %v2717 = vpack.c.b16 %v2553, %v2552
    %v2718 = vpack.c.b16 %v2555, %v2554
    %v2719 = vpack.c.b16 %v2557, %v2556
    %v2720 = vpack.c.b16 %v2559, %v2558
    %v2721 = vpack.c.b16 %v2561, %v2560
    %v2722 = vpack.c.b16 %v2563, %v2562
    %v2723 = vpack.c.b16 %v2565, %v2564
    %v2724 = vpack.c.b16 %v2567, %v2566
    %v2725 = vpack.c.b16 %v2569, %v2568
    %v2726 = vpack.c.b16 %v2571, %v2570
    %v2727 = vpack.c.b16 %v2573, %v2572
    %v2728 = vpack.c.b16 %v2575, %v2574
    %v2729 = vpack.c.b16 %v2577, %v2576
    %v2730 = vpack.c.b16 %v2579, %v2578
    %v2731 = vpack.c.b16 %v2581, %v2580
    %v2732 = vpack.c.b16 %v2583, %v2582
    %v2733 = vpack.c.b16 %v2585, %v2584
    %v2734 = vpack.c.b16 %v2587, %v2586
    %v2735 = vpack.c.b16 %v2589, %v2588
    %v2736 = vpack.c.b16 %v2591, %v2590
    %v2737 = vpack.c.b16 %v2593, %v2592
    %v2738 = vpack.c.b16 %v2595, %v2594
    %v2739 = vpack.c.b16 %v2597, %v2596
    %v2740 = vpack.c.b16 %v2599, %v2598
    %v2741 = vpack.c.b16 %v2601, %v2600
    %v2742 = vpack.c.b16 %v2603, %v2602
    %v2743 = vpack.c.b16 %v2605, %v2604
    %v2744 = vpack.c.b16 %v2607, %v2606
    %v2745 = vpack.c.b16 %v2609, %v2608
    %v2746 = vpack.c.b16 %v2611, %v2610
    %v2747 = vpack.c.b16 %v2613, %v2612
    %v2748 = vpack.c.b16 %v2615, %v2614
    %v2749 = vpack.c.b16 %v2617, %v2616
    %v2750 = vpack.c.b16 %v2619, %v2618
    %v2751 = vpack.c.b16 %v2621, %v2620
    %v2752 = vpack.c.b16 %v2623, %v2622
    %v2753 = vpack.c.b16 %v2625, %v2624
    %v2754 = vpack.c.b16 %v2627, %v2626
    %v2755 = vpack.c.b16 %v2629, %v2628
    %v2756 = vpack.c.b16 %v2631, %v2630
    %v2757 = vpack.c.b16 %v2633, %v2632
    %v2758 = vpack.c.b16 %v2635, %v2634
    %v2759 = vpack.c.b16 %v2637, %v2636
    %v2760 = vpack.c.b16 %v2639, %v2638
    %v2761 = vpack.c.b16 %v2641, %v2640
    %v2762 = vpack.c.b16 %v2643, %v2642
    %v2763 = vpack.c.b16 %v2645, %v2644
    %v2764 = vpack.c.b16 %v2647, %v2646
    %v2765 = vpack.c.b16 %v2649, %v2648
    %v2766 = vpack.c.b16 %v2651, %v2650
    %v2767 = vpack.c.b16 %v2653, %v2652
    %v2768 = vpack.c.b16 %v2655, %v2654
    %v2769 = vpack.c.b16 %v2657, %v2656
    %v2770 = vpack.c.b16 %v2659, %v2658
    %v2771 = vpack.c.b16 %v2661, %v2660
    %v2772 = vpack.c.b16 %v2663, %v2662
    %v2773 = vpack.c.b16 %v2665, %v2664
    %v2774 = vpack.c.b16 %v2667, %v2666
    %v2775 = vpack.c.b16 %v2669, %v2668
    %v2776 = vpack.c.b16 %v2671, %v2670
    %v2777 = vpack.c.b16 %v2673, %v2672
    %v2778 = vpack.c.b16 %v2675, %v2674
    %v2779 = vpack.c.b16 %v2677, %v2676
    %v2780 = vpack.c.b16 %v2679, %v2678
    %v2781 = vpack.c.b16 %v2681, %v2680
    %v2782 = vpack.c.b16 %v2683, %v2682
    %v2783 = vpack.c.b16 %v2685, %v2684
    %v2784 = vpack.c.b16 %v2687, %v2686
    %v2785 = vpack.c.b16 %v2689, %v2688
    %v2786 = vpack.c.b16 %v2691, %v2690
    %v2787 = vpack.c.b16 %v2693, %v2692
    %v2788 = vpack.c.b16 %v2695, %v2694
    %v2789 = vpack.c.b16 %v2697, %v2696
    %v2790 = vpack.c.b16 %v2699, %v2698
    %v2791 = vpack.c.b16 %v2701, %v2700
    %v2792 = vpack.c.b16 %v2703, %v2702
    %v2793 = vpack.c.b16 %v2705, %v2704
    %2882 = vmatprep.subr.bf16.mxu0 0
    %2883 = vmatpush1.bf16.msra.mxu0 %v2713
    %2884 = vmatprep.subr.bf16.mxu0 0
    %2885 = vmatpush1.bf16.msra.mxu0 %v2712
    %2886 = vmatprep.subr.bf16.mxu0 0
    %2887 = vmatpush1.bf16.msra.mxu0 %v2711
    %2888 = vmatprep.subr.bf16.mxu0 0
    %2889 = vmatpush1.bf16.msra.mxu0 %v2710
    %2890 = vmatprep.subr.bf16.mxu0 0
    %2891 = vmatpush1.bf16.msra.mxu0 %v2709
    %2892 = vmatprep.subr.bf16.mxu0 0
    %2893 = vmatpush1.bf16.msra.mxu0 %v2708
    %2894 = vmatprep.subr.bf16.mxu0 0
    %2895 = vmatpush1.bf16.msra.mxu0 %v2707
    %2896 = vmatprep.subr.bf16.mxu0 0
    %2897 = vmatpush1.bf16.msra.mxu0 %v2706
    %2898 = vmatprep.subr.bf16.mxu0 0
    %2899 = vmatpush2.bf16.msra.mxu0 %v2721
    %2900 = vmatprep.subr.bf16.mxu0 0
    %2901 = vmatpush2.bf16.msra.mxu0 %v2720
    %2902 = vmatprep.subr.bf16.mxu0 0
    %2903 = vmatpush2.bf16.msra.mxu0 %v2719
    %2904 = vmatprep.subr.bf16.mxu0 0
    %2905 = vmatpush2.bf16.msra.mxu0 %v2718
    %2906 = vmatprep.subr.bf16.mxu0 0
    %2907 = vmatpush2.bf16.msra.mxu0 %v2717
    %2908 = vmatprep.subr.bf16.mxu0 0
    %2909 = vmatpush2.bf16.msra.mxu0 %v2716
    %2910 = vmatprep.subr.bf16.mxu0 0
    %2911 = vmatpush2.bf16.msra.mxu0 %v2715
    %2912 = vmatprep.subr.bf16.mxu0 0
    %2913 = vmatpush2.bf16.msra.mxu0 %v2714
    %2914 = vmatprep.mubr.bf16.mxu0 %v2159
    %2915 = vmatmul.mubr.bf16.gmra.mxu0 %v2158
    %v2916 = vpop.f32.mrf.mxu0
    %v2917 = vadd.f32 %v2352, %v2916
    %v2918 = vpop.f32.mrf.mxu0
    %v2919 = vpop.f32.mrf.mxu0
    %v2920 = vpop.f32.mrf.mxu0
    %2921 = vdwg.mxu0
    %2922 = vmatprep.subr.bf16.mxu0 0
    %2923 = vmatpush1.bf16.msra.mxu0 %v2729
    %2924 = vmatprep.subr.bf16.mxu0 0
    %2925 = vmatpush1.bf16.msra.mxu0 %v2728
    %2926 = vmatprep.subr.bf16.mxu0 0
    %2927 = vmatpush1.bf16.msra.mxu0 %v2727
    %2928 = vmatprep.subr.bf16.mxu0 0
    %2929 = vmatpush1.bf16.msra.mxu0 %v2726
    %2930 = vmatprep.subr.bf16.mxu0 0
    %2931 = vmatpush1.bf16.msra.mxu0 %v2725
    %2932 = vmatprep.subr.bf16.mxu0 0
    %2933 = vmatpush1.bf16.msra.mxu0 %v2724
    %2934 = vmatprep.subr.bf16.mxu0 0
    %2935 = vmatpush1.bf16.msra.mxu0 %v2723
    %2936 = vmatprep.subr.bf16.mxu0 0
    %2937 = vmatpush1.bf16.msra.mxu0 %v2722
    %2938 = vmatprep.subr.bf16.mxu0 0
    %2939 = vmatpush2.bf16.msra.mxu0 %v2737
    %2940 = vmatprep.subr.bf16.mxu0 0
    %2941 = vmatpush2.bf16.msra.mxu0 %v2736
    %2942 = vmatprep.subr.bf16.mxu0 0
    %2943 = vmatpush2.bf16.msra.mxu0 %v2735
    %2944 = vmatprep.subr.bf16.mxu0 0
    %2945 = vmatpush2.bf16.msra.mxu0 %v2734
    %2946 = vmatprep.subr.bf16.mxu0 0
    %2947 = vmatpush2.bf16.msra.mxu0 %v2733
    %2948 = vmatprep.subr.bf16.mxu0 0
    %2949 = vmatpush2.bf16.msra.mxu0 %v2732
    %2950 = vmatprep.subr.bf16.mxu0 0
    %2951 = vmatpush2.bf16.msra.mxu0 %v2731
    %2952 = vmatprep.subr.bf16.mxu0 0
    %2953 = vmatpush2.bf16.msra.mxu0 %v2730
    %2954 = vmatprep.mubr.bf16.mxu0 %v2161
    %2955 = vmatmul.mubr.bf16.gmra.mxu0 %v2160
    %v2956 = vpop.f32.mrf.mxu0
    %v2957 = vadd.f32 %v2917, %v2956
    %v2958 = vpop.f32.mrf.mxu0
    %v2959 = vpop.f32.mrf.mxu0
    %v2960 = vpop.f32.mrf.mxu0
    %2961 = vdwg.mxu0
    %2962 = vmatprep.subr.bf16.mxu0 0
    %2963 = vmatpush1.bf16.msra.mxu0 %v2745
    %2964 = vmatprep.subr.bf16.mxu0 0
    %2965 = vmatpush1.bf16.msra.mxu0 %v2744
    %2966 = vmatprep.subr.bf16.mxu0 0
    %2967 = vmatpush1.bf16.msra.mxu0 %v2743
    %2968 = vmatprep.subr.bf16.mxu0 0
    %2969 = vmatpush1.bf16.msra.mxu0 %v2742
    %2970 = vmatprep.subr.bf16.mxu0 0
    %2971 = vmatpush1.bf16.msra.mxu0 %v2741
    %2972 = vmatprep.subr.bf16.mxu0 0
    %2973 = vmatpush1.bf16.msra.mxu0 %v2740
    %2974 = vmatprep.subr.bf16.mxu0 0
    %2975 = vmatpush1.bf16.msra.mxu0 %v2739
    %2976 = vmatprep.subr.bf16.mxu0 0
    %2977 = vmatpush1.bf16.msra.mxu0 %v2738
    %2978 = vmatprep.subr.bf16.mxu0 0
    %2979 = vmatpush2.bf16.msra.mxu0 %v2753
    %2980 = vmatprep.subr.bf16.mxu0 0
    %2981 = vmatpush2.bf16.msra.mxu0 %v2752
    %2982 = vmatprep.subr.bf16.mxu0 0
    %2983 = vmatpush2.bf16.msra.mxu0 %v2751
    %2984 = vmatprep.subr.bf16.mxu0 0
    %2985 = vmatpush2.bf16.msra.mxu0 %v2750
    %2986 = vmatprep.subr.bf16.mxu0 0
    %2987 = vmatpush2.bf16.msra.mxu0 %v2749
    %2988 = vmatprep.subr.bf16.mxu0 0
    %2989 = vmatpush2.bf16.msra.mxu0 %v2748
    %2990 = vmatprep.subr.bf16.mxu0 0
    %2991 = vmatpush2.bf16.msra.mxu0 %v2747
    %2992 = vmatprep.subr.bf16.mxu0 0
    %2993 = vmatpush2.bf16.msra.mxu0 %v2746
    %2994 = vmatprep.mubr.bf16.mxu0 %v2163
    %2995 = vmatmul.mubr.bf16.gmra.mxu0 %v2162
    %v2996 = vpop.f32.mrf.mxu0
    %v2997 = vadd.f32 %v2957, %v2996
    %v2998 = vpop.f32.mrf.mxu0
    %v2999 = vpop.f32.mrf.mxu0
    %v3000 = vpop.f32.mrf.mxu0
    %3001 = vdwg.mxu0
    %3002 = vmatprep.subr.bf16.mxu0 0
    %3003 = vmatpush1.bf16.msra.mxu0 %v2761
    %3004 = vmatprep.subr.bf16.mxu0 0
    %3005 = vmatpush1.bf16.msra.mxu0 %v2760
    %3006 = vmatprep.subr.bf16.mxu0 0
    %3007 = vmatpush1.bf16.msra.mxu0 %v2759
    %3008 = vmatprep.subr.bf16.mxu0 0
    %3009 = vmatpush1.bf16.msra.mxu0 %v2758
    %3010 = vmatprep.subr.bf16.mxu0 0
    %3011 = vmatpush1.bf16.msra.mxu0 %v2757
    %3012 = vmatprep.subr.bf16.mxu0 0
    %3013 = vmatpush1.bf16.msra.mxu0 %v2756
    %3014 = vmatprep.subr.bf16.mxu0 0
    %3015 = vmatpush1.bf16.msra.mxu0 %v2755
    %3016 = vmatprep.subr.bf16.mxu0 0
    %3017 = vmatpush1.bf16.msra.mxu0 %v2754
    %3018 = vmatprep.subr.bf16.mxu0 0
    %3019 = vmatpush2.bf16.msra.mxu0 %v2769
    %3020 = vmatprep.subr.bf16.mxu0 0
    %3021 = vmatpush2.bf16.msra.mxu0 %v2768
    %3022 = vmatprep.subr.bf16.mxu0 0
    %3023 = vmatpush2.bf16.msra.mxu0 %v2767
    %3024 = vmatprep.subr.bf16.mxu0 0
    %3025 = vmatpush2.bf16.msra.mxu0 %v2766
    %3026 = vmatprep.subr.bf16.mxu0 0
    %3027 = vmatpush2.bf16.msra.mxu0 %v2765
    %3028 = vmatprep.subr.bf16.mxu0 0
    %3029 = vmatpush2.bf16.msra.mxu0 %v2764
    %3030 = vmatprep.subr.bf16.mxu0 0
    %3031 = vmatpush2.bf16.msra.mxu0 %v2763
    %3032 = vmatprep.subr.bf16.mxu0 0
    %3033 = vmatpush2.bf16.msra.mxu0 %v2762
    %3034 = vmatprep.mubr.bf16.mxu0 %v2165
    %3035 = vmatmul.mubr.bf16.gmra.mxu0 %v2164
    %v3036 = vpop.f32.mrf.mxu0
    %v3037 = vadd.f32 %v2997, %v3036
    %v3038 = vpop.f32.mrf.mxu0
    %v3039 = vpop.f32.mrf.mxu0
    %v3040 = vpop.f32.mrf.mxu0
    %3041 = vdwg.mxu0
    %3042 = vmatprep.subr.bf16.mxu0 0
    %3043 = vmatpush1.bf16.msra.mxu0 %v2777
    %3044 = vmatprep.subr.bf16.mxu0 0
    %3045 = vmatpush1.bf16.msra.mxu0 %v2776
    %3046 = vmatprep.subr.bf16.mxu0 0
    %3047 = vmatpush1.bf16.msra.mxu0 %v2775
    %3048 = vmatprep.subr.bf16.mxu0 0
    %3049 = vmatpush1.bf16.msra.mxu0 %v2774
    %3050 = vmatprep.subr.bf16.mxu0 0
    %3051 = vmatpush1.bf16.msra.mxu0 %v2773
    %3052 = vmatprep.subr.bf16.mxu0 0
    %3053 = vmatpush1.bf16.msra.mxu0 %v2772
    %3054 = vmatprep.subr.bf16.mxu0 0
    %3055 = vmatpush1.bf16.msra.mxu0 %v2771
    %3056 = vmatprep.subr.bf16.mxu0 0
    %3057 = vmatpush1.bf16.msra.mxu0 %v2770
    %3058 = vmatprep.subr.bf16.mxu0 0
    %3059 = vmatpush2.bf16.msra.mxu0 %v2785
    %3060 = vmatprep.subr.bf16.mxu0 0
    %3061 = vmatpush2.bf16.msra.mxu0 %v2784
    %3062 = vmatprep.subr.bf16.mxu0 0
    %3063 = vmatpush2.bf16.msra.mxu0 %v2783
    %3064 = vmatprep.subr.bf16.mxu0 0
    %3065 = vmatpush2.bf16.msra.mxu0 %v2782
    %3066 = vmatprep.subr.bf16.mxu0 0
    %3067 = vmatpush2.bf16.msra.mxu0 %v2781
    %3068 = vmatprep.subr.bf16.mxu0 0
    %3069 = vmatpush2.bf16.msra.mxu0 %v2780
    %3070 = vmatprep.subr.bf16.mxu0 0
    %3071 = vmatpush2.bf16.msra.mxu0 %v2779
    %3072 = vmatprep.subr.bf16.mxu0 0
    %3073 = vmatpush2.bf16.msra.mxu0 %v2778
    %3074 = vmatprep.mubr.bf16.mxu0 %v2167
    %3075 = vmatmul.mubr.bf16.gmra.mxu0 %v2166
    %v3076 = vpop.f32.mrf.mxu0
    %v3077 = vadd.f32 %v3037, %v3076
    %v3078 = vpop.f32.mrf.mxu0
    %v3079 = vpop.f32.mrf.mxu0
    %v3080 = vpop.f32.mrf.mxu0
    %3081 = vdwg.mxu0
    %3082 = vmatprep.subr.bf16.mxu0 0
    %3083 = vmatpush1.bf16.msra.mxu0 %v2793
    %3084 = vmatprep.subr.bf16.mxu0 0
    %3085 = vmatpush1.bf16.msra.mxu0 %v2792
    %3086 = vmatprep.subr.bf16.mxu0 0
    %3087 = vmatpush1.bf16.msra.mxu0 %v2791
    %3088 = vmatprep.subr.bf16.mxu0 0
    %3089 = vmatpush1.bf16.msra.mxu0 %v2790
    %3090 = vmatprep.subr.bf16.mxu0 0
    %3091 = vmatpush1.bf16.msra.mxu0 %v2789
    %3092 = vmatprep.subr.bf16.mxu0 0
    %3093 = vmatpush1.bf16.msra.mxu0 %v2788
    %3094 = vmatprep.subr.bf16.mxu0 0
    %3095 = vmatpush1.bf16.msra.mxu0 %v2787
    %3096 = vmatprep.subr.bf16.mxu0 0
    %3097 = vmatpush1.bf16.msra.mxu0 %v2786
    %3098 = vmatprep.subr.bf16.mxu0 0
    %3099 = vmatpush2.bf16.msra.mxu0 0
    %3100 = vmatprep.subr.bf16.mxu0 0
    %3101 = vmatpush2.bf16.msra.mxu0 0
    %3102 = vmatprep.subr.bf16.mxu0 0
    %3103 = vmatpush2.bf16.msra.mxu0 0
    %3104 = vmatprep.subr.bf16.mxu0 0
    %3105 = vmatpush2.bf16.msra.mxu0 0
    %3106 = vmatprep.subr.bf16.mxu0 0
    %3107 = vmatpush2.bf16.msra.mxu0 0
    %3108 = vmatprep.subr.bf16.mxu0 0
    %3109 = vmatpush2.bf16.msra.mxu0 0
    %3110 = vmatprep.subr.bf16.mxu0 0
    %3111 = vmatpush2.bf16.msra.mxu0 0
    %3112 = vmatprep.subr.bf16.mxu0 0
    %3113 = vmatpush2.bf16.msra.mxu0 0
    %3114 = vmatprep.mubr.bf16.mxu0 0
    %3115 = vmatmul.mubr.bf16.gmra.mxu0 %v2168
    %v3116 = vpop.f32.mrf.mxu0
    %v3117 = vadd.f32 %v3077, %v3116
    %v3118 = vpop.f32.mrf.mxu0
    %v3119 = vpop.f32.mrf.mxu0
    %v3120 = vpop.f32.mrf.mxu0
    %3121 = vdwg.mxu0
    %v3122 = vadd.f32 %v3117, %v1747
    %3124 = vrot.lane.b32.xlu0 %v1748, 16
    %v3125 = vpop.permute.xlu0 %3124
    %v3127 = vadd.f32 %v3117, %v3125
    %3129 = vrot.lane.b32.xlu0 %v3127, 112
    %v3130 = vpop.permute.xlu0 %3129
    %v3132 = vsel %vm322, %v3122, 0.0
    %3133 = vadd.xlane.f32.xlu0 %v3132
    %v3134 = vpop.xlane.xlu0 %3133
    %v3135 = vsel %vm322, %v3130, 0.0
    %3136 = vadd.xlane.f32.xlu0 %v3135
    %v3137 = vpop.xlane.xlu0 %3136
    %v3138 = vmul.f32 %v3134, %v1712
    %v3139 = vmul.f32 %v3137, %v1712
    %v3140 = vsub.f32 %v3122, %v3138
    %v3141 = vsub.f32 %v3130, %v3139
    %v3142 = vmul.f32 %v3140, %v3140
    %v3143 = vmul.f32 %v3141, %v3141
    %v3144 = vsel %vm322, %v3142, 0.0
    %3145 = vadd.xlane.f32.xlu0 %v3144
    %v3146 = vpop.xlane.xlu0 %3145
    %v3147 = vsel %vm322, %v3143, 0.0
    %3148 = vadd.xlane.f32.xlu0 %v3147
    %v3149 = vpop.xlane.xlu0 %3148
    %v3150 = vmul.f32 %v3146, %v1712
    %v3151 = vmul.f32 %v3149, %v1712
    %v3152 = vadd.f32 %v3150, 1e-05
    %v3153 = vadd.f32 %v3151, 1e-05
    %v3154 = vrsqrt.pop %v3152
    %v3155 = vrsqrt.pop %v3153
    %v3156 = vmul.f32 %v3140, %v3154
    %v3157 = vmul.f32 %v3141, %v3155
    %v3158 = vmul.f32 %v3156, %v1737
    %v3159 = vmul.f32 %v3157, %v1737
    %v3160 = vadd.f32 %v3158, %v1745
    %v3161 = vadd.f32 %v3159, %v1745
    %v3162 = vpack.c.bf16 %v3161, %v3160
    %v3164 = vlaneseq
    %v3165 = vshrl.u32 %v3164, 7
    %v3166 = vsub.s32 0, %v3165
    %v3167 = vrot.slane %v147, %v3166
    %v3171 = vunpack.c.l.b16 %v145
    %v3172 = vunpack.c.l.b16 %v146
    %v3173 = vpack.c.b16 %v3172, %v3171
    %v3176 = vsel %vm322, %v3162, 0
    %3178 = vmatprep.subr.bf16.mxu0 0
    %3179 = vmatpush1.bf16.msra.mxu0 0
    %3180 = vmatprep.subr.bf16.mxu0 0
    %3181 = vmatpush1.bf16.msra.mxu0 0
    %3182 = vmatprep.subr.bf16.mxu0 0
    %3183 = vmatpush1.bf16.msra.mxu0 0
    %3184 = vmatprep.subr.bf16.mxu0 0
    %3185 = vmatpush1.bf16.msra.mxu0 0
    %3186 = vmatprep.subr.bf16.mxu0 0
    %3187 = vmatpush1.bf16.msra.mxu0 0
    %3188 = vmatprep.subr.bf16.mxu0 0
    %3189 = vmatpush1.bf16.msra.mxu0 0
    %3190 = vmatprep.subr.bf16.mxu0 0
    %3191 = vmatpush1.bf16.msra.mxu0 0
    %3192 = vmatprep.subr.bf16.mxu0 0
    %3193 = vmatpush1.bf16.msra.mxu0 %v3173
    %3194 = vmatprep.subr.bf16.mxu0 0
    %3195 = vmatpush2.bf16.msra.mxu0 0
    %3196 = vmatprep.subr.bf16.mxu0 0
    %3197 = vmatpush2.bf16.msra.mxu0 0
    %3198 = vmatprep.subr.bf16.mxu0 0
    %3199 = vmatpush2.bf16.msra.mxu0 0
    %3200 = vmatprep.subr.bf16.mxu0 0
    %3201 = vmatpush2.bf16.msra.mxu0 0
    %3202 = vmatprep.subr.bf16.mxu0 0
    %3203 = vmatpush2.bf16.msra.mxu0 0
    %3204 = vmatprep.subr.bf16.mxu0 0
    %3205 = vmatpush2.bf16.msra.mxu0 0
    %3206 = vmatprep.subr.bf16.mxu0 0
    %3207 = vmatpush2.bf16.msra.mxu0 0
    %3208 = vmatprep.subr.bf16.mxu0 0
    %3209 = vmatpush2.bf16.msra.mxu0 0
    %3210 = vmatprep.mubr.bf16.mxu0 0
    %3211 = vmatmul.mubr.bf16.gmra.mxu0 %v3176
    %v3212 = vpop.f32.mrf.mxu0
    %v3213 = vadd.f32 %v3167, %v3212
    %v3214 = vpop.f32.mrf.mxu0
    %v3215 = vpop.f32.mrf.mxu0
    %v3216 = vadd.f32 %v3167, %v3215
    %v3217 = vpop.f32.mrf.mxu0
    %3218 = vdwg.mxu0
    %v3219 = vpack.c.bf16 %v3216, %v3213
    %3221 = vset.pattern.permute.xlu0 0
    %3222 = vperm.xlu0 %3221, %v149
    %v3223 = vpop.permute.xlu0 %3222
    %v3226 = vsel %vm322, %v148, 0
    %3228 = vmatprep.subr.bf16.mxu0 0
    %3229 = vmatpush1.bf16.msra.mxu0 0
    %3230 = vmatprep.subr.bf16.mxu0 0
    %3231 = vmatpush1.bf16.msra.mxu0 0
    %3232 = vmatprep.subr.bf16.mxu0 0
    %3233 = vmatpush1.bf16.msra.mxu0 0
    %3234 = vmatprep.subr.bf16.mxu0 0
    %3235 = vmatpush1.bf16.msra.mxu0 0
    %3236 = vmatprep.subr.bf16.mxu0 0
    %3237 = vmatpush1.bf16.msra.mxu0 0
    %3238 = vmatprep.subr.bf16.mxu0 0
    %3239 = vmatpush1.bf16.msra.mxu0 0
    %3240 = vmatprep.subr.bf16.mxu0 0
    %3241 = vmatpush1.bf16.msra.mxu0 0
    %3242 = vmatprep.subr.bf16.mxu0 0
    %3243 = vmatpush1.bf16.msra.mxu0 %v3219
    %3244 = vmatprep.subr.bf16.mxu0 0
    %3245 = vmatpush2.bf16.msra.mxu0 0
    %3246 = vmatprep.subr.bf16.mxu0 0
    %3247 = vmatpush2.bf16.msra.mxu0 0
    %3248 = vmatprep.subr.bf16.mxu0 0
    %3249 = vmatpush2.bf16.msra.mxu0 0
    %3250 = vmatprep.subr.bf16.mxu0 0
    %3251 = vmatpush2.bf16.msra.mxu0 0
    %3252 = vmatprep.subr.bf16.mxu0 0
    %3253 = vmatpush2.bf16.msra.mxu0 0
    %3254 = vmatprep.subr.bf16.mxu0 0
    %3255 = vmatpush2.bf16.msra.mxu0 0
    %3256 = vmatprep.subr.bf16.mxu0 0
    %3257 = vmatpush2.bf16.msra.mxu0 0
    %3258 = vmatprep.subr.bf16.mxu0 0
    %3259 = vmatpush2.bf16.msra.mxu0 0
    %3260 = vmatprep.mubr.bf16.mxu0 0
    %3261 = vmatmul.mubr.bf16.gmra.mxu0 %v3226
    %v3262 = vpop.f32.mrf.mxu0
    %v3263 = vadd.f32 %v3223, %v3262
    %v3264 = vpop.f32.mrf.mxu0
    %v3265 = vpop.f32.mrf.mxu0
    %v3266 = vpop.f32.mrf.mxu0
    %3267 = vdwg.mxu0
    %3268 = vst.msk [vmem:[%s16] sm:$0xff] %vm158, %v3263
    %s3269 = scalar_lea.vmem %s0, 8
    %v3270 = vld [vmem:[%s3269] sm:$0xff]
    %v3271 = vsel %vm158, %v3270, 0.0
    %v3272 = vrot.slane %v3271, 4
    %v3273 = vadd.f32 %v3271, %v3272
    %v3274 = vrot.slane %v3273, 2
    %v3275 = vadd.f32 %v3273, %v3274
    %v3276 = vrot.slane %v3275, 1
    %v3277 = vadd.f32 %v3275, %v3276
    %v3278 = vmul.f32 %v3277, %v166
    %v3279 = vsub.f32 %v3270, %v3278
    %v3280 = vmul.f32 %v3279, %v3279
    %v3281 = vsel %vm158, %v3280, 0.0
    %v3282 = vrot.slane %v3281, 4
    %v3283 = vadd.f32 %v3281, %v3282
    %v3284 = vrot.slane %v3283, 2
    %v3285 = vadd.f32 %v3283, %v3284
    %v3286 = vrot.slane %v3285, 1
    %v3287 = vadd.f32 %v3285, %v3286
    %v3288 = vmul.f32 %v3287, %v166
    %v3289 = vadd.f32 %v3288, 1e-05
    %v3290 = vrsqrt.pop %v3289
    %v3291 = vmul.f32 %v3279, %v3290
    %3292 = vst.msk [vmem:[#allocation2] sm:$0xff] %vm158, %v3291
    %3293 = vst.msk [vmem:[#allocation2 + $0x8] sm:$0xff] %vm158, %v3291
    %3294 = vst.msk [vmem:[#allocation2 + $0x10] sm:$0xff] %vm158, %v3291
    %v3295 = vld [vmem:[#allocation2 + $0x7] sm:$0xff]
    %v3296 = vld [vmem:[#allocation2 + $0x8] sm:$0xff]
    %v3297 = vld [vmem:[#allocation2 + $0x9] sm:$0xff]
    %3299 = vrot.lane.b32.xlu0 %v3296, 4
    %v3300 = vpop.permute.xlu0 %3299
    %3303 = vrot.lane.b32.xlu0 %v3297, 8
    %v3304 = vpop.permute.xlu0 %3303
    %v3306 = vsel %vm158, %v3295, %v3300
    %v3307 = vsel %vm196, %v3306, %v3304
    %v3308 = vpack.c.bf16 %v3307, %v3307
    %v3310 = vsel %vm204, %v3308, 0
    %3312 = vmatprep.subr.bf16.mxu0 0
    %3313 = vmatpush1.bf16.msra.mxu0 0
    %3314 = vmatprep.subr.bf16.mxu0 0
    %3315 = vmatpush1.bf16.msra.mxu0 0
    %3316 = vmatprep.subr.bf16.mxu0 0
    %3317 = vmatpush1.bf16.msra.mxu0 0
    %3318 = vmatprep.subr.bf16.mxu0 0
    %3319 = vmatpush1.bf16.msra.mxu0 0
    %3320 = vmatprep.subr.bf16.mxu0 0
    %3321 = vmatpush1.bf16.msra.mxu0 0
    %3322 = vmatprep.subr.bf16.mxu0 0
    %3323 = vmatpush1.bf16.msra.mxu0 0
    %3324 = vmatprep.subr.bf16.mxu0 0
    %3325 = vmatpush1.bf16.msra.mxu0 0
    %3326 = vmatprep.subr.bf16.mxu0 0
    %3327 = vmatpush1.bf16.msra.mxu0 %v210
    %3328 = vmatprep.subr.bf16.mxu0 0
    %3329 = vmatpush2.bf16.msra.mxu0 0
    %3330 = vmatprep.subr.bf16.mxu0 0
    %3331 = vmatpush2.bf16.msra.mxu0 0
    %3332 = vmatprep.subr.bf16.mxu0 0
    %3333 = vmatpush2.bf16.msra.mxu0 0
    %3334 = vmatprep.subr.bf16.mxu0 0
    %3335 = vmatpush2.bf16.msra.mxu0 0
    %3336 = vmatprep.subr.bf16.mxu0 0
    %3337 = vmatpush2.bf16.msra.mxu0 0
    %3338 = vmatprep.subr.bf16.mxu0 0
    %3339 = vmatpush2.bf16.msra.mxu0 0
    %3340 = vmatprep.subr.bf16.mxu0 0
    %3341 = vmatpush2.bf16.msra.mxu0 0
    %3342 = vmatprep.subr.bf16.mxu0 0
    %3343 = vmatpush2.bf16.msra.mxu0 0
    %3344 = vmatprep.mubr.bf16.mxu0 0
    %3345 = vmatmul.mubr.bf16.gmra.mxu0 %v3310
    %v3346 = vpop.f32.mrf.mxu0
    %v3347 = vadd.f32 %v136, %v3346
    %v3348 = vpop.f32.mrf.mxu0
    %v3349 = vpop.f32.mrf.mxu0
    %v3350 = vpop.f32.mrf.mxu0
    %3351 = vdwg.mxu0
    %v3352 = vpack.c.bf16 %v3347, %v3347
    %v3354 = vsel %vm271, %v3352, 0
    %3356 = vmatprep.subr.bf16.mxu0 0
    %3357 = vmatpush1.bf16.msra.mxu0 0
    %3358 = vmatprep.subr.bf16.mxu0 0
    %3359 = vmatpush1.bf16.msra.mxu0 0
    %3360 = vmatprep.subr.bf16.mxu0 0
    %3361 = vmatpush1.bf16.msra.mxu0 0
    %3362 = vmatprep.subr.bf16.mxu0 0
    %3363 = vmatpush1.bf16.msra.mxu0 0
    %3364 = vmatprep.subr.bf16.mxu0 0
    %3365 = vmatpush1.bf16.msra.mxu0 0
    %3366 = vmatprep.subr.bf16.mxu0 0
    %3367 = vmatpush1.bf16.msra.mxu0 0
    %3368 = vmatprep.subr.bf16.mxu0 0
    %3369 = vmatpush1.bf16.msra.mxu0 0
    %3370 = vmatprep.subr.bf16.mxu0 0
    %3371 = vmatpush1.bf16.msra.mxu0 %v3354
    %3372 = vmatprep.subr.bf16.mxu0 0
    %3373 = vmatpush2.bf16.msra.mxu0 0
    %3374 = vmatprep.subr.bf16.mxu0 0
    %3375 = vmatpush2.bf16.msra.mxu0 0
    %3376 = vmatprep.subr.bf16.mxu0 0
    %3377 = vmatpush2.bf16.msra.mxu0 0
    %3378 = vmatprep.subr.bf16.mxu0 0
    %3379 = vmatpush2.bf16.msra.mxu0 0
    %3380 = vmatprep.subr.bf16.mxu0 0
    %3381 = vmatpush2.bf16.msra.mxu0 0
    %3382 = vmatprep.subr.bf16.mxu0 0
    %3383 = vmatpush2.bf16.msra.mxu0 0
    %3384 = vmatprep.subr.bf16.mxu0 0
    %3385 = vmatpush2.bf16.msra.mxu0 0
    %3386 = vmatprep.subr.bf16.mxu0 0
    %3387 = vmatpush2.bf16.msra.mxu0 0
    %3388 = vmatprep.mubr.bf16.mxu0 0
    %3389 = vmatmul.mubr.bf16.gmra.mxu0 %v269
    %v3390 = vpop.f32.mrf.mxu0
    %v3391 = vadd.f32 %v256, %v3390
    %v3392 = vpop.f32.mrf.mxu0
    %v3393 = vpop.f32.mrf.mxu0
    %v3394 = vadd.f32 %v261, %v3393
    %v3395 = vpop.f32.mrf.mxu0
    %3396 = vdwg.mxu0
    %v3397 = vpack.c.bf16 %v3394, %v3391
    %3398 = vmatprep.subr.bf16.mxu0 0
    %3399 = vmatpush1.bf16.msra.mxu0 0
    %3400 = vmatprep.subr.bf16.mxu0 0
    %3401 = vmatpush1.bf16.msra.mxu0 0
    %3402 = vmatprep.subr.bf16.mxu0 0
    %3403 = vmatpush1.bf16.msra.mxu0 0
    %3404 = vmatprep.subr.bf16.mxu0 0
    %3405 = vmatpush1.bf16.msra.mxu0 0
    %3406 = vmatprep.subr.bf16.mxu0 0
    %3407 = vmatpush1.bf16.msra.mxu0 0
    %3408 = vmatprep.subr.bf16.mxu0 0
    %3409 = vmatpush1.bf16.msra.mxu0 0
    %3410 = vmatprep.subr.bf16.mxu0 0
    %3411 = vmatpush1.bf16.msra.mxu0 0
    %3412 = vmatprep.subr.bf16.mxu0 0
    %3413 = vmatpush1.bf16.msra.mxu0 %v3397
    %3414 = vmatprep.subr.bf16.mxu0 0
    %3415 = vmatpush2.bf16.msra.mxu0 0
    %3416 = vmatprep.subr.bf16.mxu0 0
    %3417 = vmatpush2.bf16.msra.mxu0 0
    %3418 = vmatprep.subr.bf16.mxu0 0
    %3419 = vmatpush2.bf16.msra.mxu0 0
    %3420 = vmatprep.subr.bf16.mxu0 0
    %3421 = vmatpush2.bf16.msra.mxu0 0
    %3422 = vmatprep.subr.bf16.mxu0 0
    %3423 = vmatpush2.bf16.msra.mxu0 0
    %3424 = vmatprep.subr.bf16.mxu0 0
    %3425 = vmatpush2.bf16.msra.mxu0 0
    %3426 = vmatprep.subr.bf16.mxu0 0
    %3427 = vmatpush2.bf16.msra.mxu0 0
    %3428 = vmatprep.subr.bf16.mxu0 0
    %3429 = vmatpush2.bf16.msra.mxu0 0
    %3430 = vmatprep.mubr.bf16.mxu0 0
    %3431 = vmatmul.mubr.bf16.gmra.mxu0 %v324
    %v3432 = vpop.f32.mrf.mxu0
    %v3433 = vadd.f32 0.0, %v3432
    %v3434 = vpop.f32.mrf.mxu0
    %v3435 = vpop.f32.mrf.mxu0
    %v3436 = vadd.f32 0.0, %v3435
    %v3437 = vpop.f32.mrf.mxu0
    %3438 = vdwg.mxu0
    %3440 = vrot.lane.b32.xlu0 %v3436, 16
    %v3441 = vpop.permute.xlu0 %3440
    %v3443 = vsel %vm322, %v3433, %v3441
    %3444 = vst.msk [vmem:[#allocation3 + $0x8] sm:$0xff] %vm150, %v3443
    %v3445 = vld [vmem:[#allocation3 + $0x3] sm:$0xff]
    %v3446 = vld [vmem:[#allocation3 + $0x4] sm:$0xff]
    %v3447 = vld [vmem:[#allocation3 + $0x5] sm:$0xff]
    %v3448 = vld [vmem:[#allocation3 + $0x6] sm:$0xff]
    %v3449 = vld [vmem:[#allocation3 + $0x7] sm:$0xff]
    %v3450 = vld [vmem:[#allocation3 + $0x8] sm:$0xff]
    %v3451 = vld [vmem:[#allocation3 + $0x9] sm:$0xff]
    %v3452 = vld [vmem:[#allocation3 + $0xa] sm:$0xff]
    %v3453 = vld [vmem:[#allocation3 + $0xb] sm:$0xff]
    %v3454 = vld [vmem:[#allocation3 + $0xc] sm:$0xff]
    %v3455 = vld [vmem:[#allocation3 + $0xd] sm:$0xff]
    %3457 = vrot.lane.b32.xlu0 %v3446, 32
    %v3458 = vpop.permute.xlu0 %3457
    %3461 = vrot.lane.b32.xlu0 %v3447, 64
    %v3462 = vpop.permute.xlu0 %3461
    %3465 = vrot.lane.b32.xlu0 %v3448, 96
    %v3466 = vpop.permute.xlu0 %3465
    %3469 = vrot.lane.b32.xlu0 %v3450, 32
    %v3470 = vpop.permute.xlu0 %3469
    %3473 = vrot.lane.b32.xlu0 %v3451, 64
    %v3474 = vpop.permute.xlu0 %3473
    %3477 = vrot.lane.b32.xlu0 %v3452, 96
    %v3478 = vpop.permute.xlu0 %3477
    %3481 = vrot.lane.b32.xlu0 %v3454, 32
    %v3482 = vpop.permute.xlu0 %3481
    %3485 = vrot.lane.b32.xlu0 %v3455, 64
    %v3486 = vpop.permute.xlu0 %3485
    %v3488 = vsel %vm150, %v3445, %v3458
    %v3489 = vsel %vm417, %v3488, %v3462
    %v3490 = vsel %vm419, %v3489, %v3466
    %v3491 = vsel %vm150, %v3449, %v3470
    %v3492 = vsel %vm417, %v3491, %v3474
    %v3493 = vsel %vm419, %v3492, %v3478
    %v3494 = vsel %vm150, %v3453, %v3482
    %v3495 = vsel %vm417, %v3494, %v3486
    %v3496 = vpack.c.bf16 %v3490, %v3490
    %v3497 = vpack.c.bf16 %v3493, %v3493
    %v3498 = vpack.c.bf16 %v3495, %v3495
    %v3499 = vld [vmem:[#allocation10] sm:$0xf]
    %v3500 = vld [vmem:[#allocation10 + $0x4] sm:$0xf]
    %v3501 = vld [vmem:[#allocation10 + $0x8] sm:$0xf]
    %v3502 = vld [vmem:[#allocation10 + $0xc] sm:$0xf]
    %v3503 = vld [vmem:[#allocation10 + $0x10] sm:$0xf]
    %v3504 = vld [vmem:[#allocation10 + $0x14] sm:$0xf]
    %v3505 = vld [vmem:[#allocation10 + $0x18] sm:$0xf]
    %v3506 = vld [vmem:[#allocation10 + $0x1c] sm:$0xf]
    %v3507 = vld [vmem:[#allocation10 + $0x20] sm:$0xf]
    %v3508 = vld [vmem:[#allocation10 + $0x24] sm:$0xf]
    %v3509 = vld [vmem:[#allocation10 + $0x28] sm:$0xf]
    %v3510 = vld [vmem:[#allocation10 + $0x2c] sm:$0xf]
    %v3511 = vld [vmem:[#allocation10 + $0x30] sm:$0xf]
    %v3512 = vld [vmem:[#allocation10 + $0x34] sm:$0xf]
    %v3513 = vld [vmem:[#allocation10 + $0x38] sm:$0xf]
    %v3514 = vld [vmem:[#allocation10 + $0x3c] sm:$0xf]
    %v3515 = vld [vmem:[#allocation10 + $0x40] sm:$0xf]
    %v3516 = vld [vmem:[#allocation10 + $0x44] sm:$0xf]
    %v3517 = vld [vmem:[#allocation10 + $0x48] sm:$0xf]
    %v3518 = vld [vmem:[#allocation10 + $0x4c] sm:$0xf]
    %v3519 = vld [vmem:[#allocation10 + $0x50] sm:$0xf]
    %v3520 = vld [vmem:[#allocation10 + $0x54] sm:$0xf]
    %v3521 = vld [vmem:[#allocation10 + $0x58] sm:$0xf]
    %v3522 = vld [vmem:[#allocation10 + $0x5c] sm:$0xf]
    %v3523 = vld [vmem:[#allocation10 + $0x60] sm:$0xf]
    %v3524 = vld [vmem:[#allocation10 + $0x64] sm:$0xf]
    %v3525 = vld [vmem:[#allocation10 + $0x68] sm:$0xf]
    %v3526 = vld [vmem:[#allocation10 + $0x6c] sm:$0xf]
    %v3527 = vld [vmem:[#allocation10 + $0x70] sm:$0xf]
    %v3528 = vld [vmem:[#allocation10 + $0x74] sm:$0xf]
    %v3529 = vld [vmem:[#allocation10 + $0x78] sm:$0xf]
    %v3530 = vld [vmem:[#allocation10 + $0x7c] sm:$0xf]
    %v3531 = vld [vmem:[#allocation10 + $0x80] sm:$0xf]
    %v3532 = vld [vmem:[#allocation10 + $0x84] sm:$0xf]
    %v3533 = vld [vmem:[#allocation10 + $0x88] sm:$0xf]
    %v3534 = vld [vmem:[#allocation10 + $0x8c] sm:$0xf]
    %v3535 = vld [vmem:[#allocation10 + $0x90] sm:$0xf]
    %v3536 = vld [vmem:[#allocation10 + $0x94] sm:$0xf]
    %v3537 = vld [vmem:[#allocation10 + $0x98] sm:$0xf]
    %v3538 = vld [vmem:[#allocation10 + $0x9c] sm:$0xf]
    %v3539 = vld [vmem:[#allocation10 + $0xa0] sm:$0xf]
    %v3540 = vld [vmem:[#allocation10 + $0xa4] sm:$0xf]
    %v3541 = vld [vmem:[#allocation10 + $0xa8] sm:$0xf]
    %v3542 = vld [vmem:[#allocation10 + $0xac] sm:$0xf]
    %v3543 = vld [vmem:[#allocation12] sm:$0x1]
    %v3545 = vlaneseq
    %v3546 = vshrl.u32 %v3545, 7
    %v3547 = vsub.s32 0, %v3546
    %v3548 = vrot.slane %v3543, %v3547
    %v3594 = vunpack.c.l.b16 %v3499
    %v3595 = vunpack.c.l.b16 %v3500
    %v3596 = vunpack.c.l.b16 %v3501
    %v3597 = vunpack.c.l.b16 %v3502
    %v3598 = vunpack.c.l.b16 %v3503
    %v3599 = vunpack.c.l.b16 %v3504
    %v3600 = vunpack.c.l.b16 %v3505
    %v3601 = vunpack.c.l.b16 %v3506
    %v3602 = vunpack.c.l.b16 %v3507
    %v3603 = vunpack.c.l.b16 %v3508
    %v3604 = vunpack.c.l.b16 %v3509
    %v3605 = vunpack.c.l.b16 %v3510
    %v3606 = vunpack.c.l.b16 %v3511
    %v3607 = vunpack.c.l.b16 %v3512
    %v3608 = vunpack.c.l.b16 %v3513
    %v3609 = vunpack.c.l.b16 %v3514
    %v3610 = vunpack.c.l.b16 %v3515
    %v3611 = vunpack.c.l.b16 %v3516
    %v3612 = vunpack.c.l.b16 %v3517
    %v3613 = vunpack.c.l.b16 %v3518
    %v3614 = vunpack.c.l.b16 %v3519
    %v3615 = vunpack.c.l.b16 %v3520
    %v3616 = vunpack.c.l.b16 %v3521
    %v3617 = vunpack.c.l.b16 %v3522
    %v3618 = vunpack.c.l.b16 %v3523
    %v3619 = vunpack.c.l.b16 %v3524
    %v3620 = vunpack.c.l.b16 %v3525
    %v3621 = vunpack.c.l.b16 %v3526
    %v3622 = vunpack.c.l.b16 %v3527
    %v3623 = vunpack.c.l.b16 %v3528
    %v3624 = vunpack.c.l.b16 %v3529
    %v3625 = vunpack.c.l.b16 %v3530
    %v3626 = vunpack.c.l.b16 %v3531
    %v3627 = vunpack.c.l.b16 %v3532
    %v3628 = vunpack.c.l.b16 %v3533
    %v3629 = vunpack.c.l.b16 %v3534
    %v3630 = vunpack.c.l.b16 %v3535
    %v3631 = vunpack.c.l.b16 %v3536
    %v3632 = vunpack.c.l.b16 %v3537
    %v3633 = vunpack.c.l.b16 %v3538
    %v3634 = vunpack.c.l.b16 %v3539
    %v3635 = vunpack.c.l.b16 %v3540
    %v3636 = vunpack.c.l.b16 %v3541
    %v3637 = vunpack.c.l.b16 %v3542
    %v3638 = vpack.c.b16 %v3595, %v3594
    %v3639 = vpack.c.b16 %v3597, %v3596
    %v3640 = vpack.c.b16 %v3599, %v3598
    %v3641 = vpack.c.b16 %v3601, %v3600
    %v3642 = vpack.c.b16 %v3603, %v3602
    %v3643 = vpack.c.b16 %v3605, %v3604
    %v3644 = vpack.c.b16 %v3607, %v3606
    %v3645 = vpack.c.b16 %v3609, %v3608
    %v3646 = vpack.c.b16 %v3611, %v3610
    %v3647 = vpack.c.b16 %v3613, %v3612
    %v3648 = vpack.c.b16 %v3615, %v3614
    %v3649 = vpack.c.b16 %v3617, %v3616
    %v3650 = vpack.c.b16 %v3619, %v3618
    %v3651 = vpack.c.b16 %v3621, %v3620
    %v3652 = vpack.c.b16 %v3623, %v3622
    %v3653 = vpack.c.b16 %v3625, %v3624
    %v3654 = vpack.c.b16 %v3627, %v3626
    %v3655 = vpack.c.b16 %v3629, %v3628
    %v3656 = vpack.c.b16 %v3631, %v3630
    %v3657 = vpack.c.b16 %v3633, %v3632
    %v3658 = vpack.c.b16 %v3635, %v3634
    %v3659 = vpack.c.b16 %v3637, %v3636
    %v3683 = vsel %vm419, %v3498, 0
    %3685 = vmatprep.subr.bf16.mxu0 0
    %3686 = vmatpush1.bf16.msra.mxu0 %v3645
    %3687 = vmatprep.subr.bf16.mxu0 0
    %3688 = vmatpush1.bf16.msra.mxu0 %v3644
    %3689 = vmatprep.subr.bf16.mxu0 0
    %3690 = vmatpush1.bf16.msra.mxu0 %v3643
    %3691 = vmatprep.subr.bf16.mxu0 0
    %3692 = vmatpush1.bf16.msra.mxu0 %v3642
    %3693 = vmatprep.subr.bf16.mxu0 0
    %3694 = vmatpush1.bf16.msra.mxu0 %v3641
    %3695 = vmatprep.subr.bf16.mxu0 0
    %3696 = vmatpush1.bf16.msra.mxu0 %v3640
    %3697 = vmatprep.subr.bf16.mxu0 0
    %3698 = vmatpush1.bf16.msra.mxu0 %v3639
    %3699 = vmatprep.subr.bf16.mxu0 0
    %3700 = vmatpush1.bf16.msra.mxu0 %v3638
    %3701 = vmatprep.subr.bf16.mxu0 0
    %3702 = vmatpush2.bf16.msra.mxu0 %v3653
    %3703 = vmatprep.subr.bf16.mxu0 0
    %3704 = vmatpush2.bf16.msra.mxu0 %v3652
    %3705 = vmatprep.subr.bf16.mxu0 0
    %3706 = vmatpush2.bf16.msra.mxu0 %v3651
    %3707 = vmatprep.subr.bf16.mxu0 0
    %3708 = vmatpush2.bf16.msra.mxu0 %v3650
    %3709 = vmatprep.subr.bf16.mxu0 0
    %3710 = vmatpush2.bf16.msra.mxu0 %v3649
    %3711 = vmatprep.subr.bf16.mxu0 0
    %3712 = vmatpush2.bf16.msra.mxu0 %v3648
    %3713 = vmatprep.subr.bf16.mxu0 0
    %3714 = vmatpush2.bf16.msra.mxu0 %v3647
    %3715 = vmatprep.subr.bf16.mxu0 0
    %3716 = vmatpush2.bf16.msra.mxu0 %v3646
    %3717 = vmatprep.mubr.bf16.mxu0 %v3497
    %3718 = vmatmul.mubr.bf16.gmra.mxu0 %v3496
    %v3719 = vpop.f32.mrf.mxu0
    %v3720 = vadd.f32 %v3548, %v3719
    %v3721 = vpop.f32.mrf.mxu0
    %v3722 = vpop.f32.mrf.mxu0
    %v3723 = vpop.f32.mrf.mxu0
    %3724 = vdwg.mxu0
    %3725 = vmatprep.subr.bf16.mxu0 0
    %3726 = vmatpush1.bf16.msra.mxu0 0
    %3727 = vmatprep.subr.bf16.mxu0 0
    %3728 = vmatpush1.bf16.msra.mxu0 0
    %3729 = vmatprep.subr.bf16.mxu0 0
    %3730 = vmatpush1.bf16.msra.mxu0 %v3659
    %3731 = vmatprep.subr.bf16.mxu0 0
    %3732 = vmatpush1.bf16.msra.mxu0 %v3658
    %3733 = vmatprep.subr.bf16.mxu0 0
    %3734 = vmatpush1.bf16.msra.mxu0 %v3657
    %3735 = vmatprep.subr.bf16.mxu0 0
    %3736 = vmatpush1.bf16.msra.mxu0 %v3656
    %3737 = vmatprep.subr.bf16.mxu0 0
    %3738 = vmatpush1.bf16.msra.mxu0 %v3655
    %3739 = vmatprep.subr.bf16.mxu0 0
    %3740 = vmatpush1.bf16.msra.mxu0 %v3654
    %3741 = vmatprep.subr.bf16.mxu0 0
    %3742 = vmatpush2.bf16.msra.mxu0 0
    %3743 = vmatprep.subr.bf16.mxu0 0
    %3744 = vmatpush2.bf16.msra.mxu0 0
    %3745 = vmatprep.subr.bf16.mxu0 0
    %3746 = vmatpush2.bf16.msra.mxu0 0
    %3747 = vmatprep.subr.bf16.mxu0 0
    %3748 = vmatpush2.bf16.msra.mxu0 0
    %3749 = vmatprep.subr.bf16.mxu0 0
    %3750 = vmatpush2.bf16.msra.mxu0 0
    %3751 = vmatprep.subr.bf16.mxu0 0
    %3752 = vmatpush2.bf16.msra.mxu0 0
    %3753 = vmatprep.subr.bf16.mxu0 0
    %3754 = vmatpush2.bf16.msra.mxu0 0
    %3755 = vmatprep.subr.bf16.mxu0 0
    %3756 = vmatpush2.bf16.msra.mxu0 0
    %3757 = vmatprep.mubr.bf16.mxu0 0
    %3758 = vmatmul.mubr.bf16.gmra.mxu0 %v3683
    %v3759 = vpop.f32.mrf.mxu0
    %v3760 = vadd.f32 %v3720, %v3759
    %v3761 = vpop.f32.mrf.mxu0
    %v3762 = vpop.f32.mrf.mxu0
    %v3763 = vpop.f32.mrf.mxu0
    %3764 = vdwg.mxu0
    %v3765 = vmul.f32 %v3760, 0.5
    %v3766 = vmul.f32 %v3760, 0.70710677
    %v3767 = vand.u32 2147483647, %v3766
    %v3768 = vmul.f32 %v3767, 0.3275911
    %v3769 = vadd.f32 %v3768, 1.0
    %v3770 = vrcp.pop %v3769
    %v3771 = vmul.f32 1.0, %v3770
    %v3772 = vmul.f32 %v3771, 1.0614054
    %v3773 = vadd.f32 %v3772, -1.4531521
    %v3774 = vmul.f32 %v3773, %v3771
    %v3775 = vadd.f32 %v3774, 1.4214138
    %v3776 = vmul.f32 %v3775, %v3771
    %v3777 = vadd.f32 %v3776, -0.28449672
    %v3778 = vmul.f32 %v3777, %v3771
    %v3779 = vadd.f32 %v3778, 0.2548296
    %v3780 = vmul.f32 %v3779, %v3771
    %v3781 = vsub.f32 0.0, %v3767
    %v3782 = vmul.f32 %v3781, %v3767
    %v3783 = vmul.f32 %v3782, 1.442695
    %v3784 = vpow.pop %v3783
    %v3785 = vmul.f32 %v3780, %v3784
    %v3786 = vsub.f32 1.0, %v3785
    %vm3787 = vcmp.ge.f32.partialorder %v3766, 0.0
    %v3788 = vsub.f32 0.0, %v3786
    %v3789 = vsel %vm3787, %v3786, %v3788
    %v3790 = vadd.f32 %v3789, 1.0
    %v3791 = vmul.f32 %v3765, %v3790
    %3792 = vst [vmem:[#allocation4 + $0x8] sm:$0xff] %v3791
    %v3793 = vld [vmem:[#allocation4 + $0x3] sm:$0xff]
    %v3794 = vld [vmem:[#allocation4 + $0x4] sm:$0xff]
    %v3795 = vld [vmem:[#allocation4 + $0x5] sm:$0xff]
    %v3796 = vld [vmem:[#allocation4 + $0x6] sm:$0xff]
    %v3797 = vld [vmem:[#allocation4 + $0x7] sm:$0xff]
    %v3798 = vld [vmem:[#allocation4 + $0x8] sm:$0xff]
    %v3799 = vld [vmem:[#allocation4 + $0x9] sm:$0xff]
    %v3800 = vld [vmem:[#allocation4 + $0xa] sm:$0xff]
    %v3801 = vld [vmem:[#allocation4 + $0xb] sm:$0xff]
    %v3802 = vld [vmem:[#allocation4 + $0xc] sm:$0xff]
    %v3803 = vld [vmem:[#allocation4 + $0xd] sm:$0xff]
    %v3804 = vpack.c.bf16 %v3793, %v3793
    %v3805 = vpack.c.bf16 %v3794, %v3794
    %v3806 = vpack.c.bf16 %v3795, %v3795
    %v3807 = vpack.c.bf16 %v3796, %v3796
    %v3808 = vpack.c.bf16 %v3797, %v3797
    %v3809 = vpack.c.bf16 %v3798, %v3798
    %v3810 = vpack.c.bf16 %v3799, %v3799
    %v3811 = vpack.c.bf16 %v3800, %v3800
    %v3812 = vpack.c.bf16 %v3801, %v3801
    %v3813 = vpack.c.bf16 %v3802, %v3802
    %v3814 = vpack.c.bf16 %v3803, %v3803
    %v3815 = vld [vmem:[#allocation13] sm:$0xf]
    %v3816 = vld [vmem:[#allocation13 + $0x4] sm:$0xf]
    %v3817 = vld [vmem:[#allocation13 + $0x8] sm:$0xf]
    %v3818 = vld [vmem:[#allocation13 + $0xc] sm:$0xf]
    %v3819 = vld [vmem:[#allocation13 + $0x10] sm:$0xf]
    %v3820 = vld [vmem:[#allocation13 + $0x14] sm:$0xf]
    %v3821 = vld [vmem:[#allocation13 + $0x18] sm:$0xf]
    %v3822 = vld [vmem:[#allocation13 + $0x1c] sm:$0xf]
    %v3823 = vld [vmem:[#allocation13 + $0x20] sm:$0xf]
    %v3824 = vld [vmem:[#allocation13 + $0x24] sm:$0xf]
    %v3825 = vld [vmem:[#allocation13 + $0x28] sm:$0xf]
    %v3826 = vld [vmem:[#allocation13 + $0x2c] sm:$0xf]
    %v3827 = vld [vmem:[#allocation13 + $0x30] sm:$0xf]
    %v3828 = vld [vmem:[#allocation13 + $0x34] sm:$0xf]
    %v3829 = vld [vmem:[#allocation13 + $0x38] sm:$0xf]
    %v3830 = vld [vmem:[#allocation13 + $0x3c] sm:$0xf]
    %v3831 = vld [vmem:[#allocation13 + $0x40] sm:$0xf]
    %v3832 = vld [vmem:[#allocation13 + $0x44] sm:$0xf]
    %v3833 = vld [vmem:[#allocation13 + $0x48] sm:$0xf]
    %v3834 = vld [vmem:[#allocation13 + $0x4c] sm:$0xf]
    %v3835 = vld [vmem:[#allocation13 + $0x50] sm:$0xf]
    %v3836 = vld [vmem:[#allocation13 + $0x54] sm:$0xf]
    %v3837 = vld [vmem:[#allocation13 + $0x58] sm:$0xf]
    %v3838 = vld [vmem:[#allocation13 + $0x5c] sm:$0xf]
    %v3839 = vld [vmem:[#allocation13 + $0x60] sm:$0xf]
    %v3840 = vld [vmem:[#allocation13 + $0x64] sm:$0xf]
    %v3841 = vld [vmem:[#allocation13 + $0x68] sm:$0xf]
    %v3842 = vld [vmem:[#allocation13 + $0x6c] sm:$0xf]
    %v3843 = vld [vmem:[#allocation13 + $0x70] sm:$0xf]
    %v3844 = vld [vmem:[#allocation13 + $0x74] sm:$0xf]
    %v3845 = vld [vmem:[#allocation13 + $0x78] sm:$0xf]
    %v3846 = vld [vmem:[#allocation13 + $0x7c] sm:$0xf]
    %v3847 = vld [vmem:[#allocation13 + $0x80] sm:$0xf]
    %v3848 = vld [vmem:[#allocation13 + $0x84] sm:$0xf]
    %v3849 = vld [vmem:[#allocation13 + $0x88] sm:$0xf]
    %v3850 = vld [vmem:[#allocation13 + $0x8c] sm:$0xf]
    %v3851 = vld [vmem:[#allocation13 + $0x90] sm:$0xf]
    %v3852 = vld [vmem:[#allocation13 + $0x94] sm:$0xf]
    %v3853 = vld [vmem:[#allocation13 + $0x98] sm:$0xf]
    %v3854 = vld [vmem:[#allocation13 + $0x9c] sm:$0xf]
    %v3855 = vld [vmem:[#allocation13 + $0xa0] sm:$0xf]
    %v3856 = vld [vmem:[#allocation13 + $0xa4] sm:$0xf]
    %v3857 = vld [vmem:[#allocation13 + $0xa8] sm:$0xf]
    %v3858 = vld [vmem:[#allocation13 + $0xac] sm:$0xf]
    %v3859 = vld [vmem:[#allocation13 + $0xb0] sm:$0xf]
    %v3860 = vld [vmem:[#allocation13 + $0xb4] sm:$0xf]
    %v3861 = vld [vmem:[#allocation13 + $0xb8] sm:$0xf]
    %v3862 = vld [vmem:[#allocation13 + $0xbc] sm:$0xf]
    %v3863 = vld [vmem:[#allocation13 + $0xc0] sm:$0xf]
    %v3864 = vld [vmem:[#allocation13 + $0xc4] sm:$0xf]
    %v3865 = vld [vmem:[#allocation13 + $0xc8] sm:$0xf]
    %v3866 = vld [vmem:[#allocation13 + $0xcc] sm:$0xf]
    %v3867 = vld [vmem:[#allocation13 + $0xd0] sm:$0xf]
    %v3868 = vld [vmem:[#allocation13 + $0xd4] sm:$0xf]
    %v3869 = vld [vmem:[#allocation13 + $0xd8] sm:$0xf]
    %v3870 = vld [vmem:[#allocation13 + $0xdc] sm:$0xf]
    %v3871 = vld [vmem:[#allocation13 + $0xe0] sm:$0xf]
    %v3872 = vld [vmem:[#allocation13 + $0xe4] sm:$0xf]
    %v3873 = vld [vmem:[#allocation13 + $0xe8] sm:$0xf]
    %v3874 = vld [vmem:[#allocation13 + $0xec] sm:$0xf]
    %v3875 = vld [vmem:[#allocation13 + $0xf0] sm:$0xf]
    %v3876 = vld [vmem:[#allocation13 + $0xf4] sm:$0xf]
    %v3877 = vld [vmem:[#allocation13 + $0xf8] sm:$0xf]
    %v3878 = vld [vmem:[#allocation13 + $0xfc] sm:$0xf]
    %v3879 = vld [vmem:[#allocation13 + $0x100] sm:$0xf]
    %v3880 = vld [vmem:[#allocation13 + $0x104] sm:$0xf]
    %v3881 = vld [vmem:[#allocation13 + $0x108] sm:$0xf]
    %v3882 = vld [vmem:[#allocation13 + $0x10c] sm:$0xf]
    %v3883 = vld [vmem:[#allocation13 + $0x110] sm:$0xf]
    %v3884 = vld [vmem:[#allocation13 + $0x114] sm:$0xf]
    %v3885 = vld [vmem:[#allocation13 + $0x118] sm:$0xf]
    %v3886 = vld [vmem:[#allocation13 + $0x11c] sm:$0xf]
    %v3887 = vld [vmem:[#allocation13 + $0x120] sm:$0xf]
    %v3888 = vld [vmem:[#allocation13 + $0x124] sm:$0xf]
    %v3889 = vld [vmem:[#allocation13 + $0x128] sm:$0xf]
    %v3890 = vld [vmem:[#allocation13 + $0x12c] sm:$0xf]
    %v3891 = vld [vmem:[#allocation13 + $0x130] sm:$0xf]
    %v3892 = vld [vmem:[#allocation13 + $0x134] sm:$0xf]
    %v3893 = vld [vmem:[#allocation13 + $0x138] sm:$0xf]
    %v3894 = vld [vmem:[#allocation13 + $0x13c] sm:$0xf]
    %v3895 = vld [vmem:[#allocation13 + $0x140] sm:$0xf]
    %v3896 = vld [vmem:[#allocation13 + $0x144] sm:$0xf]
    %v3897 = vld [vmem:[#allocation13 + $0x148] sm:$0xf]
    %v3898 = vld [vmem:[#allocation13 + $0x14c] sm:$0xf]
    %v3899 = vld [vmem:[#allocation13 + $0x150] sm:$0xf]
    %v3900 = vld [vmem:[#allocation13 + $0x154] sm:$0xf]
    %v3901 = vld [vmem:[#allocation13 + $0x158] sm:$0xf]
    %v3902 = vld [vmem:[#allocation13 + $0x15c] sm:$0xf]
    %v3903 = vld [vmem:[#allocation13 + $0x160] sm:$0xf]
    %v3904 = vld [vmem:[#allocation13 + $0x164] sm:$0xf]
    %v3905 = vld [vmem:[#allocation13 + $0x168] sm:$0xf]
    %v3906 = vld [vmem:[#allocation13 + $0x16c] sm:$0xf]
    %v3907 = vld [vmem:[#allocation13 + $0x170] sm:$0xf]
    %v3908 = vld [vmem:[#allocation13 + $0x174] sm:$0xf]
    %v3909 = vld [vmem:[#allocation13 + $0x178] sm:$0xf]
    %v3910 = vld [vmem:[#allocation13 + $0x17c] sm:$0xf]
    %v3911 = vld [vmem:[#allocation13 + $0x180] sm:$0xf]
    %v3912 = vld [vmem:[#allocation13 + $0x184] sm:$0xf]
    %v3913 = vld [vmem:[#allocation13 + $0x188] sm:$0xf]
    %v3914 = vld [vmem:[#allocation13 + $0x18c] sm:$0xf]
    %v3915 = vld [vmem:[#allocation13 + $0x190] sm:$0xf]
    %v3916 = vld [vmem:[#allocation13 + $0x194] sm:$0xf]
    %v3917 = vld [vmem:[#allocation13 + $0x198] sm:$0xf]
    %v3918 = vld [vmem:[#allocation13 + $0x19c] sm:$0xf]
    %v3919 = vld [vmem:[#allocation13 + $0x1a0] sm:$0xf]
    %v3920 = vld [vmem:[#allocation13 + $0x1a4] sm:$0xf]
    %v3921 = vld [vmem:[#allocation13 + $0x1a8] sm:$0xf]
    %v3922 = vld [vmem:[#allocation13 + $0x1ac] sm:$0xf]
    %v3923 = vld [vmem:[#allocation13 + $0x1b0] sm:$0xf]
    %v3924 = vld [vmem:[#allocation13 + $0x1b4] sm:$0xf]
    %v3925 = vld [vmem:[#allocation13 + $0x1b8] sm:$0xf]
    %v3926 = vld [vmem:[#allocation13 + $0x1bc] sm:$0xf]
    %v3927 = vld [vmem:[#allocation13 + $0x1c0] sm:$0xf]
    %v3928 = vld [vmem:[#allocation13 + $0x1c4] sm:$0xf]
    %v3929 = vld [vmem:[#allocation13 + $0x1c8] sm:$0xf]
    %v3930 = vld [vmem:[#allocation13 + $0x1cc] sm:$0xf]
    %v3931 = vld [vmem:[#allocation13 + $0x1d0] sm:$0xf]
    %v3932 = vld [vmem:[#allocation13 + $0x1d4] sm:$0xf]
    %v3933 = vld [vmem:[#allocation13 + $0x1d8] sm:$0xf]
    %v3934 = vld [vmem:[#allocation13 + $0x1dc] sm:$0xf]
    %v3935 = vld [vmem:[#allocation13 + $0x1e0] sm:$0xf]
    %v3936 = vld [vmem:[#allocation13 + $0x1e4] sm:$0xf]
    %v3937 = vld [vmem:[#allocation13 + $0x1e8] sm:$0xf]
    %v3938 = vld [vmem:[#allocation13 + $0x1ec] sm:$0xf]
    %v3939 = vld [vmem:[#allocation13 + $0x1f0] sm:$0xf]
    %v3940 = vld [vmem:[#allocation13 + $0x1f4] sm:$0xf]
    %v3941 = vld [vmem:[#allocation13 + $0x1f8] sm:$0xf]
    %v3942 = vld [vmem:[#allocation13 + $0x1fc] sm:$0xf]
    %v3943 = vld [vmem:[#allocation13 + $0x200] sm:$0xf]
    %v3944 = vld [vmem:[#allocation13 + $0x204] sm:$0xf]
    %v3945 = vld [vmem:[#allocation13 + $0x208] sm:$0xf]
    %v3946 = vld [vmem:[#allocation13 + $0x20c] sm:$0xf]
    %v3947 = vld [vmem:[#allocation13 + $0x210] sm:$0xf]
    %v3948 = vld [vmem:[#allocation13 + $0x214] sm:$0xf]
    %v3949 = vld [vmem:[#allocation13 + $0x218] sm:$0xf]
    %v3950 = vld [vmem:[#allocation13 + $0x21c] sm:$0xf]
    %v3951 = vld [vmem:[#allocation13 + $0x220] sm:$0xf]
    %v3952 = vld [vmem:[#allocation13 + $0x224] sm:$0xf]
    %v3953 = vld [vmem:[#allocation13 + $0x228] sm:$0xf]
    %v3954 = vld [vmem:[#allocation13 + $0x22c] sm:$0xf]
    %v3955 = vld [vmem:[#allocation13 + $0x230] sm:$0xf]
    %v3956 = vld [vmem:[#allocation13 + $0x234] sm:$0xf]
    %v3957 = vld [vmem:[#allocation13 + $0x238] sm:$0xf]
    %v3958 = vld [vmem:[#allocation13 + $0x23c] sm:$0xf]
    %v3959 = vld [vmem:[#allocation13 + $0x240] sm:$0xf]
    %v3960 = vld [vmem:[#allocation13 + $0x244] sm:$0xf]
    %v3961 = vld [vmem:[#allocation13 + $0x248] sm:$0xf]
    %v3962 = vld [vmem:[#allocation13 + $0x24c] sm:$0xf]
    %v3963 = vld [vmem:[#allocation13 + $0x250] sm:$0xf]
    %v3964 = vld [vmem:[#allocation13 + $0x254] sm:$0xf]
    %v3965 = vld [vmem:[#allocation13 + $0x258] sm:$0xf]
    %v3966 = vld [vmem:[#allocation13 + $0x25c] sm:$0xf]
    %v3967 = vld [vmem:[#allocation13 + $0x260] sm:$0xf]
    %v3968 = vld [vmem:[#allocation13 + $0x264] sm:$0xf]
    %v3969 = vld [vmem:[#allocation13 + $0x268] sm:$0xf]
    %v3970 = vld [vmem:[#allocation13 + $0x26c] sm:$0xf]
    %v3971 = vld [vmem:[#allocation13 + $0x270] sm:$0xf]
    %v3972 = vld [vmem:[#allocation13 + $0x274] sm:$0xf]
    %v3973 = vld [vmem:[#allocation13 + $0x278] sm:$0xf]
    %v3974 = vld [vmem:[#allocation13 + $0x27c] sm:$0xf]
    %v3975 = vld [vmem:[#allocation13 + $0x280] sm:$0xf]
    %v3976 = vld [vmem:[#allocation13 + $0x284] sm:$0xf]
    %v3977 = vld [vmem:[#allocation13 + $0x288] sm:$0xf]
    %v3978 = vld [vmem:[#allocation13 + $0x28c] sm:$0xf]
    %v3979 = vld [vmem:[#allocation13 + $0x290] sm:$0xf]
    %v3980 = vld [vmem:[#allocation13 + $0x294] sm:$0xf]
    %v3981 = vld [vmem:[#allocation13 + $0x298] sm:$0xf]
    %v3982 = vld [vmem:[#allocation13 + $0x29c] sm:$0xf]
    %v3983 = vld [vmem:[#allocation13 + $0x2a0] sm:$0xf]
    %v3984 = vld [vmem:[#allocation13 + $0x2a4] sm:$0xf]
    %v3985 = vld [vmem:[#allocation13 + $0x2a8] sm:$0xf]
    %v3986 = vld [vmem:[#allocation13 + $0x2ac] sm:$0xf]
    %v3987 = vld [vmem:[#allocation13 + $0x2b0] sm:$0xf]
    %v3988 = vld [vmem:[#allocation13 + $0x2b4] sm:$0xf]
    %v3989 = vld [vmem:[#allocation13 + $0x2b8] sm:$0xf]
    %v3990 = vld [vmem:[#allocation13 + $0x2bc] sm:$0xf]
    %v3991 = vld [vmem:[%s9] sm:$0x1]
    %v3993 = vlaneseq
    %v3994 = vshrl.u32 %v3993, 7
    %v3995 = vsub.s32 0, %v3994
    %v3996 = vrot.slane %v3991, %v3995
    %v4174 = vunpack.c.l.b16 %v3815
    %v4175 = vunpack.c.l.b16 %v3816
    %v4176 = vunpack.c.l.b16 %v3817
    %v4177 = vunpack.c.l.b16 %v3818
    %v4178 = vunpack.c.l.b16 %v3819
    %v4179 = vunpack.c.l.b16 %v3820
    %v4180 = vunpack.c.l.b16 %v3821
    %v4181 = vunpack.c.l.b16 %v3822
    %v4182 = vunpack.c.l.b16 %v3823
    %v4183 = vunpack.c.l.b16 %v3824
    %v4184 = vunpack.c.l.b16 %v3825
    %v4185 = vunpack.c.l.b16 %v3826
    %v4186 = vunpack.c.l.b16 %v3827
    %v4187 = vunpack.c.l.b16 %v3828
    %v4188 = vunpack.c.l.b16 %v3829
    %v4189 = vunpack.c.l.b16 %v3830
    %v4190 = vunpack.c.l.b16 %v3831
    %v4191 = vunpack.c.l.b16 %v3832
    %v4192 = vunpack.c.l.b16 %v3833
    %v4193 = vunpack.c.l.b16 %v3834
    %v4194 = vunpack.c.l.b16 %v3835
    %v4195 = vunpack.c.l.b16 %v3836
    %v4196 = vunpack.c.l.b16 %v3837
    %v4197 = vunpack.c.l.b16 %v3838
    %v4198 = vunpack.c.l.b16 %v3839
    %v4199 = vunpack.c.l.b16 %v3840
    %v4200 = vunpack.c.l.b16 %v3841
    %v4201 = vunpack.c.l.b16 %v3842
    %v4202 = vunpack.c.l.b16 %v3843
    %v4203 = vunpack.c.l.b16 %v3844
    %v4204 = vunpack.c.l.b16 %v3845
    %v4205 = vunpack.c.l.b16 %v3846
    %v4206 = vunpack.c.l.b16 %v3847
    %v4207 = vunpack.c.l.b16 %v3848
    %v4208 = vunpack.c.l.b16 %v3849
    %v4209 = vunpack.c.l.b16 %v3850
    %v4210 = vunpack.c.l.b16 %v3851
    %v4211 = vunpack.c.l.b16 %v3852
    %v4212 = vunpack.c.l.b16 %v3853
    %v4213 = vunpack.c.l.b16 %v3854
    %v4214 = vunpack.c.l.b16 %v3855
    %v4215 = vunpack.c.l.b16 %v3856
    %v4216 = vunpack.c.l.b16 %v3857
    %v4217 = vunpack.c.l.b16 %v3858
    %v4218 = vunpack.c.l.b16 %v3859
    %v4219 = vunpack.c.l.b16 %v3860
    %v4220 = vunpack.c.l.b16 %v3861
    %v4221 = vunpack.c.l.b16 %v3862
    %v4222 = vunpack.c.l.b16 %v3863
    %v4223 = vunpack.c.l.b16 %v3864
    %v4224 = vunpack.c.l.b16 %v3865
    %v4225 = vunpack.c.l.b16 %v3866
    %v4226 = vunpack.c.l.b16 %v3867
    %v4227 = vunpack.c.l.b16 %v3868
    %v4228 = vunpack.c.l.b16 %v3869
    %v4229 = vunpack.c.l.b16 %v3870
    %v4230 = vunpack.c.l.b16 %v3871
    %v4231 = vunpack.c.l.b16 %v3872
    %v4232 = vunpack.c.l.b16 %v3873
    %v4233 = vunpack.c.l.b16 %v3874
    %v4234 = vunpack.c.l.b16 %v3875
    %v4235 = vunpack.c.l.b16 %v3876
    %v4236 = vunpack.c.l.b16 %v3877
    %v4237 = vunpack.c.l.b16 %v3878
    %v4238 = vunpack.c.l.b16 %v3879
    %v4239 = vunpack.c.l.b16 %v3880
    %v4240 = vunpack.c.l.b16 %v3881
    %v4241 = vunpack.c.l.b16 %v3882
    %v4242 = vunpack.c.l.b16 %v3883
    %v4243 = vunpack.c.l.b16 %v3884
    %v4244 = vunpack.c.l.b16 %v3885
    %v4245 = vunpack.c.l.b16 %v3886
    %v4246 = vunpack.c.l.b16 %v3887
    %v4247 = vunpack.c.l.b16 %v3888
    %v4248 = vunpack.c.l.b16 %v3889
    %v4249 = vunpack.c.l.b16 %v3890
    %v4250 = vunpack.c.l.b16 %v3891
    %v4251 = vunpack.c.l.b16 %v3892
    %v4252 = vunpack.c.l.b16 %v3893
    %v4253 = vunpack.c.l.b16 %v3894
    %v4254 = vunpack.c.l.b16 %v3895
    %v4255 = vunpack.c.l.b16 %v3896
    %v4256 = vunpack.c.l.b16 %v3897
    %v4257 = vunpack.c.l.b16 %v3898
    %v4258 = vunpack.c.l.b16 %v3899
    %v4259 = vunpack.c.l.b16 %v3900
    %v4260 = vunpack.c.l.b16 %v3901
    %v4261 = vunpack.c.l.b16 %v3902
    %v4262 = vunpack.c.l.b16 %v3903
    %v4263 = vunpack.c.l.b16 %v3904
    %v4264 = vunpack.c.l.b16 %v3905
    %v4265 = vunpack.c.l.b16 %v3906
    %v4266 = vunpack.c.l.b16 %v3907
    %v4267 = vunpack.c.l.b16 %v3908
    %v4268 = vunpack.c.l.b16 %v3909
    %v4269 = vunpack.c.l.b16 %v3910
    %v4270 = vunpack.c.l.b16 %v3911
    %v4271 = vunpack.c.l.b16 %v3912
    %v4272 = vunpack.c.l.b16 %v3913
    %v4273 = vunpack.c.l.b16 %v3914
    %v4274 = vunpack.c.l.b16 %v3915
    %v4275 = vunpack.c.l.b16 %v3916
    %v4276 = vunpack.c.l.b16 %v3917
    %v4277 = vunpack.c.l.b16 %v3918
    %v4278 = vunpack.c.l.b16 %v3919
    %v4279 = vunpack.c.l.b16 %v3920
    %v4280 = vunpack.c.l.b16 %v3921
    %v4281 = vunpack.c.l.b16 %v3922
    %v4282 = vunpack.c.l.b16 %v3923
    %v4283 = vunpack.c.l.b16 %v3924
    %v4284 = vunpack.c.l.b16 %v3925
    %v4285 = vunpack.c.l.b16 %v3926
    %v4286 = vunpack.c.l.b16 %v3927
    %v4287 = vunpack.c.l.b16 %v3928
    %v4288 = vunpack.c.l.b16 %v3929
    %v4289 = vunpack.c.l.b16 %v3930
    %v4290 = vunpack.c.l.b16 %v3931
    %v4291 = vunpack.c.l.b16 %v3932
    %v4292 = vunpack.c.l.b16 %v3933
    %v4293 = vunpack.c.l.b16 %v3934
    %v4294 = vunpack.c.l.b16 %v3935
    %v4295 = vunpack.c.l.b16 %v3936
    %v4296 = vunpack.c.l.b16 %v3937
    %v4297 = vunpack.c.l.b16 %v3938
    %v4298 = vunpack.c.l.b16 %v3939
    %v4299 = vunpack.c.l.b16 %v3940
    %v4300 = vunpack.c.l.b16 %v3941
    %v4301 = vunpack.c.l.b16 %v3942
    %v4302 = vunpack.c.l.b16 %v3943
    %v4303 = vunpack.c.l.b16 %v3944
    %v4304 = vunpack.c.l.b16 %v3945
    %v4305 = vunpack.c.l.b16 %v3946
    %v4306 = vunpack.c.l.b16 %v3947
    %v4307 = vunpack.c.l.b16 %v3948
    %v4308 = vunpack.c.l.b16 %v3949
    %v4309 = vunpack.c.l.b16 %v3950
    %v4310 = vunpack.c.l.b16 %v3951
    %v4311 = vunpack.c.l.b16 %v3952
    %v4312 = vunpack.c.l.b16 %v3953
    %v4313 = vunpack.c.l.b16 %v3954
    %v4314 = vunpack.c.l.b16 %v3955
    %v4315 = vunpack.c.l.b16 %v3956
    %v4316 = vunpack.c.l.b16 %v3957
    %v4317 = vunpack.c.l.b16 %v3958
    %v4318 = vunpack.c.l.b16 %v3959
    %v4319 = vunpack.c.l.b16 %v3960
    %v4320 = vunpack.c.l.b16 %v3961
    %v4321 = vunpack.c.l.b16 %v3962
    %v4322 = vunpack.c.l.b16 %v3963
    %v4323 = vunpack.c.l.b16 %v3964
    %v4324 = vunpack.c.l.b16 %v3965
    %v4325 = vunpack.c.l.b16 %v3966
    %v4326 = vunpack.c.l.b16 %v3967
    %v4327 = vunpack.c.l.b16 %v3968
    %v4328 = vunpack.c.l.b16 %v3969
    %v4329 = vunpack.c.l.b16 %v3970
    %v4330 = vunpack.c.l.b16 %v3971
    %v4331 = vunpack.c.l.b16 %v3972
    %v4332 = vunpack.c.l.b16 %v3973
    %v4333 = vunpack.c.l.b16 %v3974
    %v4334 = vunpack.c.l.b16 %v3975
    %v4335 = vunpack.c.l.b16 %v3976
    %v4336 = vunpack.c.l.b16 %v3977
    %v4337 = vunpack.c.l.b16 %v3978
    %v4338 = vunpack.c.l.b16 %v3979
    %v4339 = vunpack.c.l.b16 %v3980
    %v4340 = vunpack.c.l.b16 %v3981
    %v4341 = vunpack.c.l.b16 %v3982
    %v4342 = vunpack.c.l.b16 %v3983
    %v4343 = vunpack.c.l.b16 %v3984
    %v4344 = vunpack.c.l.b16 %v3985
    %v4345 = vunpack.c.l.b16 %v3986
    %v4346 = vunpack.c.l.b16 %v3987
    %v4347 = vunpack.c.l.b16 %v3988
    %v4348 = vunpack.c.l.b16 %v3989
    %v4349 = vunpack.c.l.b16 %v3990
    %v4350 = vpack.c.b16 %v4175, %v4174
    %v4351 = vpack.c.b16 %v4177, %v4176
    %v4352 = vpack.c.b16 %v4179, %v4178
    %v4353 = vpack.c.b16 %v4181, %v4180
    %v4354 = vpack.c.b16 %v4183, %v4182
    %v4355 = vpack.c.b16 %v4185, %v4184
    %v4356 = vpack.c.b16 %v4187, %v4186
    %v4357 = vpack.c.b16 %v4189, %v4188
    %v4358 = vpack.c.b16 %v4191, %v4190
    %v4359 = vpack.c.b16 %v4193, %v4192
    %v4360 = vpack.c.b16 %v4195, %v4194
    %v4361 = vpack.c.b16 %v4197, %v4196
    %v4362 = vpack.c.b16 %v4199, %v4198
    %v4363 = vpack.c.b16 %v4201, %v4200
    %v4364 = vpack.c.b16 %v4203, %v4202
    %v4365 = vpack.c.b16 %v4205, %v4204
    %v4366 = vpack.c.b16 %v4207, %v4206
    %v4367 = vpack.c.b16 %v4209, %v4208
    %v4368 = vpack.c.b16 %v4211, %v4210
    %v4369 = vpack.c.b16 %v4213, %v4212
    %v4370 = vpack.c.b16 %v4215, %v4214
    %v4371 = vpack.c.b16 %v4217, %v4216
    %v4372 = vpack.c.b16 %v4219, %v4218
    %v4373 = vpack.c.b16 %v4221, %v4220
    %v4374 = vpack.c.b16 %v4223, %v4222
    %v4375 = vpack.c.b16 %v4225, %v4224
    %v4376 = vpack.c.b16 %v4227, %v4226
    %v4377 = vpack.c.b16 %v4229, %v4228
    %v4378 = vpack.c.b16 %v4231, %v4230
    %v4379 = vpack.c.b16 %v4233, %v4232
    %v4380 = vpack.c.b16 %v4235, %v4234
    %v4381 = vpack.c.b16 %v4237, %v4236
    %v4382 = vpack.c.b16 %v4239, %v4238
    %v4383 = vpack.c.b16 %v4241, %v4240
    %v4384 = vpack.c.b16 %v4243, %v4242
    %v4385 = vpack.c.b16 %v4245, %v4244
    %v4386 = vpack.c.b16 %v4247, %v4246
    %v4387 = vpack.c.b16 %v4249, %v4248
    %v4388 = vpack.c.b16 %v4251, %v4250
    %v4389 = vpack.c.b16 %v4253, %v4252
    %v4390 = vpack.c.b16 %v4255, %v4254
    %v4391 = vpack.c.b16 %v4257, %v4256
    %v4392 = vpack.c.b16 %v4259, %v4258
    %v4393 = vpack.c.b16 %v4261, %v4260
    %v4394 = vpack.c.b16 %v4263, %v4262
    %v4395 = vpack.c.b16 %v4265, %v4264
    %v4396 = vpack.c.b16 %v4267, %v4266
    %v4397 = vpack.c.b16 %v4269, %v4268
    %v4398 = vpack.c.b16 %v4271, %v4270
    %v4399 = vpack.c.b16 %v4273, %v4272
    %v4400 = vpack.c.b16 %v4275, %v4274
    %v4401 = vpack.c.b16 %v4277, %v4276
    %v4402 = vpack.c.b16 %v4279, %v4278
    %v4403 = vpack.c.b16 %v4281, %v4280
    %v4404 = vpack.c.b16 %v4283, %v4282
    %v4405 = vpack.c.b16 %v4285, %v4284
    %v4406 = vpack.c.b16 %v4287, %v4286
    %v4407 = vpack.c.b16 %v4289, %v4288
    %v4408 = vpack.c.b16 %v4291, %v4290
    %v4409 = vpack.c.b16 %v4293, %v4292
    %v4410 = vpack.c.b16 %v4295, %v4294
    %v4411 = vpack.c.b16 %v4297, %v4296
    %v4412 = vpack.c.b16 %v4299, %v4298
    %v4413 = vpack.c.b16 %v4301, %v4300
    %v4414 = vpack.c.b16 %v4303, %v4302
    %v4415 = vpack.c.b16 %v4305, %v4304
    %v4416 = vpack.c.b16 %v4307, %v4306
    %v4417 = vpack.c.b16 %v4309, %v4308
    %v4418 = vpack.c.b16 %v4311, %v4310
    %v4419 = vpack.c.b16 %v4313, %v4312
    %v4420 = vpack.c.b16 %v4315, %v4314
    %v4421 = vpack.c.b16 %v4317, %v4316
    %v4422 = vpack.c.b16 %v4319, %v4318
    %v4423 = vpack.c.b16 %v4321, %v4320
    %v4424 = vpack.c.b16 %v4323, %v4322
    %v4425 = vpack.c.b16 %v4325, %v4324
    %v4426 = vpack.c.b16 %v4327, %v4326
    %v4427 = vpack.c.b16 %v4329, %v4328
    %v4428 = vpack.c.b16 %v4331, %v4330
    %v4429 = vpack.c.b16 %v4333, %v4332
    %v4430 = vpack.c.b16 %v4335, %v4334
    %v4431 = vpack.c.b16 %v4337, %v4336
    %v4432 = vpack.c.b16 %v4339, %v4338
    %v4433 = vpack.c.b16 %v4341, %v4340
    %v4434 = vpack.c.b16 %v4343, %v4342
    %v4435 = vpack.c.b16 %v4345, %v4344
    %v4436 = vpack.c.b16 %v4347, %v4346
    %v4437 = vpack.c.b16 %v4349, %v4348
    %4526 = vmatprep.subr.bf16.mxu0 0
    %4527 = vmatpush1.bf16.msra.mxu0 %v4357
    %4528 = vmatprep.subr.bf16.mxu0 0
    %4529 = vmatpush1.bf16.msra.mxu0 %v4356
    %4530 = vmatprep.subr.bf16.mxu0 0
    %4531 = vmatpush1.bf16.msra.mxu0 %v4355
    %4532 = vmatprep.subr.bf16.mxu0 0
    %4533 = vmatpush1.bf16.msra.mxu0 %v4354
    %4534 = vmatprep.subr.bf16.mxu0 0
    %4535 = vmatpush1.bf16.msra.mxu0 %v4353
    %4536 = vmatprep.subr.bf16.mxu0 0
    %4537 = vmatpush1.bf16.msra.mxu0 %v4352
    %4538 = vmatprep.subr.bf16.mxu0 0
    %4539 = vmatpush1.bf16.msra.mxu0 %v4351
    %4540 = vmatprep.subr.bf16.mxu0 0
    %4541 = vmatpush1.bf16.msra.mxu0 %v4350
    %4542 = vmatprep.subr.bf16.mxu0 0
    %4543 = vmatpush2.bf16.msra.mxu0 %v4365
    %4544 = vmatprep.subr.bf16.mxu0 0
    %4545 = vmatpush2.bf16.msra.mxu0 %v4364
    %4546 = vmatprep.subr.bf16.mxu0 0
    %4547 = vmatpush2.bf16.msra.mxu0 %v4363
    %4548 = vmatprep.subr.bf16.mxu0 0
    %4549 = vmatpush2.bf16.msra.mxu0 %v4362
    %4550 = vmatprep.subr.bf16.mxu0 0
    %4551 = vmatpush2.bf16.msra.mxu0 %v4361
    %4552 = vmatprep.subr.bf16.mxu0 0
    %4553 = vmatpush2.bf16.msra.mxu0 %v4360
    %4554 = vmatprep.subr.bf16.mxu0 0
    %4555 = vmatpush2.bf16.msra.mxu0 %v4359
    %4556 = vmatprep.subr.bf16.mxu0 0
    %4557 = vmatpush2.bf16.msra.mxu0 %v4358
    %4558 = vmatprep.mubr.bf16.mxu0 %v3805
    %4559 = vmatmul.mubr.bf16.gmra.mxu0 %v3804
    %v4560 = vpop.f32.mrf.mxu0
    %v4561 = vadd.f32 %v3996, %v4560
    %v4562 = vpop.f32.mrf.mxu0
    %v4563 = vpop.f32.mrf.mxu0
    %v4564 = vpop.f32.mrf.mxu0
    %4565 = vdwg.mxu0
    %4566 = vmatprep.subr.bf16.mxu0 0
    %4567 = vmatpush1.bf16.msra.mxu0 %v4373
    %4568 = vmatprep.subr.bf16.mxu0 0
    %4569 = vmatpush1.bf16.msra.mxu0 %v4372
    %4570 = vmatprep.subr.bf16.mxu0 0
    %4571 = vmatpush1.bf16.msra.mxu0 %v4371
    %4572 = vmatprep.subr.bf16.mxu0 0
    %4573 = vmatpush1.bf16.msra.mxu0 %v4370
    %4574 = vmatprep.subr.bf16.mxu0 0
    %4575 = vmatpush1.bf16.msra.mxu0 %v4369
    %4576 = vmatprep.subr.bf16.mxu0 0
    %4577 = vmatpush1.bf16.msra.mxu0 %v4368
    %4578 = vmatprep.subr.bf16.mxu0 0
    %4579 = vmatpush1.bf16.msra.mxu0 %v4367
    %4580 = vmatprep.subr.bf16.mxu0 0
    %4581 = vmatpush1.bf16.msra.mxu0 %v4366
    %4582 = vmatprep.subr.bf16.mxu0 0
    %4583 = vmatpush2.bf16.msra.mxu0 %v4381
    %4584 = vmatprep.subr.bf16.mxu0 0
    %4585 = vmatpush2.bf16.msra.mxu0 %v4380
    %4586 = vmatprep.subr.bf16.mxu0 0
    %4587 = vmatpush2.bf16.msra.mxu0 %v4379
    %4588 = vmatprep.subr.bf16.mxu0 0
    %4589 = vmatpush2.bf16.msra.mxu0 %v4378
    %4590 = vmatprep.subr.bf16.mxu0 0
    %4591 = vmatpush2.bf16.msra.mxu0 %v4377
    %4592 = vmatprep.subr.bf16.mxu0 0
    %4593 = vmatpush2.bf16.msra.mxu0 %v4376
    %4594 = vmatprep.subr.bf16.mxu0 0
    %4595 = vmatpush2.bf16.msra.mxu0 %v4375
    %4596 = vmatprep.subr.bf16.mxu0 0
    %4597 = vmatpush2.bf16.msra.mxu0 %v4374
    %4598 = vmatprep.mubr.bf16.mxu0 %v3807
    %4599 = vmatmul.mubr.bf16.gmra.mxu0 %v3806
    %v4600 = vpop.f32.mrf.mxu0
    %v4601 = vadd.f32 %v4561, %v4600
    %v4602 = vpop.f32.mrf.mxu0
    %v4603 = vpop.f32.mrf.mxu0
    %v4604 = vpop.f32.mrf.mxu0
    %4605 = vdwg.mxu0
    %4606 = vmatprep.subr.bf16.mxu0 0
    %4607 = vmatpush1.bf16.msra.mxu0 %v4389
    %4608 = vmatprep.subr.bf16.mxu0 0
    %4609 = vmatpush1.bf16.msra.mxu0 %v4388
    %4610 = vmatprep.subr.bf16.mxu0 0
    %4611 = vmatpush1.bf16.msra.mxu0 %v4387
    %4612 = vmatprep.subr.bf16.mxu0 0
    %4613 = vmatpush1.bf16.msra.mxu0 %v4386
    %4614 = vmatprep.subr.bf16.mxu0 0
    %4615 = vmatpush1.bf16.msra.mxu0 %v4385
    %4616 = vmatprep.subr.bf16.mxu0 0
    %4617 = vmatpush1.bf16.msra.mxu0 %v4384
    %4618 = vmatprep.subr.bf16.mxu0 0
    %4619 = vmatpush1.bf16.msra.mxu0 %v4383
    %4620 = vmatprep.subr.bf16.mxu0 0
    %4621 = vmatpush1.bf16.msra.mxu0 %v4382
    %4622 = vmatprep.subr.bf16.mxu0 0
    %4623 = vmatpush2.bf16.msra.mxu0 %v4397
    %4624 = vmatprep.subr.bf16.mxu0 0
    %4625 = vmatpush2.bf16.msra.mxu0 %v4396
    %4626 = vmatprep.subr.bf16.mxu0 0
    %4627 = vmatpush2.bf16.msra.mxu0 %v4395
    %4628 = vmatprep.subr.bf16.mxu0 0
    %4629 = vmatpush2.bf16.msra.mxu0 %v4394
    %4630 = vmatprep.subr.bf16.mxu0 0
    %4631 = vmatpush2.bf16.msra.mxu0 %v4393
    %4632 = vmatprep.subr.bf16.mxu0 0
    %4633 = vmatpush2.bf16.msra.mxu0 %v4392
    %4634 = vmatprep.subr.bf16.mxu0 0
    %4635 = vmatpush2.bf16.msra.mxu0 %v4391
    %4636 = vmatprep.subr.bf16.mxu0 0
    %4637 = vmatpush2.bf16.msra.mxu0 %v4390
    %4638 = vmatprep.mubr.bf16.mxu0 %v3809
    %4639 = vmatmul.mubr.bf16.gmra.mxu0 %v3808
    %v4640 = vpop.f32.mrf.mxu0
    %v4641 = vadd.f32 %v4601, %v4640
    %v4642 = vpop.f32.mrf.mxu0
    %v4643 = vpop.f32.mrf.mxu0
    %v4644 = vpop.f32.mrf.mxu0
    %4645 = vdwg.mxu0
    %4646 = vmatprep.subr.bf16.mxu0 0
    %4647 = vmatpush1.bf16.msra.mxu0 %v4405
    %4648 = vmatprep.subr.bf16.mxu0 0
    %4649 = vmatpush1.bf16.msra.mxu0 %v4404
    %4650 = vmatprep.subr.bf16.mxu0 0
    %4651 = vmatpush1.bf16.msra.mxu0 %v4403
    %4652 = vmatprep.subr.bf16.mxu0 0
    %4653 = vmatpush1.bf16.msra.mxu0 %v4402
    %4654 = vmatprep.subr.bf16.mxu0 0
    %4655 = vmatpush1.bf16.msra.mxu0 %v4401
    %4656 = vmatprep.subr.bf16.mxu0 0
    %4657 = vmatpush1.bf16.msra.mxu0 %v4400
    %4658 = vmatprep.subr.bf16.mxu0 0
    %4659 = vmatpush1.bf16.msra.mxu0 %v4399
    %4660 = vmatprep.subr.bf16.mxu0 0
    %4661 = vmatpush1.bf16.msra.mxu0 %v4398
    %4662 = vmatprep.subr.bf16.mxu0 0
    %4663 = vmatpush2.bf16.msra.mxu0 %v4413
    %4664 = vmatprep.subr.bf16.mxu0 0
    %4665 = vmatpush2.bf16.msra.mxu0 %v4412
    %4666 = vmatprep.subr.bf16.mxu0 0
    %4667 = vmatpush2.bf16.msra.mxu0 %v4411
    %4668 = vmatprep.subr.bf16.mxu0 0
    %4669 = vmatpush2.bf16.msra.mxu0 %v4410
    %4670 = vmatprep.subr.bf16.mxu0 0
    %4671 = vmatpush2.bf16.msra.mxu0 %v4409
    %4672 = vmatprep.subr.bf16.mxu0 0
    %4673 = vmatpush2.bf16.msra.mxu0 %v4408
    %4674 = vmatprep.subr.bf16.mxu0 0
    %4675 = vmatpush2.bf16.msra.mxu0 %v4407
    %4676 = vmatprep.subr.bf16.mxu0 0
    %4677 = vmatpush2.bf16.msra.mxu0 %v4406
    %4678 = vmatprep.mubr.bf16.mxu0 %v3811
    %4679 = vmatmul.mubr.bf16.gmra.mxu0 %v3810
    %v4680 = vpop.f32.mrf.mxu0
    %v4681 = vadd.f32 %v4641, %v4680
    %v4682 = vpop.f32.mrf.mxu0
    %v4683 = vpop.f32.mrf.mxu0
    %v4684 = vpop.f32.mrf.mxu0
    %4685 = vdwg.mxu0
    %4686 = vmatprep.subr.bf16.mxu0 0
    %4687 = vmatpush1.bf16.msra.mxu0 %v4421
    %4688 = vmatprep.subr.bf16.mxu0 0
    %4689 = vmatpush1.bf16.msra.mxu0 %v4420
    %4690 = vmatprep.subr.bf16.mxu0 0
    %4691 = vmatpush1.bf16.msra.mxu0 %v4419
    %4692 = vmatprep.subr.bf16.mxu0 0
    %4693 = vmatpush1.bf16.msra.mxu0 %v4418
    %4694 = vmatprep.subr.bf16.mxu0 0
    %4695 = vmatpush1.bf16.msra.mxu0 %v4417
    %4696 = vmatprep.subr.bf16.mxu0 0
    %4697 = vmatpush1.bf16.msra.mxu0 %v4416
    %4698 = vmatprep.subr.bf16.mxu0 0
    %4699 = vmatpush1.bf16.msra.mxu0 %v4415
    %4700 = vmatprep.subr.bf16.mxu0 0
    %4701 = vmatpush1.bf16.msra.mxu0 %v4414
    %4702 = vmatprep.subr.bf16.mxu0 0
    %4703 = vmatpush2.bf16.msra.mxu0 %v4429
    %4704 = vmatprep.subr.bf16.mxu0 0
    %4705 = vmatpush2.bf16.msra.mxu0 %v4428
    %4706 = vmatprep.subr.bf16.mxu0 0
    %4707 = vmatpush2.bf16.msra.mxu0 %v4427
    %4708 = vmatprep.subr.bf16.mxu0 0
    %4709 = vmatpush2.bf16.msra.mxu0 %v4426
    %4710 = vmatprep.subr.bf16.mxu0 0
    %4711 = vmatpush2.bf16.msra.mxu0 %v4425
    %4712 = vmatprep.subr.bf16.mxu0 0
    %4713 = vmatpush2.bf16.msra.mxu0 %v4424
    %4714 = vmatprep.subr.bf16.mxu0 0
    %4715 = vmatpush2.bf16.msra.mxu0 %v4423
    %4716 = vmatprep.subr.bf16.mxu0 0
    %4717 = vmatpush2.bf16.msra.mxu0 %v4422
    %4718 = vmatprep.mubr.bf16.mxu0 %v3813
    %4719 = vmatmul.mubr.bf16.gmra.mxu0 %v3812
    %v4720 = vpop.f32.mrf.mxu0
    %v4721 = vadd.f32 %v4681, %v4720
    %v4722 = vpop.f32.mrf.mxu0
    %v4723 = vpop.f32.mrf.mxu0
    %v4724 = vpop.f32.mrf.mxu0
    %4725 = vdwg.mxu0
    %4726 = vmatprep.subr.bf16.mxu0 0
    %4727 = vmatpush1.bf16.msra.mxu0 %v4437
    %4728 = vmatprep.subr.bf16.mxu0 0
    %4729 = vmatpush1.bf16.msra.mxu0 %v4436
    %4730 = vmatprep.subr.bf16.mxu0 0
    %4731 = vmatpush1.bf16.msra.mxu0 %v4435
    %4732 = vmatprep.subr.bf16.mxu0 0
    %4733 = vmatpush1.bf16.msra.mxu0 %v4434
    %4734 = vmatprep.subr.bf16.mxu0 0
    %4735 = vmatpush1.bf16.msra.mxu0 %v4433
    %4736 = vmatprep.subr.bf16.mxu0 0
    %4737 = vmatpush1.bf16.msra.mxu0 %v4432
    %4738 = vmatprep.subr.bf16.mxu0 0
    %4739 = vmatpush1.bf16.msra.mxu0 %v4431
    %4740 = vmatprep.subr.bf16.mxu0 0
    %4741 = vmatpush1.bf16.msra.mxu0 %v4430
    %4742 = vmatprep.subr.bf16.mxu0 0
    %4743 = vmatpush2.bf16.msra.mxu0 0
    %4744 = vmatprep.subr.bf16.mxu0 0
    %4745 = vmatpush2.bf16.msra.mxu0 0
    %4746 = vmatprep.subr.bf16.mxu0 0
    %4747 = vmatpush2.bf16.msra.mxu0 0
    %4748 = vmatprep.subr.bf16.mxu0 0
    %4749 = vmatpush2.bf16.msra.mxu0 0
    %4750 = vmatprep.subr.bf16.mxu0 0
    %4751 = vmatpush2.bf16.msra.mxu0 0
    %4752 = vmatprep.subr.bf16.mxu0 0
    %4753 = vmatpush2.bf16.msra.mxu0 0
    %4754 = vmatprep.subr.bf16.mxu0 0
    %4755 = vmatpush2.bf16.msra.mxu0 0
    %4756 = vmatprep.subr.bf16.mxu0 0
    %4757 = vmatpush2.bf16.msra.mxu0 0
    %4758 = vmatprep.mubr.bf16.mxu0 0
    %4759 = vmatmul.mubr.bf16.gmra.mxu0 %v3814
    %v4760 = vpop.f32.mrf.mxu0
    %v4761 = vadd.f32 %v4721, %v4760
    %v4762 = vpop.f32.mrf.mxu0
    %v4763 = vpop.f32.mrf.mxu0
    %v4764 = vpop.f32.mrf.mxu0
    %4765 = vdwg.mxu0
    %v4766 = vadd.f32 %v4761, %v3391
    %4768 = vrot.lane.b32.xlu0 %v3394, 16
    %v4769 = vpop.permute.xlu0 %4768
    %v4771 = vadd.f32 %v4761, %v4769
    %4773 = vrot.lane.b32.xlu0 %v4771, 112
    %v4774 = vpop.permute.xlu0 %4773
    %v4776 = vsel %vm322, %v4766, 0.0
    %4777 = vadd.xlane.f32.xlu0 %v4776
    %v4778 = vpop.xlane.xlu0 %4777
    %v4779 = vsel %vm322, %v4774, 0.0
    %4780 = vadd.xlane.f32.xlu0 %v4779
    %v4781 = vpop.xlane.xlu0 %4780
    %v4782 = vmul.f32 %v4778, %v1712
    %v4783 = vmul.f32 %v4781, %v1712
    %v4784 = vsub.f32 %v4766, %v4782
    %v4785 = vsub.f32 %v4774, %v4783
    %v4786 = vmul.f32 %v4784, %v4784
    %v4787 = vmul.f32 %v4785, %v4785
    %v4788 = vsel %vm322, %v4786, 0.0
    %4789 = vadd.xlane.f32.xlu0 %v4788
    %v4790 = vpop.xlane.xlu0 %4789
    %v4791 = vsel %vm322, %v4787, 0.0
    %4792 = vadd.xlane.f32.xlu0 %v4791
    %v4793 = vpop.xlane.xlu0 %4792
    %v4794 = vmul.f32 %v4790, %v1712
    %v4795 = vmul.f32 %v4793, %v1712
    %v4796 = vadd.f32 %v4794, 1e-05
    %v4797 = vadd.f32 %v4795, 1e-05
    %v4798 = vrsqrt.pop %v4796
    %v4799 = vrsqrt.pop %v4797
    %v4800 = vmul.f32 %v4784, %v4798
    %v4801 = vmul.f32 %v4785, %v4799
    %v4802 = vmul.f32 %v4800, %v1737
    %v4803 = vmul.f32 %v4801, %v1737
    %v4804 = vadd.f32 %v4802, %v1745
    %v4805 = vadd.f32 %v4803, %v1745
    %v4806 = vpack.c.bf16 %v4805, %v4804
    %4807 = vmatprep.subr.bf16.mxu0 0
    %4808 = vmatpush1.bf16.msra.mxu0 0
    %4809 = vmatprep.subr.bf16.mxu0 0
    %4810 = vmatpush1.bf16.msra.mxu0 0
    %4811 = vmatprep.subr.bf16.mxu0 0
    %4812 = vmatpush1.bf16.msra.mxu0 0
    %4813 = vmatprep.subr.bf16.mxu0 0
    %4814 = vmatpush1.bf16.msra.mxu0 0
    %4815 = vmatprep.subr.bf16.mxu0 0
    %4816 = vmatpush1.bf16.msra.mxu0 0
    %4817 = vmatprep.subr.bf16.mxu0 0
    %4818 = vmatpush1.bf16.msra.mxu0 0
    %4819 = vmatprep.subr.bf16.mxu0 0
    %4820 = vmatpush1.bf16.msra.mxu0 0
    %4821 = vmatprep.subr.bf16.mxu0 0
    %4822 = vmatpush1.bf16.msra.mxu0 %v4806
    %4823 = vmatprep.subr.bf16.mxu0 0
    %4824 = vmatpush2.bf16.msra.mxu0 0
    %4825 = vmatprep.subr.bf16.mxu0 0
    %4826 = vmatpush2.bf16.msra.mxu0 0
    %4827 = vmatprep.subr.bf16.mxu0 0
    %4828 = vmatpush2.bf16.msra.mxu0 0
    %4829 = vmatprep.subr.bf16.mxu0 0
    %4830 = vmatpush2.bf16.msra.mxu0 0
    %4831 = vmatprep.subr.bf16.mxu0 0
    %4832 = vmatpush2.bf16.msra.mxu0 0
    %4833 = vmatprep.subr.bf16.mxu0 0
    %4834 = vmatpush2.bf16.msra.mxu0 0
    %4835 = vmatprep.subr.bf16.mxu0 0
    %4836 = vmatpush2.bf16.msra.mxu0 0
    %4837 = vmatprep.subr.bf16.mxu0 0
    %4838 = vmatpush2.bf16.msra.mxu0 0
    %4839 = vmatprep.mubr.bf16.mxu0 0
    %4840 = vmatmul.mubr.bf16.gmra.mxu0 %v324
    %v4841 = vpop.f32.mrf.mxu0
    %v4842 = vadd.f32 0.0, %v4841
    %v4843 = vpop.f32.mrf.mxu0
    %v4844 = vpop.f32.mrf.mxu0
    %v4845 = vadd.f32 0.0, %v4844
    %v4846 = vpop.f32.mrf.mxu0
    %4847 = vdwg.mxu0
    %4849 = vrot.lane.b32.xlu0 %v4845, 16
    %v4850 = vpop.permute.xlu0 %4849
    %v4852 = vsel %vm322, %v4842, %v4850
    %4853 = vst.msk [vmem:[#allocation3 + $0x8] sm:$0xff] %vm150, %v4852
    %v4854 = vld [vmem:[#allocation3 + $0x3] sm:$0xff]
    %v4855 = vld [vmem:[#allocation3 + $0x4] sm:$0xff]
    %v4856 = vld [vmem:[#allocation3 + $0x5] sm:$0xff]
    %v4857 = vld [vmem:[#allocation3 + $0x6] sm:$0xff]
    %v4858 = vld [vmem:[#allocation3 + $0x7] sm:$0xff]
    %v4859 = vld [vmem:[#allocation3 + $0x8] sm:$0xff]
    %v4860 = vld [vmem:[#allocation3 + $0x9] sm:$0xff]
    %v4861 = vld [vmem:[#allocation3 + $0xa] sm:$0xff]
    %v4862 = vld [vmem:[#allocation3 + $0xb] sm:$0xff]
    %v4863 = vld [vmem:[#allocation3 + $0xc] sm:$0xff]
    %v4864 = vld [vmem:[#allocation3 + $0xd] sm:$0xff]
    %4866 = vrot.lane.b32.xlu0 %v4855, 32
    %v4867 = vpop.permute.xlu0 %4866
    %4870 = vrot.lane.b32.xlu0 %v4856, 64
    %v4871 = vpop.permute.xlu0 %4870
    %4874 = vrot.lane.b32.xlu0 %v4857, 96
    %v4875 = vpop.permute.xlu0 %4874
    %4878 = vrot.lane.b32.xlu0 %v4859, 32
    %v4879 = vpop.permute.xlu0 %4878
    %4882 = vrot.lane.b32.xlu0 %v4860, 64
    %v4883 = vpop.permute.xlu0 %4882
    %4886 = vrot.lane.b32.xlu0 %v4861, 96
    %v4887 = vpop.permute.xlu0 %4886
    %4890 = vrot.lane.b32.xlu0 %v4863, 32
    %v4891 = vpop.permute.xlu0 %4890
    %4894 = vrot.lane.b32.xlu0 %v4864, 64
    %v4895 = vpop.permute.xlu0 %4894
    %v4897 = vsel %vm150, %v4854, %v4867
    %v4898 = vsel %vm417, %v4897, %v4871
    %v4899 = vsel %vm419, %v4898, %v4875
    %v4900 = vsel %vm150, %v4858, %v4879
    %v4901 = vsel %vm417, %v4900, %v4883
    %v4902 = vsel %vm419, %v4901, %v4887
    %v4903 = vsel %vm150, %v4862, %v4891
    %v4904 = vsel %vm417, %v4903, %v4895
    %v4905 = vpack.c.bf16 %v4899, %v4899
    %v4906 = vpack.c.bf16 %v4902, %v4902
    %v4907 = vpack.c.bf16 %v4904, %v4904
    %v4908 = vld [vmem:[%s1851] sm:$0xf]
    %v4909 = vld [vmem:[%s1851 + $0x4] sm:$0xf]
    %v4910 = vld [vmem:[%s1851 + $0x8] sm:$0xf]
    %v4911 = vld [vmem:[%s1851 + $0xc] sm:$0xf]
    %v4912 = vld [vmem:[%s1851 + $0x10] sm:$0xf]
    %v4913 = vld [vmem:[%s1851 + $0x14] sm:$0xf]
    %v4914 = vld [vmem:[%s1851 + $0x18] sm:$0xf]
    %v4915 = vld [vmem:[%s1851 + $0x1c] sm:$0xf]
    %v4916 = vld [vmem:[%s1851 + $0x20] sm:$0xf]
    %v4917 = vld [vmem:[%s1851 + $0x24] sm:$0xf]
    %v4918 = vld [vmem:[%s1851 + $0x28] sm:$0xf]
    %v4919 = vld [vmem:[%s1851 + $0x2c] sm:$0xf]
    %v4920 = vld [vmem:[%s1851 + $0x30] sm:$0xf]
    %v4921 = vld [vmem:[%s1851 + $0x34] sm:$0xf]
    %v4922 = vld [vmem:[%s1851 + $0x38] sm:$0xf]
    %v4923 = vld [vmem:[%s1851 + $0x3c] sm:$0xf]
    %v4924 = vld [vmem:[%s1851 + $0x40] sm:$0xf]
    %v4925 = vld [vmem:[%s1851 + $0x44] sm:$0xf]
    %v4926 = vld [vmem:[%s1851 + $0x48] sm:$0xf]
    %v4927 = vld [vmem:[%s1851 + $0x4c] sm:$0xf]
    %v4928 = vld [vmem:[%s1851 + $0x50] sm:$0xf]
    %v4929 = vld [vmem:[%s1851 + $0x54] sm:$0xf]
    %v4930 = vld [vmem:[%s1851 + $0x58] sm:$0xf]
    %v4931 = vld [vmem:[%s1851 + $0x5c] sm:$0xf]
    %v4932 = vld [vmem:[%s1851 + $0x60] sm:$0xf]
    %v4933 = vld [vmem:[%s1851 + $0x64] sm:$0xf]
    %v4934 = vld [vmem:[%s1851 + $0x68] sm:$0xf]
    %v4935 = vld [vmem:[%s1851 + $0x6c] sm:$0xf]
    %v4936 = vld [vmem:[%s1851 + $0x70] sm:$0xf]
    %v4937 = vld [vmem:[%s1851 + $0x74] sm:$0xf]
    %v4938 = vld [vmem:[%s1851 + $0x78] sm:$0xf]
    %v4939 = vld [vmem:[%s1851 + $0x7c] sm:$0xf]
    %v4940 = vld [vmem:[%s1851 + $0x80] sm:$0xf]
    %v4941 = vld [vmem:[%s1851 + $0x84] sm:$0xf]
    %v4942 = vld [vmem:[%s1851 + $0x88] sm:$0xf]
    %v4943 = vld [vmem:[%s1851 + $0x8c] sm:$0xf]
    %v4944 = vld [vmem:[%s1851 + $0x90] sm:$0xf]
    %v4945 = vld [vmem:[%s1851 + $0x94] sm:$0xf]
    %v4946 = vld [vmem:[%s1851 + $0x98] sm:$0xf]
    %v4947 = vld [vmem:[%s1851 + $0x9c] sm:$0xf]
    %v4948 = vld [vmem:[%s1851 + $0xa0] sm:$0xf]
    %v4949 = vld [vmem:[%s1851 + $0xa4] sm:$0xf]
    %v4950 = vld [vmem:[%s1851 + $0xa8] sm:$0xf]
    %v4951 = vld [vmem:[%s1851 + $0xac] sm:$0xf]
    %v4952 = vld [vmem:[%s1896] sm:$0x1]
    %v4954 = vlaneseq
    %v4955 = vshrl.u32 %v4954, 7
    %v4956 = vsub.s32 0, %v4955
    %v4957 = vrot.slane %v4952, %v4956
    %v5003 = vunpack.c.l.b16 %v4908
    %v5004 = vunpack.c.l.b16 %v4909
    %v5005 = vunpack.c.l.b16 %v4910
    %v5006 = vunpack.c.l.b16 %v4911
    %v5007 = vunpack.c.l.b16 %v4912
    %v5008 = vunpack.c.l.b16 %v4913
    %v5009 = vunpack.c.l.b16 %v4914
    %v5010 = vunpack.c.l.b16 %v4915
    %v5011 = vunpack.c.l.b16 %v4916
    %v5012 = vunpack.c.l.b16 %v4917
    %v5013 = vunpack.c.l.b16 %v4918
    %v5014 = vunpack.c.l.b16 %v4919
    %v5015 = vunpack.c.l.b16 %v4920
    %v5016 = vunpack.c.l.b16 %v4921
    %v5017 = vunpack.c.l.b16 %v4922
    %v5018 = vunpack.c.l.b16 %v4923
    %v5019 = vunpack.c.l.b16 %v4924
    %v5020 = vunpack.c.l.b16 %v4925
    %v5021 = vunpack.c.l.b16 %v4926
    %v5022 = vunpack.c.l.b16 %v4927
    %v5023 = vunpack.c.l.b16 %v4928
    %v5024 = vunpack.c.l.b16 %v4929
    %v5025 = vunpack.c.l.b16 %v4930
    %v5026 = vunpack.c.l.b16 %v4931
    %v5027 = vunpack.c.l.b16 %v4932
    %v5028 = vunpack.c.l.b16 %v4933
    %v5029 = vunpack.c.l.b16 %v4934
    %v5030 = vunpack.c.l.b16 %v4935
    %v5031 = vunpack.c.l.b16 %v4936
    %v5032 = vunpack.c.l.b16 %v4937
    %v5033 = vunpack.c.l.b16 %v4938
    %v5034 = vunpack.c.l.b16 %v4939
    %v5035 = vunpack.c.l.b16 %v4940
    %v5036 = vunpack.c.l.b16 %v4941
    %v5037 = vunpack.c.l.b16 %v4942
    %v5038 = vunpack.c.l.b16 %v4943
    %v5039 = vunpack.c.l.b16 %v4944
    %v5040 = vunpack.c.l.b16 %v4945
    %v5041 = vunpack.c.l.b16 %v4946
    %v5042 = vunpack.c.l.b16 %v4947
    %v5043 = vunpack.c.l.b16 %v4948
    %v5044 = vunpack.c.l.b16 %v4949
    %v5045 = vunpack.c.l.b16 %v4950
    %v5046 = vunpack.c.l.b16 %v4951
    %v5047 = vpack.c.b16 %v5004, %v5003
    %v5048 = vpack.c.b16 %v5006, %v5005
    %v5049 = vpack.c.b16 %v5008, %v5007
    %v5050 = vpack.c.b16 %v5010, %v5009
    %v5051 = vpack.c.b16 %v5012, %v5011
    %v5052 = vpack.c.b16 %v5014, %v5013
    %v5053 = vpack.c.b16 %v5016, %v5015
    %v5054 = vpack.c.b16 %v5018, %v5017
    %v5055 = vpack.c.b16 %v5020, %v5019
    %v5056 = vpack.c.b16 %v5022, %v5021
    %v5057 = vpack.c.b16 %v5024, %v5023
    %v5058 = vpack.c.b16 %v5026, %v5025
    %v5059 = vpack.c.b16 %v5028, %v5027
    %v5060 = vpack.c.b16 %v5030, %v5029
    %v5061 = vpack.c.b16 %v5032, %v5031
    %v5062 = vpack.c.b16 %v5034, %v5033
    %v5063 = vpack.c.b16 %v5036, %v5035
    %v5064 = vpack.c.b16 %v5038, %v5037
    %v5065 = vpack.c.b16 %v5040, %v5039
    %v5066 = vpack.c.b16 %v5042, %v5041
    %v5067 = vpack.c.b16 %v5044, %v5043
    %v5068 = vpack.c.b16 %v5046, %v5045
    %v5092 = vsel %vm419, %v4907, 0
    %5094 = vmatprep.subr.bf16.mxu0 0
    %5095 = vmatpush1.bf16.msra.mxu0 %v5054
    %5096 = vmatprep.subr.bf16.mxu0 0
    %5097 = vmatpush1.bf16.msra.mxu0 %v5053
    %5098 = vmatprep.subr.bf16.mxu0 0
    %5099 = vmatpush1.bf16.msra.mxu0 %v5052
    %5100 = vmatprep.subr.bf16.mxu0 0
    %5101 = vmatpush1.bf16.msra.mxu0 %v5051
    %5102 = vmatprep.subr.bf16.mxu0 0
    %5103 = vmatpush1.bf16.msra.mxu0 %v5050
    %5104 = vmatprep.subr.bf16.mxu0 0
    %5105 = vmatpush1.bf16.msra.mxu0 %v5049
    %5106 = vmatprep.subr.bf16.mxu0 0
    %5107 = vmatpush1.bf16.msra.mxu0 %v5048
    %5108 = vmatprep.subr.bf16.mxu0 0
    %5109 = vmatpush1.bf16.msra.mxu0 %v5047
    %5110 = vmatprep.subr.bf16.mxu0 0
    %5111 = vmatpush2.bf16.msra.mxu0 %v5062
    %5112 = vmatprep.subr.bf16.mxu0 0
    %5113 = vmatpush2.bf16.msra.mxu0 %v5061
    %5114 = vmatprep.subr.bf16.mxu0 0
    %5115 = vmatpush2.bf16.msra.mxu0 %v5060
    %5116 = vmatprep.subr.bf16.mxu0 0
    %5117 = vmatpush2.bf16.msra.mxu0 %v5059
    %5118 = vmatprep.subr.bf16.mxu0 0
    %5119 = vmatpush2.bf16.msra.mxu0 %v5058
    %5120 = vmatprep.subr.bf16.mxu0 0
    %5121 = vmatpush2.bf16.msra.mxu0 %v5057
    %5122 = vmatprep.subr.bf16.mxu0 0
    %5123 = vmatpush2.bf16.msra.mxu0 %v5056
    %5124 = vmatprep.subr.bf16.mxu0 0
    %5125 = vmatpush2.bf16.msra.mxu0 %v5055
    %5126 = vmatprep.mubr.bf16.mxu0 %v4906
    %5127 = vmatmul.mubr.bf16.gmra.mxu0 %v4905
    %v5128 = vpop.f32.mrf.mxu0
    %v5129 = vadd.f32 %v4957, %v5128
    %v5130 = vpop.f32.mrf.mxu0
    %v5131 = vpop.f32.mrf.mxu0
    %v5132 = vpop.f32.mrf.mxu0
    %5133 = vdwg.mxu0
    %5134 = vmatprep.subr.bf16.mxu0 0
    %5135 = vmatpush1.bf16.msra.mxu0 0
    %5136 = vmatprep.subr.bf16.mxu0 0
    %5137 = vmatpush1.bf16.msra.mxu0 0
    %5138 = vmatprep.subr.bf16.mxu0 0
    %5139 = vmatpush1.bf16.msra.mxu0 %v5068
    %5140 = vmatprep.subr.bf16.mxu0 0
    %5141 = vmatpush1.bf16.msra.mxu0 %v5067
    %5142 = vmatprep.subr.bf16.mxu0 0
    %5143 = vmatpush1.bf16.msra.mxu0 %v5066
    %5144 = vmatprep.subr.bf16.mxu0 0
    %5145 = vmatpush1.bf16.msra.mxu0 %v5065
    %5146 = vmatprep.subr.bf16.mxu0 0
    %5147 = vmatpush1.bf16.msra.mxu0 %v5064
    %5148 = vmatprep.subr.bf16.mxu0 0
    %5149 = vmatpush1.bf16.msra.mxu0 %v5063
    %5150 = vmatprep.subr.bf16.mxu0 0
    %5151 = vmatpush2.bf16.msra.mxu0 0
    %5152 = vmatprep.subr.bf16.mxu0 0
    %5153 = vmatpush2.bf16.msra.mxu0 0
    %5154 = vmatprep.subr.bf16.mxu0 0
    %5155 = vmatpush2.bf16.msra.mxu0 0
    %5156 = vmatprep.subr.bf16.mxu0 0
    %5157 = vmatpush2.bf16.msra.mxu0 0
    %5158 = vmatprep.subr.bf16.mxu0 0
    %5159 = vmatpush2.bf16.msra.mxu0 0
    %5160 = vmatprep.subr.bf16.mxu0 0
    %5161 = vmatpush2.bf16.msra.mxu0 0
    %5162 = vmatprep.subr.bf16.mxu0 0
    %5163 = vmatpush2.bf16.msra.mxu0 0
    %5164 = vmatprep.subr.bf16.mxu0 0
    %5165 = vmatpush2.bf16.msra.mxu0 0
    %5166 = vmatprep.mubr.bf16.mxu0 0
    %5167 = vmatmul.mubr.bf16.gmra.mxu0 %v5092
    %v5168 = vpop.f32.mrf.mxu0
    %v5169 = vadd.f32 %v5129, %v5168
    %v5170 = vpop.f32.mrf.mxu0
    %v5171 = vpop.f32.mrf.mxu0
    %v5172 = vpop.f32.mrf.mxu0
    %5173 = vdwg.mxu0
    %v5174 = vmul.f32 %v5169, 0.5
    %v5175 = vmul.f32 %v5169, 0.70710677
    %v5176 = vand.u32 2147483647, %v5175
    %v5177 = vmul.f32 %v5176, 0.3275911
    %v5178 = vadd.f32 %v5177, 1.0
    %v5179 = vrcp.pop %v5178
    %v5180 = vmul.f32 1.0, %v5179
    %v5181 = vmul.f32 %v5180, 1.0614054
    %v5182 = vadd.f32 %v5181, -1.4531521
    %v5183 = vmul.f32 %v5182, %v5180
    %v5184 = vadd.f32 %v5183, 1.4214138
    %v5185 = vmul.f32 %v5184, %v5180
    %v5186 = vadd.f32 %v5185, -0.28449672
    %v5187 = vmul.f32 %v5186, %v5180
    %v5188 = vadd.f32 %v5187, 0.2548296
    %v5189 = vmul.f32 %v5188, %v5180
    %v5190 = vsub.f32 0.0, %v5176
    %v5191 = vmul.f32 %v5190, %v5176
    %v5192 = vmul.f32 %v5191, 1.442695
    %v5193 = vpow.pop %v5192
    %v5194 = vmul.f32 %v5189, %v5193
    %v5195 = vsub.f32 1.0, %v5194
    %vm5196 = vcmp.ge.f32.partialorder %v5175, 0.0
    %v5197 = vsub.f32 0.0, %v5195
    %v5198 = vsel %vm5196, %v5195, %v5197
    %v5199 = vadd.f32 %v5198, 1.0
    %v5200 = vmul.f32 %v5174, %v5199
    %5201 = vst [vmem:[#allocation4 + $0x8] sm:$0xff] %v5200
    %v5202 = vld [vmem:[#allocation4 + $0x3] sm:$0xff]
    %v5203 = vld [vmem:[#allocation4 + $0x4] sm:$0xff]
    %v5204 = vld [vmem:[#allocation4 + $0x5] sm:$0xff]
    %v5205 = vld [vmem:[#allocation4 + $0x6] sm:$0xff]
    %v5206 = vld [vmem:[#allocation4 + $0x7] sm:$0xff]
    %v5207 = vld [vmem:[#allocation4 + $0x8] sm:$0xff]
    %v5208 = vld [vmem:[#allocation4 + $0x9] sm:$0xff]
    %v5209 = vld [vmem:[#allocation4 + $0xa] sm:$0xff]
    %v5210 = vld [vmem:[#allocation4 + $0xb] sm:$0xff]
    %v5211 = vld [vmem:[#allocation4 + $0xc] sm:$0xff]
    %v5212 = vld [vmem:[#allocation4 + $0xd] sm:$0xff]
    %v5213 = vpack.c.bf16 %v5202, %v5202
    %v5214 = vpack.c.bf16 %v5203, %v5203
    %v5215 = vpack.c.bf16 %v5204, %v5204
    %v5216 = vpack.c.bf16 %v5205, %v5205
    %v5217 = vpack.c.bf16 %v5206, %v5206
    %v5218 = vpack.c.bf16 %v5207, %v5207
    %v5219 = vpack.c.bf16 %v5208, %v5208
    %v5220 = vpack.c.bf16 %v5209, %v5209
    %v5221 = vpack.c.bf16 %v5210, %v5210
    %v5222 = vpack.c.bf16 %v5211, %v5211
    %v5223 = vpack.c.bf16 %v5212, %v5212
    %v5224 = vld [vmem:[%s2169] sm:$0xf]
    %v5225 = vld [vmem:[%s2169 + $0x4] sm:$0xf]
    %v5226 = vld [vmem:[%s2169 + $0x8] sm:$0xf]
    %v5227 = vld [vmem:[%s2169 + $0xc] sm:$0xf]
    %v5228 = vld [vmem:[%s2169 + $0x10] sm:$0xf]
    %v5229 = vld [vmem:[%s2169 + $0x14] sm:$0xf]
    %v5230 = vld [vmem:[%s2169 + $0x18] sm:$0xf]
    %v5231 = vld [vmem:[%s2169 + $0x1c] sm:$0xf]
    %v5232 = vld [vmem:[%s2169 + $0x20] sm:$0xf]
    %v5233 = vld [vmem:[%s2169 + $0x24] sm:$0xf]
    %v5234 = vld [vmem:[%s2169 + $0x28] sm:$0xf]
    %v5235 = vld [vmem:[%s2169 + $0x2c] sm:$0xf]
    %v5236 = vld [vmem:[%s2169 + $0x30] sm:$0xf]
    %v5237 = vld [vmem:[%s2169 + $0x34] sm:$0xf]
    %v5238 = vld [vmem:[%s2169 + $0x38] sm:$0xf]
    %v5239 = vld [vmem:[%s2169 + $0x3c] sm:$0xf]
    %v5240 = vld [vmem:[%s2169 + $0x40] sm:$0xf]
    %v5241 = vld [vmem:[%s2169 + $0x44] sm:$0xf]
    %v5242 = vld [vmem:[%s2169 + $0x48] sm:$0xf]
    %v5243 = vld [vmem:[%s2169 + $0x4c] sm:$0xf]
    %v5244 = vld [vmem:[%s2169 + $0x50] sm:$0xf]
    %v5245 = vld [vmem:[%s2169 + $0x54] sm:$0xf]
    %v5246 = vld [vmem:[%s2169 + $0x58] sm:$0xf]
    %v5247 = vld [vmem:[%s2169 + $0x5c] sm:$0xf]
    %v5248 = vld [vmem:[%s2169 + $0x60] sm:$0xf]
    %v5249 = vld [vmem:[%s2169 + $0x64] sm:$0xf]
    %v5250 = vld [vmem:[%s2169 + $0x68] sm:$0xf]
    %v5251 = vld [vmem:[%s2169 + $0x6c] sm:$0xf]
    %v5252 = vld [vmem:[%s2169 + $0x70] sm:$0xf]
    %v5253 = vld [vmem:[%s2169 + $0x74] sm:$0xf]
    %v5254 = vld [vmem:[%s2169 + $0x78] sm:$0xf]
    %v5255 = vld [vmem:[%s2169 + $0x7c] sm:$0xf]
    %v5256 = vld [vmem:[%s2169 + $0x80] sm:$0xf]
    %v5257 = vld [vmem:[%s2169 + $0x84] sm:$0xf]
    %v5258 = vld [vmem:[%s2169 + $0x88] sm:$0xf]
    %v5259 = vld [vmem:[%s2169 + $0x8c] sm:$0xf]
    %v5260 = vld [vmem:[%s2169 + $0x90] sm:$0xf]
    %v5261 = vld [vmem:[%s2169 + $0x94] sm:$0xf]
    %v5262 = vld [vmem:[%s2169 + $0x98] sm:$0xf]
    %v5263 = vld [vmem:[%s2169 + $0x9c] sm:$0xf]
    %v5264 = vld [vmem:[%s2169 + $0xa0] sm:$0xf]
    %v5265 = vld [vmem:[%s2169 + $0xa4] sm:$0xf]
    %v5266 = vld [vmem:[%s2169 + $0xa8] sm:$0xf]
    %v5267 = vld [vmem:[%s2169 + $0xac] sm:$0xf]
    %v5268 = vld [vmem:[%s2169 + $0xb0] sm:$0xf]
    %v5269 = vld [vmem:[%s2169 + $0xb4] sm:$0xf]
    %v5270 = vld [vmem:[%s2169 + $0xb8] sm:$0xf]
    %v5271 = vld [vmem:[%s2169 + $0xbc] sm:$0xf]
    %v5272 = vld [vmem:[%s2169 + $0xc0] sm:$0xf]
    %v5273 = vld [vmem:[%s2169 + $0xc4] sm:$0xf]
    %v5274 = vld [vmem:[%s2169 + $0xc8] sm:$0xf]
    %v5275 = vld [vmem:[%s2169 + $0xcc] sm:$0xf]
    %v5276 = vld [vmem:[%s2169 + $0xd0] sm:$0xf]
    %v5277 = vld [vmem:[%s2169 + $0xd4] sm:$0xf]
    %v5278 = vld [vmem:[%s2169 + $0xd8] sm:$0xf]
    %v5279 = vld [vmem:[%s2169 + $0xdc] sm:$0xf]
    %v5280 = vld [vmem:[%s2169 + $0xe0] sm:$0xf]
    %v5281 = vld [vmem:[%s2169 + $0xe4] sm:$0xf]
    %v5282 = vld [vmem:[%s2169 + $0xe8] sm:$0xf]
    %v5283 = vld [vmem:[%s2169 + $0xec] sm:$0xf]
    %v5284 = vld [vmem:[%s2169 + $0xf0] sm:$0xf]
    %v5285 = vld [vmem:[%s2169 + $0xf4] sm:$0xf]
    %v5286 = vld [vmem:[%s2169 + $0xf8] sm:$0xf]
    %v5287 = vld [vmem:[%s2169 + $0xfc] sm:$0xf]
    %v5288 = vld [vmem:[%s2169 + $0x100] sm:$0xf]
    %v5289 = vld [vmem:[%s2169 + $0x104] sm:$0xf]
    %v5290 = vld [vmem:[%s2169 + $0x108] sm:$0xf]
    %v5291 = vld [vmem:[%s2169 + $0x10c] sm:$0xf]
    %v5292 = vld [vmem:[%s2169 + $0x110] sm:$0xf]
    %v5293 = vld [vmem:[%s2169 + $0x114] sm:$0xf]
    %v5294 = vld [vmem:[%s2169 + $0x118] sm:$0xf]
    %v5295 = vld [vmem:[%s2169 + $0x11c] sm:$0xf]
    %v5296 = vld [vmem:[%s2169 + $0x120] sm:$0xf]
    %v5297 = vld [vmem:[%s2169 + $0x124] sm:$0xf]
    %v5298 = vld [vmem:[%s2169 + $0x128] sm:$0xf]
    %v5299 = vld [vmem:[%s2169 + $0x12c] sm:$0xf]
    %v5300 = vld [vmem:[%s2169 + $0x130] sm:$0xf]
    %v5301 = vld [vmem:[%s2169 + $0x134] sm:$0xf]
    %v5302 = vld [vmem:[%s2169 + $0x138] sm:$0xf]
    %v5303 = vld [vmem:[%s2169 + $0x13c] sm:$0xf]
    %v5304 = vld [vmem:[%s2169 + $0x140] sm:$0xf]
    %v5305 = vld [vmem:[%s2169 + $0x144] sm:$0xf]
    %v5306 = vld [vmem:[%s2169 + $0x148] sm:$0xf]
    %v5307 = vld [vmem:[%s2169 + $0x14c] sm:$0xf]
    %v5308 = vld [vmem:[%s2169 + $0x150] sm:$0xf]
    %v5309 = vld [vmem:[%s2169 + $0x154] sm:$0xf]
    %v5310 = vld [vmem:[%s2169 + $0x158] sm:$0xf]
    %v5311 = vld [vmem:[%s2169 + $0x15c] sm:$0xf]
    %v5312 = vld [vmem:[%s2169 + $0x160] sm:$0xf]
    %v5313 = vld [vmem:[%s2169 + $0x164] sm:$0xf]
    %v5314 = vld [vmem:[%s2169 + $0x168] sm:$0xf]
    %v5315 = vld [vmem:[%s2169 + $0x16c] sm:$0xf]
    %v5316 = vld [vmem:[%s2169 + $0x170] sm:$0xf]
    %v5317 = vld [vmem:[%s2169 + $0x174] sm:$0xf]
    %v5318 = vld [vmem:[%s2169 + $0x178] sm:$0xf]
    %v5319 = vld [vmem:[%s2169 + $0x17c] sm:$0xf]
    %v5320 = vld [vmem:[%s2169 + $0x180] sm:$0xf]
    %v5321 = vld [vmem:[%s2169 + $0x184] sm:$0xf]
    %v5322 = vld [vmem:[%s2169 + $0x188] sm:$0xf]
    %v5323 = vld [vmem:[%s2169 + $0x18c] sm:$0xf]
    %v5324 = vld [vmem:[%s2169 + $0x190] sm:$0xf]
    %v5325 = vld [vmem:[%s2169 + $0x194] sm:$0xf]
    %v5326 = vld [vmem:[%s2169 + $0x198] sm:$0xf]
    %v5327 = vld [vmem:[%s2169 + $0x19c] sm:$0xf]
    %v5328 = vld [vmem:[%s2169 + $0x1a0] sm:$0xf]
    %v5329 = vld [vmem:[%s2169 + $0x1a4] sm:$0xf]
    %v5330 = vld [vmem:[%s2169 + $0x1a8] sm:$0xf]
    %v5331 = vld [vmem:[%s2169 + $0x1ac] sm:$0xf]
    %v5332 = vld [vmem:[%s2169 + $0x1b0] sm:$0xf]
    %v5333 = vld [vmem:[%s2169 + $0x1b4] sm:$0xf]
    %v5334 = vld [vmem:[%s2169 + $0x1b8] sm:$0xf]
    %v5335 = vld [vmem:[%s2169 + $0x1bc] sm:$0xf]
    %v5336 = vld [vmem:[%s2169 + $0x1c0] sm:$0xf]
    %v5337 = vld [vmem:[%s2169 + $0x1c4] sm:$0xf]
    %v5338 = vld [vmem:[%s2169 + $0x1c8] sm:$0xf]
    %v5339 = vld [vmem:[%s2169 + $0x1cc] sm:$0xf]
    %v5340 = vld [vmem:[%s2169 + $0x1d0] sm:$0xf]
    %v5341 = vld [vmem:[%s2169 + $0x1d4] sm:$0xf]
    %v5342 = vld [vmem:[%s2169 + $0x1d8] sm:$0xf]
    %v5343 = vld [vmem:[%s2169 + $0x1dc] sm:$0xf]
    %v5344 = vld [vmem:[%s2169 + $0x1e0] sm:$0xf]
    %v5345 = vld [vmem:[%s2169 + $0x1e4] sm:$0xf]
    %v5346 = vld [vmem:[%s2169 + $0x1e8] sm:$0xf]
    %v5347 = vld [vmem:[%s2169 + $0x1ec] sm:$0xf]
    %v5348 = vld [vmem:[%s2169 + $0x1f0] sm:$0xf]
    %v5349 = vld [vmem:[%s2169 + $0x1f4] sm:$0xf]
    %v5350 = vld [vmem:[%s2169 + $0x1f8] sm:$0xf]
    %v5351 = vld [vmem:[%s2169 + $0x1fc] sm:$0xf]
    %v5352 = vld [vmem:[%s2169 + $0x200] sm:$0xf]
    %v5353 = vld [vmem:[%s2169 + $0x204] sm:$0xf]
    %v5354 = vld [vmem:[%s2169 + $0x208] sm:$0xf]
    %v5355 = vld [vmem:[%s2169 + $0x20c] sm:$0xf]
    %v5356 = vld [vmem:[%s2169 + $0x210] sm:$0xf]
    %v5357 = vld [vmem:[%s2169 + $0x214] sm:$0xf]
    %v5358 = vld [vmem:[%s2169 + $0x218] sm:$0xf]
    %v5359 = vld [vmem:[%s2169 + $0x21c] sm:$0xf]
    %v5360 = vld [vmem:[%s2169 + $0x220] sm:$0xf]
    %v5361 = vld [vmem:[%s2169 + $0x224] sm:$0xf]
    %v5362 = vld [vmem:[%s2169 + $0x228] sm:$0xf]
    %v5363 = vld [vmem:[%s2169 + $0x22c] sm:$0xf]
    %v5364 = vld [vmem:[%s2169 + $0x230] sm:$0xf]
    %v5365 = vld [vmem:[%s2169 + $0x234] sm:$0xf]
    %v5366 = vld [vmem:[%s2169 + $0x238] sm:$0xf]
    %v5367 = vld [vmem:[%s2169 + $0x23c] sm:$0xf]
    %v5368 = vld [vmem:[%s2169 + $0x240] sm:$0xf]
    %v5369 = vld [vmem:[%s2169 + $0x244] sm:$0xf]
    %v5370 = vld [vmem:[%s2169 + $0x248] sm:$0xf]
    %v5371 = vld [vmem:[%s2169 + $0x24c] sm:$0xf]
    %v5372 = vld [vmem:[%s2169 + $0x250] sm:$0xf]
    %v5373 = vld [vmem:[%s2169 + $0x254] sm:$0xf]
    %v5374 = vld [vmem:[%s2169 + $0x258] sm:$0xf]
    %v5375 = vld [vmem:[%s2169 + $0x25c] sm:$0xf]
    %v5376 = vld [vmem:[%s2169 + $0x260] sm:$0xf]
    %v5377 = vld [vmem:[%s2169 + $0x264] sm:$0xf]
    %v5378 = vld [vmem:[%s2169 + $0x268] sm:$0xf]
    %v5379 = vld [vmem:[%s2169 + $0x26c] sm:$0xf]
    %v5380 = vld [vmem:[%s2169 + $0x270] sm:$0xf]
    %v5381 = vld [vmem:[%s2169 + $0x274] sm:$0xf]
    %v5382 = vld [vmem:[%s2169 + $0x278] sm:$0xf]
    %v5383 = vld [vmem:[%s2169 + $0x27c] sm:$0xf]
    %v5384 = vld [vmem:[%s2169 + $0x280] sm:$0xf]
    %v5385 = vld [vmem:[%s2169 + $0x284] sm:$0xf]
    %v5386 = vld [vmem:[%s2169 + $0x288] sm:$0xf]
    %v5387 = vld [vmem:[%s2169 + $0x28c] sm:$0xf]
    %v5388 = vld [vmem:[%s2169 + $0x290] sm:$0xf]
    %v5389 = vld [vmem:[%s2169 + $0x294] sm:$0xf]
    %v5390 = vld [vmem:[%s2169 + $0x298] sm:$0xf]
    %v5391 = vld [vmem:[%s2169 + $0x29c] sm:$0xf]
    %v5392 = vld [vmem:[%s2169 + $0x2a0] sm:$0xf]
    %v5393 = vld [vmem:[%s2169 + $0x2a4] sm:$0xf]
    %v5394 = vld [vmem:[%s2169 + $0x2a8] sm:$0xf]
    %v5395 = vld [vmem:[%s2169 + $0x2ac] sm:$0xf]
    %v5396 = vld [vmem:[%s2169 + $0x2b0] sm:$0xf]
    %v5397 = vld [vmem:[%s2169 + $0x2b4] sm:$0xf]
    %v5398 = vld [vmem:[%s2169 + $0x2b8] sm:$0xf]
    %v5399 = vld [vmem:[%s2169 + $0x2bc] sm:$0xf]
    %v5400 = vld [vmem:[%s2346] sm:$0x1]
    %v5402 = vlaneseq
    %v5403 = vshrl.u32 %v5402, 7
    %v5404 = vsub.s32 0, %v5403
    %v5405 = vrot.slane %v5400, %v5404
    %v5583 = vunpack.c.l.b16 %v5224
    %v5584 = vunpack.c.l.b16 %v5225
    %v5585 = vunpack.c.l.b16 %v5226
    %v5586 = vunpack.c.l.b16 %v5227
    %v5587 = vunpack.c.l.b16 %v5228
    %v5588 = vunpack.c.l.b16 %v5229
    %v5589 = vunpack.c.l.b16 %v5230
    %v5590 = vunpack.c.l.b16 %v5231
    %v5591 = vunpack.c.l.b16 %v5232
    %v5592 = vunpack.c.l.b16 %v5233
    %v5593 = vunpack.c.l.b16 %v5234
    %v5594 = vunpack.c.l.b16 %v5235
    %v5595 = vunpack.c.l.b16 %v5236
    %v5596 = vunpack.c.l.b16 %v5237
    %v5597 = vunpack.c.l.b16 %v5238
    %v5598 = vunpack.c.l.b16 %v5239
    %v5599 = vunpack.c.l.b16 %v5240
    %v5600 = vunpack.c.l.b16 %v5241
    %v5601 = vunpack.c.l.b16 %v5242
    %v5602 = vunpack.c.l.b16 %v5243
    %v5603 = vunpack.c.l.b16 %v5244
    %v5604 = vunpack.c.l.b16 %v5245
    %v5605 = vunpack.c.l.b16 %v5246
    %v5606 = vunpack.c.l.b16 %v5247
    %v5607 = vunpack.c.l.b16 %v5248
    %v5608 = vunpack.c.l.b16 %v5249
    %v5609 = vunpack.c.l.b16 %v5250
    %v5610 = vunpack.c.l.b16 %v5251
    %v5611 = vunpack.c.l.b16 %v5252
    %v5612 = vunpack.c.l.b16 %v5253
    %v5613 = vunpack.c.l.b16 %v5254
    %v5614 = vunpack.c.l.b16 %v5255
    %v5615 = vunpack.c.l.b16 %v5256
    %v5616 = vunpack.c.l.b16 %v5257
    %v5617 = vunpack.c.l.b16 %v5258
    %v5618 = vunpack.c.l.b16 %v5259
    %v5619 = vunpack.c.l.b16 %v5260
    %v5620 = vunpack.c.l.b16 %v5261
    %v5621 = vunpack.c.l.b16 %v5262
    %v5622 = vunpack.c.l.b16 %v5263
    %v5623 = vunpack.c.l.b16 %v5264
    %v5624 = vunpack.c.l.b16 %v5265
    %v5625 = vunpack.c.l.b16 %v5266
    %v5626 = vunpack.c.l.b16 %v5267
    %v5627 = vunpack.c.l.b16 %v5268
    %v5628 = vunpack.c.l.b16 %v5269
    %v5629 = vunpack.c.l.b16 %v5270
    %v5630 = vunpack.c.l.b16 %v5271
    %v5631 = vunpack.c.l.b16 %v5272
    %v5632 = vunpack.c.l.b16 %v5273
    %v5633 = vunpack.c.l.b16 %v5274
    %v5634 = vunpack.c.l.b16 %v5275
    %v5635 = vunpack.c.l.b16 %v5276
    %v5636 = vunpack.c.l.b16 %v5277
    %v5637 = vunpack.c.l.b16 %v5278
    %v5638 = vunpack.c.l.b16 %v5279
    %v5639 = vunpack.c.l.b16 %v5280
    %v5640 = vunpack.c.l.b16 %v5281
    %v5641 = vunpack.c.l.b16 %v5282
    %v5642 = vunpack.c.l.b16 %v5283
    %v5643 = vunpack.c.l.b16 %v5284
    %v5644 = vunpack.c.l.b16 %v5285
    %v5645 = vunpack.c.l.b16 %v5286
    %v5646 = vunpack.c.l.b16 %v5287
    %v5647 = vunpack.c.l.b16 %v5288
    %v5648 = vunpack.c.l.b16 %v5289
    %v5649 = vunpack.c.l.b16 %v5290
    %v5650 = vunpack.c.l.b16 %v5291
    %v5651 = vunpack.c.l.b16 %v5292
    %v5652 = vunpack.c.l.b16 %v5293
    %v5653 = vunpack.c.l.b16 %v5294
    %v5654 = vunpack.c.l.b16 %v5295
    %v5655 = vunpack.c.l.b16 %v5296
    %v5656 = vunpack.c.l.b16 %v5297
    %v5657 = vunpack.c.l.b16 %v5298
    %v5658 = vunpack.c.l.b16 %v5299
    %v5659 = vunpack.c.l.b16 %v5300
    %v5660 = vunpack.c.l.b16 %v5301
    %v5661 = vunpack.c.l.b16 %v5302
    %v5662 = vunpack.c.l.b16 %v5303
    %v5663 = vunpack.c.l.b16 %v5304
    %v5664 = vunpack.c.l.b16 %v5305
    %v5665 = vunpack.c.l.b16 %v5306
    %v5666 = vunpack.c.l.b16 %v5307
    %v5667 = vunpack.c.l.b16 %v5308
    %v5668 = vunpack.c.l.b16 %v5309
    %v5669 = vunpack.c.l.b16 %v5310
    %v5670 = vunpack.c.l.b16 %v5311
    %v5671 = vunpack.c.l.b16 %v5312
    %v5672 = vunpack.c.l.b16 %v5313
    %v5673 = vunpack.c.l.b16 %v5314
    %v5674 = vunpack.c.l.b16 %v5315
    %v5675 = vunpack.c.l.b16 %v5316
    %v5676 = vunpack.c.l.b16 %v5317
    %v5677 = vunpack.c.l.b16 %v5318
    %v5678 = vunpack.c.l.b16 %v5319
    %v5679 = vunpack.c.l.b16 %v5320
    %v5680 = vunpack.c.l.b16 %v5321
    %v5681 = vunpack.c.l.b16 %v5322
    %v5682 = vunpack.c.l.b16 %v5323
    %v5683 = vunpack.c.l.b16 %v5324
    %v5684 = vunpack.c.l.b16 %v5325
    %v5685 = vunpack.c.l.b16 %v5326
    %v5686 = vunpack.c.l.b16 %v5327
    %v5687 = vunpack.c.l.b16 %v5328
    %v5688 = vunpack.c.l.b16 %v5329
    %v5689 = vunpack.c.l.b16 %v5330
    %v5690 = vunpack.c.l.b16 %v5331
    %v5691 = vunpack.c.l.b16 %v5332
    %v5692 = vunpack.c.l.b16 %v5333
    %v5693 = vunpack.c.l.b16 %v5334
    %v5694 = vunpack.c.l.b16 %v5335
    %v5695 = vunpack.c.l.b16 %v5336
    %v5696 = vunpack.c.l.b16 %v5337
    %v5697 = vunpack.c.l.b16 %v5338
    %v5698 = vunpack.c.l.b16 %v5339
    %v5699 = vunpack.c.l.b16 %v5340
    %v5700 = vunpack.c.l.b16 %v5341
    %v5701 = vunpack.c.l.b16 %v5342
    %v5702 = vunpack.c.l.b16 %v5343
    %v5703 = vunpack.c.l.b16 %v5344
    %v5704 = vunpack.c.l.b16 %v5345
    %v5705 = vunpack.c.l.b16 %v5346
    %v5706 = vunpack.c.l.b16 %v5347
    %v5707 = vunpack.c.l.b16 %v5348
    %v5708 = vunpack.c.l.b16 %v5349
    %v5709 = vunpack.c.l.b16 %v5350
    %v5710 = vunpack.c.l.b16 %v5351
    %v5711 = vunpack.c.l.b16 %v5352
    %v5712 = vunpack.c.l.b16 %v5353
    %v5713 = vunpack.c.l.b16 %v5354
    %v5714 = vunpack.c.l.b16 %v5355
    %v5715 = vunpack.c.l.b16 %v5356
    %v5716 = vunpack.c.l.b16 %v5357
    %v5717 = vunpack.c.l.b16 %v5358
    %v5718 = vunpack.c.l.b16 %v5359
    %v5719 = vunpack.c.l.b16 %v5360
    %v5720 = vunpack.c.l.b16 %v5361
    %v5721 = vunpack.c.l.b16 %v5362
    %v5722 = vunpack.c.l.b16 %v5363
    %v5723 = vunpack.c.l.b16 %v5364
    %v5724 = vunpack.c.l.b16 %v5365
    %v5725 = vunpack.c.l.b16 %v5366
    %v5726 = vunpack.c.l.b16 %v5367
    %v5727 = vunpack.c.l.b16 %v5368
    %v5728 = vunpack.c.l.b16 %v5369
    %v5729 = vunpack.c.l.b16 %v5370
    %v5730 = vunpack.c.l.b16 %v5371
    %v5731 = vunpack.c.l.b16 %v5372
    %v5732 = vunpack.c.l.b16 %v5373
    %v5733 = vunpack.c.l.b16 %v5374
    %v5734 = vunpack.c.l.b16 %v5375
    %v5735 = vunpack.c.l.b16 %v5376
    %v5736 = vunpack.c.l.b16 %v5377
    %v5737 = vunpack.c.l.b16 %v5378
    %v5738 = vunpack.c.l.b16 %v5379
    %v5739 = vunpack.c.l.b16 %v5380
    %v5740 = vunpack.c.l.b16 %v5381
    %v5741 = vunpack.c.l.b16 %v5382
    %v5742 = vunpack.c.l.b16 %v5383
    %v5743 = vunpack.c.l.b16 %v5384
    %v5744 = vunpack.c.l.b16 %v5385
    %v5745 = vunpack.c.l.b16 %v5386
    %v5746 = vunpack.c.l.b16 %v5387
    %v5747 = vunpack.c.l.b16 %v5388
    %v5748 = vunpack.c.l.b16 %v5389
    %v5749 = vunpack.c.l.b16 %v5390
    %v5750 = vunpack.c.l.b16 %v5391
    %v5751 = vunpack.c.l.b16 %v5392
    %v5752 = vunpack.c.l.b16 %v5393
    %v5753 = vunpack.c.l.b16 %v5394
    %v5754 = vunpack.c.l.b16 %v5395
    %v5755 = vunpack.c.l.b16 %v5396
    %v5756 = vunpack.c.l.b16 %v5397
    %v5757 = vunpack.c.l.b16 %v5398
    %v5758 = vunpack.c.l.b16 %v5399
    %v5759 = vpack.c.b16 %v5584, %v5583
    %v5760 = vpack.c.b16 %v5586, %v5585
    %v5761 = vpack.c.b16 %v5588, %v5587
    %v5762 = vpack.c.b16 %v5590, %v5589
    %v5763 = vpack.c.b16 %v5592, %v5591
    %v5764 = vpack.c.b16 %v5594, %v5593
    %v5765 = vpack.c.b16 %v5596, %v5595
    %v5766 = vpack.c.b16 %v5598, %v5597
    %v5767 = vpack.c.b16 %v5600, %v5599
    %v5768 = vpack.c.b16 %v5602, %v5601
    %v5769 = vpack.c.b16 %v5604, %v5603
    %v5770 = vpack.c.b16 %v5606, %v5605
    %v5771 = vpack.c.b16 %v5608, %v5607
    %v5772 = vpack.c.b16 %v5610, %v5609
    %v5773 = vpack.c.b16 %v5612, %v5611
    %v5774 = vpack.c.b16 %v5614, %v5613
    %v5775 = vpack.c.b16 %v5616, %v5615
    %v5776 = vpack.c.b16 %v5618, %v5617
    %v5777 = vpack.c.b16 %v5620, %v5619
    %v5778 = vpack.c.b16 %v5622, %v5621
    %v5779 = vpack.c.b16 %v5624, %v5623
    %v5780 = vpack.c.b16 %v5626, %v5625
    %v5781 = vpack.c.b16 %v5628, %v5627
    %v5782 = vpack.c.b16 %v5630, %v5629
    %v5783 = vpack.c.b16 %v5632, %v5631
    %v5784 = vpack.c.b16 %v5634, %v5633
    %v5785 = vpack.c.b16 %v5636, %v5635
    %v5786 = vpack.c.b16 %v5638, %v5637
    %v5787 = vpack.c.b16 %v5640, %v5639
    %v5788 = vpack.c.b16 %v5642, %v5641
    %v5789 = vpack.c.b16 %v5644, %v5643
    %v5790 = vpack.c.b16 %v5646, %v5645
    %v5791 = vpack.c.b16 %v5648, %v5647
    %v5792 = vpack.c.b16 %v5650, %v5649
    %v5793 = vpack.c.b16 %v5652, %v5651
    %v5794 = vpack.c.b16 %v5654, %v5653
    %v5795 = vpack.c.b16 %v5656, %v5655
    %v5796 = vpack.c.b16 %v5658, %v5657
    %v5797 = vpack.c.b16 %v5660, %v5659
    %v5798 = vpack.c.b16 %v5662, %v5661
    %v5799 = vpack.c.b16 %v5664, %v5663
    %v5800 = vpack.c.b16 %v5666, %v5665
    %v5801 = vpack.c.b16 %v5668, %v5667
    %v5802 = vpack.c.b16 %v5670, %v5669
    %v5803 = vpack.c.b16 %v5672, %v5671
    %v5804 = vpack.c.b16 %v5674, %v5673
    %v5805 = vpack.c.b16 %v5676, %v5675
    %v5806 = vpack.c.b16 %v5678, %v5677
    %v5807 = vpack.c.b16 %v5680, %v5679
    %v5808 = vpack.c.b16 %v5682, %v5681
    %v5809 = vpack.c.b16 %v5684, %v5683
    %v5810 = vpack.c.b16 %v5686, %v5685
    %v5811 = vpack.c.b16 %v5688, %v5687
    %v5812 = vpack.c.b16 %v5690, %v5689
    %v5813 = vpack.c.b16 %v5692, %v5691
    %v5814 = vpack.c.b16 %v5694, %v5693
    %v5815 = vpack.c.b16 %v5696, %v5695
    %v5816 = vpack.c.b16 %v5698, %v5697
    %v5817 = vpack.c.b16 %v5700, %v5699
    %v5818 = vpack.c.b16 %v5702, %v5701
    %v5819 = vpack.c.b16 %v5704, %v5703
    %v5820 = vpack.c.b16 %v5706, %v5705
    %v5821 = vpack.c.b16 %v5708, %v5707
    %v5822 = vpack.c.b16 %v5710, %v5709
    %v5823 = vpack.c.b16 %v5712, %v5711
    %v5824 = vpack.c.b16 %v5714, %v5713
    %v5825 = vpack.c.b16 %v5716, %v5715
    %v5826 = vpack.c.b16 %v5718, %v5717
    %v5827 = vpack.c.b16 %v5720, %v5719
    %v5828 = vpack.c.b16 %v5722, %v5721
    %v5829 = vpack.c.b16 %v5724, %v5723
    %v5830 = vpack.c.b16 %v5726, %v5725
    %v5831 = vpack.c.b16 %v5728, %v5727
    %v5832 = vpack.c.b16 %v5730, %v5729
    %v5833 = vpack.c.b16 %v5732, %v5731
    %v5834 = vpack.c.b16 %v5734, %v5733
    %v5835 = vpack.c.b16 %v5736, %v5735
    %v5836 = vpack.c.b16 %v5738, %v5737
    %v5837 = vpack.c.b16 %v5740, %v5739
    %v5838 = vpack.c.b16 %v5742, %v5741
    %v5839 = vpack.c.b16 %v5744, %v5743
    %v5840 = vpack.c.b16 %v5746, %v5745
    %v5841 = vpack.c.b16 %v5748, %v5747
    %v5842 = vpack.c.b16 %v5750, %v5749
    %v5843 = vpack.c.b16 %v5752, %v5751
    %v5844 = vpack.c.b16 %v5754, %v5753
    %v5845 = vpack.c.b16 %v5756, %v5755
    %v5846 = vpack.c.b16 %v5758, %v5757
    %5935 = vmatprep.subr.bf16.mxu0 0
    %5936 = vmatpush1.bf16.msra.mxu0 %v5766
    %5937 = vmatprep.subr.bf16.mxu0 0
    %5938 = vmatpush1.bf16.msra.mxu0 %v5765
    %5939 = vmatprep.subr.bf16.mxu0 0
    %5940 = vmatpush1.bf16.msra.mxu0 %v5764
    %5941 = vmatprep.subr.bf16.mxu0 0
    %5942 = vmatpush1.bf16.msra.mxu0 %v5763
    %5943 = vmatprep.subr.bf16.mxu0 0
    %5944 = vmatpush1.bf16.msra.mxu0 %v5762
    %5945 = vmatprep.subr.bf16.mxu0 0
    %5946 = vmatpush1.bf16.msra.mxu0 %v5761
    %5947 = vmatprep.subr.bf16.mxu0 0
    %5948 = vmatpush1.bf16.msra.mxu0 %v5760
    %5949 = vmatprep.subr.bf16.mxu0 0
    %5950 = vmatpush1.bf16.msra.mxu0 %v5759
    %5951 = vmatprep.subr.bf16.mxu0 0
    %5952 = vmatpush2.bf16.msra.mxu0 %v5774
    %5953 = vmatprep.subr.bf16.mxu0 0
    %5954 = vmatpush2.bf16.msra.mxu0 %v5773
    %5955 = vmatprep.subr.bf16.mxu0 0
    %5956 = vmatpush2.bf16.msra.mxu0 %v5772
    %5957 = vmatprep.subr.bf16.mxu0 0
    %5958 = vmatpush2.bf16.msra.mxu0 %v5771
    %5959 = vmatprep.subr.bf16.mxu0 0
    %5960 = vmatpush2.bf16.msra.mxu0 %v5770
    %5961 = vmatprep.subr.bf16.mxu0 0
    %5962 = vmatpush2.bf16.msra.mxu0 %v5769
    %5963 = vmatprep.subr.bf16.mxu0 0
    %5964 = vmatpush2.bf16.msra.mxu0 %v5768
    %5965 = vmatprep.subr.bf16.mxu0 0
    %5966 = vmatpush2.bf16.msra.mxu0 %v5767
    %5967 = vmatprep.mubr.bf16.mxu0 %v5214
    %5968 = vmatmul.mubr.bf16.gmra.mxu0 %v5213
    %v5969 = vpop.f32.mrf.mxu0
    %v5970 = vadd.f32 %v5405, %v5969
    %v5971 = vpop.f32.mrf.mxu0
    %v5972 = vpop.f32.mrf.mxu0
    %v5973 = vpop.f32.mrf.mxu0
    %5974 = vdwg.mxu0
    %5975 = vmatprep.subr.bf16.mxu0 0
    %5976 = vmatpush1.bf16.msra.mxu0 %v5782
    %5977 = vmatprep.subr.bf16.mxu0 0
    %5978 = vmatpush1.bf16.msra.mxu0 %v5781
    %5979 = vmatprep.subr.bf16.mxu0 0
    %5980 = vmatpush1.bf16.msra.mxu0 %v5780
    %5981 = vmatprep.subr.bf16.mxu0 0
    %5982 = vmatpush1.bf16.msra.mxu0 %v5779
    %5983 = vmatprep.subr.bf16.mxu0 0
    %5984 = vmatpush1.bf16.msra.mxu0 %v5778
    %5985 = vmatprep.subr.bf16.mxu0 0
    %5986 = vmatpush1.bf16.msra.mxu0 %v5777
    %5987 = vmatprep.subr.bf16.mxu0 0
    %5988 = vmatpush1.bf16.msra.mxu0 %v5776
    %5989 = vmatprep.subr.bf16.mxu0 0
    %5990 = vmatpush1.bf16.msra.mxu0 %v5775
    %5991 = vmatprep.subr.bf16.mxu0 0
    %5992 = vmatpush2.bf16.msra.mxu0 %v5790
    %5993 = vmatprep.subr.bf16.mxu0 0
    %5994 = vmatpush2.bf16.msra.mxu0 %v5789
    %5995 = vmatprep.subr.bf16.mxu0 0
    %5996 = vmatpush2.bf16.msra.mxu0 %v5788
    %5997 = vmatprep.subr.bf16.mxu0 0
    %5998 = vmatpush2.bf16.msra.mxu0 %v5787
    %5999 = vmatprep.subr.bf16.mxu0 0
    %6000 = vmatpush2.bf16.msra.mxu0 %v5786
    %6001 = vmatprep.subr.bf16.mxu0 0
    %6002 = vmatpush2.bf16.msra.mxu0 %v5785
    %6003 = vmatprep.subr.bf16.mxu0 0
    %6004 = vmatpush2.bf16.msra.mxu0 %v5784
    %6005 = vmatprep.subr.bf16.mxu0 0
    %6006 = vmatpush2.bf16.msra.mxu0 %v5783
    %6007 = vmatprep.mubr.bf16.mxu0 %v5216
    %6008 = vmatmul.mubr.bf16.gmra.mxu0 %v5215
    %v6009 = vpop.f32.mrf.mxu0
    %v6010 = vadd.f32 %v5970, %v6009
    %v6011 = vpop.f32.mrf.mxu0
    %v6012 = vpop.f32.mrf.mxu0
    %v6013 = vpop.f32.mrf.mxu0
    %6014 = vdwg.mxu0
    %6015 = vmatprep.subr.bf16.mxu0 0
    %6016 = vmatpush1.bf16.msra.mxu0 %v5798
    %6017 = vmatprep.subr.bf16.mxu0 0
    %6018 = vmatpush1.bf16.msra.mxu0 %v5797
    %6019 = vmatprep.subr.bf16.mxu0 0
    %6020 = vmatpush1.bf16.msra.mxu0 %v5796
    %6021 = vmatprep.subr.bf16.mxu0 0
    %6022 = vmatpush1.bf16.msra.mxu0 %v5795
    %6023 = vmatprep.subr.bf16.mxu0 0
    %6024 = vmatpush1.bf16.msra.mxu0 %v5794
    %6025 = vmatprep.subr.bf16.mxu0 0
    %6026 = vmatpush1.bf16.msra.mxu0 %v5793
    %6027 = vmatprep.subr.bf16.mxu0 0
    %6028 = vmatpush1.bf16.msra.mxu0 %v5792
    %6029 = vmatprep.subr.bf16.mxu0 0
    %6030 = vmatpush1.bf16.msra.mxu0 %v5791
    %6031 = vmatprep.subr.bf16.mxu0 0
    %6032 = vmatpush2.bf16.msra.mxu0 %v5806
    %6033 = vmatprep.subr.bf16.mxu0 0
    %6034 = vmatpush2.bf16.msra.mxu0 %v5805
    %6035 = vmatprep.subr.bf16.mxu0 0
    %6036 = vmatpush2.bf16.msra.mxu0 %v5804
    %6037 = vmatprep.subr.bf16.mxu0 0
    %6038 = vmatpush2.bf16.msra.mxu0 %v5803
    %6039 = vmatprep.subr.bf16.mxu0 0
    %6040 = vmatpush2.bf16.msra.mxu0 %v5802
    %6041 = vmatprep.subr.bf16.mxu0 0
    %6042 = vmatpush2.bf16.msra.mxu0 %v5801
    %6043 = vmatprep.subr.bf16.mxu0 0
    %6044 = vmatpush2.bf16.msra.mxu0 %v5800
    %6045 = vmatprep.subr.bf16.mxu0 0
    %6046 = vmatpush2.bf16.msra.mxu0 %v5799
    %6047 = vmatprep.mubr.bf16.mxu0 %v5218
    %6048 = vmatmul.mubr.bf16.gmra.mxu0 %v5217
    %v6049 = vpop.f32.mrf.mxu0
    %v6050 = vadd.f32 %v6010, %v6049
    %v6051 = vpop.f32.mrf.mxu0
    %v6052 = vpop.f32.mrf.mxu0
    %v6053 = vpop.f32.mrf.mxu0
    %6054 = vdwg.mxu0
    %6055 = vmatprep.subr.bf16.mxu0 0
    %6056 = vmatpush1.bf16.msra.mxu0 %v5814
    %6057 = vmatprep.subr.bf16.mxu0 0
    %6058 = vmatpush1.bf16.msra.mxu0 %v5813
    %6059 = vmatprep.subr.bf16.mxu0 0
    %6060 = vmatpush1.bf16.msra.mxu0 %v5812
    %6061 = vmatprep.subr.bf16.mxu0 0
    %6062 = vmatpush1.bf16.msra.mxu0 %v5811
    %6063 = vmatprep.subr.bf16.mxu0 0
    %6064 = vmatpush1.bf16.msra.mxu0 %v5810
    %6065 = vmatprep.subr.bf16.mxu0 0
    %6066 = vmatpush1.bf16.msra.mxu0 %v5809
    %6067 = vmatprep.subr.bf16.mxu0 0
    %6068 = vmatpush1.bf16.msra.mxu0 %v5808
    %6069 = vmatprep.subr.bf16.mxu0 0
    %6070 = vmatpush1.bf16.msra.mxu0 %v5807
    %6071 = vmatprep.subr.bf16.mxu0 0
    %6072 = vmatpush2.bf16.msra.mxu0 %v5822
    %6073 = vmatprep.subr.bf16.mxu0 0
    %6074 = vmatpush2.bf16.msra.mxu0 %v5821
    %6075 = vmatprep.subr.bf16.mxu0 0
    %6076 = vmatpush2.bf16.msra.mxu0 %v5820
    %6077 = vmatprep.subr.bf16.mxu0 0
    %6078 = vmatpush2.bf16.msra.mxu0 %v5819
    %6079 = vmatprep.subr.bf16.mxu0 0
    %6080 = vmatpush2.bf16.msra.mxu0 %v5818
    %6081 = vmatprep.subr.bf16.mxu0 0
    %6082 = vmatpush2.bf16.msra.mxu0 %v5817
    %6083 = vmatprep.subr.bf16.mxu0 0
    %6084 = vmatpush2.bf16.msra.mxu0 %v5816
    %6085 = vmatprep.subr.bf16.mxu0 0
    %6086 = vmatpush2.bf16.msra.mxu0 %v5815
    %6087 = vmatprep.mubr.bf16.mxu0 %v5220
    %6088 = vmatmul.mubr.bf16.gmra.mxu0 %v5219
    %v6089 = vpop.f32.mrf.mxu0
    %v6090 = vadd.f32 %v6050, %v6089
    %v6091 = vpop.f32.mrf.mxu0
    %v6092 = vpop.f32.mrf.mxu0
    %v6093 = vpop.f32.mrf.mxu0
    %6094 = vdwg.mxu0
    %6095 = vmatprep.subr.bf16.mxu0 0
    %6096 = vmatpush1.bf16.msra.mxu0 %v5830
    %6097 = vmatprep.subr.bf16.mxu0 0
    %6098 = vmatpush1.bf16.msra.mxu0 %v5829
    %6099 = vmatprep.subr.bf16.mxu0 0
    %6100 = vmatpush1.bf16.msra.mxu0 %v5828
    %6101 = vmatprep.subr.bf16.mxu0 0
    %6102 = vmatpush1.bf16.msra.mxu0 %v5827
    %6103 = vmatprep.subr.bf16.mxu0 0
    %6104 = vmatpush1.bf16.msra.mxu0 %v5826
    %6105 = vmatprep.subr.bf16.mxu0 0
    %6106 = vmatpush1.bf16.msra.mxu0 %v5825
    %6107 = vmatprep.subr.bf16.mxu0 0
    %6108 = vmatpush1.bf16.msra.mxu0 %v5824
    %6109 = vmatprep.subr.bf16.mxu0 0
    %6110 = vmatpush1.bf16.msra.mxu0 %v5823
    %6111 = vmatprep.subr.bf16.mxu0 0
    %6112 = vmatpush2.bf16.msra.mxu0 %v5838
    %6113 = vmatprep.subr.bf16.mxu0 0
    %6114 = vmatpush2.bf16.msra.mxu0 %v5837
    %6115 = vmatprep.subr.bf16.mxu0 0
    %6116 = vmatpush2.bf16.msra.mxu0 %v5836
    %6117 = vmatprep.subr.bf16.mxu0 0
    %6118 = vmatpush2.bf16.msra.mxu0 %v5835
    %6119 = vmatprep.subr.bf16.mxu0 0
    %6120 = vmatpush2.bf16.msra.mxu0 %v5834
    %6121 = vmatprep.subr.bf16.mxu0 0
    %6122 = vmatpush2.bf16.msra.mxu0 %v5833
    %6123 = vmatprep.subr.bf16.mxu0 0
    %6124 = vmatpush2.bf16.msra.mxu0 %v5832
    %6125 = vmatprep.subr.bf16.mxu0 0
    %6126 = vmatpush2.bf16.msra.mxu0 %v5831
    %6127 = vmatprep.mubr.bf16.mxu0 %v5222
    %6128 = vmatmul.mubr.bf16.gmra.mxu0 %v5221
    %v6129 = vpop.f32.mrf.mxu0
    %v6130 = vadd.f32 %v6090, %v6129
    %v6131 = vpop.f32.mrf.mxu0
    %v6132 = vpop.f32.mrf.mxu0
    %v6133 = vpop.f32.mrf.mxu0
    %6134 = vdwg.mxu0
    %6135 = vmatprep.subr.bf16.mxu0 0
    %6136 = vmatpush1.bf16.msra.mxu0 %v5846
    %6137 = vmatprep.subr.bf16.mxu0 0
    %6138 = vmatpush1.bf16.msra.mxu0 %v5845
    %6139 = vmatprep.subr.bf16.mxu0 0
    %6140 = vmatpush1.bf16.msra.mxu0 %v5844
    %6141 = vmatprep.subr.bf16.mxu0 0
    %6142 = vmatpush1.bf16.msra.mxu0 %v5843
    %6143 = vmatprep.subr.bf16.mxu0 0
    %6144 = vmatpush1.bf16.msra.mxu0 %v5842
    %6145 = vmatprep.subr.bf16.mxu0 0
    %6146 = vmatpush1.bf16.msra.mxu0 %v5841
    %6147 = vmatprep.subr.bf16.mxu0 0
    %6148 = vmatpush1.bf16.msra.mxu0 %v5840
    %6149 = vmatprep.subr.bf16.mxu0 0
    %6150 = vmatpush1.bf16.msra.mxu0 %v5839
    %6151 = vmatprep.subr.bf16.mxu0 0
    %6152 = vmatpush2.bf16.msra.mxu0 0
    %6153 = vmatprep.subr.bf16.mxu0 0
    %6154 = vmatpush2.bf16.msra.mxu0 0
    %6155 = vmatprep.subr.bf16.mxu0 0
    %6156 = vmatpush2.bf16.msra.mxu0 0
    %6157 = vmatprep.subr.bf16.mxu0 0
    %6158 = vmatpush2.bf16.msra.mxu0 0
    %6159 = vmatprep.subr.bf16.mxu0 0
    %6160 = vmatpush2.bf16.msra.mxu0 0
    %6161 = vmatprep.subr.bf16.mxu0 0
    %6162 = vmatpush2.bf16.msra.mxu0 0
    %6163 = vmatprep.subr.bf16.mxu0 0
    %6164 = vmatpush2.bf16.msra.mxu0 0
    %6165 = vmatprep.subr.bf16.mxu0 0
    %6166 = vmatpush2.bf16.msra.mxu0 0
    %6167 = vmatprep.mubr.bf16.mxu0 0
    %6168 = vmatmul.mubr.bf16.gmra.mxu0 %v5223
    %v6169 = vpop.f32.mrf.mxu0
    %v6170 = vadd.f32 %v6130, %v6169
    %v6171 = vpop.f32.mrf.mxu0
    %v6172 = vpop.f32.mrf.mxu0
    %v6173 = vpop.f32.mrf.mxu0
    %6174 = vdwg.mxu0
    %v6175 = vadd.f32 %v6170, %v4804
    %6177 = vrot.lane.b32.xlu0 %v4805, 16
    %v6178 = vpop.permute.xlu0 %6177
    %v6180 = vadd.f32 %v6170, %v6178
    %6182 = vrot.lane.b32.xlu0 %v6180, 112
    %v6183 = vpop.permute.xlu0 %6182
    %v6185 = vsel %vm322, %v6175, 0.0
    %6186 = vadd.xlane.f32.xlu0 %v6185
    %v6187 = vpop.xlane.xlu0 %6186
    %v6188 = vsel %vm322, %v6183, 0.0
    %6189 = vadd.xlane.f32.xlu0 %v6188
    %v6190 = vpop.xlane.xlu0 %6189
    %v6191 = vmul.f32 %v6187, %v1712
    %v6192 = vmul.f32 %v6190, %v1712
    %v6193 = vsub.f32 %v6175, %v6191
    %v6194 = vsub.f32 %v6183, %v6192
    %v6195 = vmul.f32 %v6193, %v6193
    %v6196 = vmul.f32 %v6194, %v6194
    %v6197 = vsel %vm322, %v6195, 0.0
    %6198 = vadd.xlane.f32.xlu0 %v6197
    %v6199 = vpop.xlane.xlu0 %6198
    %v6200 = vsel %vm322, %v6196, 0.0
    %6201 = vadd.xlane.f32.xlu0 %v6200
    %v6202 = vpop.xlane.xlu0 %6201
    %v6203 = vmul.f32 %v6199, %v1712
    %v6204 = vmul.f32 %v6202, %v1712
    %v6205 = vadd.f32 %v6203, 1e-05
    %v6206 = vadd.f32 %v6204, 1e-05
    %v6207 = vrsqrt.pop %v6205
    %v6208 = vrsqrt.pop %v6206
    %v6209 = vmul.f32 %v6193, %v6207
    %v6210 = vmul.f32 %v6194, %v6208
    %v6211 = vmul.f32 %v6209, %v1737
    %v6212 = vmul.f32 %v6210, %v1737
    %v6213 = vadd.f32 %v6211, %v1745
    %v6214 = vadd.f32 %v6212, %v1745
    %v6215 = vpack.c.bf16 %v6214, %v6213
    %v6217 = vsel %vm322, %v6215, 0
    %6219 = vmatprep.subr.bf16.mxu0 0
    %6220 = vmatpush1.bf16.msra.mxu0 0
    %6221 = vmatprep.subr.bf16.mxu0 0
    %6222 = vmatpush1.bf16.msra.mxu0 0
    %6223 = vmatprep.subr.bf16.mxu0 0
    %6224 = vmatpush1.bf16.msra.mxu0 0
    %6225 = vmatprep.subr.bf16.mxu0 0
    %6226 = vmatpush1.bf16.msra.mxu0 0
    %6227 = vmatprep.subr.bf16.mxu0 0
    %6228 = vmatpush1.bf16.msra.mxu0 0
    %6229 = vmatprep.subr.bf16.mxu0 0
    %6230 = vmatpush1.bf16.msra.mxu0 0
    %6231 = vmatprep.subr.bf16.mxu0 0
    %6232 = vmatpush1.bf16.msra.mxu0 0
    %6233 = vmatprep.subr.bf16.mxu0 0
    %6234 = vmatpush1.bf16.msra.mxu0 %v3173
    %6235 = vmatprep.subr.bf16.mxu0 0
    %6236 = vmatpush2.bf16.msra.mxu0 0
    %6237 = vmatprep.subr.bf16.mxu0 0
    %6238 = vmatpush2.bf16.msra.mxu0 0
    %6239 = vmatprep.subr.bf16.mxu0 0
    %6240 = vmatpush2.bf16.msra.mxu0 0
    %6241 = vmatprep.subr.bf16.mxu0 0
    %6242 = vmatpush2.bf16.msra.mxu0 0
    %6243 = vmatprep.subr.bf16.mxu0 0
    %6244 = vmatpush2.bf16.msra.mxu0 0
    %6245 = vmatprep.subr.bf16.mxu0 0
    %6246 = vmatpush2.bf16.msra.mxu0 0
    %6247 = vmatprep.subr.bf16.mxu0 0
    %6248 = vmatpush2.bf16.msra.mxu0 0
    %6249 = vmatprep.subr.bf16.mxu0 0
    %6250 = vmatpush2.bf16.msra.mxu0 0
    %6251 = vmatprep.mubr.bf16.mxu0 0
    %6252 = vmatmul.mubr.bf16.gmra.mxu0 %v6217
    %v6253 = vpop.f32.mrf.mxu0
    %v6254 = vadd.f32 %v3167, %v6253
    %v6255 = vpop.f32.mrf.mxu0
    %v6256 = vpop.f32.mrf.mxu0
    %v6257 = vadd.f32 %v3167, %v6256
    %v6258 = vpop.f32.mrf.mxu0
    %6259 = vdwg.mxu0
    %v6260 = vpack.c.bf16 %v6257, %v6254
    %6261 = vmatprep.subr.bf16.mxu0 0
    %6262 = vmatpush1.bf16.msra.mxu0 0
    %6263 = vmatprep.subr.bf16.mxu0 0
    %6264 = vmatpush1.bf16.msra.mxu0 0
    %6265 = vmatprep.subr.bf16.mxu0 0
    %6266 = vmatpush1.bf16.msra.mxu0 0
    %6267 = vmatprep.subr.bf16.mxu0 0
    %6268 = vmatpush1.bf16.msra.mxu0 0
    %6269 = vmatprep.subr.bf16.mxu0 0
    %6270 = vmatpush1.bf16.msra.mxu0 0
    %6271 = vmatprep.subr.bf16.mxu0 0
    %6272 = vmatpush1.bf16.msra.mxu0 0
    %6273 = vmatprep.subr.bf16.mxu0 0
    %6274 = vmatpush1.bf16.msra.mxu0 0
    %6275 = vmatprep.subr.bf16.mxu0 0
    %6276 = vmatpush1.bf16.msra.mxu0 %v6260
    %6277 = vmatprep.subr.bf16.mxu0 0
    %6278 = vmatpush2.bf16.msra.mxu0 0
    %6279 = vmatprep.subr.bf16.mxu0 0
    %6280 = vmatpush2.bf16.msra.mxu0 0
    %6281 = vmatprep.subr.bf16.mxu0 0
    %6282 = vmatpush2.bf16.msra.mxu0 0
    %6283 = vmatprep.subr.bf16.mxu0 0
    %6284 = vmatpush2.bf16.msra.mxu0 0
    %6285 = vmatprep.subr.bf16.mxu0 0
    %6286 = vmatpush2.bf16.msra.mxu0 0
    %6287 = vmatprep.subr.bf16.mxu0 0
    %6288 = vmatpush2.bf16.msra.mxu0 0
    %6289 = vmatprep.subr.bf16.mxu0 0
    %6290 = vmatpush2.bf16.msra.mxu0 0
    %6291 = vmatprep.subr.bf16.mxu0 0
    %6292 = vmatpush2.bf16.msra.mxu0 0
    %6293 = vmatprep.mubr.bf16.mxu0 0
    %6294 = vmatmul.mubr.bf16.gmra.mxu0 %v3226
    %v6295 = vpop.f32.mrf.mxu0
    %v6296 = vadd.f32 %v3223, %v6295
    %v6297 = vpop.f32.mrf.mxu0
    %v6298 = vpop.f32.mrf.mxu0
    %v6299 = vpop.f32.mrf.mxu0
    %6300 = vdwg.mxu0
    %s6301 = scalar_lea.vmem %s16, 8
    %6302 = vst.msk [vmem:[%s6301] sm:$0xff] %vm158, %v6296
    // Predicated region
    $region90: #{_lambda_.1} parent=1 // pred_check
      _
    $region91: #{_lambda_.1} parent=1 // pred_check_branch
      %6304 = sbr.rel (0) target = $region93
    $region92: #{_lambda_.1} parent=1 // pred_region
      _
    $region93: #{_lambda_.1} parent=1 // pred_fallthru
      _
    // Predicated region
    $region94: #{_lambda_.1} parent=1 // pred_check
      _
    $region95: #{_lambda_.1} parent=1 // pred_check_branch
      %6306 = sbr.rel (0) target = $region97
    $region96: #{_lambda_.1} parent=1 // pred_region
      _
    $region97: #{_lambda_.1} parent=1 // pred_fallthru
      _
    %6307 = vsyncpa [#allocation6], 1
    %6308 = vsyncpa [#allocation8], 1
    %6309 = vsyncpa [#allocation11], 1
    %6310 = vsyncpa [#allocation14], 1

</llo_original>
